<compile_context>
chip_gen: v7x
topology: tpu7x:2x2x1
jax: 0.10.0
libtpu: 0.0.40
codegen_flags: <defaults>
</compile_context>

<pallas_src>
import functools

import numpy as np
import jax
import jax.numpy as jnp
from jax.experimental import pallas as pl
from jax.experimental.pallas import tpu as pltpu


def _round_up(x, m):
    return ((x + m - 1) // m) * m


_GUARD = 8  # sublane-aligned guard rows around the padded conv1 scratch


def _encoder_block_kernel(patches_ref, mask_ref, w1_ref, sb1_ref, w2_ref,
                          sb2_ref, wr_ref, br_ref, o_ref, h1_ref,
                          *, H, W, S, k_rows):
    # patches_ref: (1, H*S, K1p)        bf16  im2col of x, band layout
    # mask_ref:    (CH, Coutp)          f32   0/1 column-validity mask (1 chunk)
    # w1_ref:      (K1p, Coutp)         bf16  conv1 im2col weight
    # sb1_ref:     (2, Coutp)           f32   row0=scale, row1=bias (BN1 folded)
    # w2_ref:      (9, Coutp, Coutp)    bf16  conv2 per-tap weights
    # sb2_ref:     (2, Coutp)           f32
    # wr_ref:      (K1p, Coutp)         bf16  residual weight @ centre-tap rows
    # br_ref:      (1, Coutp)           f32
    # o_ref:       (1, H*S, Coutp)      bf16  output, band layout
    # h1_ref:      ((H+2)*S+2*GUARD, Coutp) bf16 VMEM scratch (padded conv1 out)
    coutp = o_ref.shape[2]
    CH = k_rows * S
    HS = H * S
    n_chunks = HS // CH

    scale1 = sb1_ref[0:1, :]
    bias1 = sb1_ref[1:2, :]
    scale2 = sb2_ref[0:1, :]
    bias2 = sb2_ref[1:2, :]
    br = br_ref[...]

    # zero top/bottom halo bands -> conv 'same' zero padding in y for conv2
    zband = jnp.zeros((S + _GUARD, coutp), h1_ref.dtype)
    h1_ref[pl.ds(0, S + _GUARD), :] = zband
    h1_ref[pl.ds(_GUARD + (H + 1) * S, S + _GUARD), :] = zband

    def conv1_chunk(c):
        r0 = c * CH
        p = patches_ref[0, pl.ds(r0, CH), :]                       # zero-copy slab
        a = jnp.dot(p, w1_ref[...], preferred_element_type=jnp.float32)
        h = jnp.maximum(a * scale1 + bias1, 0.0) * mask_ref[...]   # BN+ReLU+mask
        h1_ref[pl.ds(_GUARD + S + r0, CH), :] = h.astype(h1_ref.dtype)

    def conv2_chunk(c):
        r0 = c * CH
        acc = jnp.zeros((CH, coutp), jnp.float32)
        for kh in range(3):
            for kw in range(3):
                off = _GUARD + r0 + kh * S + (kw - 1)              # contiguous slab
                acc = acc + jnp.dot(h1_ref[pl.ds(off, CH), :],
                                    w2_ref[kh * 3 + kw],
                                    preferred_element_type=jnp.float32)
        h2 = jnp.maximum(acc * scale2 + bias2, 0.0)
        res = jnp.dot(patches_ref[0, pl.ds(r0, CH), :], wr_ref[...],
                      preferred_element_type=jnp.float32) + br
        o_ref[0, pl.ds(r0, CH), :] = (h2 + res).astype(o_ref.dtype)

    # conv1 chunk c+1 finishes the halo rows conv2 chunk c needs (CH >= S+1),
    # so stagger the chunks to let the scheduler overlap VPU epilogue / MXU.
    if n_chunks > 1 and CH >= S + 1:
        conv1_chunk(0)
        for c in range(1, n_chunks):
            conv1_chunk(c)
            conv2_chunk(c - 1)
        conv2_chunk(n_chunks - 1)
    else:
        for c in range(n_chunks):
            conv1_chunk(c)
        for c in range(n_chunks):
            conv2_chunk(c)


def encoder_block(x_nhwc, kp):
    """x_nhwc: (N, H, W, Cin) float32. Returns (N, H, W, Cout) float32."""
    N, H, W, cin = x_nhwc.shape
    cout, coutp, K1p = kp["cout"], kp["coutp"], kp["K1p"]
    assert cin == kp["cin"]

    S = _round_up(W + 2, 8)            # flat-layout row stride (incl. junk cols)
    HS = H * S
    # chunk = k_rows whole image rows: keeps stores 8-aligned and the column
    # mask chunk-periodic; ~128 flat rows keeps the f32 accumulator in vregs.
    k_rows = 1
    for k in range(1, H + 1):
        if H % k == 0 and k * S <= 128:
            k_rows = k
    CH = k_rows * S

    # im2col in band layout: row r = y*S + xx holds the 3x3*cin patch for output
    # pixel (y, x = xx-1); columns xx=0 and xx>W are junk (masked in-kernel).
    x_big = jnp.pad(x_nhwc, ((0, 0), (1, 1), (2, S - W), (0, 0)))
    taps = [x_big[:, kh:kh + H, kw:kw + S, :]
            for kh in range(3) for kw in range(3)]
    patches = jnp.concatenate(taps, axis=-1).reshape(N, HS, 9 * cin)
    patches = jnp.pad(patches, ((0, 0), (0, 0), (0, K1p - 9 * cin)))
    patches = patches.astype(jnp.bfloat16)

    # 0/1 column-validity mask for one chunk (zeroes junk halo columns of the
    # conv1 output so conv2 sees proper 'same' zero padding in x).
    row_mask = ((jnp.arange(S) >= 1) & (jnp.arange(S) <= W)).astype(jnp.float32)
    colmask = jnp.tile(row_mask[:, None], (k_rows, coutp))

    scratch_rows = (H + 2) * S + 2 * _GUARD

    # VMEM budget: grid-varying blocks double-buffered, weights counted once.
    est = (2 * HS * K1p * 2 + 2 * HS * coutp * 2 + CH * coutp * 4
           + (2 * K1p * coutp + 9 * coutp * coutp) * 2 + 5 * coutp * 4
           + scratch_rows * coutp * 2)
    try:
        vmem_cap = int(pltpu.get_tpu_info().vmem_capacity_bytes)
    except Exception:
        vmem_cap = 64 << 20            # conservative fallback (v7x per-core)
    ceiling = max(int(0.62 * vmem_cap), 16 << 20)
    vmem_limit = int(min(max(est + (4 << 20), 16 << 20), ceiling))

    kernel = functools.partial(_encoder_block_kernel, H=H, W=W, S=S,
                               k_rows=k_rows)

    grid_spec = pltpu.PrefetchScalarGridSpec(
        num_scalar_prefetch=0,
        grid=(N,),
        in_specs=[
            pl.BlockSpec((1, HS, K1p), lambda n: (n, 0, 0)),       # patches
            pl.BlockSpec((CH, coutp), lambda n: (0, 0)),           # colmask
            pl.BlockSpec((K1p, coutp), lambda n: (0, 0)),          # w1
            pl.BlockSpec((2, coutp), lambda n: (0, 0)),            # sb1
            pl.BlockSpec((9, coutp, coutp), lambda n: (0, 0, 0)),  # w2
            pl.BlockSpec((2, coutp), lambda n: (0, 0)),            # sb2
            pl.BlockSpec((K1p, coutp), lambda n: (0, 0)),          # wr
            pl.BlockSpec((1, coutp), lambda n: (0, 0)),            # br
        ],
        out_specs=pl.BlockSpec((1, HS, coutp), lambda n: (n, 0, 0)),
        scratch_shapes=[pltpu.VMEM((scratch_rows, coutp), jnp.bfloat16)],
    )

    out = pl.pallas_call(
        kernel,
        out_shape=jax.ShapeDtypeStruct((N, HS, coutp), jnp.bfloat16),
        grid_spec=grid_spec,
        compiler_params=pltpu.CompilerParams(
            dimension_semantics=("parallel",),
            vmem_limit_bytes=vmem_limit),
    )(patches, colmask, kp["w1"], kp["sb1"], kp["w2"], kp["sb2"],
      kp["wr"], kp["br"])

    out = out.reshape(N, H, S, coutp)[:, :, 1:W + 1, :cout]
    return out.astype(jnp.float32)


def make_raw_params(key, cin, cout, eps=1e-5):
    """PyTorch-equivalent parameters with BN (inference) + conv bias folded."""
    ks = jax.random.split(key, 14)
    w1 = jax.random.normal(ks[0], (3, 3, cin, cout), jnp.float32) * 0.1
    b1 = jax.random.normal(ks[1], (cout,), jnp.float32) * 0.1
    w2 = jax.random.normal(ks[2], (3, 3, cout, cout), jnp.float32) * 0.1
    b2 = jax.random.normal(ks[3], (cout,), jnp.float32) * 0.1
    g1 = 1.0 + 0.1 * jax.random.normal(ks[4], (cout,), jnp.float32)
    be1 = 0.1 * jax.random.normal(ks[5], (cout,), jnp.float32)
    m1 = 0.1 * jax.random.normal(ks[6], (cout,), jnp.float32)
    v1 = 1.0 + 0.1 * jax.nn.softplus(jax.random.normal(ks[7], (cout,), jnp.float32))
    g2 = 1.0 + 0.1 * jax.random.normal(ks[8], (cout,), jnp.float32)
    be2 = 0.1 * jax.random.normal(ks[9], (cout,), jnp.float32)
    m2 = 0.1 * jax.random.normal(ks[10], (cout,), jnp.float32)
    v2 = 1.0 + 0.1 * jax.nn.softplus(jax.random.normal(ks[11], (cout,), jnp.float32))
    if cin != cout:
        wr = jax.random.normal(ks[12], (cin, cout), jnp.float32) * 0.1
        br = jax.random.normal(ks[13], (cout,), jnp.float32) * 0.1
    else:  # nn.Identity residual
        wr = jnp.eye(cout, dtype=jnp.float32)
        br = jnp.zeros((cout,), jnp.float32)

    s1 = g1 / jnp.sqrt(v1 + eps)
    bb1 = be1 - m1 * s1 + s1 * b1
    s2 = g2 / jnp.sqrt(v2 + eps)
    bb2 = be2 - m2 * s2 + s2 * b2
    return {"w1": w1, "s1": s1, "b1": bb1,
            "w2": w2, "s2": s2, "b2": bb2,
            "wr": wr, "br": br}


def pack_params(p, cin, cout, lane=128):
    """Pack weights for the kernel: im2col conv1 weight, per-tap conv2 weights,
    residual weight embedded at the centre-tap rows; channels padded to 128."""
    coutp = _round_up(cout, lane)
    K1 = 9 * cin
    K1p = _round_up(K1, lane)
    dco = coutp - cout

    w1 = jnp.pad(p["w1"].reshape(K1, cout),
                 ((0, K1p - K1), (0, dco))).astype(jnp.bfloat16)
    w2 = jnp.pad(p["w2"].reshape(9, cout, cout),
                 ((0, 0), (0, dco), (0, dco))).astype(jnp.bfloat16)
    wr = jnp.zeros((K1p, coutp), jnp.float32)
    wr = wr.at[4 * cin:5 * cin, :cout].set(p["wr"])   # centre tap = (kh=1,kw=1)
    wr = wr.astype(jnp.bfloat16)

    sb1 = jnp.pad(jnp.stack([p["s1"], p["b1"]], axis=0), ((0, 0), (0, dco)))
    sb2 = jnp.pad(jnp.stack([p["s2"], p["b2"]], axis=0), ((0, 0), (0, dco)))
    br = jnp.pad(p["br"].reshape(1, -1), ((0, 0), (0, dco)))
    return {"w1": w1, "sb1": sb1, "w2": w2, "sb2": sb2, "wr": wr, "br": br,
            "cin": cin, "cout": cout, "coutp": coutp, "K1p": K1p}


def reference_forward(x_nhwc, p):
    """Pure-JAX reference mirroring the kernel's bf16-input / f32-accumulate math."""
    bf = lambda a: a.astype(jnp.bfloat16).astype(jnp.float32)

    def conv3x3(x, w):
        return jax.lax.conv_general_dilated(
            bf(x), bf(w), window_strides=(1, 1), padding="SAME",
            dimension_numbers=("NHWC", "HWIO", "NHWC"),
            precision=jax.lax.Precision.HIGHEST)

    h = jnp.maximum(conv3x3(x_nhwc, p["w1"]) * p["s1"] + p["b1"], 0.0)
    h = jnp.maximum(conv3x3(h, p["w2"]) * p["s2"] + p["b2"], 0.0)
    res = jnp.einsum("nhwc,cd->nhwd", bf(x_nhwc), bf(p["wr"]),
                     precision=jax.lax.Precision.HIGHEST) + p["br"]
    return h + res


if __name__ == "__main__":
    N, Cin, Cout, H, W = 2, 4, 8, 16, 16
    key = jax.random.PRNGKey(0)
    kx, kparam = jax.random.split(key)

    # PyTorch-equivalent NCHW input, transposed to NHWC for the kernel.
    x_nchw = jax.random.normal(kx, (N, Cin, H, W), jnp.float32)
    x_nhwc = jnp.transpose(x_nchw, (0, 2, 3, 1))

    raw = make_raw_params(kparam, Cin, Cout)
    packed = pack_params(raw, Cin, Cout)

    out = jax.block_until_ready(encoder_block(x_nhwc, packed))
    ref = jax.block_until_ready(reference_forward(x_nhwc, raw))

    assert out.shape == (N, H, W, Cout)
    np.testing.assert_allclose(np.asarray(out), np.asarray(ref),
                               atol=2e-2, rtol=2e-2)
    print("KERNEL_OK")
</pallas_src>

<mosaic_0001>
module attributes {stable_mosaic.version = 11 : i64} {
  func.func @_encoder_block_kernel(%arg0: i32, %arg1: memref<1x384x128xbf16, #tpu.memory_space<vmem>>, %arg2: memref<96x128xf32, #tpu.memory_space<vmem>>, %arg3: memref<128x128xbf16, #tpu.memory_space<vmem>>, %arg4: memref<2x128xf32, #tpu.memory_space<vmem>>, %arg5: memref<9x128x128xbf16, #tpu.memory_space<vmem>>, %arg6: memref<2x128xf32, #tpu.memory_space<vmem>>, %arg7: memref<128x128xbf16, #tpu.memory_space<vmem>>, %arg8: memref<1x128xf32, #tpu.memory_space<vmem>>, %arg9: memref<1x384x128xbf16, #tpu.memory_space<vmem>>, %arg10: memref<448x128xbf16, #tpu.memory_space<vmem>>) attributes {dimension_semantics = [#tpu.dimension_semantics<parallel>], iteration_bounds = array<i64: 2>, scalar_prefetch = 0 : i64, scratch_operands = 1 : i64, tpu.core_type = #tpu.core_type<tc>, window_params = [{transform_indices = @transform_0, window_bounds = array<i64: 1, 384, 128>}, {pipeline_mode = #tpu.pipeline_mode<synchronous>, transform_indices = @transform_1, window_bounds = array<i64: 96, 128>}, {pipeline_mode = #tpu.pipeline_mode<synchronous>, transform_indices = @transform_2, window_bounds = array<i64: 128, 128>}, {pipeline_mode = #tpu.pipeline_mode<synchronous>, transform_indices = @transform_3, window_bounds = array<i64: 2, 128>}, {pipeline_mode = #tpu.pipeline_mode<synchronous>, transform_indices = @transform_4, window_bounds = array<i64: 9, 128, 128>}, {pipeline_mode = #tpu.pipeline_mode<synchronous>, transform_indices = @transform_5, window_bounds = array<i64: 2, 128>}, {pipeline_mode = #tpu.pipeline_mode<synchronous>, transform_indices = @transform_6, window_bounds = array<i64: 128, 128>}, {pipeline_mode = #tpu.pipeline_mode<synchronous>, transform_indices = @transform_7, window_bounds = array<i64: 1, 128>}, {transform_indices = @transform_8, window_bounds = array<i64: 1, 384, 128>}]} {
    %c0 = arith.constant 0 : index
    %c0_0 = arith.constant 0 : index
    %0 = vector.load %arg4[%c0, %c0_0] : memref<2x128xf32, #tpu.memory_space<vmem>>, vector<1x128xf32>
    %c1 = arith.constant 1 : index
    %c0_1 = arith.constant 0 : index
    %1 = vector.load %arg4[%c1, %c0_1] : memref<2x128xf32, #tpu.memory_space<vmem>>, vector<1x128xf32>
    %c0_2 = arith.constant 0 : index
    %c0_3 = arith.constant 0 : index
    %2 = vector.load %arg6[%c0_2, %c0_3] : memref<2x128xf32, #tpu.memory_space<vmem>>, vector<1x128xf32>
    %c1_4 = arith.constant 1 : index
    %c0_5 = arith.constant 0 : index
    %3 = vector.load %arg6[%c1_4, %c0_5] : memref<2x128xf32, #tpu.memory_space<vmem>>, vector<1x128xf32>
    %c0_6 = arith.constant 0 : index
    %c0_7 = arith.constant 0 : index
    %4 = vector.load %arg8[%c0_6, %c0_7] : memref<1x128xf32, #tpu.memory_space<vmem>>, vector<1x128xf32>
    %cst = arith.constant 0.000000e+00 : bf16
    %5 = vector.broadcast %cst : bf16 to vector<32x128xbf16>
    %c0_8 = arith.constant 0 : index
    %c0_9 = arith.constant 0 : index
    %6 = vector.load %arg10[%c0_8, %c0_9] : memref<448x128xbf16, #tpu.memory_space<vmem>>, vector<32x128xbf16>
    tpu.vector_store %arg10[%c0_8, %c0_9], %5 {strides = array<i32>} : memref<448x128xbf16, #tpu.memory_space<vmem>>, vector<32x128xbf16>,
    %c416 = arith.constant 416 : index
    %c0_10 = arith.constant 0 : index
    %7 = vector.load %arg10[%c416, %c0_10] : memref<448x128xbf16, #tpu.memory_space<vmem>>, vector<32x128xbf16>
    tpu.vector_store %arg10[%c416, %c0_10], %5 {strides = array<i32>} : memref<448x128xbf16, #tpu.memory_space<vmem>>, vector<32x128xbf16>,
    %c0_11 = arith.constant 0 : index
    %c0_12 = arith.constant 0 : index
    %c0_13 = arith.constant 0 : index
    %8 = vector.load %arg1[%c0_11, %c0_12, %c0_13] : memref<1x384x128xbf16, #tpu.memory_space<vmem>>, vector<1x96x128xbf16>
    %9 = vector.shape_cast %8 : vector<1x96x128xbf16> to vector<96x128xbf16>
    %c0_14 = arith.constant 0 : index
    %c0_15 = arith.constant 0 : index
    %10 = vector.load %arg3[%c0_14, %c0_15] : memref<128x128xbf16, #tpu.memory_space<vmem>>, vector<128x128xbf16>
    %cst_16 = arith.constant dense<0.000000e+00> : vector<96x128xf32>
    %11 = tpu.matmul %9, %10, %cst_16 {dimension_numbers = #tpu.dot_dimension_numbers<[1], [0], [0], [1], [0, 0, 1, 1], [], []>} : vector<96x128xbf16>, vector<128x128xbf16>, vector<96x128xf32> -> vector<96x128xf32>
    %12 = vector.broadcast %0 : vector<1x128xf32> to vector<96x128xf32>
    %13 = arith.mulf %11, %12 : vector<96x128xf32>
    %14 = vector.broadcast %1 : vector<1x128xf32> to vector<96x128xf32>
    %15 = arith.addf %13, %14 : vector<96x128xf32>
    %cst_17 = arith.constant 0.000000e+00 : f32
    %16 = vector.broadcast %cst_17 : f32 to vector<96x128xf32>
    %17 = arith.maximumf %15, %16 : vector<96x128xf32>
    %c0_18 = arith.constant 0 : index
    %c0_19 = arith.constant 0 : index
    %18 = vector.load %arg2[%c0_18, %c0_19] : memref<96x128xf32, #tpu.memory_space<vmem>>, vector<96x128xf32>
    %19 = arith.mulf %17, %18 : vector<96x128xf32>
    %20 = arith.truncf %19 : vector<96x128xf32> to vector<96x128xbf16>
    %c32 = arith.constant 32 : index
    %c0_20 = arith.constant 0 : index
    %21 = vector.load %arg10[%c32, %c0_20] : memref<448x128xbf16, #tpu.memory_space<vmem>>, vector<96x128xbf16>
    tpu.vector_store %arg10[%c32, %c0_20], %20 {strides = array<i32>} : memref<448x128xbf16, #tpu.memory_space<vmem>>, vector<96x128xbf16>,
    %c0_21 = arith.constant 0 : index
    %c96 = arith.constant 96 : index
    %c0_22 = arith.constant 0 : index
    %22 = vector.load %arg1[%c0_21, %c96, %c0_22] : memref<1x384x128xbf16, #tpu.memory_space<vmem>>, vector<1x96x128xbf16>
    %23 = vector.shape_cast %22 : vector<1x96x128xbf16> to vector<96x128xbf16>
    %c0_23 = arith.constant 0 : index
    %c0_24 = arith.constant 0 : index
    %24 = vector.load %arg3[%c0_23, %c0_24] : memref<128x128xbf16, #tpu.memory_space<vmem>>, vector<128x128xbf16>
    %cst_25 = arith.constant dense<0.000000e+00> : vector<96x128xf32>
    %25 = tpu.matmul %23, %24, %cst_25 {dimension_numbers = #tpu.dot_dimension_numbers<[1], [0], [0], [1], [0, 0, 1, 1], [], []>} : vector<96x128xbf16>, vector<128x128xbf16>, vector<96x128xf32> -> vector<96x128xf32>
    %26 = vector.broadcast %0 : vector<1x128xf32> to vector<96x128xf32>
    %27 = arith.mulf %25, %26 : vector<96x128xf32>
    %28 = vector.broadcast %1 : vector<1x128xf32> to vector<96x128xf32>
    %29 = arith.addf %27, %28 : vector<96x128xf32>
    %cst_26 = arith.constant 0.000000e+00 : f32
    %30 = vector.broadcast %cst_26 : f32 to vector<96x128xf32>
    %31 = arith.maximumf %29, %30 : vector<96x128xf32>
    %c0_27 = arith.constant 0 : index
    %c0_28 = arith.constant 0 : index
    %32 = vector.load %arg2[%c0_27, %c0_28] : memref<96x128xf32, #tpu.memory_space<vmem>>, vector<96x128xf32>
    %33 = arith.mulf %31, %32 : vector<96x128xf32>
    %34 = arith.truncf %33 : vector<96x128xf32> to vector<96x128xbf16>
    %c128 = arith.constant 128 : index
    %c0_29 = arith.constant 0 : index
    %35 = vector.load %arg10[%c128, %c0_29] : memref<448x128xbf16, #tpu.memory_space<vmem>>, vector<96x128xbf16>
    tpu.vector_store %arg10[%c128, %c0_29], %34 {strides = array<i32>} : memref<448x128xbf16, #tpu.memory_space<vmem>>, vector<96x128xbf16>,
    %cst_30 = arith.constant 0.000000e+00 : f32
    %36 = vector.broadcast %cst_30 : f32 to vector<96x128xf32>
    %c7 = arith.constant 7 : index
    %c0_31 = arith.constant 0 : index
    %37 = vector.load %arg10[%c7, %c0_31] : memref<448x128xbf16, #tpu.memory_space<vmem>>, vector<96x128xbf16>
    %c0_32 = arith.constant 0 : index
    %c0_33 = arith.constant 0 : index
    %c0_34 = arith.constant 0 : index
    %38 = vector.load %arg5[%c0_32, %c0_33, %c0_34] : memref<9x128x128xbf16, #tpu.memory_space<vmem>>, vector<1x128x128xbf16>
    %39 = vector.shape_cast %38 : vector<1x128x128xbf16> to vector<128x128xbf16>
    %cst_35 = arith.constant dense<0.000000e+00> : vector<96x128xf32>
    %40 = tpu.matmul %37, %39, %cst_35 {dimension_numbers = #tpu.dot_dimension_numbers<[1], [0], [0], [1], [0, 0, 1, 1], [], []>} : vector<96x128xbf16>, vector<128x128xbf16>, vector<96x128xf32> -> vector<96x128xf32>
    %41 = arith.addf %36, %40 : vector<96x128xf32>
    %c8 = arith.constant 8 : index
    %c0_36 = arith.constant 0 : index
    %42 = vector.load %arg10[%c8, %c0_36] : memref<448x128xbf16, #tpu.memory_space<vmem>>, vector<96x128xbf16>
    %c1_37 = arith.constant 1 : index
    %c0_38 = arith.constant 0 : index
    %c0_39 = arith.constant 0 : index
    %43 = vector.load %arg5[%c1_37, %c0_38, %c0_39] : memref<9x128x128xbf16, #tpu.memory_space<vmem>>, vector<1x128x128xbf16>
    %44 = vector.shape_cast %43 : vector<1x128x128xbf16> to vector<128x128xbf16>
    %cst_40 = arith.constant dense<0.000000e+00> : vector<96x128xf32>
    %45 = tpu.matmul %42, %44, %cst_40 {dimension_numbers = #tpu.dot_dimension_numbers<[1], [0], [0], [1], [0, 0, 1, 1], [], []>} : vector<96x128xbf16>, vector<128x128xbf16>, vector<96x128xf32> -> vector<96x128xf32>
    %46 = arith.addf %41, %45 : vector<96x128xf32>
    %c9 = arith.constant 9 : index
    %c0_41 = arith.constant 0 : index
    %47 = vector.load %arg10[%c9, %c0_41] : memref<448x128xbf16, #tpu.memory_space<vmem>>, vector<96x128xbf16>
    %c2 = arith.constant 2 : index
    %c0_42 = arith.constant 0 : index
    %c0_43 = arith.constant 0 : index
    %48 = vector.load %arg5[%c2, %c0_42, %c0_43] : memref<9x128x128xbf16, #tpu.memory_space<vmem>>, vector<1x128x128xbf16>
    %49 = vector.shape_cast %48 : vector<1x128x128xbf16> to vector<128x128xbf16>
    %cst_44 = arith.constant dense<0.000000e+00> : vector<96x128xf32>
    %50 = tpu.matmul %47, %49, %cst_44 {dimension_numbers = #tpu.dot_dimension_numbers<[1], [0], [0], [1], [0, 0, 1, 1], [], []>} : vector<96x128xbf16>, vector<128x128xbf16>, vector<96x128xf32> -> vector<96x128xf32>
    %51 = arith.addf %46, %50 : vector<96x128xf32>
    %c31 = arith.constant 31 : index
    %c0_45 = arith.constant 0 : index
    %52 = vector.load %arg10[%c31, %c0_45] : memref<448x128xbf16, #tpu.memory_space<vmem>>, vector<96x128xbf16>
    %c3 = arith.constant 3 : index
    %c0_46 = arith.constant 0 : index
    %c0_47 = arith.constant 0 : index
    %53 = vector.load %arg5[%c3, %c0_46, %c0_47] : memref<9x128x128xbf16, #tpu.memory_space<vmem>>, vector<1x128x128xbf16>
    %54 = vector.shape_cast %53 : vector<1x128x128xbf16> to vector<128x128xbf16>
    %cst_48 = arith.constant dense<0.000000e+00> : vector<96x128xf32>
    %55 = tpu.matmul %52, %54, %cst_48 {dimension_numbers = #tpu.dot_dimension_numbers<[1], [0], [0], [1], [0, 0, 1, 1], [], []>} : vector<96x128xbf16>, vector<128x128xbf16>, vector<96x128xf32> -> vector<96x128xf32>
    %56 = arith.addf %51, %55 : vector<96x128xf32>
    %c32_49 = arith.constant 32 : index
    %c0_50 = arith.constant 0 : index
    %57 = vector.load %arg10[%c32_49, %c0_50] : memref<448x128xbf16, #tpu.memory_space<vmem>>, vector<96x128xbf16>
    %c4 = arith.constant 4 : index
    %c0_51 = arith.constant 0 : index
    %c0_52 = arith.constant 0 : index
    %58 = vector.load %arg5[%c4, %c0_51, %c0_52] : memref<9x128x128xbf16, #tpu.memory_space<vmem>>, vector<1x128x128xbf16>
    %59 = vector.shape_cast %58 : vector<1x128x128xbf16> to vector<128x128xbf16>
    %cst_53 = arith.constant dense<0.000000e+00> : vector<96x128xf32>
    %60 = tpu.matmul %57, %59, %cst_53 {dimension_numbers = #tpu.dot_dimension_numbers<[1], [0], [0], [1], [0, 0, 1, 1], [], []>} : vector<96x128xbf16>, vector<128x128xbf16>, vector<96x128xf32> -> vector<96x128xf32>
    %61 = arith.addf %56, %60 : vector<96x128xf32>
    %c33 = arith.constant 33 : index
    %c0_54 = arith.constant 0 : index
    %62 = vector.load %arg10[%c33, %c0_54] : memref<448x128xbf16, #tpu.memory_space<vmem>>, vector<96x128xbf16>
    %c5 = arith.constant 5 : index
    %c0_55 = arith.constant 0 : index
    %c0_56 = arith.constant 0 : index
    %63 = vector.load %arg5[%c5, %c0_55, %c0_56] : memref<9x128x128xbf16, #tpu.memory_space<vmem>>, vector<1x128x128xbf16>
    %64 = vector.shape_cast %63 : vector<1x128x128xbf16> to vector<128x128xbf16>
    %cst_57 = arith.constant dense<0.000000e+00> : vector<96x128xf32>
    %65 = tpu.matmul %62, %64, %cst_57 {dimension_numbers = #tpu.dot_dimension_numbers<[1], [0], [0], [1], [0, 0, 1, 1], [], []>} : vector<96x128xbf16>, vector<128x128xbf16>, vector<96x128xf32> -> vector<96x128xf32>
    %66 = arith.addf %61, %65 : vector<96x128xf32>
    %c55 = arith.constant 55 : index
    %c0_58 = arith.constant 0 : index
    %67 = vector.load %arg10[%c55, %c0_58] : memref<448x128xbf16, #tpu.memory_space<vmem>>, vector<96x128xbf16>
    %c6 = arith.constant 6 : index
    %c0_59 = arith.constant 0 : index
    %c0_60 = arith.constant 0 : index
    %68 = vector.load %arg5[%c6, %c0_59, %c0_60] : memref<9x128x128xbf16, #tpu.memory_space<vmem>>, vector<1x128x128xbf16>
    %69 = vector.shape_cast %68 : vector<1x128x128xbf16> to vector<128x128xbf16>
    %cst_61 = arith.constant dense<0.000000e+00> : vector<96x128xf32>
    %70 = tpu.matmul %67, %69, %cst_61 {dimension_numbers = #tpu.dot_dimension_numbers<[1], [0], [0], [1], [0, 0, 1, 1], [], []>} : vector<96x128xbf16>, vector<128x128xbf16>, vector<96x128xf32> -> vector<96x128xf32>
    %71 = arith.addf %66, %70 : vector<96x128xf32>
    %c56 = arith.constant 56 : index
    %c0_62 = arith.constant 0 : index
    %72 = vector.load %arg10[%c56, %c0_62] : memref<448x128xbf16, #tpu.memory_space<vmem>>, vector<96x128xbf16>
    %c7_63 = arith.constant 7 : index
    %c0_64 = arith.constant 0 : index
    %c0_65 = arith.constant 0 : index
    %73 = vector.load %arg5[%c7_63, %c0_64, %c0_65] : memref<9x128x128xbf16, #tpu.memory_space<vmem>>, vector<1x128x128xbf16>
    %74 = vector.shape_cast %73 : vector<1x128x128xbf16> to vector<128x128xbf16>
    %cst_66 = arith.constant dense<0.000000e+00> : vector<96x128xf32>
    %75 = tpu.matmul %72, %74, %cst_66 {dimension_numbers = #tpu.dot_dimension_numbers<[1], [0], [0], [1], [0, 0, 1, 1], [], []>} : vector<96x128xbf16>, vector<128x128xbf16>, vector<96x128xf32> -> vector<96x128xf32>
    %76 = arith.addf %71, %75 : vector<96x128xf32>
    %c57 = arith.constant 57 : index
    %c0_67 = arith.constant 0 : index
    %77 = vector.load %arg10[%c57, %c0_67] : memref<448x128xbf16, #tpu.memory_space<vmem>>, vector<96x128xbf16>
    %c8_68 = arith.constant 8 : index
    %c0_69 = arith.constant 0 : index
    %c0_70 = arith.constant 0 : index
    %78 = vector.load %arg5[%c8_68, %c0_69, %c0_70] : memref<9x128x128xbf16, #tpu.memory_space<vmem>>, vector<1x128x128xbf16>
    %79 = vector.shape_cast %78 : vector<1x128x128xbf16> to vector<128x128xbf16>
    %cst_71 = arith.constant dense<0.000000e+00> : vector<96x128xf32>
    %80 = tpu.matmul %77, %79, %cst_71 {dimension_numbers = #tpu.dot_dimension_numbers<[1], [0], [0], [1], [0, 0, 1, 1], [], []>} : vector<96x128xbf16>, vector<128x128xbf16>, vector<96x128xf32> -> vector<96x128xf32>
    %81 = arith.addf %76, %80 : vector<96x128xf32>
    %82 = vector.broadcast %2 : vector<1x128xf32> to vector<96x128xf32>
    %83 = arith.mulf %81, %82 : vector<96x128xf32>
    %84 = vector.broadcast %3 : vector<1x128xf32> to vector<96x128xf32>
    %85 = arith.addf %83, %84 : vector<96x128xf32>
    %cst_72 = arith.constant 0.000000e+00 : f32
    %86 = vector.broadcast %cst_72 : f32 to vector<96x128xf32>
    %87 = arith.maximumf %85, %86 : vector<96x128xf32>
    %c0_73 = arith.constant 0 : index
    %c0_74 = arith.constant 0 : index
    %c0_75 = arith.constant 0 : index
    %88 = vector.load %arg1[%c0_73, %c0_74, %c0_75] : memref<1x384x128xbf16, #tpu.memory_space<vmem>>, vector<1x96x128xbf16>
    %89 = vector.shape_cast %88 : vector<1x96x128xbf16> to vector<96x128xbf16>
    %c0_76 = arith.constant 0 : index
    %c0_77 = arith.constant 0 : index
    %90 = vector.load %arg7[%c0_76, %c0_77] : memref<128x128xbf16, #tpu.memory_space<vmem>>, vector<128x128xbf16>
    %cst_78 = arith.constant dense<0.000000e+00> : vector<96x128xf32>
    %91 = tpu.matmul %89, %90, %cst_78 {dimension_numbers = #tpu.dot_dimension_numbers<[1], [0], [0], [1], [0, 0, 1, 1], [], []>} : vector<96x128xbf16>, vector<128x128xbf16>, vector<96x128xf32> -> vector<96x128xf32>
    %92 = vector.broadcast %4 : vector<1x128xf32> to vector<96x128xf32>
    %93 = arith.addf %91, %92 : vector<96x128xf32>
    %94 = arith.addf %87, %93 : vector<96x128xf32>
    %95 = arith.truncf %94 : vector<96x128xf32> to vector<96x128xbf16>
    %c0_79 = arith.constant 0 : index
    %c0_80 = arith.constant 0 : index
    %c0_81 = arith.constant 0 : index
    %96 = vector.load %arg9[%c0_79, %c0_80, %c0_81] : memref<1x384x128xbf16, #tpu.memory_space<vmem>>, vector<1x96x128xbf16>
    %97 = vector.shape_cast %96 : vector<1x96x128xbf16> to vector<96x128xbf16>
    %98 = vector.shape_cast %95 : vector<96x128xbf16> to vector<1x96x128xbf16>
    tpu.vector_store %arg9[%c0_79, %c0_80, %c0_81], %98 {strides = array<i32>} : memref<1x384x128xbf16, #tpu.memory_space<vmem>>, vector<1x96x128xbf16>,
    %c0_82 = arith.constant 0 : index
    %c192 = arith.constant 192 : index
    %c0_83 = arith.constant 0 : index
    %99 = vector.load %arg1[%c0_82, %c192, %c0_83] : memref<1x384x128xbf16, #tpu.memory_space<vmem>>, vector<1x96x128xbf16>
    %100 = vector.shape_cast %99 : vector<1x96x128xbf16> to vector<96x128xbf16>
    %c0_84 = arith.constant 0 : index
    %c0_85 = arith.constant 0 : index
    %101 = vector.load %arg3[%c0_84, %c0_85] : memref<128x128xbf16, #tpu.memory_space<vmem>>, vector<128x128xbf16>
    %cst_86 = arith.constant dense<0.000000e+00> : vector<96x128xf32>
    %102 = tpu.matmul %100, %101, %cst_86 {dimension_numbers = #tpu.dot_dimension_numbers<[1], [0], [0], [1], [0, 0, 1, 1], [], []>} : vector<96x128xbf16>, vector<128x128xbf16>, vector<96x128xf32> -> vector<96x128xf32>
    %103 = vector.broadcast %0 : vector<1x128xf32> to vector<96x128xf32>
    %104 = arith.mulf %102, %103 : vector<96x128xf32>
    %105 = vector.broadcast %1 : vector<1x128xf32> to vector<96x128xf32>
    %106 = arith.addf %104, %105 : vector<96x128xf32>
    %cst_87 = arith.constant 0.000000e+00 : f32
    %107 = vector.broadcast %cst_87 : f32 to vector<96x128xf32>
    %108 = arith.maximumf %106, %107 : vector<96x128xf32>
    %c0_88 = arith.constant 0 : index
    %c0_89 = arith.constant 0 : index
    %109 = vector.load %arg2[%c0_88, %c0_89] : memref<96x128xf32, #tpu.memory_space<vmem>>, vector<96x128xf32>
    %110 = arith.mulf %108, %109 : vector<96x128xf32>
    %111 = arith.truncf %110 : vector<96x128xf32> to vector<96x128xbf16>
    %c224 = arith.constant 224 : index
    %c0_90 = arith.constant 0 : index
    %112 = vector.load %arg10[%c224, %c0_90] : memref<448x128xbf16, #tpu.memory_space<vmem>>, vector<96x128xbf16>
    tpu.vector_store %arg10[%c224, %c0_90], %111 {strides = array<i32>} : memref<448x128xbf16, #tpu.memory_space<vmem>>, vector<96x128xbf16>,
    %cst_91 = arith.constant 0.000000e+00 : f32
    %113 = vector.broadcast %cst_91 : f32 to vector<96x128xf32>
    %c103 = arith.constant 103 : index
    %c0_92 = arith.constant 0 : index
    %114 = vector.load %arg10[%c103, %c0_92] : memref<448x128xbf16, #tpu.memory_space<vmem>>, vector<96x128xbf16>
    %c0_93 = arith.constant 0 : index
    %c0_94 = arith.constant 0 : index
    %c0_95 = arith.constant 0 : index
    %115 = vector.load %arg5[%c0_93, %c0_94, %c0_95] : memref<9x128x128xbf16, #tpu.memory_space<vmem>>, vector<1x128x128xbf16>
    %116 = vector.shape_cast %115 : vector<1x128x128xbf16> to vector<128x128xbf16>
    %cst_96 = arith.constant dense<0.000000e+00> : vector<96x128xf32>
    %117 = tpu.matmul %114, %116, %cst_96 {dimension_numbers = #tpu.dot_dimension_numbers<[1], [0], [0], [1], [0, 0, 1, 1], [], []>} : vector<96x128xbf16>, vector<128x128xbf16>, vector<96x128xf32> -> vector<96x128xf32>
    %118 = arith.addf %113, %117 : vector<96x128xf32>
    %c104 = arith.constant 104 : index
    %c0_97 = arith.constant 0 : index
    %119 = vector.load %arg10[%c104, %c0_97] : memref<448x128xbf16, #tpu.memory_space<vmem>>, vector<96x128xbf16>
    %c1_98 = arith.constant 1 : index
    %c0_99 = arith.constant 0 : index
    %c0_100 = arith.constant 0 : index
    %120 = vector.load %arg5[%c1_98, %c0_99, %c0_100] : memref<9x128x128xbf16, #tpu.memory_space<vmem>>, vector<1x128x128xbf16>
    %121 = vector.shape_cast %120 : vector<1x128x128xbf16> to vector<128x128xbf16>
    %cst_101 = arith.constant dense<0.000000e+00> : vector<96x128xf32>
    %122 = tpu.matmul %119, %121, %cst_101 {dimension_numbers = #tpu.dot_dimension_numbers<[1], [0], [0], [1], [0, 0, 1, 1], [], []>} : vector<96x128xbf16>, vector<128x128xbf16>, vector<96x128xf32> -> vector<96x128xf32>
    %123 = arith.addf %118, %122 : vector<96x128xf32>
    %c105 = arith.constant 105 : index
    %c0_102 = arith.constant 0 : index
    %124 = vector.load %arg10[%c105, %c0_102] : memref<448x128xbf16, #tpu.memory_space<vmem>>, vector<96x128xbf16>
    %c2_103 = arith.constant 2 : index
    %c0_104 = arith.constant 0 : index
    %c0_105 = arith.constant 0 : index
    %125 = vector.load %arg5[%c2_103, %c0_104, %c0_105] : memref<9x128x128xbf16, #tpu.memory_space<vmem>>, vector<1x128x128xbf16>
    %126 = vector.shape_cast %125 : vector<1x128x128xbf16> to vector<128x128xbf16>
    %cst_106 = arith.constant dense<0.000000e+00> : vector<96x128xf32>
    %127 = tpu.matmul %124, %126, %cst_106 {dimension_numbers = #tpu.dot_dimension_numbers<[1], [0], [0], [1], [0, 0, 1, 1], [], []>} : vector<96x128xbf16>, vector<128x128xbf16>, vector<96x128xf32> -> vector<96x128xf32>
    %128 = arith.addf %123, %127 : vector<96x128xf32>
    %c127 = arith.constant 127 : index
    %c0_107 = arith.constant 0 : index
    %129 = vector.load %arg10[%c127, %c0_107] : memref<448x128xbf16, #tpu.memory_space<vmem>>, vector<96x128xbf16>
    %c3_108 = arith.constant 3 : index
    %c0_109 = arith.constant 0 : index
    %c0_110 = arith.constant 0 : index
    %130 = vector.load %arg5[%c3_108, %c0_109, %c0_110] : memref<9x128x128xbf16, #tpu.memory_space<vmem>>, vector<1x128x128xbf16>
    %131 = vector.shape_cast %130 : vector<1x128x128xbf16> to vector<128x128xbf16>
    %cst_111 = arith.constant dense<0.000000e+00> : vector<96x128xf32>
    %132 = tpu.matmul %129, %131, %cst_111 {dimension_numbers = #tpu.dot_dimension_numbers<[1], [0], [0], [1], [0, 0, 1, 1], [], []>} : vector<96x128xbf16>, vector<128x128xbf16>, vector<96x128xf32> -> vector<96x128xf32>
    %133 = arith.addf %128, %132 : vector<96x128xf32>
    %c128_112 = arith.constant 128 : index
    %c0_113 = arith.constant 0 : index
    %134 = vector.load %arg10[%c128_112, %c0_113] : memref<448x128xbf16, #tpu.memory_space<vmem>>, vector<96x128xbf16>
    %c4_114 = arith.constant 4 : index
    %c0_115 = arith.constant 0 : index
    %c0_116 = arith.constant 0 : index
    %135 = vector.load %arg5[%c4_114, %c0_115, %c0_116] : memref<9x128x128xbf16, #tpu.memory_space<vmem>>, vector<1x128x128xbf16>
    %136 = vector.shape_cast %135 : vector<1x128x128xbf16> to vector<128x128xbf16>
    %cst_117 = arith.constant dense<0.000000e+00> : vector<96x128xf32>
    %137 = tpu.matmul %134, %136, %cst_117 {dimension_numbers = #tpu.dot_dimension_numbers<[1], [0], [0], [1], [0, 0, 1, 1], [], []>} : vector<96x128xbf16>, vector<128x128xbf16>, vector<96x128xf32> -> vector<96x128xf32>
    %138 = arith.addf %133, %137 : vector<96x128xf32>
    %c129 = arith.constant 129 : index
    %c0_118 = arith.constant 0 : index
    %139 = vector.load %arg10[%c129, %c0_118] : memref<448x128xbf16, #tpu.memory_space<vmem>>, vector<96x128xbf16>
    %c5_119 = arith.constant 5 : index
    %c0_120 = arith.constant 0 : index
    %c0_121 = arith.constant 0 : index
    %140 = vector.load %arg5[%c5_119, %c0_120, %c0_121] : memref<9x128x128xbf16, #tpu.memory_space<vmem>>, vector<1x128x128xbf16>
    %141 = vector.shape_cast %140 : vector<1x128x128xbf16> to vector<128x128xbf16>
    %cst_122 = arith.constant dense<0.000000e+00> : vector<96x128xf32>
    %142 = tpu.matmul %139, %141, %cst_122 {dimension_numbers = #tpu.dot_dimension_numbers<[1], [0], [0], [1], [0, 0, 1, 1], [], []>} : vector<96x128xbf16>, vector<128x128xbf16>, vector<96x128xf32> -> vector<96x128xf32>
    %143 = arith.addf %138, %142 : vector<96x128xf32>
    %c151 = arith.constant 151 : index
    %c0_123 = arith.constant 0 : index
    %144 = vector.load %arg10[%c151, %c0_123] : memref<448x128xbf16, #tpu.memory_space<vmem>>, vector<96x128xbf16>
    %c6_124 = arith.constant 6 : index
    %c0_125 = arith.constant 0 : index
    %c0_126 = arith.constant 0 : index
    %145 = vector.load %arg5[%c6_124, %c0_125, %c0_126] : memref<9x128x128xbf16, #tpu.memory_space<vmem>>, vector<1x128x128xbf16>
    %146 = vector.shape_cast %145 : vector<1x128x128xbf16> to vector<128x128xbf16>
    %cst_127 = arith.constant dense<0.000000e+00> : vector<96x128xf32>
    %147 = tpu.matmul %144, %146, %cst_127 {dimension_numbers = #tpu.dot_dimension_numbers<[1], [0], [0], [1], [0, 0, 1, 1], [], []>} : vector<96x128xbf16>, vector<128x128xbf16>, vector<96x128xf32> -> vector<96x128xf32>
    %148 = arith.addf %143, %147 : vector<96x128xf32>
    %c152 = arith.constant 152 : index
    %c0_128 = arith.constant 0 : index
    %149 = vector.load %arg10[%c152, %c0_128] : memref<448x128xbf16, #tpu.memory_space<vmem>>, vector<96x128xbf16>
    %c7_129 = arith.constant 7 : index
    %c0_130 = arith.constant 0 : index
    %c0_131 = arith.constant 0 : index
    %150 = vector.load %arg5[%c7_129, %c0_130, %c0_131] : memref<9x128x128xbf16, #tpu.memory_space<vmem>>, vector<1x128x128xbf16>
    %151 = vector.shape_cast %150 : vector<1x128x128xbf16> to vector<128x128xbf16>
    %cst_132 = arith.constant dense<0.000000e+00> : vector<96x128xf32>
    %152 = tpu.matmul %149, %151, %cst_132 {dimension_numbers = #tpu.dot_dimension_numbers<[1], [0], [0], [1], [0, 0, 1, 1], [], []>} : vector<96x128xbf16>, vector<128x128xbf16>, vector<96x128xf32> -> vector<96x128xf32>
    %153 = arith.addf %148, %152 : vector<96x128xf32>
    %c153 = arith.constant 153 : index
    %c0_133 = arith.constant 0 : index
    %154 = vector.load %arg10[%c153, %c0_133] : memref<448x128xbf16, #tpu.memory_space<vmem>>, vector<96x128xbf16>
    %c8_134 = arith.constant 8 : index
    %c0_135 = arith.constant 0 : index
    %c0_136 = arith.constant 0 : index
    %155 = vector.load %arg5[%c8_134, %c0_135, %c0_136] : memref<9x128x128xbf16, #tpu.memory_space<vmem>>, vector<1x128x128xbf16>
    %156 = vector.shape_cast %155 : vector<1x128x128xbf16> to vector<128x128xbf16>
    %cst_137 = arith.constant dense<0.000000e+00> : vector<96x128xf32>
    %157 = tpu.matmul %154, %156, %cst_137 {dimension_numbers = #tpu.dot_dimension_numbers<[1], [0], [0], [1], [0, 0, 1, 1], [], []>} : vector<96x128xbf16>, vector<128x128xbf16>, vector<96x128xf32> -> vector<96x128xf32>
    %158 = arith.addf %153, %157 : vector<96x128xf32>
    %159 = vector.broadcast %2 : vector<1x128xf32> to vector<96x128xf32>
    %160 = arith.mulf %158, %159 : vector<96x128xf32>
    %161 = vector.broadcast %3 : vector<1x128xf32> to vector<96x128xf32>
    %162 = arith.addf %160, %161 : vector<96x128xf32>
    %cst_138 = arith.constant 0.000000e+00 : f32
    %163 = vector.broadcast %cst_138 : f32 to vector<96x128xf32>
    %164 = arith.maximumf %162, %163 : vector<96x128xf32>
    %c0_139 = arith.constant 0 : index
    %c96_140 = arith.constant 96 : index
    %c0_141 = arith.constant 0 : index
    %165 = vector.load %arg1[%c0_139, %c96_140, %c0_141] : memref<1x384x128xbf16, #tpu.memory_space<vmem>>, vector<1x96x128xbf16>
    %166 = vector.shape_cast %165 : vector<1x96x128xbf16> to vector<96x128xbf16>
    %c0_142 = arith.constant 0 : index
    %c0_143 = arith.constant 0 : index
    %167 = vector.load %arg7[%c0_142, %c0_143] : memref<128x128xbf16, #tpu.memory_space<vmem>>, vector<128x128xbf16>
    %cst_144 = arith.constant dense<0.000000e+00> : vector<96x128xf32>
    %168 = tpu.matmul %166, %167, %cst_144 {dimension_numbers = #tpu.dot_dimension_numbers<[1], [0], [0], [1], [0, 0, 1, 1], [], []>} : vector<96x128xbf16>, vector<128x128xbf16>, vector<96x128xf32> -> vector<96x128xf32>
    %169 = vector.broadcast %4 : vector<1x128xf32> to vector<96x128xf32>
    %170 = arith.addf %168, %169 : vector<96x128xf32>
    %171 = arith.addf %164, %170 : vector<96x128xf32>
    %172 = arith.truncf %171 : vector<96x128xf32> to vector<96x128xbf16>
    %c0_145 = arith.constant 0 : index
    %c96_146 = arith.constant 96 : index
    %c0_147 = arith.constant 0 : index
    %173 = vector.load %arg9[%c0_145, %c96_146, %c0_147] : memref<1x384x128xbf16, #tpu.memory_space<vmem>>, vector<1x96x128xbf16>
    %174 = vector.shape_cast %173 : vector<1x96x128xbf16> to vector<96x128xbf16>
    %175 = vector.shape_cast %172 : vector<96x128xbf16> to vector<1x96x128xbf16>
    tpu.vector_store %arg9[%c0_145, %c96_146, %c0_147], %175 {strides = array<i32>} : memref<1x384x128xbf16, #tpu.memory_space<vmem>>, vector<1x96x128xbf16>,
    %c0_148 = arith.constant 0 : index
    %c288 = arith.constant 288 : index
    %c0_149 = arith.constant 0 : index
    %176 = vector.load %arg1[%c0_148, %c288, %c0_149] : memref<1x384x128xbf16, #tpu.memory_space<vmem>>, vector<1x96x128xbf16>
    %177 = vector.shape_cast %176 : vector<1x96x128xbf16> to vector<96x128xbf16>
    %c0_150 = arith.constant 0 : index
    %c0_151 = arith.constant 0 : index
    %178 = vector.load %arg3[%c0_150, %c0_151] : memref<128x128xbf16, #tpu.memory_space<vmem>>, vector<128x128xbf16>
    %cst_152 = arith.constant dense<0.000000e+00> : vector<96x128xf32>
    %179 = tpu.matmul %177, %178, %cst_152 {dimension_numbers = #tpu.dot_dimension_numbers<[1], [0], [0], [1], [0, 0, 1, 1], [], []>} : vector<96x128xbf16>, vector<128x128xbf16>, vector<96x128xf32> -> vector<96x128xf32>
    %180 = vector.broadcast %0 : vector<1x128xf32> to vector<96x128xf32>
    %181 = arith.mulf %179, %180 : vector<96x128xf32>
    %182 = vector.broadcast %1 : vector<1x128xf32> to vector<96x128xf32>
    %183 = arith.addf %181, %182 : vector<96x128xf32>
    %cst_153 = arith.constant 0.000000e+00 : f32
    %184 = vector.broadcast %cst_153 : f32 to vector<96x128xf32>
    %185 = arith.maximumf %183, %184 : vector<96x128xf32>
    %c0_154 = arith.constant 0 : index
    %c0_155 = arith.constant 0 : index
    %186 = vector.load %arg2[%c0_154, %c0_155] : memref<96x128xf32, #tpu.memory_space<vmem>>, vector<96x128xf32>
    %187 = arith.mulf %185, %186 : vector<96x128xf32>
    %188 = arith.truncf %187 : vector<96x128xf32> to vector<96x128xbf16>
    %c320 = arith.constant 320 : index
    %c0_156 = arith.constant 0 : index
    %189 = vector.load %arg10[%c320, %c0_156] : memref<448x128xbf16, #tpu.memory_space<vmem>>, vector<96x128xbf16>
    tpu.vector_store %arg10[%c320, %c0_156], %188 {strides = array<i32>} : memref<448x128xbf16, #tpu.memory_space<vmem>>, vector<96x128xbf16>,
    %cst_157 = arith.constant 0.000000e+00 : f32
    %190 = vector.broadcast %cst_157 : f32 to vector<96x128xf32>
    %c199 = arith.constant 199 : index
    %c0_158 = arith.constant 0 : index
    %191 = vector.load %arg10[%c199, %c0_158] : memref<448x128xbf16, #tpu.memory_space<vmem>>, vector<96x128xbf16>
    %c0_159 = arith.constant 0 : index
    %c0_160 = arith.constant 0 : index
    %c0_161 = arith.constant 0 : index
    %192 = vector.load %arg5[%c0_159, %c0_160, %c0_161] : memref<9x128x128xbf16, #tpu.memory_space<vmem>>, vector<1x128x128xbf16>
    %193 = vector.shape_cast %192 : vector<1x128x128xbf16> to vector<128x128xbf16>
    %cst_162 = arith.constant dense<0.000000e+00> : vector<96x128xf32>
    %194 = tpu.matmul %191, %193, %cst_162 {dimension_numbers = #tpu.dot_dimension_numbers<[1], [0], [0], [1], [0, 0, 1, 1], [], []>} : vector<96x128xbf16>, vector<128x128xbf16>, vector<96x128xf32> -> vector<96x128xf32>
    %195 = arith.addf %190, %194 : vector<96x128xf32>
    %c200 = arith.constant 200 : index
    %c0_163 = arith.constant 0 : index
    %196 = vector.load %arg10[%c200, %c0_163] : memref<448x128xbf16, #tpu.memory_space<vmem>>, vector<96x128xbf16>
    %c1_164 = arith.constant 1 : index
    %c0_165 = arith.constant 0 : index
    %c0_166 = arith.constant 0 : index
    %197 = vector.load %arg5[%c1_164, %c0_165, %c0_166] : memref<9x128x128xbf16, #tpu.memory_space<vmem>>, vector<1x128x128xbf16>
    %198 = vector.shape_cast %197 : vector<1x128x128xbf16> to vector<128x128xbf16>
    %cst_167 = arith.constant dense<0.000000e+00> : vector<96x128xf32>
    %199 = tpu.matmul %196, %198, %cst_167 {dimension_numbers = #tpu.dot_dimension_numbers<[1], [0], [0], [1], [0, 0, 1, 1], [], []>} : vector<96x128xbf16>, vector<128x128xbf16>, vector<96x128xf32> -> vector<96x128xf32>
    %200 = arith.addf %195, %199 : vector<96x128xf32>
    %c201 = arith.constant 201 : index
    %c0_168 = arith.constant 0 : index
    %201 = vector.load %arg10[%c201, %c0_168] : memref<448x128xbf16, #tpu.memory_space<vmem>>, vector<96x128xbf16>
    %c2_169 = arith.constant 2 : index
    %c0_170 = arith.constant 0 : index
    %c0_171 = arith.constant 0 : index
    %202 = vector.load %arg5[%c2_169, %c0_170, %c0_171] : memref<9x128x128xbf16, #tpu.memory_space<vmem>>, vector<1x128x128xbf16>
    %203 = vector.shape_cast %202 : vector<1x128x128xbf16> to vector<128x128xbf16>
    %cst_172 = arith.constant dense<0.000000e+00> : vector<96x128xf32>
    %204 = tpu.matmul %201, %203, %cst_172 {dimension_numbers = #tpu.dot_dimension_numbers<[1], [0], [0], [1], [0, 0, 1, 1], [], []>} : vector<96x128xbf16>, vector<128x128xbf16>, vector<96x128xf32> -> vector<96x128xf32>
    %205 = arith.addf %200, %204 : vector<96x128xf32>
    %c223 = arith.constant 223 : index
    %c0_173 = arith.constant 0 : index
    %206 = vector.load %arg10[%c223, %c0_173] : memref<448x128xbf16, #tpu.memory_space<vmem>>, vector<96x128xbf16>
    %c3_174 = arith.constant 3 : index
    %c0_175 = arith.constant 0 : index
    %c0_176 = arith.constant 0 : index
    %207 = vector.load %arg5[%c3_174, %c0_175, %c0_176] : memref<9x128x128xbf16, #tpu.memory_space<vmem>>, vector<1x128x128xbf16>
    %208 = vector.shape_cast %207 : vector<1x128x128xbf16> to vector<128x128xbf16>
    %cst_177 = arith.constant dense<0.000000e+00> : vector<96x128xf32>
    %209 = tpu.matmul %206, %208, %cst_177 {dimension_numbers = #tpu.dot_dimension_numbers<[1], [0], [0], [1], [0, 0, 1, 1], [], []>} : vector<96x128xbf16>, vector<128x128xbf16>, vector<96x128xf32> -> vector<96x128xf32>
    %210 = arith.addf %205, %209 : vector<96x128xf32>
    %c224_178 = arith.constant 224 : index
    %c0_179 = arith.constant 0 : index
    %211 = vector.load %arg10[%c224_178, %c0_179] : memref<448x128xbf16, #tpu.memory_space<vmem>>, vector<96x128xbf16>
    %c4_180 = arith.constant 4 : index
    %c0_181 = arith.constant 0 : index
    %c0_182 = arith.constant 0 : index
    %212 = vector.load %arg5[%c4_180, %c0_181, %c0_182] : memref<9x128x128xbf16, #tpu.memory_space<vmem>>, vector<1x128x128xbf16>
    %213 = vector.shape_cast %212 : vector<1x128x128xbf16> to vector<128x128xbf16>
    %cst_183 = arith.constant dense<0.000000e+00> : vector<96x128xf32>
    %214 = tpu.matmul %211, %213, %cst_183 {dimension_numbers = #tpu.dot_dimension_numbers<[1], [0], [0], [1], [0, 0, 1, 1], [], []>} : vector<96x128xbf16>, vector<128x128xbf16>, vector<96x128xf32> -> vector<96x128xf32>
    %215 = arith.addf %210, %214 : vector<96x128xf32>
    %c225 = arith.constant 225 : index
    %c0_184 = arith.constant 0 : index
    %216 = vector.load %arg10[%c225, %c0_184] : memref<448x128xbf16, #tpu.memory_space<vmem>>, vector<96x128xbf16>
    %c5_185 = arith.constant 5 : index
    %c0_186 = arith.constant 0 : index
    %c0_187 = arith.constant 0 : index
    %217 = vector.load %arg5[%c5_185, %c0_186, %c0_187] : memref<9x128x128xbf16, #tpu.memory_space<vmem>>, vector<1x128x128xbf16>
    %218 = vector.shape_cast %217 : vector<1x128x128xbf16> to vector<128x128xbf16>
    %cst_188 = arith.constant dense<0.000000e+00> : vector<96x128xf32>
    %219 = tpu.matmul %216, %218, %cst_188 {dimension_numbers = #tpu.dot_dimension_numbers<[1], [0], [0], [1], [0, 0, 1, 1], [], []>} : vector<96x128xbf16>, vector<128x128xbf16>, vector<96x128xf32> -> vector<96x128xf32>
    %220 = arith.addf %215, %219 : vector<96x128xf32>
    %c247 = arith.constant 247 : index
    %c0_189 = arith.constant 0 : index
    %221 = vector.load %arg10[%c247, %c0_189] : memref<448x128xbf16, #tpu.memory_space<vmem>>, vector<96x128xbf16>
    %c6_190 = arith.constant 6 : index
    %c0_191 = arith.constant 0 : index
    %c0_192 = arith.constant 0 : index
    %222 = vector.load %arg5[%c6_190, %c0_191, %c0_192] : memref<9x128x128xbf16, #tpu.memory_space<vmem>>, vector<1x128x128xbf16>
    %223 = vector.shape_cast %222 : vector<1x128x128xbf16> to vector<128x128xbf16>
    %cst_193 = arith.constant dense<0.000000e+00> : vector<96x128xf32>
    %224 = tpu.matmul %221, %223, %cst_193 {dimension_numbers = #tpu.dot_dimension_numbers<[1], [0], [0], [1], [0, 0, 1, 1], [], []>} : vector<96x128xbf16>, vector<128x128xbf16>, vector<96x128xf32> -> vector<96x128xf32>
    %225 = arith.addf %220, %224 : vector<96x128xf32>
    %c248 = arith.constant 248 : index
    %c0_194 = arith.constant 0 : index
    %226 = vector.load %arg10[%c248, %c0_194] : memref<448x128xbf16, #tpu.memory_space<vmem>>, vector<96x128xbf16>
    %c7_195 = arith.constant 7 : index
    %c0_196 = arith.constant 0 : index
    %c0_197 = arith.constant 0 : index
    %227 = vector.load %arg5[%c7_195, %c0_196, %c0_197] : memref<9x128x128xbf16, #tpu.memory_space<vmem>>, vector<1x128x128xbf16>
    %228 = vector.shape_cast %227 : vector<1x128x128xbf16> to vector<128x128xbf16>
    %cst_198 = arith.constant dense<0.000000e+00> : vector<96x128xf32>
    %229 = tpu.matmul %226, %228, %cst_198 {dimension_numbers = #tpu.dot_dimension_numbers<[1], [0], [0], [1], [0, 0, 1, 1], [], []>} : vector<96x128xbf16>, vector<128x128xbf16>, vector<96x128xf32> -> vector<96x128xf32>
    %230 = arith.addf %225, %229 : vector<96x128xf32>
    %c249 = arith.constant 249 : index
    %c0_199 = arith.constant 0 : index
    %231 = vector.load %arg10[%c249, %c0_199] : memref<448x128xbf16, #tpu.memory_space<vmem>>, vector<96x128xbf16>
    %c8_200 = arith.constant 8 : index
    %c0_201 = arith.constant 0 : index
    %c0_202 = arith.constant 0 : index
    %232 = vector.load %arg5[%c8_200, %c0_201, %c0_202] : memref<9x128x128xbf16, #tpu.memory_space<vmem>>, vector<1x128x128xbf16>
    %233 = vector.shape_cast %232 : vector<1x128x128xbf16> to vector<128x128xbf16>
    %cst_203 = arith.constant dense<0.000000e+00> : vector<96x128xf32>
    %234 = tpu.matmul %231, %233, %cst_203 {dimension_numbers = #tpu.dot_dimension_numbers<[1], [0], [0], [1], [0, 0, 1, 1], [], []>} : vector<96x128xbf16>, vector<128x128xbf16>, vector<96x128xf32> -> vector<96x128xf32>
    %235 = arith.addf %230, %234 : vector<96x128xf32>
    %236 = vector.broadcast %2 : vector<1x128xf32> to vector<96x128xf32>
    %237 = arith.mulf %235, %236 : vector<96x128xf32>
    %238 = vector.broadcast %3 : vector<1x128xf32> to vector<96x128xf32>
    %239 = arith.addf %237, %238 : vector<96x128xf32>
    %cst_204 = arith.constant 0.000000e+00 : f32
    %240 = vector.broadcast %cst_204 : f32 to vector<96x128xf32>
    %241 = arith.maximumf %239, %240 : vector<96x128xf32>
    %c0_205 = arith.constant 0 : index
    %c192_206 = arith.constant 192 : index
    %c0_207 = arith.constant 0 : index
    %242 = vector.load %arg1[%c0_205, %c192_206, %c0_207] : memref<1x384x128xbf16, #tpu.memory_space<vmem>>, vector<1x96x128xbf16>
    %243 = vector.shape_cast %242 : vector<1x96x128xbf16> to vector<96x128xbf16>
    %c0_208 = arith.constant 0 : index
    %c0_209 = arith.constant 0 : index
    %244 = vector.load %arg7[%c0_208, %c0_209] : memref<128x128xbf16, #tpu.memory_space<vmem>>, vector<128x128xbf16>
    %cst_210 = arith.constant dense<0.000000e+00> : vector<96x128xf32>
    %245 = tpu.matmul %243, %244, %cst_210 {dimension_numbers = #tpu.dot_dimension_numbers<[1], [0], [0], [1], [0, 0, 1, 1], [], []>} : vector<96x128xbf16>, vector<128x128xbf16>, vector<96x128xf32> -> vector<96x128xf32>
    %246 = vector.broadcast %4 : vector<1x128xf32> to vector<96x128xf32>
    %247 = arith.addf %245, %246 : vector<96x128xf32>
    %248 = arith.addf %241, %247 : vector<96x128xf32>
    %249 = arith.truncf %248 : vector<96x128xf32> to vector<96x128xbf16>
    %c0_211 = arith.constant 0 : index
    %c192_212 = arith.constant 192 : index
    %c0_213 = arith.constant 0 : index
    %250 = vector.load %arg9[%c0_211, %c192_212, %c0_213] : memref<1x384x128xbf16, #tpu.memory_space<vmem>>, vector<1x96x128xbf16>
    %251 = vector.shape_cast %250 : vector<1x96x128xbf16> to vector<96x128xbf16>
    %252 = vector.shape_cast %249 : vector<96x128xbf16> to vector<1x96x128xbf16>
    tpu.vector_store %arg9[%c0_211, %c192_212, %c0_213], %252 {strides = array<i32>} : memref<1x384x128xbf16, #tpu.memory_space<vmem>>, vector<1x96x128xbf16>,
    %cst_214 = arith.constant 0.000000e+00 : f32
    %253 = vector.broadcast %cst_214 : f32 to vector<96x128xf32>
    %c295 = arith.constant 295 : index
    %c0_215 = arith.constant 0 : index
    %254 = vector.load %arg10[%c295, %c0_215] : memref<448x128xbf16, #tpu.memory_space<vmem>>, vector<96x128xbf16>
    %c0_216 = arith.constant 0 : index
    %c0_217 = arith.constant 0 : index
    %c0_218 = arith.constant 0 : index
    %255 = vector.load %arg5[%c0_216, %c0_217, %c0_218] : memref<9x128x128xbf16, #tpu.memory_space<vmem>>, vector<1x128x128xbf16>
    %256 = vector.shape_cast %255 : vector<1x128x128xbf16> to vector<128x128xbf16>
    %cst_219 = arith.constant dense<0.000000e+00> : vector<96x128xf32>
    %257 = tpu.matmul %254, %256, %cst_219 {dimension_numbers = #tpu.dot_dimension_numbers<[1], [0], [0], [1], [0, 0, 1, 1], [], []>} : vector<96x128xbf16>, vector<128x128xbf16>, vector<96x128xf32> -> vector<96x128xf32>
    %258 = arith.addf %253, %257 : vector<96x128xf32>
    %c296 = arith.constant 296 : index
    %c0_220 = arith.constant 0 : index
    %259 = vector.load %arg10[%c296, %c0_220] : memref<448x128xbf16, #tpu.memory_space<vmem>>, vector<96x128xbf16>
    %c1_221 = arith.constant 1 : index
    %c0_222 = arith.constant 0 : index
    %c0_223 = arith.constant 0 : index
    %260 = vector.load %arg5[%c1_221, %c0_222, %c0_223] : memref<9x128x128xbf16, #tpu.memory_space<vmem>>, vector<1x128x128xbf16>
    %261 = vector.shape_cast %260 : vector<1x128x128xbf16> to vector<128x128xbf16>
    %cst_224 = arith.constant dense<0.000000e+00> : vector<96x128xf32>
    %262 = tpu.matmul %259, %261, %cst_224 {dimension_numbers = #tpu.dot_dimension_numbers<[1], [0], [0], [1], [0, 0, 1, 1], [], []>} : vector<96x128xbf16>, vector<128x128xbf16>, vector<96x128xf32> -> vector<96x128xf32>
    %263 = arith.addf %258, %262 : vector<96x128xf32>
    %c297 = arith.constant 297 : index
    %c0_225 = arith.constant 0 : index
    %264 = vector.load %arg10[%c297, %c0_225] : memref<448x128xbf16, #tpu.memory_space<vmem>>, vector<96x128xbf16>
    %c2_226 = arith.constant 2 : index
    %c0_227 = arith.constant 0 : index
    %c0_228 = arith.constant 0 : index
    %265 = vector.load %arg5[%c2_226, %c0_227, %c0_228] : memref<9x128x128xbf16, #tpu.memory_space<vmem>>, vector<1x128x128xbf16>
    %266 = vector.shape_cast %265 : vector<1x128x128xbf16> to vector<128x128xbf16>
    %cst_229 = arith.constant dense<0.000000e+00> : vector<96x128xf32>
    %267 = tpu.matmul %264, %266, %cst_229 {dimension_numbers = #tpu.dot_dimension_numbers<[1], [0], [0], [1], [0, 0, 1, 1], [], []>} : vector<96x128xbf16>, vector<128x128xbf16>, vector<96x128xf32> -> vector<96x128xf32>
    %268 = arith.addf %263, %267 : vector<96x128xf32>
    %c319 = arith.constant 319 : index
    %c0_230 = arith.constant 0 : index
    %269 = vector.load %arg10[%c319, %c0_230] : memref<448x128xbf16, #tpu.memory_space<vmem>>, vector<96x128xbf16>
    %c3_231 = arith.constant 3 : index
    %c0_232 = arith.constant 0 : index
    %c0_233 = arith.constant 0 : index
    %270 = vector.load %arg5[%c3_231, %c0_232, %c0_233] : memref<9x128x128xbf16, #tpu.memory_space<vmem>>, vector<1x128x128xbf16>
    %271 = vector.shape_cast %270 : vector<1x128x128xbf16> to vector<128x128xbf16>
    %cst_234 = arith.constant dense<0.000000e+00> : vector<96x128xf32>
    %272 = tpu.matmul %269, %271, %cst_234 {dimension_numbers = #tpu.dot_dimension_numbers<[1], [0], [0], [1], [0, 0, 1, 1], [], []>} : vector<96x128xbf16>, vector<128x128xbf16>, vector<96x128xf32> -> vector<96x128xf32>
    %273 = arith.addf %268, %272 : vector<96x128xf32>
    %c320_235 = arith.constant 320 : index
    %c0_236 = arith.constant 0 : index
    %274 = vector.load %arg10[%c320_235, %c0_236] : memref<448x128xbf16, #tpu.memory_space<vmem>>, vector<96x128xbf16>
    %c4_237 = arith.constant 4 : index
    %c0_238 = arith.constant 0 : index
    %c0_239 = arith.constant 0 : index
    %275 = vector.load %arg5[%c4_237, %c0_238, %c0_239] : memref<9x128x128xbf16, #tpu.memory_space<vmem>>, vector<1x128x128xbf16>
    %276 = vector.shape_cast %275 : vector<1x128x128xbf16> to vector<128x128xbf16>
    %cst_240 = arith.constant dense<0.000000e+00> : vector<96x128xf32>
    %277 = tpu.matmul %274, %276, %cst_240 {dimension_numbers = #tpu.dot_dimension_numbers<[1], [0], [0], [1], [0, 0, 1, 1], [], []>} : vector<96x128xbf16>, vector<128x128xbf16>, vector<96x128xf32> -> vector<96x128xf32>
    %278 = arith.addf %273, %277 : vector<96x128xf32>
    %c321 = arith.constant 321 : index
    %c0_241 = arith.constant 0 : index
    %279 = vector.load %arg10[%c321, %c0_241] : memref<448x128xbf16, #tpu.memory_space<vmem>>, vector<96x128xbf16>
    %c5_242 = arith.constant 5 : index
    %c0_243 = arith.constant 0 : index
    %c0_244 = arith.constant 0 : index
    %280 = vector.load %arg5[%c5_242, %c0_243, %c0_244] : memref<9x128x128xbf16, #tpu.memory_space<vmem>>, vector<1x128x128xbf16>
    %281 = vector.shape_cast %280 : vector<1x128x128xbf16> to vector<128x128xbf16>
    %cst_245 = arith.constant dense<0.000000e+00> : vector<96x128xf32>
    %282 = tpu.matmul %279, %281, %cst_245 {dimension_numbers = #tpu.dot_dimension_numbers<[1], [0], [0], [1], [0, 0, 1, 1], [], []>} : vector<96x128xbf16>, vector<128x128xbf16>, vector<96x128xf32> -> vector<96x128xf32>
    %283 = arith.addf %278, %282 : vector<96x128xf32>
    %c343 = arith.constant 343 : index
    %c0_246 = arith.constant 0 : index
    %284 = vector.load %arg10[%c343, %c0_246] : memref<448x128xbf16, #tpu.memory_space<vmem>>, vector<96x128xbf16>
    %c6_247 = arith.constant 6 : index
    %c0_248 = arith.constant 0 : index
    %c0_249 = arith.constant 0 : index
    %285 = vector.load %arg5[%c6_247, %c0_248, %c0_249] : memref<9x128x128xbf16, #tpu.memory_space<vmem>>, vector<1x128x128xbf16>
    %286 = vector.shape_cast %285 : vector<1x128x128xbf16> to vector<128x128xbf16>
    %cst_250 = arith.constant dense<0.000000e+00> : vector<96x128xf32>
    %287 = tpu.matmul %284, %286, %cst_250 {dimension_numbers = #tpu.dot_dimension_numbers<[1], [0], [0], [1], [0, 0, 1, 1], [], []>} : vector<96x128xbf16>, vector<128x128xbf16>, vector<96x128xf32> -> vector<96x128xf32>
    %288 = arith.addf %283, %287 : vector<96x128xf32>
    %c344 = arith.constant 344 : index
    %c0_251 = arith.constant 0 : index
    %289 = vector.load %arg10[%c344, %c0_251] : memref<448x128xbf16, #tpu.memory_space<vmem>>, vector<96x128xbf16>
    %c7_252 = arith.constant 7 : index
    %c0_253 = arith.constant 0 : index
    %c0_254 = arith.constant 0 : index
    %290 = vector.load %arg5[%c7_252, %c0_253, %c0_254] : memref<9x128x128xbf16, #tpu.memory_space<vmem>>, vector<1x128x128xbf16>
    %291 = vector.shape_cast %290 : vector<1x128x128xbf16> to vector<128x128xbf16>
    %cst_255 = arith.constant dense<0.000000e+00> : vector<96x128xf32>
    %292 = tpu.matmul %289, %291, %cst_255 {dimension_numbers = #tpu.dot_dimension_numbers<[1], [0], [0], [1], [0, 0, 1, 1], [], []>} : vector<96x128xbf16>, vector<128x128xbf16>, vector<96x128xf32> -> vector<96x128xf32>
    %293 = arith.addf %288, %292 : vector<96x128xf32>
    %c345 = arith.constant 345 : index
    %c0_256 = arith.constant 0 : index
    %294 = vector.load %arg10[%c345, %c0_256] : memref<448x128xbf16, #tpu.memory_space<vmem>>, vector<96x128xbf16>
    %c8_257 = arith.constant 8 : index
    %c0_258 = arith.constant 0 : index
    %c0_259 = arith.constant 0 : index
    %295 = vector.load %arg5[%c8_257, %c0_258, %c0_259] : memref<9x128x128xbf16, #tpu.memory_space<vmem>>, vector<1x128x128xbf16>
    %296 = vector.shape_cast %295 : vector<1x128x128xbf16> to vector<128x128xbf16>
    %cst_260 = arith.constant dense<0.000000e+00> : vector<96x128xf32>
    %297 = tpu.matmul %294, %296, %cst_260 {dimension_numbers = #tpu.dot_dimension_numbers<[1], [0], [0], [1], [0, 0, 1, 1], [], []>} : vector<96x128xbf16>, vector<128x128xbf16>, vector<96x128xf32> -> vector<96x128xf32>
    %298 = arith.addf %293, %297 : vector<96x128xf32>
    %299 = vector.broadcast %2 : vector<1x128xf32> to vector<96x128xf32>
    %300 = arith.mulf %298, %299 : vector<96x128xf32>
    %301 = vector.broadcast %3 : vector<1x128xf32> to vector<96x128xf32>
    %302 = arith.addf %300, %301 : vector<96x128xf32>
    %cst_261 = arith.constant 0.000000e+00 : f32
    %303 = vector.broadcast %cst_261 : f32 to vector<96x128xf32>
    %304 = arith.maximumf %302, %303 : vector<96x128xf32>
    %c0_262 = arith.constant 0 : index
    %c288_263 = arith.constant 288 : index
    %c0_264 = arith.constant 0 : index
    %305 = vector.load %arg1[%c0_262, %c288_263, %c0_264] : memref<1x384x128xbf16, #tpu.memory_space<vmem>>, vector<1x96x128xbf16>
    %306 = vector.shape_cast %305 : vector<1x96x128xbf16> to vector<96x128xbf16>
    %c0_265 = arith.constant 0 : index
    %c0_266 = arith.constant 0 : index
    %307 = vector.load %arg7[%c0_265, %c0_266] : memref<128x128xbf16, #tpu.memory_space<vmem>>, vector<128x128xbf16>
    %cst_267 = arith.constant dense<0.000000e+00> : vector<96x128xf32>
    %308 = tpu.matmul %306, %307, %cst_267 {dimension_numbers = #tpu.dot_dimension_numbers<[1], [0], [0], [1], [0, 0, 1, 1], [], []>} : vector<96x128xbf16>, vector<128x128xbf16>, vector<96x128xf32> -> vector<96x128xf32>
    %309 = vector.broadcast %4 : vector<1x128xf32> to vector<96x128xf32>
    %310 = arith.addf %308, %309 : vector<96x128xf32>
    %311 = arith.addf %304, %310 : vector<96x128xf32>
    %312 = arith.truncf %311 : vector<96x128xf32> to vector<96x128xbf16>
    %c0_268 = arith.constant 0 : index
    %c288_269 = arith.constant 288 : index
    %c0_270 = arith.constant 0 : index
    %313 = vector.load %arg9[%c0_268, %c288_269, %c0_270] : memref<1x384x128xbf16, #tpu.memory_space<vmem>>, vector<1x96x128xbf16>
    %314 = vector.shape_cast %313 : vector<1x96x128xbf16> to vector<96x128xbf16>
    %315 = vector.shape_cast %312 : vector<96x128xbf16> to vector<1x96x128xbf16>
    tpu.vector_store %arg9[%c0_268, %c288_269, %c0_270], %315 {strides = array<i32>} : memref<1x384x128xbf16, #tpu.memory_space<vmem>>, vector<1x96x128xbf16>,
    return
  }
  func.func @transform_0(%arg0: i32) -> (i32, i32, i32) {
    %c0_i32 = arith.constant 0 : i32
    %c0_i32_0 = arith.constant 0 : i32
    %c0_i32_1 = arith.constant 0 : i32
    return %arg0, %c0_i32, %c0_i32_0 : i32, i32, i32
  }
  func.func @transform_1(%arg0: i32) -> (i32, i32) {
    %c0_i32 = arith.constant 0 : i32
    %c0_i32_0 = arith.constant 0 : i32
    %c0_i32_1 = arith.constant 0 : i32
    return %c0_i32, %c0_i32_0 : i32, i32
  }
  func.func @transform_2(%arg0: i32) -> (i32, i32) {
    %c0_i32 = arith.constant 0 : i32
    %c0_i32_0 = arith.constant 0 : i32
    %c0_i32_1 = arith.constant 0 : i32
    return %c0_i32, %c0_i32_0 : i32, i32
  }
  func.func @transform_3(%arg0: i32) -> (i32, i32) {
    %c0_i32 = arith.constant 0 : i32
    %c0_i32_0 = arith.constant 0 : i32
    %c0_i32_1 = arith.constant 0 : i32
    return %c0_i32, %c0_i32_0 : i32, i32
  }
  func.func @transform_4(%arg0: i32) -> (i32, i32, i32) {
    %c0_i32 = arith.constant 0 : i32
    %c0_i32_0 = arith.constant 0 : i32
    %c0_i32_1 = arith.constant 0 : i32
    %c0_i32_2 = arith.constant 0 : i32
    return %c0_i32, %c0_i32_0, %c0_i32_1 : i32, i32, i32
  }
  func.func @transform_5(%arg0: i32) -> (i32, i32) {
    %c0_i32 = arith.constant 0 : i32
    %c0_i32_0 = arith.constant 0 : i32
    %c0_i32_1 = arith.constant 0 : i32
    return %c0_i32, %c0_i32_0 : i32, i32
  }
  func.func @transform_6(%arg0: i32) -> (i32, i32) {
    %c0_i32 = arith.constant 0 : i32
    %c0_i32_0 = arith.constant 0 : i32
    %c0_i32_1 = arith.constant 0 : i32
    return %c0_i32, %c0_i32_0 : i32, i32
  }
  func.func @transform_7(%arg0: i32) -> (i32, i32) {
    %c0_i32 = arith.constant 0 : i32
    %c0_i32_0 = arith.constant 0 : i32
    %c0_i32_1 = arith.constant 0 : i32
    return %c0_i32, %c0_i32_0 : i32, i32
  }
  func.func @transform_8(%arg0: i32) -> (i32, i32, i32) {
    %c0_i32 = arith.constant 0 : i32
    %c0_i32_0 = arith.constant 0 : i32
    %c0_i32_1 = arith.constant 0 : i32
    return %arg0, %c0_i32, %c0_i32_0 : i32, i32, i32
  }
}

</mosaic_0001>

<llo_original>
// kernel: tpu_custom_call.1
$region0: #{tpu_custom_call.1}
  #allocation0 [shape = 'u32[]', space=smem, size = 0x4, offset = 0x4, fixed_abs, tag = 'smem constant byte address 0x4 - core index']
  #allocation1 [shape = 'u32[144,128]{1,0:T(1,128)}', space=vmem, size = 0x12000, scoped, tag = 'internal scratch']
  #allocation2 [shape = 'bf16[448,128]{1,0:T(16,128)(2,1)}', space=vmem, size = 0x1c000, scoped, tag = 'scratch operand']
  %s0 = inlined_call_operand.hbm [shape: bf16[2,384,128], index: 0, kind: input, shape index: {}]
  %s1 = inlined_call_operand.hbm [shape: f32[96,128], index: 1, kind: input, shape index: {}]
  %s2 = inlined_call_operand.hbm [shape: bf16[128,128], index: 2, kind: input, shape index: {}]
  %s3 = inlined_call_operand.vmem [shape: f32[2,128], index: 3, kind: input, shape index: {}]
  %s4 = inlined_call_operand.hbm [shape: bf16[9,128,128], index: 4, kind: input, shape index: {}]
  %s5 = inlined_call_operand.vmem [shape: f32[2,128], index: 5, kind: input, shape index: {}]
  %s6 = inlined_call_operand.hbm [shape: bf16[128,128], index: 6, kind: input, shape index: {}]
  %s7 = inlined_call_operand.vmem [shape: f32[1,128], index: 7, kind: input, shape index: {}]
  %s8 = inlined_call_operand.hbm [shape: bf16[2,384,128], index: 8, kind: output, shape index: {}]
  %s9 = sld [smem:[#allocation0]]
  $region85: #{tpu_custom_call.1} parent=0
    _
  %s11 = ssub.s32 1, %s9
  %s12 = scalar_select 0, %s11, %s9
  $region1: #{tpu_custom_call.1} parent=0
    #allocation3 [shape = 'u8[196608]{0}', space=vmem, size = 0x30000, scoped, tag = 'input window, operand 0']
    #allocation4 [shape = 's32[2]{0}', space=sflag, size = 0x8, scoped, tag = 'scoped memory for tpu_custom_call.1']
    #allocation5 [shape = 's32[2]{0}', space=sflag, size = 0x8, scoped, tag = 'scoped memory for tpu_custom_call.1']
    #allocation6 [shape = 'u8[49152]{0}', space=vmem, size = 0xc000, scoped, tag = 'input window, operand 1, single buffered']
    #allocation7 [shape = 's32[1]{0}', space=sflag, size = 0x4, scoped, tag = 'scoped memory for tpu_custom_call.1']
    #allocation8 [shape = 'u8[32768]{0}', space=vmem, size = 0x8000, scoped, tag = 'input window, operand 2, single buffered']
    #allocation9 [shape = 'u8[294912]{0}', space=vmem, size = 0x48000, scoped, tag = 'input window, operand 4, single buffered']
    #allocation10 [shape = 's32[1]{0}', space=sflag, size = 0x4, scoped, tag = 'scoped memory for tpu_custom_call.1']
    #allocation11 [shape = 'u8[32768]{0}', space=vmem, size = 0x8000, scoped, tag = 'input window, operand 6, single buffered']
    #allocation12 [shape = 'u8[196608]{0}', space=vmem, size = 0x30000, scoped, tag = 'output window, operand 0']
    %13 = vsyncpa [#allocation4], 0
    %s14 = scalar_lea.sflag [#allocation4], 1
    %15 = vsyncpa %s14, 0
    %16 = vsyncpa [#allocation7], 0
    %17 = vsyncpa [#allocation10], 0
    %18 = vsyncpa [#allocation5], 0
    %s19 = scalar_lea.sflag [#allocation5], 1
    %20 = vsyncpa %s19, 0
    loop: start=0, step=1, limit=4
    $region2: #{tpu_custom_call.1} parent=1 // loop_pre_header
      _
    $region3: #{tpu_custom_call.1} parent=1 // loop_header
      %s22 = sphi 0, %s26
      %p23 = scmp.ge.s32.totalorder %s22, 4
      %s32 = sphi 0, %s34
      %s35 = sphi 0, %s32
      %s36 = sphi 0, %s35
      %s52 = sphi 0, %s36
      %s56 = sphi 0, %s56
      %s58 = sphi 0, %s56
      %s59 = sphi 0, %s58
      %s73 = sphi 0, %s59
      %s77 = sphi 0, %s77
      %s79 = sphi 0, %s77
      %s80 = sphi 0, %s79
      %s94 = sphi 0, %s80
      %s98 = sphi 0, %s98
      %s100 = sphi 0, %s98
      %s101 = sphi 0, %s100
      %s115 = sphi 0, %s101
      %s119 = sphi 0, %s119
      %s121 = sphi 0, %s119
      %s122 = sphi 0, %s121
      %s136 = sphi 0, %s122
      %s140 = sphi 0, %s140
      %s142 = sphi 0, %s140
      %s143 = sphi 0, %s142
      %s157 = sphi 0, %s143
      %s161 = sphi 0, %s161
      %s163 = sphi 0, %s161
      %s164 = sphi 0, %s163
      %s178 = sphi 0, %s164
      %s182 = sphi 0, %s182
      %s184 = sphi 0, %s182
      %s185 = sphi 0, %s184
      %s199 = sphi 0, %s185
      %s205 = sphi 0, %s207
      %s208 = sphi 0, %s205
      %s209 = sphi 0, %s208
      %s225 = sphi 0, %s209
    $region4: #{tpu_custom_call.1} parent=1 // loop_header_branch
      %25 = sbr.rel (%p23) target = $region8
    $region5: #{tpu_custom_call.1} parent=1 // loop_body
      %s27 = ssub.s32 %s22, 1
      %s28 = ssub.s32 %s22, 2
      %s29 = sadd.s32 %s22, 1
      %s30 = ssub.s32 %s22, %s29
      %p31 = scmp.eq.s32.totalorder %s30, 0
      %s33 = sadd.s32 %s32, 1
      %s34 = scalar_select %p31, %s32, %s33
      %p37 = pneg %p31
      %p38 = scmp.eq.s32.totalorder %s22, 1
      %p39 = por %p37, %p38
      %p40 = scmp.ne.s32.totalorder %s32, %s35
      %p41 = scmp.eq.s32.totalorder %s22, 0
      %p42 = por %p40, %p41
      %p43 = scmp.ne.s32.totalorder %s32, %s35
      %p44 = scmp.eq.s32.totalorder %s27, 1
      %p45 = por %p43, %p44
      %p46 = scmp.ne.s32.totalorder %s35, %s36
      %p47 = scmp.eq.s32.totalorder %s27, 0
      %p48 = por %p46, %p47
      %p49 = scmp.ne.s32.totalorder %s35, %s36
      %p50 = scmp.eq.s32.totalorder %s28, 1
      %p51 = por %p49, %p50
      %p53 = scmp.ne.s32.totalorder %s36, %s52
      %p54 = scmp.eq.s32.totalorder %s28, 0
      %p55 = por %p53, %p54
      %s57 = sadd.s32 %s56, 1
      %p60 = scmp.eq.s32.totalorder %s22, 1
      %p61 = scmp.ne.s32.totalorder %s56, %s58
      %p62 = scmp.eq.s32.totalorder %s22, 0
      %p63 = por %p61, %p62
      %p64 = scmp.ne.s32.totalorder %s56, %s58
      %p65 = scmp.eq.s32.totalorder %s27, 1
      %p66 = por %p64, %p65
      %p67 = scmp.ne.s32.totalorder %s58, %s59
      %p68 = scmp.eq.s32.totalorder %s27, 0
      %p69 = por %p67, %p68
      %p70 = scmp.ne.s32.totalorder %s58, %s59
      %p71 = scmp.eq.s32.totalorder %s28, 1
      %p72 = por %p70, %p71
      %p74 = scmp.ne.s32.totalorder %s59, %s73
      %p75 = scmp.eq.s32.totalorder %s28, 0
      %p76 = por %p74, %p75
      %s78 = sadd.s32 %s77, 1
      %p81 = scmp.eq.s32.totalorder %s22, 1
      %p82 = scmp.ne.s32.totalorder %s77, %s79
      %p83 = scmp.eq.s32.totalorder %s22, 0
      %p84 = por %p82, %p83
      %p85 = scmp.ne.s32.totalorder %s77, %s79
      %p86 = scmp.eq.s32.totalorder %s27, 1
      %p87 = por %p85, %p86
      %p88 = scmp.ne.s32.totalorder %s79, %s80
      %p89 = scmp.eq.s32.totalorder %s27, 0
      %p90 = por %p88, %p89
      %p91 = scmp.ne.s32.totalorder %s79, %s80
      %p92 = scmp.eq.s32.totalorder %s28, 1
      %p93 = por %p91, %p92
      %p95 = scmp.ne.s32.totalorder %s80, %s94
      %p96 = scmp.eq.s32.totalorder %s28, 0
      %p97 = por %p95, %p96
      %s99 = sadd.s32 %s98, 1
      %p102 = scmp.eq.s32.totalorder %s22, 1
      %p103 = scmp.ne.s32.totalorder %s98, %s100
      %p104 = scmp.eq.s32.totalorder %s22, 0
      %p105 = por %p103, %p104
      %p106 = scmp.ne.s32.totalorder %s98, %s100
      %p107 = scmp.eq.s32.totalorder %s27, 1
      %p108 = por %p106, %p107
      %p109 = scmp.ne.s32.totalorder %s100, %s101
      %p110 = scmp.eq.s32.totalorder %s27, 0
      %p111 = por %p109, %p110
      %p112 = scmp.ne.s32.totalorder %s100, %s101
      %p113 = scmp.eq.s32.totalorder %s28, 1
      %p114 = por %p112, %p113
      %p116 = scmp.ne.s32.totalorder %s101, %s115
      %p117 = scmp.eq.s32.totalorder %s28, 0
      %p118 = por %p116, %p117
      %s120 = sadd.s32 %s119, 1
      %p123 = scmp.eq.s32.totalorder %s22, 1
      %p124 = scmp.ne.s32.totalorder %s119, %s121
      %p125 = scmp.eq.s32.totalorder %s22, 0
      %p126 = por %p124, %p125
      %p127 = scmp.ne.s32.totalorder %s119, %s121
      %p128 = scmp.eq.s32.totalorder %s27, 1
      %p129 = por %p127, %p128
      %p130 = scmp.ne.s32.totalorder %s121, %s122
      %p131 = scmp.eq.s32.totalorder %s27, 0
      %p132 = por %p130, %p131
      %p133 = scmp.ne.s32.totalorder %s121, %s122
      %p134 = scmp.eq.s32.totalorder %s28, 1
      %p135 = por %p133, %p134
      %p137 = scmp.ne.s32.totalorder %s122, %s136
      %p138 = scmp.eq.s32.totalorder %s28, 0
      %p139 = por %p137, %p138
      %s141 = sadd.s32 %s140, 1
      %p144 = scmp.eq.s32.totalorder %s22, 1
      %p145 = scmp.ne.s32.totalorder %s140, %s142
      %p146 = scmp.eq.s32.totalorder %s22, 0
      %p147 = por %p145, %p146
      %p148 = scmp.ne.s32.totalorder %s140, %s142
      %p149 = scmp.eq.s32.totalorder %s27, 1
      %p150 = por %p148, %p149
      %p151 = scmp.ne.s32.totalorder %s142, %s143
      %p152 = scmp.eq.s32.totalorder %s27, 0
      %p153 = por %p151, %p152
      %p154 = scmp.ne.s32.totalorder %s142, %s143
      %p155 = scmp.eq.s32.totalorder %s28, 1
      %p156 = por %p154, %p155
      %p158 = scmp.ne.s32.totalorder %s143, %s157
      %p159 = scmp.eq.s32.totalorder %s28, 0
      %p160 = por %p158, %p159
      %s162 = sadd.s32 %s161, 1
      %p165 = scmp.eq.s32.totalorder %s22, 1
      %p166 = scmp.ne.s32.totalorder %s161, %s163
      %p167 = scmp.eq.s32.totalorder %s22, 0
      %p168 = por %p166, %p167
      %p169 = scmp.ne.s32.totalorder %s161, %s163
      %p170 = scmp.eq.s32.totalorder %s27, 1
      %p171 = por %p169, %p170
      %p172 = scmp.ne.s32.totalorder %s163, %s164
      %p173 = scmp.eq.s32.totalorder %s27, 0
      %p174 = por %p172, %p173
      %p175 = scmp.ne.s32.totalorder %s163, %s164
      %p176 = scmp.eq.s32.totalorder %s28, 1
      %p177 = por %p175, %p176
      %p179 = scmp.ne.s32.totalorder %s164, %s178
      %p180 = scmp.eq.s32.totalorder %s28, 0
      %p181 = por %p179, %p180
      %s183 = sadd.s32 %s182, 1
      %p186 = scmp.eq.s32.totalorder %s22, 1
      %p187 = scmp.ne.s32.totalorder %s182, %s184
      %p188 = scmp.eq.s32.totalorder %s22, 0
      %p189 = por %p187, %p188
      %p190 = scmp.ne.s32.totalorder %s182, %s184
      %p191 = scmp.eq.s32.totalorder %s27, 1
      %p192 = por %p190, %p191
      %p193 = scmp.ne.s32.totalorder %s184, %s185
      %p194 = scmp.eq.s32.totalorder %s27, 0
      %p195 = por %p193, %p194
      %p196 = scmp.ne.s32.totalorder %s184, %s185
      %p197 = scmp.eq.s32.totalorder %s28, 1
      %p198 = por %p196, %p197
      %p200 = scmp.ne.s32.totalorder %s185, %s199
      %p201 = scmp.eq.s32.totalorder %s28, 0
      %p202 = por %p200, %p201
      %s203 = ssub.s32 %s22, %s29
      %p204 = scmp.eq.s32.totalorder %s203, 0
      %s206 = sadd.s32 %s205, 1
      %s207 = scalar_select %p204, %s205, %s206
      %p210 = pneg %p204
      %p211 = scmp.eq.s32.totalorder %s22, 1
      %p212 = por %p210, %p211
      %p213 = scmp.ne.s32.totalorder %s205, %s208
      %p214 = scmp.eq.s32.totalorder %s22, 0
      %p215 = por %p213, %p214
      %p216 = scmp.ne.s32.totalorder %s205, %s208
      %p217 = scmp.eq.s32.totalorder %s27, 1
      %p218 = por %p216, %p217
      %p219 = scmp.ne.s32.totalorder %s208, %s209
      %p220 = scmp.eq.s32.totalorder %s27, 0
      %p221 = por %p219, %p220
      %p222 = scmp.ne.s32.totalorder %s208, %s209
      %p223 = scmp.eq.s32.totalorder %s28, 1
      %p224 = por %p222, %p223
      %p226 = scmp.ne.s32.totalorder %s209, %s225
      %p227 = scmp.eq.s32.totalorder %s28, 0
      %p228 = por %p226, %p227
      %p229 = scmp.le.s32.totalorder 1, %s22
      %p230 = scmp.lt.s32.totalorder %s22, 3
      %p231 = pnand %p229, %p230
      %p232 = pneg %p231
      // Predicated region
      $region9: #{tpu_custom_call.1} parent=5 // pred_check
        _
      $region10: #{tpu_custom_call.1} parent=5 // pred_check_branch
        %234 = sbr.rel (%p231) target = $region12
      $region11: #{tpu_custom_call.1} parent=5 // pred_region
        %s235 = ssub.s32 %s22, 1
        // Predicated region
        $region13: #{tpu_custom_call.1} parent=11 // pred_check
          %p236 = pneg %p69
        $region14: #{tpu_custom_call.1} parent=11 // pred_check_branch
          %238 = sbr.rel (%p236) target = $region16
        $region15: #{tpu_custom_call.1} parent=11 // pred_region
          %s240 = ssub.s32 1536, 1536
          %241 = vsyncadd [#allocation7], %s240
          %s242 = sshll.u32 [#allocation6], 4
          %s243 = int_to_ptr.vmem [resolvable:$true] %s242
          %248 = dma.hbm_to_vmem [thread:$0]  %s1, 1536, %s243, [#allocation7], 128, 128, 8
        $region16: #{tpu_custom_call.1} parent=11 // pred_fallthru
          _
        // Predicated region
        $region17: #{tpu_custom_call.1} parent=11 // pred_check
          %p249 = pneg %p90
        $region18: #{tpu_custom_call.1} parent=11 // pred_check_branch
          %251 = sbr.rel (%p249) target = $region20
        $region19: #{tpu_custom_call.1} parent=11 // pred_region
          %s253 = ssub.s32 1024, 1024
          %254 = vsyncadd [#allocation7], %s253
          %s255 = sshll.u32 [#allocation8], 4
          %s256 = int_to_ptr.vmem [resolvable:$true] %s255
          %261 = dma.hbm_to_vmem [thread:$0]  %s2, 1024, %s256, [#allocation7], 64, 64, 4
        $region20: #{tpu_custom_call.1} parent=11 // pred_fallthru
          _
        // Predicated region
        $region21: #{tpu_custom_call.1} parent=11 // pred_check
          %p262 = pneg %p111
        $region22: #{tpu_custom_call.1} parent=11 // pred_check_branch
          %264 = sbr.rel (%p262) target = $region24
        $region23: #{tpu_custom_call.1} parent=11 // pred_region
          _
        $region24: #{tpu_custom_call.1} parent=11 // pred_fallthru
          _
        // Predicated region
        $region25: #{tpu_custom_call.1} parent=11 // pred_check
          %p265 = pneg %p132
        $region26: #{tpu_custom_call.1} parent=11 // pred_check_branch
          %267 = sbr.rel (%p265) target = $region28
        $region27: #{tpu_custom_call.1} parent=11 // pred_region
          %s269 = ssub.s32 9216, 9216
          %270 = vsyncadd [#allocation10], %s269
          %s271 = sshll.u32 [#allocation9], 4
          %s272 = int_to_ptr.vmem [resolvable:$true] %s271
          %277 = dma.hbm_to_vmem [thread:$0]  %s4, 9216, %s272, [#allocation10], 64, 64, 4
        $region28: #{tpu_custom_call.1} parent=11 // pred_fallthru
          _
        // Predicated region
        $region29: #{tpu_custom_call.1} parent=11 // pred_check
          %p278 = pneg %p153
        $region30: #{tpu_custom_call.1} parent=11 // pred_check_branch
          %280 = sbr.rel (%p278) target = $region32
        $region31: #{tpu_custom_call.1} parent=11 // pred_region
          _
        $region32: #{tpu_custom_call.1} parent=11 // pred_fallthru
          _
        // Predicated region
        $region33: #{tpu_custom_call.1} parent=11 // pred_check
          %p281 = pneg %p174
        $region34: #{tpu_custom_call.1} parent=11 // pred_check_branch
          %283 = sbr.rel (%p281) target = $region36
        $region35: #{tpu_custom_call.1} parent=11 // pred_region
          %s285 = ssub.s32 1024, 1024
          %286 = vsyncadd [#allocation10], %s285
          %s287 = sshll.u32 [#allocation11], 4
          %s288 = int_to_ptr.vmem [resolvable:$true] %s287
          %293 = dma.hbm_to_vmem [thread:$0]  %s6, 1024, %s288, [#allocation10], 64, 64, 4
        $region36: #{tpu_custom_call.1} parent=11 // pred_fallthru
          _
        // Predicated region
        $region37: #{tpu_custom_call.1} parent=11 // pred_check
          %p294 = pneg %p195
        $region38: #{tpu_custom_call.1} parent=11 // pred_check_branch
          %296 = sbr.rel (%p294) target = $region40
        $region39: #{tpu_custom_call.1} parent=11 // pred_region
          _
        $region40: #{tpu_custom_call.1} parent=11 // pred_fallthru
          _
      $region12: #{tpu_custom_call.1} parent=5 // pred_fallthru
        _
      %p297 = scmp.lt.s32.totalorder %s22, 2
      // Predicated region
      $region41: #{tpu_custom_call.1} parent=5 // pred_check
        %p298 = pneg %p297
      $region42: #{tpu_custom_call.1} parent=5 // pred_check_branch
        %300 = sbr.rel (%p298) target = $region44
      $region43: #{tpu_custom_call.1} parent=5 // pred_region
        // Predicated region
        $region45: #{tpu_custom_call.1} parent=43 // pred_check
          %p301 = pneg %p42
        $region46: #{tpu_custom_call.1} parent=43 // pred_check_branch
          %303 = sbr.rel (%p301) target = $region48
        $region47: #{tpu_custom_call.1} parent=43 // pred_region
          %s304 = sand.u32 %s32, 1
          %s305 = scalar_lea.sflag [#allocation4], %s304
          %s306 = sand.u32 %s32, 1
          %s307 = smul.addr %s306, 192
          %s308 = scalar_lea.vmem [#allocation3], %s307
          %s310 = ssub.s32 3072, 3072
          %311 = vsyncadd %s305, %s310
          %s312 = smul.addr %s22, 48
          %s313 = smul.addr %s312, 64
          %s314 = scalar_lea.hbm %s0, %s313
          %s315 = sshll.u32 %s308, 4
          %s316 = int_to_ptr.vmem [resolvable:$true] %s315
          %321 = dma.hbm_to_vmem [thread:$0]  %s314, 3072, %s316, %s305, 64, 64, 4
        $region48: #{tpu_custom_call.1} parent=43 // pred_fallthru
          _
      $region44: #{tpu_custom_call.1} parent=5 // pred_fallthru
        _
      %p322 = scmp.le.s32.totalorder 1, %s22
      %p323 = scmp.lt.s32.totalorder %s22, 3
      %p324 = pnand %p322, %p323
      %p325 = pneg %p324
      // Predicated region
      $region49: #{tpu_custom_call.1} parent=5 // pred_check
        _
      $region50: #{tpu_custom_call.1} parent=5 // pred_check_branch
        %327 = sbr.rel (%p324) target = $region52
      $region51: #{tpu_custom_call.1} parent=5 // pred_region
        %s328 = ssub.s32 %s22, 1
        %s329 = sand.u32 %s35, 1
        %s330 = scalar_lea.sflag [#allocation4], %s329
        %s331 = sand.u32 %s35, 1
        %s332 = smul.addr %s331, 192
        %s333 = scalar_lea.vmem [#allocation3], %s332
        // Predicated region
        $region53: #{tpu_custom_call.1} parent=51 // pred_check
          %p334 = pneg %p48
        $region54: #{tpu_custom_call.1} parent=51 // pred_check_branch
          %336 = sbr.rel (%p334) target = $region56
        $region55: #{tpu_custom_call.1} parent=51 // pred_region
          %337 = dma.done %s330, 3072
        $region56: #{tpu_custom_call.1} parent=51 // pred_fallthru
          _
        // Predicated region
        $region57: #{tpu_custom_call.1} parent=51 // pred_check
          %p338 = pneg %p69
        $region58: #{tpu_custom_call.1} parent=51 // pred_check_branch
          %340 = sbr.rel (%p338) target = $region60
        $region59: #{tpu_custom_call.1} parent=51 // pred_region
          %341 = dma.done [#allocation7], 1536
        $region60: #{tpu_custom_call.1} parent=51 // pred_fallthru
          _
        // Predicated region
        $region61: #{tpu_custom_call.1} parent=51 // pred_check
          %p342 = pneg %p90
        $region62: #{tpu_custom_call.1} parent=51 // pred_check_branch
          %344 = sbr.rel (%p342) target = $region64
        $region63: #{tpu_custom_call.1} parent=51 // pred_region
          %345 = dma.done [#allocation7], 1024
        $region64: #{tpu_custom_call.1} parent=51 // pred_fallthru
          _
        // Predicated region
        $region65: #{tpu_custom_call.1} parent=51 // pred_check
          %p346 = pneg %p132
        $region66: #{tpu_custom_call.1} parent=51 // pred_check_branch
          %348 = sbr.rel (%p346) target = $region68
        $region67: #{tpu_custom_call.1} parent=51 // pred_region
          %349 = dma.done [#allocation10], 9216
        $region68: #{tpu_custom_call.1} parent=51 // pred_fallthru
          _
        // Predicated region
        $region69: #{tpu_custom_call.1} parent=51 // pred_check
          %p350 = pneg %p174
        $region70: #{tpu_custom_call.1} parent=51 // pred_check_branch
          %352 = sbr.rel (%p350) target = $region72
        $region71: #{tpu_custom_call.1} parent=51 // pred_region
          %353 = dma.done [#allocation10], 1024
        $region72: #{tpu_custom_call.1} parent=51 // pred_fallthru
          _
        %s354 = sand.u32 %s35, 1
        %s355 = scalar_lea.sflag [#allocation4], %s354
        %s356 = sand.u32 %s35, 1
        %s357 = smul.addr %s356, 192
        %s358 = scalar_lea.vmem [#allocation3], %s357
        %p359 = pneg %p48
        %p360 = pneg %p45
        %p361 = pneg %p69
        %p362 = pneg %p66
        %p363 = pneg %p90
        %p364 = pneg %p87
        %p365 = pneg %p111
        %p366 = pneg %p108
        %p367 = pneg %p132
        %p368 = pneg %p129
        %p369 = pneg %p153
        %p370 = pneg %p150
        %p371 = pneg %p174
        %p372 = pneg %p171
        %p373 = pneg %p195
        %p374 = pneg %p192
        %p375 = pneg %p221
        %p376 = pneg %p218
        %s377 = sand.u32 %s208, 1
        %s378 = scalar_lea.sflag [#allocation5], %s377
        %s379 = sand.u32 %s208, 1
        %s380 = smul.addr %s379, 192
        %s381 = scalar_lea.vmem [#allocation12], %s380
        %v383 = vld [vmem:[%s3] sm:$0x1]
        %v384 = vld [vmem:[%s3 + $0x1] sm:$0x1]
        %v385 = vld [vmem:[%s5] sm:$0x1]
        %v386 = vld [vmem:[%s5 + $0x1] sm:$0x1]
        %v387 = vld [vmem:[%s7] sm:$0x1]
        %388 = vst [vmem:[#allocation2] sm:$0xff] 0
        %389 = vst [vmem:[#allocation2 + $0x8] sm:$0xff] 0
        %390 = vst [vmem:[#allocation2 + $0xd0] sm:$0xff] 0
        %391 = vst [vmem:[#allocation2 + $0xd8] sm:$0xff] 0
        %v392 = vld [vmem:[%s333] sm:$0xf]
        %v393 = vld [vmem:[%s333 + $0x4] sm:$0xf]
        %v394 = vld [vmem:[%s333 + $0x8] sm:$0xf]
        %v395 = vld [vmem:[%s333 + $0xc] sm:$0xf]
        %v396 = vld [vmem:[%s333 + $0x10] sm:$0xf]
        %v397 = vld [vmem:[%s333 + $0x14] sm:$0xf]
        %v398 = vld [vmem:[%s333 + $0x18] sm:$0xf]
        %v399 = vld [vmem:[%s333 + $0x1c] sm:$0xf]
        %v400 = vld [vmem:[%s333 + $0x20] sm:$0xf]
        %v401 = vld [vmem:[%s333 + $0x24] sm:$0xf]
        %v402 = vld [vmem:[%s333 + $0x28] sm:$0xf]
        %v403 = vld [vmem:[%s333 + $0x2c] sm:$0xf]
        %v404 = vld [vmem:[#allocation8] sm:$0xf]
        %v405 = vld [vmem:[#allocation8 + $0x4] sm:$0xf]
        %v406 = vld [vmem:[#allocation8 + $0x8] sm:$0xf]
        %v407 = vld [vmem:[#allocation8 + $0xc] sm:$0xf]
        %v408 = vld [vmem:[#allocation8 + $0x10] sm:$0xf]
        %v409 = vld [vmem:[#allocation8 + $0x14] sm:$0xf]
        %v410 = vld [vmem:[#allocation8 + $0x18] sm:$0xf]
        %v411 = vld [vmem:[#allocation8 + $0x1c] sm:$0xf]
        %v412 = vld [vmem:[#allocation8 + $0x20] sm:$0xf]
        %v413 = vld [vmem:[#allocation8 + $0x24] sm:$0xf]
        %v414 = vld [vmem:[#allocation8 + $0x28] sm:$0xf]
        %v415 = vld [vmem:[#allocation8 + $0x2c] sm:$0xf]
        %v416 = vld [vmem:[#allocation8 + $0x30] sm:$0xf]
        %v417 = vld [vmem:[#allocation8 + $0x34] sm:$0xf]
        %v418 = vld [vmem:[#allocation8 + $0x38] sm:$0xf]
        %v419 = vld [vmem:[#allocation8 + $0x3c] sm:$0xf]
        %v432 = vunpack.c.l.b16 %v392
        %v433 = vunpack.c.l.b16 %v393
        %v434 = vunpack.c.l.b16 %v394
        %v435 = vunpack.c.l.b16 %v395
        %v436 = vunpack.c.l.b16 %v396
        %v437 = vunpack.c.l.b16 %v397
        %v438 = vunpack.c.l.b16 %v398
        %v439 = vunpack.c.l.b16 %v399
        %v440 = vunpack.c.l.b16 %v400
        %v441 = vunpack.c.l.b16 %v401
        %v442 = vunpack.c.l.b16 %v402
        %v443 = vunpack.c.l.b16 %v403
        %v444 = vpack.c.b16 %v433, %v432
        %v445 = vpack.c.b16 %v435, %v434
        %v446 = vpack.c.b16 %v437, %v436
        %v447 = vpack.c.b16 %v439, %v438
        %v448 = vpack.c.b16 %v441, %v440
        %v449 = vpack.c.b16 %v443, %v442
        %v472 = vunpack.c.l.b16 %v404
        %v473 = vunpack.c.l.b16 %v405
        %v474 = vunpack.c.l.b16 %v406
        %v475 = vunpack.c.l.b16 %v407
        %v476 = vunpack.c.l.b16 %v408
        %v477 = vunpack.c.l.b16 %v409
        %v478 = vunpack.c.l.b16 %v410
        %v479 = vunpack.c.l.b16 %v411
        %v480 = vunpack.c.l.b16 %v412
        %v481 = vunpack.c.l.b16 %v413
        %v482 = vunpack.c.l.b16 %v414
        %v483 = vunpack.c.l.b16 %v415
        %v484 = vunpack.c.l.b16 %v416
        %v485 = vunpack.c.l.b16 %v417
        %v486 = vunpack.c.l.b16 %v418
        %v487 = vunpack.c.l.b16 %v419
        %v488 = vpack.c.b16 %v473, %v472
        %v489 = vpack.c.b16 %v475, %v474
        %v490 = vpack.c.b16 %v477, %v476
        %v491 = vpack.c.b16 %v479, %v478
        %v492 = vpack.c.b16 %v481, %v480
        %v493 = vpack.c.b16 %v483, %v482
        %v494 = vpack.c.b16 %v485, %v484
        %v495 = vpack.c.b16 %v487, %v486
        %504 = vmatprep.subr.bf16.mxu0 0
        %505 = vmatpush1.bf16.msra.mxu0 %v488
        %506 = vmatprep.subr.bf16.mxu0 0
        %507 = vmatpush1.bf16.msra.mxu0 %v489
        %508 = vmatprep.subr.bf16.mxu0 0
        %509 = vmatpush1.bf16.msra.mxu0 %v490
        %510 = vmatprep.subr.bf16.mxu0 0
        %511 = vmatpush1.bf16.msra.mxu0 %v491
        %512 = vmatprep.subr.bf16.mxu0 0
        %513 = vmatpush1.bf16.msra.mxu0 %v492
        %514 = vmatprep.subr.bf16.mxu0 0
        %515 = vmatpush1.bf16.msra.mxu0 %v493
        %516 = vmatprep.subr.bf16.mxu0 0
        %517 = vmatpush1.bf16.msra.mxu0 %v494
        %518 = vmatprep.subr.bf16.mxu0 0
        %519 = vmatpush1.bf16.msra.mxu0 %v495
        %520 = vmatprep.subr.bf16.mxu0 0
        %521 = vmatpush1.bf16.msra.mxu0 0
        %522 = vmatprep.subr.bf16.mxu0 0
        %523 = vmatpush1.bf16.msra.mxu0 0
        %524 = vmatprep.subr.bf16.mxu0 0
        %525 = vmatpush1.bf16.msra.mxu0 0
        %526 = vmatprep.subr.bf16.mxu0 0
        %527 = vmatpush1.bf16.msra.mxu0 0
        %528 = vmatprep.subr.bf16.mxu0 0
        %529 = vmatpush1.bf16.msra.mxu0 0
        %530 = vmatprep.subr.bf16.mxu0 0
        %531 = vmatpush1.bf16.msra.mxu0 0
        %532 = vmatprep.subr.bf16.mxu0 0
        %533 = vmatpush1.bf16.msra.mxu0 0
        %534 = vmatprep.subr.bf16.mxu0 0
        %535 = vmatpush1.bf16.msra.mxu0 0
        %536 = vmatprep.mubr.bf16.mxu0 0
        %537 = vmatmul.mubr.bf16.gmra.mrb[0].mxu0 %v444
        %v538 = vpop.f32.mrb[0].mxu0
        %v539 = vadd.f32 0.0, %v538
        %v540 = vpop.f32.mrb[0].mxu0
        %v541 = vpop.f32.mrb[0].mxu0
        %v542 = vadd.f32 0.0, %v541
        %v543 = vpop.f32.mrb[0].mxu0
        %544 = vmatprep.mubr.bf16.mxu0 0
        %545 = vmatmul.mubr.bf16.gmra.mrb[0].mxu0 %v445
        %v546 = vpop.f32.mrb[0].mxu0
        %v547 = vadd.f32 0.0, %v546
        %v548 = vpop.f32.mrb[0].mxu0
        %v549 = vpop.f32.mrb[0].mxu0
        %v550 = vadd.f32 0.0, %v549
        %v551 = vpop.f32.mrb[0].mxu0
        %552 = vmatprep.mubr.bf16.mxu0 0
        %553 = vmatmul.mubr.bf16.gmra.mrb[0].mxu0 %v446
        %v554 = vpop.f32.mrb[0].mxu0
        %v555 = vadd.f32 0.0, %v554
        %v556 = vpop.f32.mrb[0].mxu0
        %v557 = vpop.f32.mrb[0].mxu0
        %v558 = vadd.f32 0.0, %v557
        %v559 = vpop.f32.mrb[0].mxu0
        %560 = vmatprep.mubr.bf16.mxu0 0
        %561 = vmatmul.mubr.bf16.gmra.mrb[0].mxu0 %v447
        %v562 = vpop.f32.mrb[0].mxu0
        %v563 = vadd.f32 0.0, %v562
        %v564 = vpop.f32.mrb[0].mxu0
        %v565 = vpop.f32.mrb[0].mxu0
        %v566 = vadd.f32 0.0, %v565
        %v567 = vpop.f32.mrb[0].mxu0
        %568 = vmatprep.mubr.bf16.mxu0 0
        %569 = vmatmul.mubr.bf16.gmra.mrb[0].mxu0 %v448
        %v570 = vpop.f32.mrb[0].mxu0
        %v571 = vadd.f32 0.0, %v570
        %v572 = vpop.f32.mrb[0].mxu0
        %v573 = vpop.f32.mrb[0].mxu0
        %v574 = vadd.f32 0.0, %v573
        %v575 = vpop.f32.mrb[0].mxu0
        %576 = vmatprep.mubr.bf16.mxu0 0
        %577 = vmatmul.mubr.bf16.gmra.mrb[0].mxu0 %v449
        %v578 = vpop.f32.mrb[0].mxu0
        %v579 = vadd.f32 0.0, %v578
        %v580 = vpop.f32.mrb[0].mxu0
        %v581 = vpop.f32.mrb[0].mxu0
        %v582 = vadd.f32 0.0, %v581
        %v583 = vpop.f32.mrb[0].mxu0
        %584 = vdwg.mxu0
        %v585 = vlaneseq
        %v586 = vshrl.u32 %v585, 7
        %v587 = vsub.s32 0, %v586
        %v588 = vrot.slane %v383, %v587
        %v589 = vmul.f32 %v539, %v588
        %v590 = vmul.f32 %v542, %v588
        %v591 = vmul.f32 %v547, %v588
        %v592 = vmul.f32 %v550, %v588
        %v593 = vmul.f32 %v555, %v588
        %v594 = vmul.f32 %v558, %v588
        %v595 = vmul.f32 %v563, %v588
        %v596 = vmul.f32 %v566, %v588
        %v597 = vmul.f32 %v571, %v588
        %v598 = vmul.f32 %v574, %v588
        %v599 = vmul.f32 %v579, %v588
        %v600 = vmul.f32 %v582, %v588
        %v601 = vlaneseq
        %v602 = vshrl.u32 %v601, 7
        %v603 = vsub.s32 0, %v602
        %v604 = vrot.slane %v384, %v603
        %v605 = vadd.f32 %v589, %v604
        %v606 = vadd.f32 %v590, %v604
        %v607 = vadd.f32 %v591, %v604
        %v608 = vadd.f32 %v592, %v604
        %v609 = vadd.f32 %v593, %v604
        %v610 = vadd.f32 %v594, %v604
        %v611 = vadd.f32 %v595, %v604
        %v612 = vadd.f32 %v596, %v604
        %v613 = vadd.f32 %v597, %v604
        %v614 = vadd.f32 %v598, %v604
        %v615 = vadd.f32 %v599, %v604
        %v616 = vadd.f32 %v600, %v604
        %v617 = vmax.f32 %v605, 0.0
        %v618 = vmax.f32 %v606, 0.0
        %v619 = vmax.f32 %v607, 0.0
        %v620 = vmax.f32 %v608, 0.0
        %v621 = vmax.f32 %v609, 0.0
        %v622 = vmax.f32 %v610, 0.0
        %v623 = vmax.f32 %v611, 0.0
        %v624 = vmax.f32 %v612, 0.0
        %v625 = vmax.f32 %v613, 0.0
        %v626 = vmax.f32 %v614, 0.0
        %v627 = vmax.f32 %v615, 0.0
        %v628 = vmax.f32 %v616, 0.0
        %v629 = vld [vmem:[#allocation6] sm:$0xff]
        %v630 = vld [vmem:[#allocation6 + $0x8] sm:$0xff]
        %v631 = vld [vmem:[#allocation6 + $0x10] sm:$0xff]
        %v632 = vld [vmem:[#allocation6 + $0x18] sm:$0xff]
        %v633 = vld [vmem:[#allocation6 + $0x20] sm:$0xff]
        %v634 = vld [vmem:[#allocation6 + $0x28] sm:$0xff]
        %v635 = vld [vmem:[#allocation6 + $0x30] sm:$0xff]
        %v636 = vld [vmem:[#allocation6 + $0x38] sm:$0xff]
        %v637 = vld [vmem:[#allocation6 + $0x40] sm:$0xff]
        %v638 = vld [vmem:[#allocation6 + $0x48] sm:$0xff]
        %v639 = vld [vmem:[#allocation6 + $0x50] sm:$0xff]
        %v640 = vld [vmem:[#allocation6 + $0x58] sm:$0xff]
        %v641 = vmul.f32 %v617, %v629
        %v642 = vmul.f32 %v618, %v630
        %v643 = vmul.f32 %v619, %v631
        %v644 = vmul.f32 %v620, %v632
        %v645 = vmul.f32 %v621, %v633
        %v646 = vmul.f32 %v622, %v634
        %v647 = vmul.f32 %v623, %v635
        %v648 = vmul.f32 %v624, %v636
        %v649 = vmul.f32 %v625, %v637
        %v650 = vmul.f32 %v626, %v638
        %v651 = vmul.f32 %v627, %v639
        %v652 = vmul.f32 %v628, %v640
        %v653 = vpack.c.bf16 %v642, %v641
        %v654 = vpack.c.bf16 %v644, %v643
        %v655 = vpack.c.bf16 %v646, %v645
        %v656 = vpack.c.bf16 %v648, %v647
        %v657 = vpack.c.bf16 %v650, %v649
        %v658 = vpack.c.bf16 %v652, %v651
        %659 = vst [vmem:[#allocation2 + $0x10] sm:$0xff] %v653
        %660 = vst [vmem:[#allocation2 + $0x18] sm:$0xff] %v654
        %661 = vst [vmem:[#allocation2 + $0x20] sm:$0xff] %v655
        %662 = vst [vmem:[#allocation2 + $0x28] sm:$0xff] %v656
        %663 = vst [vmem:[#allocation2 + $0x30] sm:$0xff] %v657
        %664 = vst [vmem:[#allocation2 + $0x38] sm:$0xff] %v658
        %v665 = vld [vmem:[%s333 + $0x30] sm:$0xf]
        %v666 = vld [vmem:[%s333 + $0x34] sm:$0xf]
        %v667 = vld [vmem:[%s333 + $0x38] sm:$0xf]
        %v668 = vld [vmem:[%s333 + $0x3c] sm:$0xf]
        %v669 = vld [vmem:[%s333 + $0x40] sm:$0xf]
        %v670 = vld [vmem:[%s333 + $0x44] sm:$0xf]
        %v671 = vld [vmem:[%s333 + $0x48] sm:$0xf]
        %v672 = vld [vmem:[%s333 + $0x4c] sm:$0xf]
        %v673 = vld [vmem:[%s333 + $0x50] sm:$0xf]
        %v674 = vld [vmem:[%s333 + $0x54] sm:$0xf]
        %v675 = vld [vmem:[%s333 + $0x58] sm:$0xf]
        %v676 = vld [vmem:[%s333 + $0x5c] sm:$0xf]
        %v677 = vld [vmem:[#allocation8] sm:$0xf]
        %v678 = vld [vmem:[#allocation8 + $0x4] sm:$0xf]
        %v679 = vld [vmem:[#allocation8 + $0x8] sm:$0xf]
        %v680 = vld [vmem:[#allocation8 + $0xc] sm:$0xf]
        %v681 = vld [vmem:[#allocation8 + $0x10] sm:$0xf]
        %v682 = vld [vmem:[#allocation8 + $0x14] sm:$0xf]
        %v683 = vld [vmem:[#allocation8 + $0x18] sm:$0xf]
        %v684 = vld [vmem:[#allocation8 + $0x1c] sm:$0xf]
        %v685 = vld [vmem:[#allocation8 + $0x20] sm:$0xf]
        %v686 = vld [vmem:[#allocation8 + $0x24] sm:$0xf]
        %v687 = vld [vmem:[#allocation8 + $0x28] sm:$0xf]
        %v688 = vld [vmem:[#allocation8 + $0x2c] sm:$0xf]
        %v689 = vld [vmem:[#allocation8 + $0x30] sm:$0xf]
        %v690 = vld [vmem:[#allocation8 + $0x34] sm:$0xf]
        %v691 = vld [vmem:[#allocation8 + $0x38] sm:$0xf]
        %v692 = vld [vmem:[#allocation8 + $0x3c] sm:$0xf]
        %v705 = vunpack.c.l.b16 %v665
        %v706 = vunpack.c.l.b16 %v666
        %v707 = vunpack.c.l.b16 %v667
        %v708 = vunpack.c.l.b16 %v668
        %v709 = vunpack.c.l.b16 %v669
        %v710 = vunpack.c.l.b16 %v670
        %v711 = vunpack.c.l.b16 %v671
        %v712 = vunpack.c.l.b16 %v672
        %v713 = vunpack.c.l.b16 %v673
        %v714 = vunpack.c.l.b16 %v674
        %v715 = vunpack.c.l.b16 %v675
        %v716 = vunpack.c.l.b16 %v676
        %v717 = vpack.c.b16 %v706, %v705
        %v718 = vpack.c.b16 %v708, %v707
        %v719 = vpack.c.b16 %v710, %v709
        %v720 = vpack.c.b16 %v712, %v711
        %v721 = vpack.c.b16 %v714, %v713
        %v722 = vpack.c.b16 %v716, %v715
        %v745 = vunpack.c.l.b16 %v677
        %v746 = vunpack.c.l.b16 %v678
        %v747 = vunpack.c.l.b16 %v679
        %v748 = vunpack.c.l.b16 %v680
        %v749 = vunpack.c.l.b16 %v681
        %v750 = vunpack.c.l.b16 %v682
        %v751 = vunpack.c.l.b16 %v683
        %v752 = vunpack.c.l.b16 %v684
        %v753 = vunpack.c.l.b16 %v685
        %v754 = vunpack.c.l.b16 %v686
        %v755 = vunpack.c.l.b16 %v687
        %v756 = vunpack.c.l.b16 %v688
        %v757 = vunpack.c.l.b16 %v689
        %v758 = vunpack.c.l.b16 %v690
        %v759 = vunpack.c.l.b16 %v691
        %v760 = vunpack.c.l.b16 %v692
        %v761 = vpack.c.b16 %v746, %v745
        %v762 = vpack.c.b16 %v748, %v747
        %v763 = vpack.c.b16 %v750, %v749
        %v764 = vpack.c.b16 %v752, %v751
        %v765 = vpack.c.b16 %v754, %v753
        %v766 = vpack.c.b16 %v756, %v755
        %v767 = vpack.c.b16 %v758, %v757
        %v768 = vpack.c.b16 %v760, %v759
        %777 = vmatprep.subr.bf16.mxu0 0
        %778 = vmatpush1.bf16.msra.mxu0 %v761
        %779 = vmatprep.subr.bf16.mxu0 0
        %780 = vmatpush1.bf16.msra.mxu0 %v762
        %781 = vmatprep.subr.bf16.mxu0 0
        %782 = vmatpush1.bf16.msra.mxu0 %v763
        %783 = vmatprep.subr.bf16.mxu0 0
        %784 = vmatpush1.bf16.msra.mxu0 %v764
        %785 = vmatprep.subr.bf16.mxu0 0
        %786 = vmatpush1.bf16.msra.mxu0 %v765
        %787 = vmatprep.subr.bf16.mxu0 0
        %788 = vmatpush1.bf16.msra.mxu0 %v766
        %789 = vmatprep.subr.bf16.mxu0 0
        %790 = vmatpush1.bf16.msra.mxu0 %v767
        %791 = vmatprep.subr.bf16.mxu0 0
        %792 = vmatpush1.bf16.msra.mxu0 %v768
        %793 = vmatprep.subr.bf16.mxu0 0
        %794 = vmatpush1.bf16.msra.mxu0 0
        %795 = vmatprep.subr.bf16.mxu0 0
        %796 = vmatpush1.bf16.msra.mxu0 0
        %797 = vmatprep.subr.bf16.mxu0 0
        %798 = vmatpush1.bf16.msra.mxu0 0
        %799 = vmatprep.subr.bf16.mxu0 0
        %800 = vmatpush1.bf16.msra.mxu0 0
        %801 = vmatprep.subr.bf16.mxu0 0
        %802 = vmatpush1.bf16.msra.mxu0 0
        %803 = vmatprep.subr.bf16.mxu0 0
        %804 = vmatpush1.bf16.msra.mxu0 0
        %805 = vmatprep.subr.bf16.mxu0 0
        %806 = vmatpush1.bf16.msra.mxu0 0
        %807 = vmatprep.subr.bf16.mxu0 0
        %808 = vmatpush1.bf16.msra.mxu0 0
        %809 = vmatprep.mubr.bf16.mxu0 0
        %810 = vmatmul.mubr.bf16.gmra.mrb[0].mxu0 %v717
        %v811 = vpop.f32.mrb[0].mxu0
        %v812 = vadd.f32 0.0, %v811
        %v813 = vpop.f32.mrb[0].mxu0
        %v814 = vpop.f32.mrb[0].mxu0
        %v815 = vadd.f32 0.0, %v814
        %v816 = vpop.f32.mrb[0].mxu0
        %817 = vmatprep.mubr.bf16.mxu0 0
        %818 = vmatmul.mubr.bf16.gmra.mrb[0].mxu0 %v718
        %v819 = vpop.f32.mrb[0].mxu0
        %v820 = vadd.f32 0.0, %v819
        %v821 = vpop.f32.mrb[0].mxu0
        %v822 = vpop.f32.mrb[0].mxu0
        %v823 = vadd.f32 0.0, %v822
        %v824 = vpop.f32.mrb[0].mxu0
        %825 = vmatprep.mubr.bf16.mxu0 0
        %826 = vmatmul.mubr.bf16.gmra.mrb[0].mxu0 %v719
        %v827 = vpop.f32.mrb[0].mxu0
        %v828 = vadd.f32 0.0, %v827
        %v829 = vpop.f32.mrb[0].mxu0
        %v830 = vpop.f32.mrb[0].mxu0
        %v831 = vadd.f32 0.0, %v830
        %v832 = vpop.f32.mrb[0].mxu0
        %833 = vmatprep.mubr.bf16.mxu0 0
        %834 = vmatmul.mubr.bf16.gmra.mrb[0].mxu0 %v720
        %v835 = vpop.f32.mrb[0].mxu0
        %v836 = vadd.f32 0.0, %v835
        %v837 = vpop.f32.mrb[0].mxu0
        %v838 = vpop.f32.mrb[0].mxu0
        %v839 = vadd.f32 0.0, %v838
        %v840 = vpop.f32.mrb[0].mxu0
        %841 = vmatprep.mubr.bf16.mxu0 0
        %842 = vmatmul.mubr.bf16.gmra.mrb[0].mxu0 %v721
        %v843 = vpop.f32.mrb[0].mxu0
        %v844 = vadd.f32 0.0, %v843
        %v845 = vpop.f32.mrb[0].mxu0
        %v846 = vpop.f32.mrb[0].mxu0
        %v847 = vadd.f32 0.0, %v846
        %v848 = vpop.f32.mrb[0].mxu0
        %849 = vmatprep.mubr.bf16.mxu0 0
        %850 = vmatmul.mubr.bf16.gmra.mrb[0].mxu0 %v722
        %v851 = vpop.f32.mrb[0].mxu0
        %v852 = vadd.f32 0.0, %v851
        %v853 = vpop.f32.mrb[0].mxu0
        %v854 = vpop.f32.mrb[0].mxu0
        %v855 = vadd.f32 0.0, %v854
        %v856 = vpop.f32.mrb[0].mxu0
        %857 = vdwg.mxu0
        %v858 = vmul.f32 %v812, %v588
        %v859 = vmul.f32 %v815, %v588
        %v860 = vmul.f32 %v820, %v588
        %v861 = vmul.f32 %v823, %v588
        %v862 = vmul.f32 %v828, %v588
        %v863 = vmul.f32 %v831, %v588
        %v864 = vmul.f32 %v836, %v588
        %v865 = vmul.f32 %v839, %v588
        %v866 = vmul.f32 %v844, %v588
        %v867 = vmul.f32 %v847, %v588
        %v868 = vmul.f32 %v852, %v588
        %v869 = vmul.f32 %v855, %v588
        %v870 = vadd.f32 %v858, %v604
        %v871 = vadd.f32 %v859, %v604
        %v872 = vadd.f32 %v860, %v604
        %v873 = vadd.f32 %v861, %v604
        %v874 = vadd.f32 %v862, %v604
        %v875 = vadd.f32 %v863, %v604
        %v876 = vadd.f32 %v864, %v604
        %v877 = vadd.f32 %v865, %v604
        %v878 = vadd.f32 %v866, %v604
        %v879 = vadd.f32 %v867, %v604
        %v880 = vadd.f32 %v868, %v604
        %v881 = vadd.f32 %v869, %v604
        %v882 = vmax.f32 %v870, 0.0
        %v883 = vmax.f32 %v871, 0.0
        %v884 = vmax.f32 %v872, 0.0
        %v885 = vmax.f32 %v873, 0.0
        %v886 = vmax.f32 %v874, 0.0
        %v887 = vmax.f32 %v875, 0.0
        %v888 = vmax.f32 %v876, 0.0
        %v889 = vmax.f32 %v877, 0.0
        %v890 = vmax.f32 %v878, 0.0
        %v891 = vmax.f32 %v879, 0.0
        %v892 = vmax.f32 %v880, 0.0
        %v893 = vmax.f32 %v881, 0.0
        %v894 = vld [vmem:[#allocation6] sm:$0xff]
        %v895 = vld [vmem:[#allocation6 + $0x8] sm:$0xff]
        %v896 = vld [vmem:[#allocation6 + $0x10] sm:$0xff]
        %v897 = vld [vmem:[#allocation6 + $0x18] sm:$0xff]
        %v898 = vld [vmem:[#allocation6 + $0x20] sm:$0xff]
        %v899 = vld [vmem:[#allocation6 + $0x28] sm:$0xff]
        %v900 = vld [vmem:[#allocation6 + $0x30] sm:$0xff]
        %v901 = vld [vmem:[#allocation6 + $0x38] sm:$0xff]
        %v902 = vld [vmem:[#allocation6 + $0x40] sm:$0xff]
        %v903 = vld [vmem:[#allocation6 + $0x48] sm:$0xff]
        %v904 = vld [vmem:[#allocation6 + $0x50] sm:$0xff]
        %v905 = vld [vmem:[#allocation6 + $0x58] sm:$0xff]
        %v906 = vmul.f32 %v882, %v894
        %v907 = vmul.f32 %v883, %v895
        %v908 = vmul.f32 %v884, %v896
        %v909 = vmul.f32 %v885, %v897
        %v910 = vmul.f32 %v886, %v898
        %v911 = vmul.f32 %v887, %v899
        %v912 = vmul.f32 %v888, %v900
        %v913 = vmul.f32 %v889, %v901
        %v914 = vmul.f32 %v890, %v902
        %v915 = vmul.f32 %v891, %v903
        %v916 = vmul.f32 %v892, %v904
        %v917 = vmul.f32 %v893, %v905
        %v918 = vpack.c.bf16 %v907, %v906
        %v919 = vpack.c.bf16 %v909, %v908
        %v920 = vpack.c.bf16 %v911, %v910
        %v921 = vpack.c.bf16 %v913, %v912
        %v922 = vpack.c.bf16 %v915, %v914
        %v923 = vpack.c.bf16 %v917, %v916
        %924 = vst [vmem:[#allocation2 + $0x40] sm:$0xff] %v918
        %925 = vst [vmem:[#allocation2 + $0x48] sm:$0xff] %v919
        %926 = vst [vmem:[#allocation2 + $0x50] sm:$0xff] %v920
        %927 = vst [vmem:[#allocation2 + $0x58] sm:$0xff] %v921
        %928 = vst [vmem:[#allocation2 + $0x60] sm:$0xff] %v922
        %929 = vst [vmem:[#allocation2 + $0x68] sm:$0xff] %v923
        %v930 = vld [vmem:[#allocation2] sm:$0xf8]
        %v931 = vld [vmem:[#allocation2 + $0x8] sm:$0xff]
        %v932 = vld [vmem:[#allocation2 + $0x10] sm:$0xff]
        %v933 = vld [vmem:[#allocation2 + $0x18] sm:$0xff]
        %v934 = vld [vmem:[#allocation2 + $0x20] sm:$0xff]
        %v935 = vld [vmem:[#allocation2 + $0x28] sm:$0xff]
        %v936 = vld [vmem:[#allocation2 + $0x30] sm:$0xf]
        %v937 = vld [vmem:[#allocation9] sm:$0xf]
        %v938 = vld [vmem:[#allocation9 + $0x4] sm:$0xf]
        %v939 = vld [vmem:[#allocation9 + $0x8] sm:$0xf]
        %v940 = vld [vmem:[#allocation9 + $0xc] sm:$0xf]
        %v941 = vld [vmem:[#allocation9 + $0x10] sm:$0xf]
        %v942 = vld [vmem:[#allocation9 + $0x14] sm:$0xf]
        %v943 = vld [vmem:[#allocation9 + $0x18] sm:$0xf]
        %v944 = vld [vmem:[#allocation9 + $0x1c] sm:$0xf]
        %v945 = vld [vmem:[#allocation9 + $0x20] sm:$0xf]
        %v946 = vld [vmem:[#allocation9 + $0x24] sm:$0xf]
        %v947 = vld [vmem:[#allocation9 + $0x28] sm:$0xf]
        %v948 = vld [vmem:[#allocation9 + $0x2c] sm:$0xf]
        %v949 = vld [vmem:[#allocation9 + $0x30] sm:$0xf]
        %v950 = vld [vmem:[#allocation9 + $0x34] sm:$0xf]
        %v951 = vld [vmem:[#allocation9 + $0x38] sm:$0xf]
        %v952 = vld [vmem:[#allocation9 + $0x3c] sm:$0xf]
        %v953 = vld [vmem:[#allocation2] sm:$0xf0]
        %s954 = scalar_lea.vmem [#allocation9], 64
        %v955 = vld [vmem:[%s954] sm:$0xf]
        %v956 = vld [vmem:[%s954 + $0x4] sm:$0xf]
        %v957 = vld [vmem:[%s954 + $0x8] sm:$0xf]
        %v958 = vld [vmem:[%s954 + $0xc] sm:$0xf]
        %v959 = vld [vmem:[%s954 + $0x10] sm:$0xf]
        %v960 = vld [vmem:[%s954 + $0x14] sm:$0xf]
        %v961 = vld [vmem:[%s954 + $0x18] sm:$0xf]
        %v962 = vld [vmem:[%s954 + $0x1c] sm:$0xf]
        %v963 = vld [vmem:[%s954 + $0x20] sm:$0xf]
        %v964 = vld [vmem:[%s954 + $0x24] sm:$0xf]
        %v965 = vld [vmem:[%s954 + $0x28] sm:$0xf]
        %v966 = vld [vmem:[%s954 + $0x2c] sm:$0xf]
        %v967 = vld [vmem:[%s954 + $0x30] sm:$0xf]
        %v968 = vld [vmem:[%s954 + $0x34] sm:$0xf]
        %v969 = vld [vmem:[%s954 + $0x38] sm:$0xf]
        %v970 = vld [vmem:[%s954 + $0x3c] sm:$0xf]
        %vm978 = vcmask 1043456
        %v979 = vrot.slane %v953, 4
        %v980 = vrot.slane %v931, 4
        %v981 = vsel %vm978, %v979, %v980
        %v982 = vrot.slane %v932, 4
        %v983 = vsel %vm978, %v980, %v982
        %v984 = vrot.slane %v933, 4
        %v985 = vsel %vm978, %v982, %v984
        %v986 = vrot.slane %v934, 4
        %v987 = vsel %vm978, %v984, %v986
        %v988 = vrot.slane %v935, 4
        %v989 = vsel %vm978, %v986, %v988
        %v990 = vrot.slane %v936, 4
        %v991 = vsel %vm978, %v988, %v990
        %v1014 = vunpack.c.l.b16 %v955
        %v1015 = vunpack.c.l.b16 %v956
        %v1016 = vunpack.c.l.b16 %v957
        %v1017 = vunpack.c.l.b16 %v958
        %v1018 = vunpack.c.l.b16 %v959
        %v1019 = vunpack.c.l.b16 %v960
        %v1020 = vunpack.c.l.b16 %v961
        %v1021 = vunpack.c.l.b16 %v962
        %v1022 = vunpack.c.l.b16 %v963
        %v1023 = vunpack.c.l.b16 %v964
        %v1024 = vunpack.c.l.b16 %v965
        %v1025 = vunpack.c.l.b16 %v966
        %v1026 = vunpack.c.l.b16 %v967
        %v1027 = vunpack.c.l.b16 %v968
        %v1028 = vunpack.c.l.b16 %v969
        %v1029 = vunpack.c.l.b16 %v970
        %v1030 = vpack.c.b16 %v1015, %v1014
        %v1031 = vpack.c.b16 %v1017, %v1016
        %v1032 = vpack.c.b16 %v1019, %v1018
        %v1033 = vpack.c.b16 %v1021, %v1020
        %v1034 = vpack.c.b16 %v1023, %v1022
        %v1035 = vpack.c.b16 %v1025, %v1024
        %v1036 = vpack.c.b16 %v1027, %v1026
        %v1037 = vpack.c.b16 %v1029, %v1028
        %1046 = vmatprep.subr.bf16.mxu0 0
        %1047 = vmatpush1.bf16.msra.mxu0 %v1030
        %1048 = vmatprep.subr.bf16.mxu0 0
        %1049 = vmatpush1.bf16.msra.mxu0 %v1031
        %1050 = vmatprep.subr.bf16.mxu0 0
        %1051 = vmatpush1.bf16.msra.mxu0 %v1032
        %1052 = vmatprep.subr.bf16.mxu0 0
        %1053 = vmatpush1.bf16.msra.mxu0 %v1033
        %1054 = vmatprep.subr.bf16.mxu0 0
        %1055 = vmatpush1.bf16.msra.mxu0 %v1034
        %1056 = vmatprep.subr.bf16.mxu0 0
        %1057 = vmatpush1.bf16.msra.mxu0 %v1035
        %1058 = vmatprep.subr.bf16.mxu0 0
        %1059 = vmatpush1.bf16.msra.mxu0 %v1036
        %1060 = vmatprep.subr.bf16.mxu0 0
        %1061 = vmatpush1.bf16.msra.mxu0 %v1037
        %1062 = vmatprep.subr.bf16.mxu0 0
        %1063 = vmatpush1.bf16.msra.mxu0 0
        %1064 = vmatprep.subr.bf16.mxu0 0
        %1065 = vmatpush1.bf16.msra.mxu0 0
        %1066 = vmatprep.subr.bf16.mxu0 0
        %1067 = vmatpush1.bf16.msra.mxu0 0
        %1068 = vmatprep.subr.bf16.mxu0 0
        %1069 = vmatpush1.bf16.msra.mxu0 0
        %1070 = vmatprep.subr.bf16.mxu0 0
        %1071 = vmatpush1.bf16.msra.mxu0 0
        %1072 = vmatprep.subr.bf16.mxu0 0
        %1073 = vmatpush1.bf16.msra.mxu0 0
        %1074 = vmatprep.subr.bf16.mxu0 0
        %1075 = vmatpush1.bf16.msra.mxu0 0
        %1076 = vmatprep.subr.bf16.mxu0 0
        %1077 = vmatpush1.bf16.msra.mxu0 0
        %1078 = vmatprep.mubr.bf16.mxu0 0
        %1079 = vmatmul.mubr.bf16.gmra.mrb[0].mxu0 %v981
        %v1080 = vpop.f32.mrb[0].mxu0
        %v1081 = vadd.f32 0.0, %v1080
        %v1082 = vpop.f32.mrb[0].mxu0
        %v1083 = vpop.f32.mrb[0].mxu0
        %v1084 = vadd.f32 0.0, %v1083
        %v1085 = vpop.f32.mrb[0].mxu0
        %1086 = vmatprep.mubr.bf16.mxu0 0
        %1087 = vmatmul.mubr.bf16.gmra.mrb[0].mxu0 %v983
        %v1088 = vpop.f32.mrb[0].mxu0
        %v1089 = vadd.f32 0.0, %v1088
        %v1090 = vpop.f32.mrb[0].mxu0
        %v1091 = vpop.f32.mrb[0].mxu0
        %v1092 = vadd.f32 0.0, %v1091
        %v1093 = vpop.f32.mrb[0].mxu0
        %1094 = vmatprep.mubr.bf16.mxu0 0
        %1095 = vmatmul.mubr.bf16.gmra.mrb[0].mxu0 %v985
        %v1096 = vpop.f32.mrb[0].mxu0
        %v1097 = vadd.f32 0.0, %v1096
        %v1098 = vpop.f32.mrb[0].mxu0
        %v1099 = vpop.f32.mrb[0].mxu0
        %v1100 = vadd.f32 0.0, %v1099
        %v1101 = vpop.f32.mrb[0].mxu0
        %1102 = vmatprep.mubr.bf16.mxu0 0
        %1103 = vmatmul.mubr.bf16.gmra.mrb[0].mxu0 %v987
        %v1104 = vpop.f32.mrb[0].mxu0
        %v1105 = vadd.f32 0.0, %v1104
        %v1106 = vpop.f32.mrb[0].mxu0
        %v1107 = vpop.f32.mrb[0].mxu0
        %v1108 = vadd.f32 0.0, %v1107
        %v1109 = vpop.f32.mrb[0].mxu0
        %1110 = vmatprep.mubr.bf16.mxu0 0
        %1111 = vmatmul.mubr.bf16.gmra.mrb[0].mxu0 %v989
        %v1112 = vpop.f32.mrb[0].mxu0
        %v1113 = vadd.f32 0.0, %v1112
        %v1114 = vpop.f32.mrb[0].mxu0
        %v1115 = vpop.f32.mrb[0].mxu0
        %v1116 = vadd.f32 0.0, %v1115
        %v1117 = vpop.f32.mrb[0].mxu0
        %1118 = vmatprep.mubr.bf16.mxu0 0
        %1119 = vmatmul.mubr.bf16.gmra.mrb[0].mxu0 %v991
        %v1120 = vpop.f32.mrb[0].mxu0
        %v1121 = vadd.f32 0.0, %v1120
        %v1122 = vpop.f32.mrb[0].mxu0
        %v1123 = vpop.f32.mrb[0].mxu0
        %v1124 = vadd.f32 0.0, %v1123
        %v1125 = vpop.f32.mrb[0].mxu0
        %1126 = vdwg.mxu0
        %vm1127 = vsmask.f32 4352
        %v1129 = vshrl.u32 %v930, 16
        %v1131 = vrot.slane %v1129, 3
        %v1132 = vshll.u32 %v930, 16
        %v1134 = vrot.slane %v1132, 4
        %v1135 = vor.u32 %v1131, %v1134
        %v1137 = vshrl.u32 %v931, 16
        %v1139 = vrot.slane %v1137, 3
        %v1140 = vshll.u32 %v931, 16
        %v1142 = vrot.slane %v1140, 4
        %v1143 = vor.u32 %v1139, %v1142
        %v1144 = vsel %vm1127, %v1135, %v1143
        %v1146 = vshrl.u32 %v932, 16
        %v1148 = vrot.slane %v1146, 3
        %v1149 = vshll.u32 %v932, 16
        %v1151 = vrot.slane %v1149, 4
        %v1152 = vor.u32 %v1148, %v1151
        %v1153 = vsel %vm1127, %v1143, %v1152
        %v1155 = vshrl.u32 %v933, 16
        %v1157 = vrot.slane %v1155, 3
        %v1158 = vshll.u32 %v933, 16
        %v1160 = vrot.slane %v1158, 4
        %v1161 = vor.u32 %v1157, %v1160
        %v1162 = vsel %vm1127, %v1152, %v1161
        %v1164 = vshrl.u32 %v934, 16
        %v1166 = vrot.slane %v1164, 3
        %v1167 = vshll.u32 %v934, 16
        %v1169 = vrot.slane %v1167, 4
        %v1170 = vor.u32 %v1166, %v1169
        %v1171 = vsel %vm1127, %v1161, %v1170
        %v1173 = vshrl.u32 %v935, 16
        %v1175 = vrot.slane %v1173, 3
        %v1176 = vshll.u32 %v935, 16
        %v1178 = vrot.slane %v1176, 4
        %v1179 = vor.u32 %v1175, %v1178
        %v1180 = vsel %vm1127, %v1170, %v1179
        %v1182 = vshrl.u32 %v936, 16
        %v1184 = vrot.slane %v1182, 3
        %v1185 = vshll.u32 %v936, 16
        %v1187 = vrot.slane %v1185, 4
        %v1188 = vor.u32 %v1184, %v1187
        %v1189 = vsel %vm1127, %v1179, %v1188
        %v1212 = vunpack.c.l.b16 %v937
        %v1213 = vunpack.c.l.b16 %v938
        %v1214 = vunpack.c.l.b16 %v939
        %v1215 = vunpack.c.l.b16 %v940
        %v1216 = vunpack.c.l.b16 %v941
        %v1217 = vunpack.c.l.b16 %v942
        %v1218 = vunpack.c.l.b16 %v943
        %v1219 = vunpack.c.l.b16 %v944
        %v1220 = vunpack.c.l.b16 %v945
        %v1221 = vunpack.c.l.b16 %v946
        %v1222 = vunpack.c.l.b16 %v947
        %v1223 = vunpack.c.l.b16 %v948
        %v1224 = vunpack.c.l.b16 %v949
        %v1225 = vunpack.c.l.b16 %v950
        %v1226 = vunpack.c.l.b16 %v951
        %v1227 = vunpack.c.l.b16 %v952
        %v1228 = vpack.c.b16 %v1213, %v1212
        %v1229 = vpack.c.b16 %v1215, %v1214
        %v1230 = vpack.c.b16 %v1217, %v1216
        %v1231 = vpack.c.b16 %v1219, %v1218
        %v1232 = vpack.c.b16 %v1221, %v1220
        %v1233 = vpack.c.b16 %v1223, %v1222
        %v1234 = vpack.c.b16 %v1225, %v1224
        %v1235 = vpack.c.b16 %v1227, %v1226
        %1244 = vmatprep.subr.bf16.mxu0 0
        %1245 = vmatpush1.bf16.msra.mxu0 %v1228
        %1246 = vmatprep.subr.bf16.mxu0 0
        %1247 = vmatpush1.bf16.msra.mxu0 %v1229
        %1248 = vmatprep.subr.bf16.mxu0 0
        %1249 = vmatpush1.bf16.msra.mxu0 %v1230
        %1250 = vmatprep.subr.bf16.mxu0 0
        %1251 = vmatpush1.bf16.msra.mxu0 %v1231
        %1252 = vmatprep.subr.bf16.mxu0 0
        %1253 = vmatpush1.bf16.msra.mxu0 %v1232
        %1254 = vmatprep.subr.bf16.mxu0 0
        %1255 = vmatpush1.bf16.msra.mxu0 %v1233
        %1256 = vmatprep.subr.bf16.mxu0 0
        %1257 = vmatpush1.bf16.msra.mxu0 %v1234
        %1258 = vmatprep.subr.bf16.mxu0 0
        %1259 = vmatpush1.bf16.msra.mxu0 %v1235
        %1260 = vmatprep.subr.bf16.mxu0 0
        %1261 = vmatpush1.bf16.msra.mxu0 0
        %1262 = vmatprep.subr.bf16.mxu0 0
        %1263 = vmatpush1.bf16.msra.mxu0 0
        %1264 = vmatprep.subr.bf16.mxu0 0
        %1265 = vmatpush1.bf16.msra.mxu0 0
        %1266 = vmatprep.subr.bf16.mxu0 0
        %1267 = vmatpush1.bf16.msra.mxu0 0
        %1268 = vmatprep.subr.bf16.mxu0 0
        %1269 = vmatpush1.bf16.msra.mxu0 0
        %1270 = vmatprep.subr.bf16.mxu0 0
        %1271 = vmatpush1.bf16.msra.mxu0 0
        %1272 = vmatprep.subr.bf16.mxu0 0
        %1273 = vmatpush1.bf16.msra.mxu0 0
        %1274 = vmatprep.subr.bf16.mxu0 0
        %1275 = vmatpush1.bf16.msra.mxu0 0
        %1276 = vmatprep.mubr.bf16.mxu0 0
        %1277 = vmatmul.mubr.bf16.gmra.mrb[0].mxu0 %v1144
        %v1278 = vpop.f32.mrb[0].mxu0
        %v1279 = vadd.f32 %v1081, %v1278
        %v1280 = vpop.f32.mrb[0].mxu0
        %v1281 = vpop.f32.mrb[0].mxu0
        %v1282 = vadd.f32 %v1084, %v1281
        %v1283 = vpop.f32.mrb[0].mxu0
        %1284 = vmatprep.mubr.bf16.mxu0 0
        %1285 = vmatmul.mubr.bf16.gmra.mrb[0].mxu0 %v1153
        %v1286 = vpop.f32.mrb[0].mxu0
        %v1287 = vadd.f32 %v1089, %v1286
        %v1288 = vpop.f32.mrb[0].mxu0
        %v1289 = vpop.f32.mrb[0].mxu0
        %v1290 = vadd.f32 %v1092, %v1289
        %v1291 = vpop.f32.mrb[0].mxu0
        %1292 = vmatprep.mubr.bf16.mxu0 0
        %1293 = vmatmul.mubr.bf16.gmra.mrb[0].mxu0 %v1162
        %v1294 = vpop.f32.mrb[0].mxu0
        %v1295 = vadd.f32 %v1097, %v1294
        %v1296 = vpop.f32.mrb[0].mxu0
        %v1297 = vpop.f32.mrb[0].mxu0
        %v1298 = vadd.f32 %v1100, %v1297
        %v1299 = vpop.f32.mrb[0].mxu0
        %1300 = vmatprep.mubr.bf16.mxu0 0
        %1301 = vmatmul.mubr.bf16.gmra.mrb[0].mxu0 %v1171
        %v1302 = vpop.f32.mrb[0].mxu0
        %v1303 = vadd.f32 %v1105, %v1302
        %v1304 = vpop.f32.mrb[0].mxu0
        %v1305 = vpop.f32.mrb[0].mxu0
        %v1306 = vadd.f32 %v1108, %v1305
        %v1307 = vpop.f32.mrb[0].mxu0
        %1308 = vmatprep.mubr.bf16.mxu0 0
        %1309 = vmatmul.mubr.bf16.gmra.mrb[0].mxu0 %v1180
        %v1310 = vpop.f32.mrb[0].mxu0
        %v1311 = vadd.f32 %v1113, %v1310
        %v1312 = vpop.f32.mrb[0].mxu0
        %v1313 = vpop.f32.mrb[0].mxu0
        %v1314 = vadd.f32 %v1116, %v1313
        %v1315 = vpop.f32.mrb[0].mxu0
        %1316 = vmatprep.mubr.bf16.mxu0 0
        %1317 = vmatmul.mubr.bf16.gmra.mrb[0].mxu0 %v1189
        %v1318 = vpop.f32.mrb[0].mxu0
        %v1319 = vadd.f32 %v1121, %v1318
        %v1320 = vpop.f32.mrb[0].mxu0
        %v1321 = vpop.f32.mrb[0].mxu0
        %v1322 = vadd.f32 %v1124, %v1321
        %v1323 = vpop.f32.mrb[0].mxu0
        %1324 = vdwg.mxu0
        %v1325 = vld [vmem:[#allocation2 + $0x30] sm:$0x1f]
        %s1326 = scalar_lea.vmem [#allocation9], 128
        %v1327 = vld [vmem:[%s1326] sm:$0xf]
        %v1328 = vld [vmem:[%s1326 + $0x4] sm:$0xf]
        %v1329 = vld [vmem:[%s1326 + $0x8] sm:$0xf]
        %v1330 = vld [vmem:[%s1326 + $0xc] sm:$0xf]
        %v1331 = vld [vmem:[%s1326 + $0x10] sm:$0xf]
        %v1332 = vld [vmem:[%s1326 + $0x14] sm:$0xf]
        %v1333 = vld [vmem:[%s1326 + $0x18] sm:$0xf]
        %v1334 = vld [vmem:[%s1326 + $0x1c] sm:$0xf]
        %v1335 = vld [vmem:[%s1326 + $0x20] sm:$0xf]
        %v1336 = vld [vmem:[%s1326 + $0x24] sm:$0xf]
        %v1337 = vld [vmem:[%s1326 + $0x28] sm:$0xf]
        %v1338 = vld [vmem:[%s1326 + $0x2c] sm:$0xf]
        %v1339 = vld [vmem:[%s1326 + $0x30] sm:$0xf]
        %v1340 = vld [vmem:[%s1326 + $0x34] sm:$0xf]
        %v1341 = vld [vmem:[%s1326 + $0x38] sm:$0xf]
        %v1342 = vld [vmem:[%s1326 + $0x3c] sm:$0xf]
        %vm1343 = vsmask.f32 3328
        %v1345 = vshrl.u32 %v953, 16
        %v1347 = vrot.slane %v1345, 4
        %v1348 = vshll.u32 %v953, 16
        %v1350 = vrot.slane %v1348, 5
        %v1351 = vor.u32 %v1347, %v1350
        %v1352 = vrot.slane %v1137, 4
        %v1353 = vrot.slane %v1140, 5
        %v1354 = vor.u32 %v1352, %v1353
        %v1355 = vsel %vm1343, %v1351, %v1354
        %v1356 = vrot.slane %v1146, 4
        %v1357 = vrot.slane %v1149, 5
        %v1358 = vor.u32 %v1356, %v1357
        %v1359 = vsel %vm1343, %v1354, %v1358
        %v1360 = vrot.slane %v1155, 4
        %v1361 = vrot.slane %v1158, 5
        %v1362 = vor.u32 %v1360, %v1361
        %v1363 = vsel %vm1343, %v1358, %v1362
        %v1364 = vrot.slane %v1164, 4
        %v1365 = vrot.slane %v1167, 5
        %v1366 = vor.u32 %v1364, %v1365
        %v1367 = vsel %vm1343, %v1362, %v1366
        %v1368 = vrot.slane %v1173, 4
        %v1369 = vrot.slane %v1176, 5
        %v1370 = vor.u32 %v1368, %v1369
        %v1371 = vsel %vm1343, %v1366, %v1370
        %v1373 = vshrl.u32 %v1325, 16
        %v1375 = vrot.slane %v1373, 4
        %v1376 = vshll.u32 %v1325, 16
        %v1378 = vrot.slane %v1376, 5
        %v1379 = vor.u32 %v1375, %v1378
        %v1380 = vsel %vm1343, %v1370, %v1379
        %v1403 = vunpack.c.l.b16 %v1327
        %v1404 = vunpack.c.l.b16 %v1328
        %v1405 = vunpack.c.l.b16 %v1329
        %v1406 = vunpack.c.l.b16 %v1330
        %v1407 = vunpack.c.l.b16 %v1331
        %v1408 = vunpack.c.l.b16 %v1332
        %v1409 = vunpack.c.l.b16 %v1333
        %v1410 = vunpack.c.l.b16 %v1334
        %v1411 = vunpack.c.l.b16 %v1335
        %v1412 = vunpack.c.l.b16 %v1336
        %v1413 = vunpack.c.l.b16 %v1337
        %v1414 = vunpack.c.l.b16 %v1338
        %v1415 = vunpack.c.l.b16 %v1339
        %v1416 = vunpack.c.l.b16 %v1340
        %v1417 = vunpack.c.l.b16 %v1341
        %v1418 = vunpack.c.l.b16 %v1342
        %v1419 = vpack.c.b16 %v1404, %v1403
        %v1420 = vpack.c.b16 %v1406, %v1405
        %v1421 = vpack.c.b16 %v1408, %v1407
        %v1422 = vpack.c.b16 %v1410, %v1409
        %v1423 = vpack.c.b16 %v1412, %v1411
        %v1424 = vpack.c.b16 %v1414, %v1413
        %v1425 = vpack.c.b16 %v1416, %v1415
        %v1426 = vpack.c.b16 %v1418, %v1417
        %1435 = vmatprep.subr.bf16.mxu0 0
        %1436 = vmatpush1.bf16.msra.mxu0 %v1419
        %1437 = vmatprep.subr.bf16.mxu0 0
        %1438 = vmatpush1.bf16.msra.mxu0 %v1420
        %1439 = vmatprep.subr.bf16.mxu0 0
        %1440 = vmatpush1.bf16.msra.mxu0 %v1421
        %1441 = vmatprep.subr.bf16.mxu0 0
        %1442 = vmatpush1.bf16.msra.mxu0 %v1422
        %1443 = vmatprep.subr.bf16.mxu0 0
        %1444 = vmatpush1.bf16.msra.mxu0 %v1423
        %1445 = vmatprep.subr.bf16.mxu0 0
        %1446 = vmatpush1.bf16.msra.mxu0 %v1424
        %1447 = vmatprep.subr.bf16.mxu0 0
        %1448 = vmatpush1.bf16.msra.mxu0 %v1425
        %1449 = vmatprep.subr.bf16.mxu0 0
        %1450 = vmatpush1.bf16.msra.mxu0 %v1426
        %1451 = vmatprep.subr.bf16.mxu0 0
        %1452 = vmatpush1.bf16.msra.mxu0 0
        %1453 = vmatprep.subr.bf16.mxu0 0
        %1454 = vmatpush1.bf16.msra.mxu0 0
        %1455 = vmatprep.subr.bf16.mxu0 0
        %1456 = vmatpush1.bf16.msra.mxu0 0
        %1457 = vmatprep.subr.bf16.mxu0 0
        %1458 = vmatpush1.bf16.msra.mxu0 0
        %1459 = vmatprep.subr.bf16.mxu0 0
        %1460 = vmatpush1.bf16.msra.mxu0 0
        %1461 = vmatprep.subr.bf16.mxu0 0
        %1462 = vmatpush1.bf16.msra.mxu0 0
        %1463 = vmatprep.subr.bf16.mxu0 0
        %1464 = vmatpush1.bf16.msra.mxu0 0
        %1465 = vmatprep.subr.bf16.mxu0 0
        %1466 = vmatpush1.bf16.msra.mxu0 0
        %1467 = vmatprep.mubr.bf16.mxu0 0
        %1468 = vmatmul.mubr.bf16.gmra.mrb[0].mxu0 %v1355
        %v1469 = vpop.f32.mrb[0].mxu0
        %v1470 = vadd.f32 0.0, %v1469
        %v1471 = vpop.f32.mrb[0].mxu0
        %v1472 = vpop.f32.mrb[0].mxu0
        %v1473 = vadd.f32 0.0, %v1472
        %v1474 = vpop.f32.mrb[0].mxu0
        %1475 = vmatprep.mubr.bf16.mxu0 0
        %1476 = vmatmul.mubr.bf16.gmra.mrb[0].mxu0 %v1359
        %v1477 = vpop.f32.mrb[0].mxu0
        %v1478 = vadd.f32 0.0, %v1477
        %v1479 = vpop.f32.mrb[0].mxu0
        %v1480 = vpop.f32.mrb[0].mxu0
        %v1481 = vadd.f32 0.0, %v1480
        %v1482 = vpop.f32.mrb[0].mxu0
        %1483 = vmatprep.mubr.bf16.mxu0 0
        %1484 = vmatmul.mubr.bf16.gmra.mrb[0].mxu0 %v1363
        %v1485 = vpop.f32.mrb[0].mxu0
        %v1486 = vadd.f32 0.0, %v1485
        %v1487 = vpop.f32.mrb[0].mxu0
        %v1488 = vpop.f32.mrb[0].mxu0
        %v1489 = vadd.f32 0.0, %v1488
        %v1490 = vpop.f32.mrb[0].mxu0
        %1491 = vmatprep.mubr.bf16.mxu0 0
        %1492 = vmatmul.mubr.bf16.gmra.mrb[0].mxu0 %v1367
        %v1493 = vpop.f32.mrb[0].mxu0
        %v1494 = vadd.f32 0.0, %v1493
        %v1495 = vpop.f32.mrb[0].mxu0
        %v1496 = vpop.f32.mrb[0].mxu0
        %v1497 = vadd.f32 0.0, %v1496
        %v1498 = vpop.f32.mrb[0].mxu0
        %1499 = vmatprep.mubr.bf16.mxu0 0
        %1500 = vmatmul.mubr.bf16.gmra.mrb[0].mxu0 %v1371
        %v1501 = vpop.f32.mrb[0].mxu0
        %v1502 = vadd.f32 0.0, %v1501
        %v1503 = vpop.f32.mrb[0].mxu0
        %v1504 = vpop.f32.mrb[0].mxu0
        %v1505 = vadd.f32 0.0, %v1504
        %v1506 = vpop.f32.mrb[0].mxu0
        %1507 = vmatprep.mubr.bf16.mxu0 0
        %1508 = vmatmul.mubr.bf16.gmra.mrb[0].mxu0 %v1380
        %v1509 = vpop.f32.mrb[0].mxu0
        %v1510 = vadd.f32 0.0, %v1509
        %v1511 = vpop.f32.mrb[0].mxu0
        %v1512 = vpop.f32.mrb[0].mxu0
        %v1513 = vadd.f32 0.0, %v1512
        %v1514 = vpop.f32.mrb[0].mxu0
        %1515 = vdwg.mxu0
        %v1516 = vadd.f32 %v1279, %v1470
        %v1517 = vadd.f32 %v1282, %v1473
        %v1518 = vadd.f32 %v1287, %v1478
        %v1519 = vadd.f32 %v1290, %v1481
        %v1520 = vadd.f32 %v1295, %v1486
        %v1521 = vadd.f32 %v1298, %v1489
        %v1522 = vadd.f32 %v1303, %v1494
        %v1523 = vadd.f32 %v1306, %v1497
        %v1524 = vadd.f32 %v1311, %v1502
        %v1525 = vadd.f32 %v1314, %v1505
        %v1526 = vadd.f32 %v1319, %v1510
        %v1527 = vadd.f32 %v1322, %v1513
        %v1528 = vld [vmem:[#allocation2 + $0x8] sm:$0x80]
        %v1529 = vld [vmem:[#allocation2 + $0x10] sm:$0xff]
        %v1530 = vld [vmem:[#allocation2 + $0x18] sm:$0xff]
        %v1531 = vld [vmem:[#allocation2 + $0x20] sm:$0xff]
        %v1532 = vld [vmem:[#allocation2 + $0x28] sm:$0xff]
        %v1533 = vld [vmem:[#allocation2 + $0x30] sm:$0xff]
        %v1534 = vld [vmem:[#allocation2 + $0x38] sm:$0xff]
        %s1535 = scalar_lea.vmem [#allocation9], 192
        %v1536 = vld [vmem:[%s1535] sm:$0xf]
        %v1537 = vld [vmem:[%s1535 + $0x4] sm:$0xf]
        %v1538 = vld [vmem:[%s1535 + $0x8] sm:$0xf]
        %v1539 = vld [vmem:[%s1535 + $0xc] sm:$0xf]
        %v1540 = vld [vmem:[%s1535 + $0x10] sm:$0xf]
        %v1541 = vld [vmem:[%s1535 + $0x14] sm:$0xf]
        %v1542 = vld [vmem:[%s1535 + $0x18] sm:$0xf]
        %v1543 = vld [vmem:[%s1535 + $0x1c] sm:$0xf]
        %v1544 = vld [vmem:[%s1535 + $0x20] sm:$0xf]
        %v1545 = vld [vmem:[%s1535 + $0x24] sm:$0xf]
        %v1546 = vld [vmem:[%s1535 + $0x28] sm:$0xf]
        %v1547 = vld [vmem:[%s1535 + $0x2c] sm:$0xf]
        %v1548 = vld [vmem:[%s1535 + $0x30] sm:$0xf]
        %v1549 = vld [vmem:[%s1535 + $0x34] sm:$0xf]
        %v1550 = vld [vmem:[%s1535 + $0x38] sm:$0xf]
        %v1551 = vld [vmem:[%s1535 + $0x3c] sm:$0xf]
        %vm1552 = vsmask.f32 256
        %v1554 = vshrl.u32 %v1528, 16
        %v1556 = vrot.slane %v1554, 7
        %v1558 = vshrl.u32 %v1529, 16
        %v1560 = vrot.slane %v1558, 7
        %v1561 = vshll.u32 %v1529, 16
        %v1563 = vor.u32 %v1560, %v1561
        %v1564 = vsel %vm1552, %v1556, %v1563
        %v1566 = vshrl.u32 %v1530, 16
        %v1568 = vrot.slane %v1566, 7
        %v1569 = vshll.u32 %v1530, 16
        %v1571 = vor.u32 %v1568, %v1569
        %v1572 = vsel %vm1552, %v1560, %v1571
        %v1574 = vshrl.u32 %v1531, 16
        %v1576 = vrot.slane %v1574, 7
        %v1577 = vshll.u32 %v1531, 16
        %v1579 = vor.u32 %v1576, %v1577
        %v1580 = vsel %vm1552, %v1568, %v1579
        %v1582 = vshrl.u32 %v1532, 16
        %v1584 = vrot.slane %v1582, 7
        %v1585 = vshll.u32 %v1532, 16
        %v1587 = vor.u32 %v1584, %v1585
        %v1588 = vsel %vm1552, %v1576, %v1587
        %v1590 = vshrl.u32 %v1533, 16
        %v1592 = vrot.slane %v1590, 7
        %v1593 = vshll.u32 %v1533, 16
        %v1595 = vor.u32 %v1592, %v1593
        %v1596 = vsel %vm1552, %v1584, %v1595
        %v1598 = vshrl.u32 %v1534, 16
        %v1600 = vrot.slane %v1598, 7
        %v1601 = vshll.u32 %v1534, 16
        %v1603 = vor.u32 %v1600, %v1601
        %v1604 = vsel %vm1552, %v1592, %v1603
        %v1627 = vunpack.c.l.b16 %v1536
        %v1628 = vunpack.c.l.b16 %v1537
        %v1629 = vunpack.c.l.b16 %v1538
        %v1630 = vunpack.c.l.b16 %v1539
        %v1631 = vunpack.c.l.b16 %v1540
        %v1632 = vunpack.c.l.b16 %v1541
        %v1633 = vunpack.c.l.b16 %v1542
        %v1634 = vunpack.c.l.b16 %v1543
        %v1635 = vunpack.c.l.b16 %v1544
        %v1636 = vunpack.c.l.b16 %v1545
        %v1637 = vunpack.c.l.b16 %v1546
        %v1638 = vunpack.c.l.b16 %v1547
        %v1639 = vunpack.c.l.b16 %v1548
        %v1640 = vunpack.c.l.b16 %v1549
        %v1641 = vunpack.c.l.b16 %v1550
        %v1642 = vunpack.c.l.b16 %v1551
        %v1643 = vpack.c.b16 %v1628, %v1627
        %v1644 = vpack.c.b16 %v1630, %v1629
        %v1645 = vpack.c.b16 %v1632, %v1631
        %v1646 = vpack.c.b16 %v1634, %v1633
        %v1647 = vpack.c.b16 %v1636, %v1635
        %v1648 = vpack.c.b16 %v1638, %v1637
        %v1649 = vpack.c.b16 %v1640, %v1639
        %v1650 = vpack.c.b16 %v1642, %v1641
        %1659 = vmatprep.subr.bf16.mxu0 0
        %1660 = vmatpush1.bf16.msra.mxu0 %v1643
        %1661 = vmatprep.subr.bf16.mxu0 0
        %1662 = vmatpush1.bf16.msra.mxu0 %v1644
        %1663 = vmatprep.subr.bf16.mxu0 0
        %1664 = vmatpush1.bf16.msra.mxu0 %v1645
        %1665 = vmatprep.subr.bf16.mxu0 0
        %1666 = vmatpush1.bf16.msra.mxu0 %v1646
        %1667 = vmatprep.subr.bf16.mxu0 0
        %1668 = vmatpush1.bf16.msra.mxu0 %v1647
        %1669 = vmatprep.subr.bf16.mxu0 0
        %1670 = vmatpush1.bf16.msra.mxu0 %v1648
        %1671 = vmatprep.subr.bf16.mxu0 0
        %1672 = vmatpush1.bf16.msra.mxu0 %v1649
        %1673 = vmatprep.subr.bf16.mxu0 0
        %1674 = vmatpush1.bf16.msra.mxu0 %v1650
        %1675 = vmatprep.subr.bf16.mxu0 0
        %1676 = vmatpush1.bf16.msra.mxu0 0
        %1677 = vmatprep.subr.bf16.mxu0 0
        %1678 = vmatpush1.bf16.msra.mxu0 0
        %1679 = vmatprep.subr.bf16.mxu0 0
        %1680 = vmatpush1.bf16.msra.mxu0 0
        %1681 = vmatprep.subr.bf16.mxu0 0
        %1682 = vmatpush1.bf16.msra.mxu0 0
        %1683 = vmatprep.subr.bf16.mxu0 0
        %1684 = vmatpush1.bf16.msra.mxu0 0
        %1685 = vmatprep.subr.bf16.mxu0 0
        %1686 = vmatpush1.bf16.msra.mxu0 0
        %1687 = vmatprep.subr.bf16.mxu0 0
        %1688 = vmatpush1.bf16.msra.mxu0 0
        %1689 = vmatprep.subr.bf16.mxu0 0
        %1690 = vmatpush1.bf16.msra.mxu0 0
        %1691 = vmatprep.mubr.bf16.mxu0 0
        %1692 = vmatmul.mubr.bf16.gmra.mrb[0].mxu0 %v1564
        %v1693 = vpop.f32.mrb[0].mxu0
        %v1694 = vadd.f32 0.0, %v1693
        %v1695 = vpop.f32.mrb[0].mxu0
        %v1696 = vpop.f32.mrb[0].mxu0
        %v1697 = vadd.f32 0.0, %v1696
        %v1698 = vpop.f32.mrb[0].mxu0
        %1699 = vmatprep.mubr.bf16.mxu0 0
        %1700 = vmatmul.mubr.bf16.gmra.mrb[0].mxu0 %v1572
        %v1701 = vpop.f32.mrb[0].mxu0
        %v1702 = vadd.f32 0.0, %v1701
        %v1703 = vpop.f32.mrb[0].mxu0
        %v1704 = vpop.f32.mrb[0].mxu0
        %v1705 = vadd.f32 0.0, %v1704
        %v1706 = vpop.f32.mrb[0].mxu0
        %1707 = vmatprep.mubr.bf16.mxu0 0
        %1708 = vmatmul.mubr.bf16.gmra.mrb[0].mxu0 %v1580
        %v1709 = vpop.f32.mrb[0].mxu0
        %v1710 = vadd.f32 0.0, %v1709
        %v1711 = vpop.f32.mrb[0].mxu0
        %v1712 = vpop.f32.mrb[0].mxu0
        %v1713 = vadd.f32 0.0, %v1712
        %v1714 = vpop.f32.mrb[0].mxu0
        %1715 = vmatprep.mubr.bf16.mxu0 0
        %1716 = vmatmul.mubr.bf16.gmra.mrb[0].mxu0 %v1588
        %v1717 = vpop.f32.mrb[0].mxu0
        %v1718 = vadd.f32 0.0, %v1717
        %v1719 = vpop.f32.mrb[0].mxu0
        %v1720 = vpop.f32.mrb[0].mxu0
        %v1721 = vadd.f32 0.0, %v1720
        %v1722 = vpop.f32.mrb[0].mxu0
        %1723 = vmatprep.mubr.bf16.mxu0 0
        %1724 = vmatmul.mubr.bf16.gmra.mrb[0].mxu0 %v1596
        %v1725 = vpop.f32.mrb[0].mxu0
        %v1726 = vadd.f32 0.0, %v1725
        %v1727 = vpop.f32.mrb[0].mxu0
        %v1728 = vpop.f32.mrb[0].mxu0
        %v1729 = vadd.f32 0.0, %v1728
        %v1730 = vpop.f32.mrb[0].mxu0
        %1731 = vmatprep.mubr.bf16.mxu0 0
        %1732 = vmatmul.mubr.bf16.gmra.mrb[0].mxu0 %v1604
        %v1733 = vpop.f32.mrb[0].mxu0
        %v1734 = vadd.f32 0.0, %v1733
        %v1735 = vpop.f32.mrb[0].mxu0
        %v1736 = vpop.f32.mrb[0].mxu0
        %v1737 = vadd.f32 0.0, %v1736
        %v1738 = vpop.f32.mrb[0].mxu0
        %1739 = vdwg.mxu0
        %v1740 = vadd.f32 %v1516, %v1694
        %v1741 = vadd.f32 %v1517, %v1697
        %v1742 = vadd.f32 %v1518, %v1702
        %v1743 = vadd.f32 %v1519, %v1705
        %v1744 = vadd.f32 %v1520, %v1710
        %v1745 = vadd.f32 %v1521, %v1713
        %v1746 = vadd.f32 %v1522, %v1718
        %v1747 = vadd.f32 %v1523, %v1721
        %v1748 = vadd.f32 %v1524, %v1726
        %v1749 = vadd.f32 %v1525, %v1729
        %v1750 = vadd.f32 %v1526, %v1734
        %v1751 = vadd.f32 %v1527, %v1737
        %s1752 = scalar_lea.vmem [#allocation9], 256
        %v1753 = vld [vmem:[%s1752] sm:$0xf]
        %v1754 = vld [vmem:[%s1752 + $0x4] sm:$0xf]
        %v1755 = vld [vmem:[%s1752 + $0x8] sm:$0xf]
        %v1756 = vld [vmem:[%s1752 + $0xc] sm:$0xf]
        %v1757 = vld [vmem:[%s1752 + $0x10] sm:$0xf]
        %v1758 = vld [vmem:[%s1752 + $0x14] sm:$0xf]
        %v1759 = vld [vmem:[%s1752 + $0x18] sm:$0xf]
        %v1760 = vld [vmem:[%s1752 + $0x1c] sm:$0xf]
        %v1761 = vld [vmem:[%s1752 + $0x20] sm:$0xf]
        %v1762 = vld [vmem:[%s1752 + $0x24] sm:$0xf]
        %v1763 = vld [vmem:[%s1752 + $0x28] sm:$0xf]
        %v1764 = vld [vmem:[%s1752 + $0x2c] sm:$0xf]
        %v1765 = vld [vmem:[%s1752 + $0x30] sm:$0xf]
        %v1766 = vld [vmem:[%s1752 + $0x34] sm:$0xf]
        %v1767 = vld [vmem:[%s1752 + $0x38] sm:$0xf]
        %v1768 = vld [vmem:[%s1752 + $0x3c] sm:$0xf]
        %v1785 = vunpack.c.l.b16 %v1753
        %v1786 = vunpack.c.l.b16 %v1754
        %v1787 = vunpack.c.l.b16 %v1755
        %v1788 = vunpack.c.l.b16 %v1756
        %v1789 = vunpack.c.l.b16 %v1757
        %v1790 = vunpack.c.l.b16 %v1758
        %v1791 = vunpack.c.l.b16 %v1759
        %v1792 = vunpack.c.l.b16 %v1760
        %v1793 = vunpack.c.l.b16 %v1761
        %v1794 = vunpack.c.l.b16 %v1762
        %v1795 = vunpack.c.l.b16 %v1763
        %v1796 = vunpack.c.l.b16 %v1764
        %v1797 = vunpack.c.l.b16 %v1765
        %v1798 = vunpack.c.l.b16 %v1766
        %v1799 = vunpack.c.l.b16 %v1767
        %v1800 = vunpack.c.l.b16 %v1768
        %v1801 = vpack.c.b16 %v1786, %v1785
        %v1802 = vpack.c.b16 %v1788, %v1787
        %v1803 = vpack.c.b16 %v1790, %v1789
        %v1804 = vpack.c.b16 %v1792, %v1791
        %v1805 = vpack.c.b16 %v1794, %v1793
        %v1806 = vpack.c.b16 %v1796, %v1795
        %v1807 = vpack.c.b16 %v1798, %v1797
        %v1808 = vpack.c.b16 %v1800, %v1799
        %1817 = vmatprep.subr.bf16.mxu0 0
        %1818 = vmatpush1.bf16.msra.mxu0 %v1801
        %1819 = vmatprep.subr.bf16.mxu0 0
        %1820 = vmatpush1.bf16.msra.mxu0 %v1802
        %1821 = vmatprep.subr.bf16.mxu0 0
        %1822 = vmatpush1.bf16.msra.mxu0 %v1803
        %1823 = vmatprep.subr.bf16.mxu0 0
        %1824 = vmatpush1.bf16.msra.mxu0 %v1804
        %1825 = vmatprep.subr.bf16.mxu0 0
        %1826 = vmatpush1.bf16.msra.mxu0 %v1805
        %1827 = vmatprep.subr.bf16.mxu0 0
        %1828 = vmatpush1.bf16.msra.mxu0 %v1806
        %1829 = vmatprep.subr.bf16.mxu0 0
        %1830 = vmatpush1.bf16.msra.mxu0 %v1807
        %1831 = vmatprep.subr.bf16.mxu0 0
        %1832 = vmatpush1.bf16.msra.mxu0 %v1808
        %1833 = vmatprep.subr.bf16.mxu0 0
        %1834 = vmatpush1.bf16.msra.mxu0 0
        %1835 = vmatprep.subr.bf16.mxu0 0
        %1836 = vmatpush1.bf16.msra.mxu0 0
        %1837 = vmatprep.subr.bf16.mxu0 0
        %1838 = vmatpush1.bf16.msra.mxu0 0
        %1839 = vmatprep.subr.bf16.mxu0 0
        %1840 = vmatpush1.bf16.msra.mxu0 0
        %1841 = vmatprep.subr.bf16.mxu0 0
        %1842 = vmatpush1.bf16.msra.mxu0 0
        %1843 = vmatprep.subr.bf16.mxu0 0
        %1844 = vmatpush1.bf16.msra.mxu0 0
        %1845 = vmatprep.subr.bf16.mxu0 0
        %1846 = vmatpush1.bf16.msra.mxu0 0
        %1847 = vmatprep.subr.bf16.mxu0 0
        %1848 = vmatpush1.bf16.msra.mxu0 0
        %1849 = vmatprep.mubr.bf16.mxu0 0
        %1850 = vmatmul.mubr.bf16.gmra.mrb[0].mxu0 %v1529
        %v1851 = vpop.f32.mrb[0].mxu0
        %v1852 = vadd.f32 0.0, %v1851
        %v1853 = vpop.f32.mrb[0].mxu0
        %v1854 = vpop.f32.mrb[0].mxu0
        %v1855 = vadd.f32 0.0, %v1854
        %v1856 = vpop.f32.mrb[0].mxu0
        %1857 = vmatprep.mubr.bf16.mxu0 0
        %1858 = vmatmul.mubr.bf16.gmra.mrb[0].mxu0 %v1530
        %v1859 = vpop.f32.mrb[0].mxu0
        %v1860 = vadd.f32 0.0, %v1859
        %v1861 = vpop.f32.mrb[0].mxu0
        %v1862 = vpop.f32.mrb[0].mxu0
        %v1863 = vadd.f32 0.0, %v1862
        %v1864 = vpop.f32.mrb[0].mxu0
        %1865 = vmatprep.mubr.bf16.mxu0 0
        %1866 = vmatmul.mubr.bf16.gmra.mrb[0].mxu0 %v1531
        %v1867 = vpop.f32.mrb[0].mxu0
        %v1868 = vadd.f32 0.0, %v1867
        %v1869 = vpop.f32.mrb[0].mxu0
        %v1870 = vpop.f32.mrb[0].mxu0
        %v1871 = vadd.f32 0.0, %v1870
        %v1872 = vpop.f32.mrb[0].mxu0
        %1873 = vmatprep.mubr.bf16.mxu0 0
        %1874 = vmatmul.mubr.bf16.gmra.mrb[0].mxu0 %v1532
        %v1875 = vpop.f32.mrb[0].mxu0
        %v1876 = vadd.f32 0.0, %v1875
        %v1877 = vpop.f32.mrb[0].mxu0
        %v1878 = vpop.f32.mrb[0].mxu0
        %v1879 = vadd.f32 0.0, %v1878
        %v1880 = vpop.f32.mrb[0].mxu0
        %1881 = vmatprep.mubr.bf16.mxu0 0
        %1882 = vmatmul.mubr.bf16.gmra.mrb[0].mxu0 %v1533
        %v1883 = vpop.f32.mrb[0].mxu0
        %v1884 = vadd.f32 0.0, %v1883
        %v1885 = vpop.f32.mrb[0].mxu0
        %v1886 = vpop.f32.mrb[0].mxu0
        %v1887 = vadd.f32 0.0, %v1886
        %v1888 = vpop.f32.mrb[0].mxu0
        %1889 = vmatprep.mubr.bf16.mxu0 0
        %1890 = vmatmul.mubr.bf16.gmra.mrb[0].mxu0 %v1534
        %v1891 = vpop.f32.mrb[0].mxu0
        %v1892 = vadd.f32 0.0, %v1891
        %v1893 = vpop.f32.mrb[0].mxu0
        %v1894 = vpop.f32.mrb[0].mxu0
        %v1895 = vadd.f32 0.0, %v1894
        %v1896 = vpop.f32.mrb[0].mxu0
        %1897 = vdwg.mxu0
        %v1898 = vadd.f32 %v1740, %v1852
        %v1899 = vadd.f32 %v1741, %v1855
        %v1900 = vadd.f32 %v1742, %v1860
        %v1901 = vadd.f32 %v1743, %v1863
        %v1902 = vadd.f32 %v1744, %v1868
        %v1903 = vadd.f32 %v1745, %v1871
        %v1904 = vadd.f32 %v1746, %v1876
        %v1905 = vadd.f32 %v1747, %v1879
        %v1906 = vadd.f32 %v1748, %v1884
        %v1907 = vadd.f32 %v1749, %v1887
        %v1908 = vadd.f32 %v1750, %v1892
        %v1909 = vadd.f32 %v1751, %v1895
        %v1910 = vld [vmem:[#allocation2 + $0x10] sm:$0xff]
        %v1911 = vld [vmem:[#allocation2 + $0x18] sm:$0xff]
        %v1912 = vld [vmem:[#allocation2 + $0x20] sm:$0xff]
        %v1913 = vld [vmem:[#allocation2 + $0x28] sm:$0xff]
        %v1914 = vld [vmem:[#allocation2 + $0x30] sm:$0xff]
        %v1915 = vld [vmem:[#allocation2 + $0x38] sm:$0xff]
        %v1916 = vld [vmem:[#allocation2 + $0x40] sm:$0x1]
        %s1917 = scalar_lea.vmem [#allocation9], 320
        %v1918 = vld [vmem:[%s1917] sm:$0xf]
        %v1919 = vld [vmem:[%s1917 + $0x4] sm:$0xf]
        %v1920 = vld [vmem:[%s1917 + $0x8] sm:$0xf]
        %v1921 = vld [vmem:[%s1917 + $0xc] sm:$0xf]
        %v1922 = vld [vmem:[%s1917 + $0x10] sm:$0xf]
        %v1923 = vld [vmem:[%s1917 + $0x14] sm:$0xf]
        %v1924 = vld [vmem:[%s1917 + $0x18] sm:$0xf]
        %v1925 = vld [vmem:[%s1917 + $0x1c] sm:$0xf]
        %v1926 = vld [vmem:[%s1917 + $0x20] sm:$0xf]
        %v1927 = vld [vmem:[%s1917 + $0x24] sm:$0xf]
        %v1928 = vld [vmem:[%s1917 + $0x28] sm:$0xf]
        %v1929 = vld [vmem:[%s1917 + $0x2c] sm:$0xf]
        %v1930 = vld [vmem:[%s1917 + $0x30] sm:$0xf]
        %v1931 = vld [vmem:[%s1917 + $0x34] sm:$0xf]
        %v1932 = vld [vmem:[%s1917 + $0x38] sm:$0xf]
        %v1933 = vld [vmem:[%s1917 + $0x3c] sm:$0xf]
        %vm1934 = vsmask.f32 7424
        %v1936 = vshrl.u32 %v1910, 16
        %v1938 = vshll.u32 %v1910, 16
        %v1940 = vrot.slane %v1938, 1
        %v1941 = vor.u32 %v1936, %v1940
        %v1943 = vshll.u32 %v1911, 16
        %v1945 = vrot.slane %v1943, 1
        %v1946 = vsel %vm1934, %v1941, %v1945
        %v1947 = vshrl.u32 %v1911, 16
        %v1949 = vor.u32 %v1947, %v1945
        %v1951 = vshll.u32 %v1912, 16
        %v1953 = vrot.slane %v1951, 1
        %v1954 = vsel %vm1934, %v1949, %v1953
        %v1955 = vshrl.u32 %v1912, 16
        %v1957 = vor.u32 %v1955, %v1953
        %v1959 = vshll.u32 %v1913, 16
        %v1961 = vrot.slane %v1959, 1
        %v1962 = vsel %vm1934, %v1957, %v1961
        %v1963 = vshrl.u32 %v1913, 16
        %v1965 = vor.u32 %v1963, %v1961
        %v1967 = vshll.u32 %v1914, 16
        %v1969 = vrot.slane %v1967, 1
        %v1970 = vsel %vm1934, %v1965, %v1969
        %v1971 = vshrl.u32 %v1914, 16
        %v1973 = vor.u32 %v1971, %v1969
        %v1975 = vshll.u32 %v1915, 16
        %v1977 = vrot.slane %v1975, 1
        %v1978 = vsel %vm1934, %v1973, %v1977
        %v1979 = vshrl.u32 %v1915, 16
        %v1981 = vor.u32 %v1979, %v1977
        %v1983 = vshll.u32 %v1916, 16
        %v1985 = vrot.slane %v1983, 1
        %v1986 = vsel %vm1934, %v1981, %v1985
        %v2009 = vunpack.c.l.b16 %v1918
        %v2010 = vunpack.c.l.b16 %v1919
        %v2011 = vunpack.c.l.b16 %v1920
        %v2012 = vunpack.c.l.b16 %v1921
        %v2013 = vunpack.c.l.b16 %v1922
        %v2014 = vunpack.c.l.b16 %v1923
        %v2015 = vunpack.c.l.b16 %v1924
        %v2016 = vunpack.c.l.b16 %v1925
        %v2017 = vunpack.c.l.b16 %v1926
        %v2018 = vunpack.c.l.b16 %v1927
        %v2019 = vunpack.c.l.b16 %v1928
        %v2020 = vunpack.c.l.b16 %v1929
        %v2021 = vunpack.c.l.b16 %v1930
        %v2022 = vunpack.c.l.b16 %v1931
        %v2023 = vunpack.c.l.b16 %v1932
        %v2024 = vunpack.c.l.b16 %v1933
        %v2025 = vpack.c.b16 %v2010, %v2009
        %v2026 = vpack.c.b16 %v2012, %v2011
        %v2027 = vpack.c.b16 %v2014, %v2013
        %v2028 = vpack.c.b16 %v2016, %v2015
        %v2029 = vpack.c.b16 %v2018, %v2017
        %v2030 = vpack.c.b16 %v2020, %v2019
        %v2031 = vpack.c.b16 %v2022, %v2021
        %v2032 = vpack.c.b16 %v2024, %v2023
        %2041 = vmatprep.subr.bf16.mxu0 0
        %2042 = vmatpush1.bf16.msra.mxu0 %v2025
        %2043 = vmatprep.subr.bf16.mxu0 0
        %2044 = vmatpush1.bf16.msra.mxu0 %v2026
        %2045 = vmatprep.subr.bf16.mxu0 0
        %2046 = vmatpush1.bf16.msra.mxu0 %v2027
        %2047 = vmatprep.subr.bf16.mxu0 0
        %2048 = vmatpush1.bf16.msra.mxu0 %v2028
        %2049 = vmatprep.subr.bf16.mxu0 0
        %2050 = vmatpush1.bf16.msra.mxu0 %v2029
        %2051 = vmatprep.subr.bf16.mxu0 0
        %2052 = vmatpush1.bf16.msra.mxu0 %v2030
        %2053 = vmatprep.subr.bf16.mxu0 0
        %2054 = vmatpush1.bf16.msra.mxu0 %v2031
        %2055 = vmatprep.subr.bf16.mxu0 0
        %2056 = vmatpush1.bf16.msra.mxu0 %v2032
        %2057 = vmatprep.subr.bf16.mxu0 0
        %2058 = vmatpush1.bf16.msra.mxu0 0
        %2059 = vmatprep.subr.bf16.mxu0 0
        %2060 = vmatpush1.bf16.msra.mxu0 0
        %2061 = vmatprep.subr.bf16.mxu0 0
        %2062 = vmatpush1.bf16.msra.mxu0 0
        %2063 = vmatprep.subr.bf16.mxu0 0
        %2064 = vmatpush1.bf16.msra.mxu0 0
        %2065 = vmatprep.subr.bf16.mxu0 0
        %2066 = vmatpush1.bf16.msra.mxu0 0
        %2067 = vmatprep.subr.bf16.mxu0 0
        %2068 = vmatpush1.bf16.msra.mxu0 0
        %2069 = vmatprep.subr.bf16.mxu0 0
        %2070 = vmatpush1.bf16.msra.mxu0 0
        %2071 = vmatprep.subr.bf16.mxu0 0
        %2072 = vmatpush1.bf16.msra.mxu0 0
        %2073 = vmatprep.mubr.bf16.mxu0 0
        %2074 = vmatmul.mubr.bf16.gmra.mrb[0].mxu0 %v1946
        %v2075 = vpop.f32.mrb[0].mxu0
        %v2076 = vadd.f32 0.0, %v2075
        %v2077 = vpop.f32.mrb[0].mxu0
        %v2078 = vpop.f32.mrb[0].mxu0
        %v2079 = vadd.f32 0.0, %v2078
        %v2080 = vpop.f32.mrb[0].mxu0
        %2081 = vmatprep.mubr.bf16.mxu0 0
        %2082 = vmatmul.mubr.bf16.gmra.mrb[0].mxu0 %v1954
        %v2083 = vpop.f32.mrb[0].mxu0
        %v2084 = vadd.f32 0.0, %v2083
        %v2085 = vpop.f32.mrb[0].mxu0
        %v2086 = vpop.f32.mrb[0].mxu0
        %v2087 = vadd.f32 0.0, %v2086
        %v2088 = vpop.f32.mrb[0].mxu0
        %2089 = vmatprep.mubr.bf16.mxu0 0
        %2090 = vmatmul.mubr.bf16.gmra.mrb[0].mxu0 %v1962
        %v2091 = vpop.f32.mrb[0].mxu0
        %v2092 = vadd.f32 0.0, %v2091
        %v2093 = vpop.f32.mrb[0].mxu0
        %v2094 = vpop.f32.mrb[0].mxu0
        %v2095 = vadd.f32 0.0, %v2094
        %v2096 = vpop.f32.mrb[0].mxu0
        %2097 = vmatprep.mubr.bf16.mxu0 0
        %2098 = vmatmul.mubr.bf16.gmra.mrb[0].mxu0 %v1970
        %v2099 = vpop.f32.mrb[0].mxu0
        %v2100 = vadd.f32 0.0, %v2099
        %v2101 = vpop.f32.mrb[0].mxu0
        %v2102 = vpop.f32.mrb[0].mxu0
        %v2103 = vadd.f32 0.0, %v2102
        %v2104 = vpop.f32.mrb[0].mxu0
        %2105 = vmatprep.mubr.bf16.mxu0 0
        %2106 = vmatmul.mubr.bf16.gmra.mrb[0].mxu0 %v1978
        %v2107 = vpop.f32.mrb[0].mxu0
        %v2108 = vadd.f32 0.0, %v2107
        %v2109 = vpop.f32.mrb[0].mxu0
        %v2110 = vpop.f32.mrb[0].mxu0
        %v2111 = vadd.f32 0.0, %v2110
        %v2112 = vpop.f32.mrb[0].mxu0
        %2113 = vmatprep.mubr.bf16.mxu0 0
        %2114 = vmatmul.mubr.bf16.gmra.mrb[0].mxu0 %v1986
        %v2115 = vpop.f32.mrb[0].mxu0
        %v2116 = vadd.f32 0.0, %v2115
        %v2117 = vpop.f32.mrb[0].mxu0
        %v2118 = vpop.f32.mrb[0].mxu0
        %v2119 = vadd.f32 0.0, %v2118
        %v2120 = vpop.f32.mrb[0].mxu0
        %2121 = vdwg.mxu0
        %v2122 = vadd.f32 %v1898, %v2076
        %v2123 = vadd.f32 %v1899, %v2079
        %v2124 = vadd.f32 %v1900, %v2084
        %v2125 = vadd.f32 %v1901, %v2087
        %v2126 = vadd.f32 %v1902, %v2092
        %v2127 = vadd.f32 %v1903, %v2095
        %v2128 = vadd.f32 %v1904, %v2100
        %v2129 = vadd.f32 %v1905, %v2103
        %v2130 = vadd.f32 %v1906, %v2108
        %v2131 = vadd.f32 %v1907, %v2111
        %v2132 = vadd.f32 %v1908, %v2116
        %v2133 = vadd.f32 %v1909, %v2119
        %v2134 = vld [vmem:[#allocation2 + $0x18] sm:$0xf8]
        %v2135 = vld [vmem:[#allocation2 + $0x20] sm:$0xff]
        %v2136 = vld [vmem:[#allocation2 + $0x28] sm:$0xff]
        %v2137 = vld [vmem:[#allocation2 + $0x30] sm:$0xff]
        %v2138 = vld [vmem:[#allocation2 + $0x38] sm:$0xff]
        %v2139 = vld [vmem:[#allocation2 + $0x40] sm:$0xff]
        %v2140 = vld [vmem:[#allocation2 + $0x48] sm:$0xf]
        %s2141 = scalar_lea.vmem [#allocation9], 384
        %v2142 = vld [vmem:[%s2141] sm:$0xf]
        %v2143 = vld [vmem:[%s2141 + $0x4] sm:$0xf]
        %v2144 = vld [vmem:[%s2141 + $0x8] sm:$0xf]
        %v2145 = vld [vmem:[%s2141 + $0xc] sm:$0xf]
        %v2146 = vld [vmem:[%s2141 + $0x10] sm:$0xf]
        %v2147 = vld [vmem:[%s2141 + $0x14] sm:$0xf]
        %v2148 = vld [vmem:[%s2141 + $0x18] sm:$0xf]
        %v2149 = vld [vmem:[%s2141 + $0x1c] sm:$0xf]
        %v2150 = vld [vmem:[%s2141 + $0x20] sm:$0xf]
        %v2151 = vld [vmem:[%s2141 + $0x24] sm:$0xf]
        %v2152 = vld [vmem:[%s2141 + $0x28] sm:$0xf]
        %v2153 = vld [vmem:[%s2141 + $0x2c] sm:$0xf]
        %v2154 = vld [vmem:[%s2141 + $0x30] sm:$0xf]
        %v2155 = vld [vmem:[%s2141 + $0x34] sm:$0xf]
        %v2156 = vld [vmem:[%s2141 + $0x38] sm:$0xf]
        %v2157 = vld [vmem:[%s2141 + $0x3c] sm:$0xf]
        %v2159 = vshrl.u32 %v2134, 16
        %v2161 = vrot.slane %v2159, 3
        %v2162 = vshll.u32 %v2134, 16
        %v2164 = vrot.slane %v2162, 4
        %v2165 = vor.u32 %v2161, %v2164
        %v2167 = vshrl.u32 %v2135, 16
        %v2169 = vrot.slane %v2167, 3
        %v2170 = vshll.u32 %v2135, 16
        %v2172 = vrot.slane %v2170, 4
        %v2173 = vor.u32 %v2169, %v2172
        %v2174 = vsel %vm1127, %v2165, %v2173
        %v2176 = vshrl.u32 %v2136, 16
        %v2178 = vrot.slane %v2176, 3
        %v2179 = vshll.u32 %v2136, 16
        %v2181 = vrot.slane %v2179, 4
        %v2182 = vor.u32 %v2178, %v2181
        %v2183 = vsel %vm1127, %v2173, %v2182
        %v2185 = vshrl.u32 %v2137, 16
        %v2187 = vrot.slane %v2185, 3
        %v2188 = vshll.u32 %v2137, 16
        %v2190 = vrot.slane %v2188, 4
        %v2191 = vor.u32 %v2187, %v2190
        %v2192 = vsel %vm1127, %v2182, %v2191
        %v2194 = vshrl.u32 %v2138, 16
        %v2196 = vrot.slane %v2194, 3
        %v2197 = vshll.u32 %v2138, 16
        %v2199 = vrot.slane %v2197, 4
        %v2200 = vor.u32 %v2196, %v2199
        %v2201 = vsel %vm1127, %v2191, %v2200
        %v2203 = vshrl.u32 %v2139, 16
        %v2205 = vrot.slane %v2203, 3
        %v2206 = vshll.u32 %v2139, 16
        %v2208 = vrot.slane %v2206, 4
        %v2209 = vor.u32 %v2205, %v2208
        %v2210 = vsel %vm1127, %v2200, %v2209
        %v2212 = vshrl.u32 %v2140, 16
        %v2214 = vrot.slane %v2212, 3
        %v2215 = vshll.u32 %v2140, 16
        %v2217 = vrot.slane %v2215, 4
        %v2218 = vor.u32 %v2214, %v2217
        %v2219 = vsel %vm1127, %v2209, %v2218
        %v2242 = vunpack.c.l.b16 %v2142
        %v2243 = vunpack.c.l.b16 %v2143
        %v2244 = vunpack.c.l.b16 %v2144
        %v2245 = vunpack.c.l.b16 %v2145
        %v2246 = vunpack.c.l.b16 %v2146
        %v2247 = vunpack.c.l.b16 %v2147
        %v2248 = vunpack.c.l.b16 %v2148
        %v2249 = vunpack.c.l.b16 %v2149
        %v2250 = vunpack.c.l.b16 %v2150
        %v2251 = vunpack.c.l.b16 %v2151
        %v2252 = vunpack.c.l.b16 %v2152
        %v2253 = vunpack.c.l.b16 %v2153
        %v2254 = vunpack.c.l.b16 %v2154
        %v2255 = vunpack.c.l.b16 %v2155
        %v2256 = vunpack.c.l.b16 %v2156
        %v2257 = vunpack.c.l.b16 %v2157
        %v2258 = vpack.c.b16 %v2243, %v2242
        %v2259 = vpack.c.b16 %v2245, %v2244
        %v2260 = vpack.c.b16 %v2247, %v2246
        %v2261 = vpack.c.b16 %v2249, %v2248
        %v2262 = vpack.c.b16 %v2251, %v2250
        %v2263 = vpack.c.b16 %v2253, %v2252
        %v2264 = vpack.c.b16 %v2255, %v2254
        %v2265 = vpack.c.b16 %v2257, %v2256
        %2274 = vmatprep.subr.bf16.mxu0 0
        %2275 = vmatpush1.bf16.msra.mxu0 %v2258
        %2276 = vmatprep.subr.bf16.mxu0 0
        %2277 = vmatpush1.bf16.msra.mxu0 %v2259
        %2278 = vmatprep.subr.bf16.mxu0 0
        %2279 = vmatpush1.bf16.msra.mxu0 %v2260
        %2280 = vmatprep.subr.bf16.mxu0 0
        %2281 = vmatpush1.bf16.msra.mxu0 %v2261
        %2282 = vmatprep.subr.bf16.mxu0 0
        %2283 = vmatpush1.bf16.msra.mxu0 %v2262
        %2284 = vmatprep.subr.bf16.mxu0 0
        %2285 = vmatpush1.bf16.msra.mxu0 %v2263
        %2286 = vmatprep.subr.bf16.mxu0 0
        %2287 = vmatpush1.bf16.msra.mxu0 %v2264
        %2288 = vmatprep.subr.bf16.mxu0 0
        %2289 = vmatpush1.bf16.msra.mxu0 %v2265
        %2290 = vmatprep.subr.bf16.mxu0 0
        %2291 = vmatpush1.bf16.msra.mxu0 0
        %2292 = vmatprep.subr.bf16.mxu0 0
        %2293 = vmatpush1.bf16.msra.mxu0 0
        %2294 = vmatprep.subr.bf16.mxu0 0
        %2295 = vmatpush1.bf16.msra.mxu0 0
        %2296 = vmatprep.subr.bf16.mxu0 0
        %2297 = vmatpush1.bf16.msra.mxu0 0
        %2298 = vmatprep.subr.bf16.mxu0 0
        %2299 = vmatpush1.bf16.msra.mxu0 0
        %2300 = vmatprep.subr.bf16.mxu0 0
        %2301 = vmatpush1.bf16.msra.mxu0 0
        %2302 = vmatprep.subr.bf16.mxu0 0
        %2303 = vmatpush1.bf16.msra.mxu0 0
        %2304 = vmatprep.subr.bf16.mxu0 0
        %2305 = vmatpush1.bf16.msra.mxu0 0
        %2306 = vmatprep.mubr.bf16.mxu0 0
        %2307 = vmatmul.mubr.bf16.gmra.mrb[0].mxu0 %v2174
        %v2308 = vpop.f32.mrb[0].mxu0
        %v2309 = vadd.f32 0.0, %v2308
        %v2310 = vpop.f32.mrb[0].mxu0
        %v2311 = vpop.f32.mrb[0].mxu0
        %v2312 = vadd.f32 0.0, %v2311
        %v2313 = vpop.f32.mrb[0].mxu0
        %2314 = vmatprep.mubr.bf16.mxu0 0
        %2315 = vmatmul.mubr.bf16.gmra.mrb[0].mxu0 %v2183
        %v2316 = vpop.f32.mrb[0].mxu0
        %v2317 = vadd.f32 0.0, %v2316
        %v2318 = vpop.f32.mrb[0].mxu0
        %v2319 = vpop.f32.mrb[0].mxu0
        %v2320 = vadd.f32 0.0, %v2319
        %v2321 = vpop.f32.mrb[0].mxu0
        %2322 = vmatprep.mubr.bf16.mxu0 0
        %2323 = vmatmul.mubr.bf16.gmra.mrb[0].mxu0 %v2192
        %v2324 = vpop.f32.mrb[0].mxu0
        %v2325 = vadd.f32 0.0, %v2324
        %v2326 = vpop.f32.mrb[0].mxu0
        %v2327 = vpop.f32.mrb[0].mxu0
        %v2328 = vadd.f32 0.0, %v2327
        %v2329 = vpop.f32.mrb[0].mxu0
        %2330 = vmatprep.mubr.bf16.mxu0 0
        %2331 = vmatmul.mubr.bf16.gmra.mrb[0].mxu0 %v2201
        %v2332 = vpop.f32.mrb[0].mxu0
        %v2333 = vadd.f32 0.0, %v2332
        %v2334 = vpop.f32.mrb[0].mxu0
        %v2335 = vpop.f32.mrb[0].mxu0
        %v2336 = vadd.f32 0.0, %v2335
        %v2337 = vpop.f32.mrb[0].mxu0
        %2338 = vmatprep.mubr.bf16.mxu0 0
        %2339 = vmatmul.mubr.bf16.gmra.mrb[0].mxu0 %v2210
        %v2340 = vpop.f32.mrb[0].mxu0
        %v2341 = vadd.f32 0.0, %v2340
        %v2342 = vpop.f32.mrb[0].mxu0
        %v2343 = vpop.f32.mrb[0].mxu0
        %v2344 = vadd.f32 0.0, %v2343
        %v2345 = vpop.f32.mrb[0].mxu0
        %2346 = vmatprep.mubr.bf16.mxu0 0
        %2347 = vmatmul.mubr.bf16.gmra.mrb[0].mxu0 %v2219
        %v2348 = vpop.f32.mrb[0].mxu0
        %v2349 = vadd.f32 0.0, %v2348
        %v2350 = vpop.f32.mrb[0].mxu0
        %v2351 = vpop.f32.mrb[0].mxu0
        %v2352 = vadd.f32 0.0, %v2351
        %v2353 = vpop.f32.mrb[0].mxu0
        %2354 = vdwg.mxu0
        %v2355 = vadd.f32 %v2122, %v2309
        %v2356 = vadd.f32 %v2123, %v2312
        %v2357 = vadd.f32 %v2124, %v2317
        %v2358 = vadd.f32 %v2125, %v2320
        %v2359 = vadd.f32 %v2126, %v2325
        %v2360 = vadd.f32 %v2127, %v2328
        %v2361 = vadd.f32 %v2128, %v2333
        %v2362 = vadd.f32 %v2129, %v2336
        %v2363 = vadd.f32 %v2130, %v2341
        %v2364 = vadd.f32 %v2131, %v2344
        %v2365 = vadd.f32 %v2132, %v2349
        %v2366 = vadd.f32 %v2133, %v2352
        %v2367 = vld [vmem:[#allocation2 + $0x18] sm:$0xf0]
        %s2368 = scalar_lea.vmem [#allocation9], 448
        %v2369 = vld [vmem:[%s2368] sm:$0xf]
        %v2370 = vld [vmem:[%s2368 + $0x4] sm:$0xf]
        %v2371 = vld [vmem:[%s2368 + $0x8] sm:$0xf]
        %v2372 = vld [vmem:[%s2368 + $0xc] sm:$0xf]
        %v2373 = vld [vmem:[%s2368 + $0x10] sm:$0xf]
        %v2374 = vld [vmem:[%s2368 + $0x14] sm:$0xf]
        %v2375 = vld [vmem:[%s2368 + $0x18] sm:$0xf]
        %v2376 = vld [vmem:[%s2368 + $0x1c] sm:$0xf]
        %v2377 = vld [vmem:[%s2368 + $0x20] sm:$0xf]
        %v2378 = vld [vmem:[%s2368 + $0x24] sm:$0xf]
        %v2379 = vld [vmem:[%s2368 + $0x28] sm:$0xf]
        %v2380 = vld [vmem:[%s2368 + $0x2c] sm:$0xf]
        %v2381 = vld [vmem:[%s2368 + $0x30] sm:$0xf]
        %v2382 = vld [vmem:[%s2368 + $0x34] sm:$0xf]
        %v2383 = vld [vmem:[%s2368 + $0x38] sm:$0xf]
        %v2384 = vld [vmem:[%s2368 + $0x3c] sm:$0xf]
        %v2392 = vrot.slane %v2367, 4
        %v2393 = vrot.slane %v2135, 4
        %v2394 = vsel %vm978, %v2392, %v2393
        %v2395 = vrot.slane %v2136, 4
        %v2396 = vsel %vm978, %v2393, %v2395
        %v2397 = vrot.slane %v2137, 4
        %v2398 = vsel %vm978, %v2395, %v2397
        %v2399 = vrot.slane %v2138, 4
        %v2400 = vsel %vm978, %v2397, %v2399
        %v2401 = vrot.slane %v2139, 4
        %v2402 = vsel %vm978, %v2399, %v2401
        %v2403 = vrot.slane %v2140, 4
        %v2404 = vsel %vm978, %v2401, %v2403
        %v2427 = vunpack.c.l.b16 %v2369
        %v2428 = vunpack.c.l.b16 %v2370
        %v2429 = vunpack.c.l.b16 %v2371
        %v2430 = vunpack.c.l.b16 %v2372
        %v2431 = vunpack.c.l.b16 %v2373
        %v2432 = vunpack.c.l.b16 %v2374
        %v2433 = vunpack.c.l.b16 %v2375
        %v2434 = vunpack.c.l.b16 %v2376
        %v2435 = vunpack.c.l.b16 %v2377
        %v2436 = vunpack.c.l.b16 %v2378
        %v2437 = vunpack.c.l.b16 %v2379
        %v2438 = vunpack.c.l.b16 %v2380
        %v2439 = vunpack.c.l.b16 %v2381
        %v2440 = vunpack.c.l.b16 %v2382
        %v2441 = vunpack.c.l.b16 %v2383
        %v2442 = vunpack.c.l.b16 %v2384
        %v2443 = vpack.c.b16 %v2428, %v2427
        %v2444 = vpack.c.b16 %v2430, %v2429
        %v2445 = vpack.c.b16 %v2432, %v2431
        %v2446 = vpack.c.b16 %v2434, %v2433
        %v2447 = vpack.c.b16 %v2436, %v2435
        %v2448 = vpack.c.b16 %v2438, %v2437
        %v2449 = vpack.c.b16 %v2440, %v2439
        %v2450 = vpack.c.b16 %v2442, %v2441
        %2459 = vmatprep.subr.bf16.mxu0 0
        %2460 = vmatpush1.bf16.msra.mxu0 %v2443
        %2461 = vmatprep.subr.bf16.mxu0 0
        %2462 = vmatpush1.bf16.msra.mxu0 %v2444
        %2463 = vmatprep.subr.bf16.mxu0 0
        %2464 = vmatpush1.bf16.msra.mxu0 %v2445
        %2465 = vmatprep.subr.bf16.mxu0 0
        %2466 = vmatpush1.bf16.msra.mxu0 %v2446
        %2467 = vmatprep.subr.bf16.mxu0 0
        %2468 = vmatpush1.bf16.msra.mxu0 %v2447
        %2469 = vmatprep.subr.bf16.mxu0 0
        %2470 = vmatpush1.bf16.msra.mxu0 %v2448
        %2471 = vmatprep.subr.bf16.mxu0 0
        %2472 = vmatpush1.bf16.msra.mxu0 %v2449
        %2473 = vmatprep.subr.bf16.mxu0 0
        %2474 = vmatpush1.bf16.msra.mxu0 %v2450
        %2475 = vmatprep.subr.bf16.mxu0 0
        %2476 = vmatpush1.bf16.msra.mxu0 0
        %2477 = vmatprep.subr.bf16.mxu0 0
        %2478 = vmatpush1.bf16.msra.mxu0 0
        %2479 = vmatprep.subr.bf16.mxu0 0
        %2480 = vmatpush1.bf16.msra.mxu0 0
        %2481 = vmatprep.subr.bf16.mxu0 0
        %2482 = vmatpush1.bf16.msra.mxu0 0
        %2483 = vmatprep.subr.bf16.mxu0 0
        %2484 = vmatpush1.bf16.msra.mxu0 0
        %2485 = vmatprep.subr.bf16.mxu0 0
        %2486 = vmatpush1.bf16.msra.mxu0 0
        %2487 = vmatprep.subr.bf16.mxu0 0
        %2488 = vmatpush1.bf16.msra.mxu0 0
        %2489 = vmatprep.subr.bf16.mxu0 0
        %2490 = vmatpush1.bf16.msra.mxu0 0
        %2491 = vmatprep.mubr.bf16.mxu0 0
        %2492 = vmatmul.mubr.bf16.gmra.mrb[0].mxu0 %v2394
        %v2493 = vpop.f32.mrb[0].mxu0
        %v2494 = vadd.f32 0.0, %v2493
        %v2495 = vpop.f32.mrb[0].mxu0
        %v2496 = vpop.f32.mrb[0].mxu0
        %v2497 = vadd.f32 0.0, %v2496
        %v2498 = vpop.f32.mrb[0].mxu0
        %2499 = vmatprep.mubr.bf16.mxu0 0
        %2500 = vmatmul.mubr.bf16.gmra.mrb[0].mxu0 %v2396
        %v2501 = vpop.f32.mrb[0].mxu0
        %v2502 = vadd.f32 0.0, %v2501
        %v2503 = vpop.f32.mrb[0].mxu0
        %v2504 = vpop.f32.mrb[0].mxu0
        %v2505 = vadd.f32 0.0, %v2504
        %v2506 = vpop.f32.mrb[0].mxu0
        %2507 = vmatprep.mubr.bf16.mxu0 0
        %2508 = vmatmul.mubr.bf16.gmra.mrb[0].mxu0 %v2398
        %v2509 = vpop.f32.mrb[0].mxu0
        %v2510 = vadd.f32 0.0, %v2509
        %v2511 = vpop.f32.mrb[0].mxu0
        %v2512 = vpop.f32.mrb[0].mxu0
        %v2513 = vadd.f32 0.0, %v2512
        %v2514 = vpop.f32.mrb[0].mxu0
        %2515 = vmatprep.mubr.bf16.mxu0 0
        %2516 = vmatmul.mubr.bf16.gmra.mrb[0].mxu0 %v2400
        %v2517 = vpop.f32.mrb[0].mxu0
        %v2518 = vadd.f32 0.0, %v2517
        %v2519 = vpop.f32.mrb[0].mxu0
        %v2520 = vpop.f32.mrb[0].mxu0
        %v2521 = vadd.f32 0.0, %v2520
        %v2522 = vpop.f32.mrb[0].mxu0
        %2523 = vmatprep.mubr.bf16.mxu0 0
        %2524 = vmatmul.mubr.bf16.gmra.mrb[0].mxu0 %v2402
        %v2525 = vpop.f32.mrb[0].mxu0
        %v2526 = vadd.f32 0.0, %v2525
        %v2527 = vpop.f32.mrb[0].mxu0
        %v2528 = vpop.f32.mrb[0].mxu0
        %v2529 = vadd.f32 0.0, %v2528
        %v2530 = vpop.f32.mrb[0].mxu0
        %2531 = vmatprep.mubr.bf16.mxu0 0
        %2532 = vmatmul.mubr.bf16.gmra.mrb[0].mxu0 %v2404
        %v2533 = vpop.f32.mrb[0].mxu0
        %v2534 = vadd.f32 0.0, %v2533
        %v2535 = vpop.f32.mrb[0].mxu0
        %v2536 = vpop.f32.mrb[0].mxu0
        %v2537 = vadd.f32 0.0, %v2536
        %v2538 = vpop.f32.mrb[0].mxu0
        %2539 = vdwg.mxu0
        %v2540 = vadd.f32 %v2355, %v2494
        %v2541 = vadd.f32 %v2356, %v2497
        %v2542 = vadd.f32 %v2357, %v2502
        %v2543 = vadd.f32 %v2358, %v2505
        %v2544 = vadd.f32 %v2359, %v2510
        %v2545 = vadd.f32 %v2360, %v2513
        %v2546 = vadd.f32 %v2361, %v2518
        %v2547 = vadd.f32 %v2362, %v2521
        %v2548 = vadd.f32 %v2363, %v2526
        %v2549 = vadd.f32 %v2364, %v2529
        %v2550 = vadd.f32 %v2365, %v2534
        %v2551 = vadd.f32 %v2366, %v2537
        %v2552 = vld [vmem:[#allocation2 + $0x48] sm:$0x1f]
        %s2553 = scalar_lea.vmem [#allocation9], 512
        %v2554 = vld [vmem:[%s2553] sm:$0xf]
        %v2555 = vld [vmem:[%s2553 + $0x4] sm:$0xf]
        %v2556 = vld [vmem:[%s2553 + $0x8] sm:$0xf]
        %v2557 = vld [vmem:[%s2553 + $0xc] sm:$0xf]
        %v2558 = vld [vmem:[%s2553 + $0x10] sm:$0xf]
        %v2559 = vld [vmem:[%s2553 + $0x14] sm:$0xf]
        %v2560 = vld [vmem:[%s2553 + $0x18] sm:$0xf]
        %v2561 = vld [vmem:[%s2553 + $0x1c] sm:$0xf]
        %v2562 = vld [vmem:[%s2553 + $0x20] sm:$0xf]
        %v2563 = vld [vmem:[%s2553 + $0x24] sm:$0xf]
        %v2564 = vld [vmem:[%s2553 + $0x28] sm:$0xf]
        %v2565 = vld [vmem:[%s2553 + $0x2c] sm:$0xf]
        %v2566 = vld [vmem:[%s2553 + $0x30] sm:$0xf]
        %v2567 = vld [vmem:[%s2553 + $0x34] sm:$0xf]
        %v2568 = vld [vmem:[%s2553 + $0x38] sm:$0xf]
        %v2569 = vld [vmem:[%s2553 + $0x3c] sm:$0xf]
        %v2571 = vshrl.u32 %v2367, 16
        %v2573 = vrot.slane %v2571, 4
        %v2574 = vshll.u32 %v2367, 16
        %v2576 = vrot.slane %v2574, 5
        %v2577 = vor.u32 %v2573, %v2576
        %v2578 = vrot.slane %v2167, 4
        %v2579 = vrot.slane %v2170, 5
        %v2580 = vor.u32 %v2578, %v2579
        %v2581 = vsel %vm1343, %v2577, %v2580
        %v2582 = vrot.slane %v2176, 4
        %v2583 = vrot.slane %v2179, 5
        %v2584 = vor.u32 %v2582, %v2583
        %v2585 = vsel %vm1343, %v2580, %v2584
        %v2586 = vrot.slane %v2185, 4
        %v2587 = vrot.slane %v2188, 5
        %v2588 = vor.u32 %v2586, %v2587
        %v2589 = vsel %vm1343, %v2584, %v2588
        %v2590 = vrot.slane %v2194, 4
        %v2591 = vrot.slane %v2197, 5
        %v2592 = vor.u32 %v2590, %v2591
        %v2593 = vsel %vm1343, %v2588, %v2592
        %v2594 = vrot.slane %v2203, 4
        %v2595 = vrot.slane %v2206, 5
        %v2596 = vor.u32 %v2594, %v2595
        %v2597 = vsel %vm1343, %v2592, %v2596
        %v2599 = vshrl.u32 %v2552, 16
        %v2601 = vrot.slane %v2599, 4
        %v2602 = vshll.u32 %v2552, 16
        %v2604 = vrot.slane %v2602, 5
        %v2605 = vor.u32 %v2601, %v2604
        %v2606 = vsel %vm1343, %v2596, %v2605
        %v2629 = vunpack.c.l.b16 %v2554
        %v2630 = vunpack.c.l.b16 %v2555
        %v2631 = vunpack.c.l.b16 %v2556
        %v2632 = vunpack.c.l.b16 %v2557
        %v2633 = vunpack.c.l.b16 %v2558
        %v2634 = vunpack.c.l.b16 %v2559
        %v2635 = vunpack.c.l.b16 %v2560
        %v2636 = vunpack.c.l.b16 %v2561
        %v2637 = vunpack.c.l.b16 %v2562
        %v2638 = vunpack.c.l.b16 %v2563
        %v2639 = vunpack.c.l.b16 %v2564
        %v2640 = vunpack.c.l.b16 %v2565
        %v2641 = vunpack.c.l.b16 %v2566
        %v2642 = vunpack.c.l.b16 %v2567
        %v2643 = vunpack.c.l.b16 %v2568
        %v2644 = vunpack.c.l.b16 %v2569
        %v2645 = vpack.c.b16 %v2630, %v2629
        %v2646 = vpack.c.b16 %v2632, %v2631
        %v2647 = vpack.c.b16 %v2634, %v2633
        %v2648 = vpack.c.b16 %v2636, %v2635
        %v2649 = vpack.c.b16 %v2638, %v2637
        %v2650 = vpack.c.b16 %v2640, %v2639
        %v2651 = vpack.c.b16 %v2642, %v2641
        %v2652 = vpack.c.b16 %v2644, %v2643
        %2661 = vmatprep.subr.bf16.mxu0 0
        %2662 = vmatpush1.bf16.msra.mxu0 %v2645
        %2663 = vmatprep.subr.bf16.mxu0 0
        %2664 = vmatpush1.bf16.msra.mxu0 %v2646
        %2665 = vmatprep.subr.bf16.mxu0 0
        %2666 = vmatpush1.bf16.msra.mxu0 %v2647
        %2667 = vmatprep.subr.bf16.mxu0 0
        %2668 = vmatpush1.bf16.msra.mxu0 %v2648
        %2669 = vmatprep.subr.bf16.mxu0 0
        %2670 = vmatpush1.bf16.msra.mxu0 %v2649
        %2671 = vmatprep.subr.bf16.mxu0 0
        %2672 = vmatpush1.bf16.msra.mxu0 %v2650
        %2673 = vmatprep.subr.bf16.mxu0 0
        %2674 = vmatpush1.bf16.msra.mxu0 %v2651
        %2675 = vmatprep.subr.bf16.mxu0 0
        %2676 = vmatpush1.bf16.msra.mxu0 %v2652
        %2677 = vmatprep.subr.bf16.mxu0 0
        %2678 = vmatpush1.bf16.msra.mxu0 0
        %2679 = vmatprep.subr.bf16.mxu0 0
        %2680 = vmatpush1.bf16.msra.mxu0 0
        %2681 = vmatprep.subr.bf16.mxu0 0
        %2682 = vmatpush1.bf16.msra.mxu0 0
        %2683 = vmatprep.subr.bf16.mxu0 0
        %2684 = vmatpush1.bf16.msra.mxu0 0
        %2685 = vmatprep.subr.bf16.mxu0 0
        %2686 = vmatpush1.bf16.msra.mxu0 0
        %2687 = vmatprep.subr.bf16.mxu0 0
        %2688 = vmatpush1.bf16.msra.mxu0 0
        %2689 = vmatprep.subr.bf16.mxu0 0
        %2690 = vmatpush1.bf16.msra.mxu0 0
        %2691 = vmatprep.subr.bf16.mxu0 0
        %2692 = vmatpush1.bf16.msra.mxu0 0
        %2693 = vmatprep.mubr.bf16.mxu0 0
        %2694 = vmatmul.mubr.bf16.gmra.mrb[0].mxu0 %v2581
        %v2695 = vpop.f32.mrb[0].mxu0
        %v2696 = vadd.f32 0.0, %v2695
        %v2697 = vpop.f32.mrb[0].mxu0
        %v2698 = vpop.f32.mrb[0].mxu0
        %v2699 = vadd.f32 0.0, %v2698
        %v2700 = vpop.f32.mrb[0].mxu0
        %2701 = vmatprep.mubr.bf16.mxu0 0
        %2702 = vmatmul.mubr.bf16.gmra.mrb[0].mxu0 %v2585
        %v2703 = vpop.f32.mrb[0].mxu0
        %v2704 = vadd.f32 0.0, %v2703
        %v2705 = vpop.f32.mrb[0].mxu0
        %v2706 = vpop.f32.mrb[0].mxu0
        %v2707 = vadd.f32 0.0, %v2706
        %v2708 = vpop.f32.mrb[0].mxu0
        %2709 = vmatprep.mubr.bf16.mxu0 0
        %2710 = vmatmul.mubr.bf16.gmra.mrb[0].mxu0 %v2589
        %v2711 = vpop.f32.mrb[0].mxu0
        %v2712 = vadd.f32 0.0, %v2711
        %v2713 = vpop.f32.mrb[0].mxu0
        %v2714 = vpop.f32.mrb[0].mxu0
        %v2715 = vadd.f32 0.0, %v2714
        %v2716 = vpop.f32.mrb[0].mxu0
        %2717 = vmatprep.mubr.bf16.mxu0 0
        %2718 = vmatmul.mubr.bf16.gmra.mrb[0].mxu0 %v2593
        %v2719 = vpop.f32.mrb[0].mxu0
        %v2720 = vadd.f32 0.0, %v2719
        %v2721 = vpop.f32.mrb[0].mxu0
        %v2722 = vpop.f32.mrb[0].mxu0
        %v2723 = vadd.f32 0.0, %v2722
        %v2724 = vpop.f32.mrb[0].mxu0
        %2725 = vmatprep.mubr.bf16.mxu0 0
        %2726 = vmatmul.mubr.bf16.gmra.mrb[0].mxu0 %v2597
        %v2727 = vpop.f32.mrb[0].mxu0
        %v2728 = vadd.f32 0.0, %v2727
        %v2729 = vpop.f32.mrb[0].mxu0
        %v2730 = vpop.f32.mrb[0].mxu0
        %v2731 = vadd.f32 0.0, %v2730
        %v2732 = vpop.f32.mrb[0].mxu0
        %2733 = vmatprep.mubr.bf16.mxu0 0
        %2734 = vmatmul.mubr.bf16.gmra.mrb[0].mxu0 %v2606
        %v2735 = vpop.f32.mrb[0].mxu0
        %v2736 = vadd.f32 0.0, %v2735
        %v2737 = vpop.f32.mrb[0].mxu0
        %v2738 = vpop.f32.mrb[0].mxu0
        %v2739 = vadd.f32 0.0, %v2738
        %v2740 = vpop.f32.mrb[0].mxu0
        %2741 = vdwg.mxu0
        %v2742 = vadd.f32 %v2540, %v2696
        %v2743 = vadd.f32 %v2541, %v2699
        %v2744 = vadd.f32 %v2542, %v2704
        %v2745 = vadd.f32 %v2543, %v2707
        %v2746 = vadd.f32 %v2544, %v2712
        %v2747 = vadd.f32 %v2545, %v2715
        %v2748 = vadd.f32 %v2546, %v2720
        %v2749 = vadd.f32 %v2547, %v2723
        %v2750 = vadd.f32 %v2548, %v2728
        %v2751 = vadd.f32 %v2549, %v2731
        %v2752 = vadd.f32 %v2550, %v2736
        %v2753 = vadd.f32 %v2551, %v2739
        %v2754 = vlaneseq
        %v2755 = vshrl.u32 %v2754, 7
        %v2756 = vsub.s32 0, %v2755
        %v2757 = vrot.slane %v385, %v2756
        %v2758 = vmul.f32 %v2742, %v2757
        %v2759 = vmul.f32 %v2743, %v2757
        %v2760 = vmul.f32 %v2744, %v2757
        %v2761 = vmul.f32 %v2745, %v2757
        %v2762 = vmul.f32 %v2746, %v2757
        %v2763 = vmul.f32 %v2747, %v2757
        %v2764 = vmul.f32 %v2748, %v2757
        %v2765 = vmul.f32 %v2749, %v2757
        %v2766 = vmul.f32 %v2750, %v2757
        %v2767 = vmul.f32 %v2751, %v2757
        %v2768 = vmul.f32 %v2752, %v2757
        %v2769 = vmul.f32 %v2753, %v2757
        %v2770 = vlaneseq
        %v2771 = vshrl.u32 %v2770, 7
        %v2772 = vsub.s32 0, %v2771
        %v2773 = vrot.slane %v386, %v2772
        %v2774 = vadd.f32 %v2758, %v2773
        %v2775 = vadd.f32 %v2759, %v2773
        %v2776 = vadd.f32 %v2760, %v2773
        %v2777 = vadd.f32 %v2761, %v2773
        %v2778 = vadd.f32 %v2762, %v2773
        %v2779 = vadd.f32 %v2763, %v2773
        %v2780 = vadd.f32 %v2764, %v2773
        %v2781 = vadd.f32 %v2765, %v2773
        %v2782 = vadd.f32 %v2766, %v2773
        %v2783 = vadd.f32 %v2767, %v2773
        %v2784 = vadd.f32 %v2768, %v2773
        %v2785 = vadd.f32 %v2769, %v2773
        %v2786 = vmax.f32 %v2774, 0.0
        %v2787 = vmax.f32 %v2775, 0.0
        %v2788 = vmax.f32 %v2776, 0.0
        %v2789 = vmax.f32 %v2777, 0.0
        %v2790 = vmax.f32 %v2778, 0.0
        %v2791 = vmax.f32 %v2779, 0.0
        %v2792 = vmax.f32 %v2780, 0.0
        %v2793 = vmax.f32 %v2781, 0.0
        %v2794 = vmax.f32 %v2782, 0.0
        %v2795 = vmax.f32 %v2783, 0.0
        %v2796 = vmax.f32 %v2784, 0.0
        %v2797 = vmax.f32 %v2785, 0.0
        %v2798 = vld [vmem:[%s333] sm:$0xf]
        %v2799 = vld [vmem:[%s333 + $0x4] sm:$0xf]
        %v2800 = vld [vmem:[%s333 + $0x8] sm:$0xf]
        %v2801 = vld [vmem:[%s333 + $0xc] sm:$0xf]
        %v2802 = vld [vmem:[%s333 + $0x10] sm:$0xf]
        %v2803 = vld [vmem:[%s333 + $0x14] sm:$0xf]
        %v2804 = vld [vmem:[%s333 + $0x18] sm:$0xf]
        %v2805 = vld [vmem:[%s333 + $0x1c] sm:$0xf]
        %v2806 = vld [vmem:[%s333 + $0x20] sm:$0xf]
        %v2807 = vld [vmem:[%s333 + $0x24] sm:$0xf]
        %v2808 = vld [vmem:[%s333 + $0x28] sm:$0xf]
        %v2809 = vld [vmem:[%s333 + $0x2c] sm:$0xf]
        %v2810 = vld [vmem:[#allocation11] sm:$0xf]
        %v2811 = vld [vmem:[#allocation11 + $0x4] sm:$0xf]
        %v2812 = vld [vmem:[#allocation11 + $0x8] sm:$0xf]
        %v2813 = vld [vmem:[#allocation11 + $0xc] sm:$0xf]
        %v2814 = vld [vmem:[#allocation11 + $0x10] sm:$0xf]
        %v2815 = vld [vmem:[#allocation11 + $0x14] sm:$0xf]
        %v2816 = vld [vmem:[#allocation11 + $0x18] sm:$0xf]
        %v2817 = vld [vmem:[#allocation11 + $0x1c] sm:$0xf]
        %v2818 = vld [vmem:[#allocation11 + $0x20] sm:$0xf]
        %v2819 = vld [vmem:[#allocation11 + $0x24] sm:$0xf]
        %v2820 = vld [vmem:[#allocation11 + $0x28] sm:$0xf]
        %v2821 = vld [vmem:[#allocation11 + $0x2c] sm:$0xf]
        %v2822 = vld [vmem:[#allocation11 + $0x30] sm:$0xf]
        %v2823 = vld [vmem:[#allocation11 + $0x34] sm:$0xf]
        %v2824 = vld [vmem:[#allocation11 + $0x38] sm:$0xf]
        %v2825 = vld [vmem:[#allocation11 + $0x3c] sm:$0xf]
        %v2827 = vlaneseq
        %v2828 = vshrl.u32 %v2827, 7
        %v2829 = vsub.s32 0, %v2828
        %v2830 = vrot.slane %v387, %v2829
        %v2844 = vunpack.c.l.b16 %v2798
        %v2845 = vunpack.c.l.b16 %v2799
        %v2846 = vunpack.c.l.b16 %v2800
        %v2847 = vunpack.c.l.b16 %v2801
        %v2848 = vunpack.c.l.b16 %v2802
        %v2849 = vunpack.c.l.b16 %v2803
        %v2850 = vunpack.c.l.b16 %v2804
        %v2851 = vunpack.c.l.b16 %v2805
        %v2852 = vunpack.c.l.b16 %v2806
        %v2853 = vunpack.c.l.b16 %v2807
        %v2854 = vunpack.c.l.b16 %v2808
        %v2855 = vunpack.c.l.b16 %v2809
        %v2856 = vpack.c.b16 %v2845, %v2844
        %v2857 = vpack.c.b16 %v2847, %v2846
        %v2858 = vpack.c.b16 %v2849, %v2848
        %v2859 = vpack.c.b16 %v2851, %v2850
        %v2860 = vpack.c.b16 %v2853, %v2852
        %v2861 = vpack.c.b16 %v2855, %v2854
        %v2884 = vunpack.c.l.b16 %v2810
        %v2885 = vunpack.c.l.b16 %v2811
        %v2886 = vunpack.c.l.b16 %v2812
        %v2887 = vunpack.c.l.b16 %v2813
        %v2888 = vunpack.c.l.b16 %v2814
        %v2889 = vunpack.c.l.b16 %v2815
        %v2890 = vunpack.c.l.b16 %v2816
        %v2891 = vunpack.c.l.b16 %v2817
        %v2892 = vunpack.c.l.b16 %v2818
        %v2893 = vunpack.c.l.b16 %v2819
        %v2894 = vunpack.c.l.b16 %v2820
        %v2895 = vunpack.c.l.b16 %v2821
        %v2896 = vunpack.c.l.b16 %v2822
        %v2897 = vunpack.c.l.b16 %v2823
        %v2898 = vunpack.c.l.b16 %v2824
        %v2899 = vunpack.c.l.b16 %v2825
        %v2900 = vpack.c.b16 %v2885, %v2884
        %v2901 = vpack.c.b16 %v2887, %v2886
        %v2902 = vpack.c.b16 %v2889, %v2888
        %v2903 = vpack.c.b16 %v2891, %v2890
        %v2904 = vpack.c.b16 %v2893, %v2892
        %v2905 = vpack.c.b16 %v2895, %v2894
        %v2906 = vpack.c.b16 %v2897, %v2896
        %v2907 = vpack.c.b16 %v2899, %v2898
        %2916 = vmatprep.subr.bf16.mxu0 0
        %2917 = vmatpush1.bf16.msra.mxu0 %v2900
        %2918 = vmatprep.subr.bf16.mxu0 0
        %2919 = vmatpush1.bf16.msra.mxu0 %v2901
        %2920 = vmatprep.subr.bf16.mxu0 0
        %2921 = vmatpush1.bf16.msra.mxu0 %v2902
        %2922 = vmatprep.subr.bf16.mxu0 0
        %2923 = vmatpush1.bf16.msra.mxu0 %v2903
        %2924 = vmatprep.subr.bf16.mxu0 0
        %2925 = vmatpush1.bf16.msra.mxu0 %v2904
        %2926 = vmatprep.subr.bf16.mxu0 0
        %2927 = vmatpush1.bf16.msra.mxu0 %v2905
        %2928 = vmatprep.subr.bf16.mxu0 0
        %2929 = vmatpush1.bf16.msra.mxu0 %v2906
        %2930 = vmatprep.subr.bf16.mxu0 0
        %2931 = vmatpush1.bf16.msra.mxu0 %v2907
        %2932 = vmatprep.subr.bf16.mxu0 0
        %2933 = vmatpush1.bf16.msra.mxu0 0
        %2934 = vmatprep.subr.bf16.mxu0 0
        %2935 = vmatpush1.bf16.msra.mxu0 0
        %2936 = vmatprep.subr.bf16.mxu0 0
        %2937 = vmatpush1.bf16.msra.mxu0 0
        %2938 = vmatprep.subr.bf16.mxu0 0
        %2939 = vmatpush1.bf16.msra.mxu0 0
        %2940 = vmatprep.subr.bf16.mxu0 0
        %2941 = vmatpush1.bf16.msra.mxu0 0
        %2942 = vmatprep.subr.bf16.mxu0 0
        %2943 = vmatpush1.bf16.msra.mxu0 0
        %2944 = vmatprep.subr.bf16.mxu0 0
        %2945 = vmatpush1.bf16.msra.mxu0 0
        %2946 = vmatprep.subr.bf16.mxu0 0
        %2947 = vmatpush1.bf16.msra.mxu0 0
        %2948 = vmatprep.mubr.bf16.mxu0 0
        %2949 = vmatmul.mubr.bf16.gmra.mrb[0].mxu0 %v2856
        %v2950 = vpop.f32.mrb[0].mxu0
        %v2951 = vadd.f32 %v2830, %v2950
        %v2952 = vpop.f32.mrb[0].mxu0
        %v2953 = vpop.f32.mrb[0].mxu0
        %v2954 = vadd.f32 %v2830, %v2953
        %v2955 = vpop.f32.mrb[0].mxu0
        %2956 = vmatprep.mubr.bf16.mxu0 0
        %2957 = vmatmul.mubr.bf16.gmra.mrb[0].mxu0 %v2857
        %v2958 = vpop.f32.mrb[0].mxu0
        %v2959 = vadd.f32 %v2830, %v2958
        %v2960 = vpop.f32.mrb[0].mxu0
        %v2961 = vpop.f32.mrb[0].mxu0
        %v2962 = vadd.f32 %v2830, %v2961
        %v2963 = vpop.f32.mrb[0].mxu0
        %2964 = vmatprep.mubr.bf16.mxu0 0
        %2965 = vmatmul.mubr.bf16.gmra.mrb[0].mxu0 %v2858
        %v2966 = vpop.f32.mrb[0].mxu0
        %v2967 = vadd.f32 %v2830, %v2966
        %v2968 = vpop.f32.mrb[0].mxu0
        %v2969 = vpop.f32.mrb[0].mxu0
        %v2970 = vadd.f32 %v2830, %v2969
        %v2971 = vpop.f32.mrb[0].mxu0
        %2972 = vmatprep.mubr.bf16.mxu0 0
        %2973 = vmatmul.mubr.bf16.gmra.mrb[0].mxu0 %v2859
        %v2974 = vpop.f32.mrb[0].mxu0
        %v2975 = vadd.f32 %v2830, %v2974
        %v2976 = vpop.f32.mrb[0].mxu0
        %v2977 = vpop.f32.mrb[0].mxu0
        %v2978 = vadd.f32 %v2830, %v2977
        %v2979 = vpop.f32.mrb[0].mxu0
        %2980 = vmatprep.mubr.bf16.mxu0 0
        %2981 = vmatmul.mubr.bf16.gmra.mrb[0].mxu0 %v2860
        %v2982 = vpop.f32.mrb[0].mxu0
        %v2983 = vadd.f32 %v2830, %v2982
        %v2984 = vpop.f32.mrb[0].mxu0
        %v2985 = vpop.f32.mrb[0].mxu0
        %v2986 = vadd.f32 %v2830, %v2985
        %v2987 = vpop.f32.mrb[0].mxu0
        %2988 = vmatprep.mubr.bf16.mxu0 0
        %2989 = vmatmul.mubr.bf16.gmra.mrb[0].mxu0 %v2861
        %v2990 = vpop.f32.mrb[0].mxu0
        %v2991 = vadd.f32 %v2830, %v2990
        %v2992 = vpop.f32.mrb[0].mxu0
        %v2993 = vpop.f32.mrb[0].mxu0
        %v2994 = vadd.f32 %v2830, %v2993
        %v2995 = vpop.f32.mrb[0].mxu0
        %2996 = vdwg.mxu0
        %v2997 = vadd.f32 %v2786, %v2951
        %v2998 = vadd.f32 %v2787, %v2954
        %v2999 = vadd.f32 %v2788, %v2959
        %v3000 = vadd.f32 %v2789, %v2962
        %v3001 = vadd.f32 %v2790, %v2967
        %v3002 = vadd.f32 %v2791, %v2970
        %v3003 = vadd.f32 %v2792, %v2975
        %v3004 = vadd.f32 %v2793, %v2978
        %v3005 = vadd.f32 %v2794, %v2983
        %v3006 = vadd.f32 %v2795, %v2986
        %v3007 = vadd.f32 %v2796, %v2991
        %v3008 = vadd.f32 %v2797, %v2994
        %v3009 = vpack.c.bf16 %v2998, %v2997
        %v3010 = vpack.c.bf16 %v3000, %v2999
        %v3011 = vpack.c.bf16 %v3002, %v3001
        %v3012 = vpack.c.bf16 %v3004, %v3003
        %v3013 = vpack.c.bf16 %v3006, %v3005
        %v3014 = vpack.c.bf16 %v3008, %v3007
        %v3021 = vunpack.c.l.b16 %v3009
        %v3022 = vunpack.c.h.b16 %v3009
        %v3023 = vunpack.c.l.b16 %v3010
        %v3024 = vunpack.c.h.b16 %v3010
        %v3025 = vunpack.c.l.b16 %v3011
        %v3026 = vunpack.c.h.b16 %v3011
        %v3027 = vunpack.c.l.b16 %v3012
        %v3028 = vunpack.c.h.b16 %v3012
        %v3029 = vunpack.c.l.b16 %v3013
        %v3030 = vunpack.c.h.b16 %v3013
        %v3031 = vunpack.c.l.b16 %v3014
        %v3032 = vunpack.c.h.b16 %v3014
        %v3033 = vpack.c.b16 %v3021, %v3021
        %v3034 = vpack.c.b16 %v3022, %v3022
        %v3035 = vpack.c.b16 %v3023, %v3023
        %v3036 = vpack.c.b16 %v3024, %v3024
        %v3037 = vpack.c.b16 %v3025, %v3025
        %v3038 = vpack.c.b16 %v3026, %v3026
        %v3039 = vpack.c.b16 %v3027, %v3027
        %v3040 = vpack.c.b16 %v3028, %v3028
        %v3041 = vpack.c.b16 %v3029, %v3029
        %v3042 = vpack.c.b16 %v3030, %v3030
        %v3043 = vpack.c.b16 %v3031, %v3031
        %v3044 = vpack.c.b16 %v3032, %v3032
        %3057 = vst [vmem:[%s381] sm:$0xf] %v3033
        %3058 = vst [vmem:[%s381 + $0x4] sm:$0xf] %v3034
        %3059 = vst [vmem:[%s381 + $0x8] sm:$0xf] %v3035
        %3060 = vst [vmem:[%s381 + $0xc] sm:$0xf] %v3036
        %3061 = vst [vmem:[%s381 + $0x10] sm:$0xf] %v3037
        %3062 = vst [vmem:[%s381 + $0x14] sm:$0xf] %v3038
        %3063 = vst [vmem:[%s381 + $0x18] sm:$0xf] %v3039
        %3064 = vst [vmem:[%s381 + $0x1c] sm:$0xf] %v3040
        %3065 = vst [vmem:[%s381 + $0x20] sm:$0xf] %v3041
        %3066 = vst [vmem:[%s381 + $0x24] sm:$0xf] %v3042
        %3067 = vst [vmem:[%s381 + $0x28] sm:$0xf] %v3043
        %3068 = vst [vmem:[%s381 + $0x2c] sm:$0xf] %v3044
        %v3069 = vld [vmem:[%s333 + $0x60] sm:$0xf]
        %v3070 = vld [vmem:[%s333 + $0x64] sm:$0xf]
        %v3071 = vld [vmem:[%s333 + $0x68] sm:$0xf]
        %v3072 = vld [vmem:[%s333 + $0x6c] sm:$0xf]
        %v3073 = vld [vmem:[%s333 + $0x70] sm:$0xf]
        %v3074 = vld [vmem:[%s333 + $0x74] sm:$0xf]
        %v3075 = vld [vmem:[%s333 + $0x78] sm:$0xf]
        %v3076 = vld [vmem:[%s333 + $0x7c] sm:$0xf]
        %v3077 = vld [vmem:[%s333 + $0x80] sm:$0xf]
        %v3078 = vld [vmem:[%s333 + $0x84] sm:$0xf]
        %v3079 = vld [vmem:[%s333 + $0x88] sm:$0xf]
        %v3080 = vld [vmem:[%s333 + $0x8c] sm:$0xf]
        %v3081 = vld [vmem:[#allocation8] sm:$0xf]
        %v3082 = vld [vmem:[#allocation8 + $0x4] sm:$0xf]
        %v3083 = vld [vmem:[#allocation8 + $0x8] sm:$0xf]
        %v3084 = vld [vmem:[#allocation8 + $0xc] sm:$0xf]
        %v3085 = vld [vmem:[#allocation8 + $0x10] sm:$0xf]
        %v3086 = vld [vmem:[#allocation8 + $0x14] sm:$0xf]
        %v3087 = vld [vmem:[#allocation8 + $0x18] sm:$0xf]
        %v3088 = vld [vmem:[#allocation8 + $0x1c] sm:$0xf]
        %v3089 = vld [vmem:[#allocation8 + $0x20] sm:$0xf]
        %v3090 = vld [vmem:[#allocation8 + $0x24] sm:$0xf]
        %v3091 = vld [vmem:[#allocation8 + $0x28] sm:$0xf]
        %v3092 = vld [vmem:[#allocation8 + $0x2c] sm:$0xf]
        %v3093 = vld [vmem:[#allocation8 + $0x30] sm:$0xf]
        %v3094 = vld [vmem:[#allocation8 + $0x34] sm:$0xf]
        %v3095 = vld [vmem:[#allocation8 + $0x38] sm:$0xf]
        %v3096 = vld [vmem:[#allocation8 + $0x3c] sm:$0xf]
        %v3109 = vunpack.c.l.b16 %v3069
        %v3110 = vunpack.c.l.b16 %v3070
        %v3111 = vunpack.c.l.b16 %v3071
        %v3112 = vunpack.c.l.b16 %v3072
        %v3113 = vunpack.c.l.b16 %v3073
        %v3114 = vunpack.c.l.b16 %v3074
        %v3115 = vunpack.c.l.b16 %v3075
        %v3116 = vunpack.c.l.b16 %v3076
        %v3117 = vunpack.c.l.b16 %v3077
        %v3118 = vunpack.c.l.b16 %v3078
        %v3119 = vunpack.c.l.b16 %v3079
        %v3120 = vunpack.c.l.b16 %v3080
        %v3121 = vpack.c.b16 %v3110, %v3109
        %v3122 = vpack.c.b16 %v3112, %v3111
        %v3123 = vpack.c.b16 %v3114, %v3113
        %v3124 = vpack.c.b16 %v3116, %v3115
        %v3125 = vpack.c.b16 %v3118, %v3117
        %v3126 = vpack.c.b16 %v3120, %v3119
        %v3149 = vunpack.c.l.b16 %v3081
        %v3150 = vunpack.c.l.b16 %v3082
        %v3151 = vunpack.c.l.b16 %v3083
        %v3152 = vunpack.c.l.b16 %v3084
        %v3153 = vunpack.c.l.b16 %v3085
        %v3154 = vunpack.c.l.b16 %v3086
        %v3155 = vunpack.c.l.b16 %v3087
        %v3156 = vunpack.c.l.b16 %v3088
        %v3157 = vunpack.c.l.b16 %v3089
        %v3158 = vunpack.c.l.b16 %v3090
        %v3159 = vunpack.c.l.b16 %v3091
        %v3160 = vunpack.c.l.b16 %v3092
        %v3161 = vunpack.c.l.b16 %v3093
        %v3162 = vunpack.c.l.b16 %v3094
        %v3163 = vunpack.c.l.b16 %v3095
        %v3164 = vunpack.c.l.b16 %v3096
        %v3165 = vpack.c.b16 %v3150, %v3149
        %v3166 = vpack.c.b16 %v3152, %v3151
        %v3167 = vpack.c.b16 %v3154, %v3153
        %v3168 = vpack.c.b16 %v3156, %v3155
        %v3169 = vpack.c.b16 %v3158, %v3157
        %v3170 = vpack.c.b16 %v3160, %v3159
        %v3171 = vpack.c.b16 %v3162, %v3161
        %v3172 = vpack.c.b16 %v3164, %v3163
        %3181 = vmatprep.subr.bf16.mxu0 0
        %3182 = vmatpush1.bf16.msra.mxu0 %v3165
        %3183 = vmatprep.subr.bf16.mxu0 0
        %3184 = vmatpush1.bf16.msra.mxu0 %v3166
        %3185 = vmatprep.subr.bf16.mxu0 0
        %3186 = vmatpush1.bf16.msra.mxu0 %v3167
        %3187 = vmatprep.subr.bf16.mxu0 0
        %3188 = vmatpush1.bf16.msra.mxu0 %v3168
        %3189 = vmatprep.subr.bf16.mxu0 0
        %3190 = vmatpush1.bf16.msra.mxu0 %v3169
        %3191 = vmatprep.subr.bf16.mxu0 0
        %3192 = vmatpush1.bf16.msra.mxu0 %v3170
        %3193 = vmatprep.subr.bf16.mxu0 0
        %3194 = vmatpush1.bf16.msra.mxu0 %v3171
        %3195 = vmatprep.subr.bf16.mxu0 0
        %3196 = vmatpush1.bf16.msra.mxu0 %v3172
        %3197 = vmatprep.subr.bf16.mxu0 0
        %3198 = vmatpush1.bf16.msra.mxu0 0
        %3199 = vmatprep.subr.bf16.mxu0 0
        %3200 = vmatpush1.bf16.msra.mxu0 0
        %3201 = vmatprep.subr.bf16.mxu0 0
        %3202 = vmatpush1.bf16.msra.mxu0 0
        %3203 = vmatprep.subr.bf16.mxu0 0
        %3204 = vmatpush1.bf16.msra.mxu0 0
        %3205 = vmatprep.subr.bf16.mxu0 0
        %3206 = vmatpush1.bf16.msra.mxu0 0
        %3207 = vmatprep.subr.bf16.mxu0 0
        %3208 = vmatpush1.bf16.msra.mxu0 0
        %3209 = vmatprep.subr.bf16.mxu0 0
        %3210 = vmatpush1.bf16.msra.mxu0 0
        %3211 = vmatprep.subr.bf16.mxu0 0
        %3212 = vmatpush1.bf16.msra.mxu0 0
        %3213 = vmatprep.mubr.bf16.mxu0 0
        %3214 = vmatmul.mubr.bf16.gmra.mrb[0].mxu0 %v3121
        %v3215 = vpop.f32.mrb[0].mxu0
        %v3216 = vadd.f32 0.0, %v3215
        %v3217 = vpop.f32.mrb[0].mxu0
        %v3218 = vpop.f32.mrb[0].mxu0
        %v3219 = vadd.f32 0.0, %v3218
        %v3220 = vpop.f32.mrb[0].mxu0
        %3221 = vmatprep.mubr.bf16.mxu0 0
        %3222 = vmatmul.mubr.bf16.gmra.mrb[0].mxu0 %v3122
        %v3223 = vpop.f32.mrb[0].mxu0
        %v3224 = vadd.f32 0.0, %v3223
        %v3225 = vpop.f32.mrb[0].mxu0
        %v3226 = vpop.f32.mrb[0].mxu0
        %v3227 = vadd.f32 0.0, %v3226
        %v3228 = vpop.f32.mrb[0].mxu0
        %3229 = vmatprep.mubr.bf16.mxu0 0
        %3230 = vmatmul.mubr.bf16.gmra.mrb[0].mxu0 %v3123
        %v3231 = vpop.f32.mrb[0].mxu0
        %v3232 = vadd.f32 0.0, %v3231
        %v3233 = vpop.f32.mrb[0].mxu0
        %v3234 = vpop.f32.mrb[0].mxu0
        %v3235 = vadd.f32 0.0, %v3234
        %v3236 = vpop.f32.mrb[0].mxu0
        %3237 = vmatprep.mubr.bf16.mxu0 0
        %3238 = vmatmul.mubr.bf16.gmra.mrb[0].mxu0 %v3124
        %v3239 = vpop.f32.mrb[0].mxu0
        %v3240 = vadd.f32 0.0, %v3239
        %v3241 = vpop.f32.mrb[0].mxu0
        %v3242 = vpop.f32.mrb[0].mxu0
        %v3243 = vadd.f32 0.0, %v3242
        %v3244 = vpop.f32.mrb[0].mxu0
        %3245 = vmatprep.mubr.bf16.mxu0 0
        %3246 = vmatmul.mubr.bf16.gmra.mrb[0].mxu0 %v3125
        %v3247 = vpop.f32.mrb[0].mxu0
        %v3248 = vadd.f32 0.0, %v3247
        %v3249 = vpop.f32.mrb[0].mxu0
        %v3250 = vpop.f32.mrb[0].mxu0
        %v3251 = vadd.f32 0.0, %v3250
        %v3252 = vpop.f32.mrb[0].mxu0
        %3253 = vmatprep.mubr.bf16.mxu0 0
        %3254 = vmatmul.mubr.bf16.gmra.mrb[0].mxu0 %v3126
        %v3255 = vpop.f32.mrb[0].mxu0
        %v3256 = vadd.f32 0.0, %v3255
        %v3257 = vpop.f32.mrb[0].mxu0
        %v3258 = vpop.f32.mrb[0].mxu0
        %v3259 = vadd.f32 0.0, %v3258
        %v3260 = vpop.f32.mrb[0].mxu0
        %3261 = vdwg.mxu0
        %v3262 = vmul.f32 %v3216, %v588
        %v3263 = vmul.f32 %v3219, %v588
        %v3264 = vmul.f32 %v3224, %v588
        %v3265 = vmul.f32 %v3227, %v588
        %v3266 = vmul.f32 %v3232, %v588
        %v3267 = vmul.f32 %v3235, %v588
        %v3268 = vmul.f32 %v3240, %v588
        %v3269 = vmul.f32 %v3243, %v588
        %v3270 = vmul.f32 %v3248, %v588
        %v3271 = vmul.f32 %v3251, %v588
        %v3272 = vmul.f32 %v3256, %v588
        %v3273 = vmul.f32 %v3259, %v588
        %v3274 = vadd.f32 %v3262, %v604
        %v3275 = vadd.f32 %v3263, %v604
        %v3276 = vadd.f32 %v3264, %v604
        %v3277 = vadd.f32 %v3265, %v604
        %v3278 = vadd.f32 %v3266, %v604
        %v3279 = vadd.f32 %v3267, %v604
        %v3280 = vadd.f32 %v3268, %v604
        %v3281 = vadd.f32 %v3269, %v604
        %v3282 = vadd.f32 %v3270, %v604
        %v3283 = vadd.f32 %v3271, %v604
        %v3284 = vadd.f32 %v3272, %v604
        %v3285 = vadd.f32 %v3273, %v604
        %v3286 = vmax.f32 %v3274, 0.0
        %v3287 = vmax.f32 %v3275, 0.0
        %v3288 = vmax.f32 %v3276, 0.0
        %v3289 = vmax.f32 %v3277, 0.0
        %v3290 = vmax.f32 %v3278, 0.0
        %v3291 = vmax.f32 %v3279, 0.0
        %v3292 = vmax.f32 %v3280, 0.0
        %v3293 = vmax.f32 %v3281, 0.0
        %v3294 = vmax.f32 %v3282, 0.0
        %v3295 = vmax.f32 %v3283, 0.0
        %v3296 = vmax.f32 %v3284, 0.0
        %v3297 = vmax.f32 %v3285, 0.0
        %v3298 = vld [vmem:[#allocation6] sm:$0xff]
        %v3299 = vld [vmem:[#allocation6 + $0x8] sm:$0xff]
        %v3300 = vld [vmem:[#allocation6 + $0x10] sm:$0xff]
        %v3301 = vld [vmem:[#allocation6 + $0x18] sm:$0xff]
        %v3302 = vld [vmem:[#allocation6 + $0x20] sm:$0xff]
        %v3303 = vld [vmem:[#allocation6 + $0x28] sm:$0xff]
        %v3304 = vld [vmem:[#allocation6 + $0x30] sm:$0xff]
        %v3305 = vld [vmem:[#allocation6 + $0x38] sm:$0xff]
        %v3306 = vld [vmem:[#allocation6 + $0x40] sm:$0xff]
        %v3307 = vld [vmem:[#allocation6 + $0x48] sm:$0xff]
        %v3308 = vld [vmem:[#allocation6 + $0x50] sm:$0xff]
        %v3309 = vld [vmem:[#allocation6 + $0x58] sm:$0xff]
        %v3310 = vmul.f32 %v3286, %v3298
        %v3311 = vmul.f32 %v3287, %v3299
        %v3312 = vmul.f32 %v3288, %v3300
        %v3313 = vmul.f32 %v3289, %v3301
        %v3314 = vmul.f32 %v3290, %v3302
        %v3315 = vmul.f32 %v3291, %v3303
        %v3316 = vmul.f32 %v3292, %v3304
        %v3317 = vmul.f32 %v3293, %v3305
        %v3318 = vmul.f32 %v3294, %v3306
        %v3319 = vmul.f32 %v3295, %v3307
        %v3320 = vmul.f32 %v3296, %v3308
        %v3321 = vmul.f32 %v3297, %v3309
        %v3322 = vpack.c.bf16 %v3311, %v3310
        %v3323 = vpack.c.bf16 %v3313, %v3312
        %v3324 = vpack.c.bf16 %v3315, %v3314
        %v3325 = vpack.c.bf16 %v3317, %v3316
        %v3326 = vpack.c.bf16 %v3319, %v3318
        %v3327 = vpack.c.bf16 %v3321, %v3320
        %3328 = vst [vmem:[#allocation2 + $0x70] sm:$0xff] %v3322
        %3329 = vst [vmem:[#allocation2 + $0x78] sm:$0xff] %v3323
        %3330 = vst [vmem:[#allocation2 + $0x80] sm:$0xff] %v3324
        %3331 = vst [vmem:[#allocation2 + $0x88] sm:$0xff] %v3325
        %3332 = vst [vmem:[#allocation2 + $0x90] sm:$0xff] %v3326
        %3333 = vst [vmem:[#allocation2 + $0x98] sm:$0xff] %v3327
        %v3334 = vld [vmem:[#allocation2 + $0x30] sm:$0xf8]
        %v3335 = vld [vmem:[#allocation2 + $0x38] sm:$0xff]
        %v3336 = vld [vmem:[#allocation2 + $0x40] sm:$0xff]
        %v3337 = vld [vmem:[#allocation2 + $0x48] sm:$0xff]
        %v3338 = vld [vmem:[#allocation2 + $0x50] sm:$0xff]
        %v3339 = vld [vmem:[#allocation2 + $0x58] sm:$0xff]
        %v3340 = vld [vmem:[#allocation2 + $0x60] sm:$0xf]
        %v3341 = vld [vmem:[#allocation9] sm:$0xf]
        %v3342 = vld [vmem:[#allocation9 + $0x4] sm:$0xf]
        %v3343 = vld [vmem:[#allocation9 + $0x8] sm:$0xf]
        %v3344 = vld [vmem:[#allocation9 + $0xc] sm:$0xf]
        %v3345 = vld [vmem:[#allocation9 + $0x10] sm:$0xf]
        %v3346 = vld [vmem:[#allocation9 + $0x14] sm:$0xf]
        %v3347 = vld [vmem:[#allocation9 + $0x18] sm:$0xf]
        %v3348 = vld [vmem:[#allocation9 + $0x1c] sm:$0xf]
        %v3349 = vld [vmem:[#allocation9 + $0x20] sm:$0xf]
        %v3350 = vld [vmem:[#allocation9 + $0x24] sm:$0xf]
        %v3351 = vld [vmem:[#allocation9 + $0x28] sm:$0xf]
        %v3352 = vld [vmem:[#allocation9 + $0x2c] sm:$0xf]
        %v3353 = vld [vmem:[#allocation9 + $0x30] sm:$0xf]
        %v3354 = vld [vmem:[#allocation9 + $0x34] sm:$0xf]
        %v3355 = vld [vmem:[#allocation9 + $0x38] sm:$0xf]
        %v3356 = vld [vmem:[#allocation9 + $0x3c] sm:$0xf]
        %v3357 = vld [vmem:[#allocation2 + $0x30] sm:$0xf0]
        %v3358 = vld [vmem:[%s954] sm:$0xf]
        %v3359 = vld [vmem:[%s954 + $0x4] sm:$0xf]
        %v3360 = vld [vmem:[%s954 + $0x8] sm:$0xf]
        %v3361 = vld [vmem:[%s954 + $0xc] sm:$0xf]
        %v3362 = vld [vmem:[%s954 + $0x10] sm:$0xf]
        %v3363 = vld [vmem:[%s954 + $0x14] sm:$0xf]
        %v3364 = vld [vmem:[%s954 + $0x18] sm:$0xf]
        %v3365 = vld [vmem:[%s954 + $0x1c] sm:$0xf]
        %v3366 = vld [vmem:[%s954 + $0x20] sm:$0xf]
        %v3367 = vld [vmem:[%s954 + $0x24] sm:$0xf]
        %v3368 = vld [vmem:[%s954 + $0x28] sm:$0xf]
        %v3369 = vld [vmem:[%s954 + $0x2c] sm:$0xf]
        %v3370 = vld [vmem:[%s954 + $0x30] sm:$0xf]
        %v3371 = vld [vmem:[%s954 + $0x34] sm:$0xf]
        %v3372 = vld [vmem:[%s954 + $0x38] sm:$0xf]
        %v3373 = vld [vmem:[%s954 + $0x3c] sm:$0xf]
        %v3381 = vrot.slane %v3357, 4
        %v3382 = vrot.slane %v3335, 4
        %v3383 = vsel %vm978, %v3381, %v3382
        %v3384 = vrot.slane %v3336, 4
        %v3385 = vsel %vm978, %v3382, %v3384
        %v3386 = vrot.slane %v3337, 4
        %v3387 = vsel %vm978, %v3384, %v3386
        %v3388 = vrot.slane %v3338, 4
        %v3389 = vsel %vm978, %v3386, %v3388
        %v3390 = vrot.slane %v3339, 4
        %v3391 = vsel %vm978, %v3388, %v3390
        %v3392 = vrot.slane %v3340, 4
        %v3393 = vsel %vm978, %v3390, %v3392
        %v3416 = vunpack.c.l.b16 %v3358
        %v3417 = vunpack.c.l.b16 %v3359
        %v3418 = vunpack.c.l.b16 %v3360
        %v3419 = vunpack.c.l.b16 %v3361
        %v3420 = vunpack.c.l.b16 %v3362
        %v3421 = vunpack.c.l.b16 %v3363
        %v3422 = vunpack.c.l.b16 %v3364
        %v3423 = vunpack.c.l.b16 %v3365
        %v3424 = vunpack.c.l.b16 %v3366
        %v3425 = vunpack.c.l.b16 %v3367
        %v3426 = vunpack.c.l.b16 %v3368
        %v3427 = vunpack.c.l.b16 %v3369
        %v3428 = vunpack.c.l.b16 %v3370
        %v3429 = vunpack.c.l.b16 %v3371
        %v3430 = vunpack.c.l.b16 %v3372
        %v3431 = vunpack.c.l.b16 %v3373
        %v3432 = vpack.c.b16 %v3417, %v3416
        %v3433 = vpack.c.b16 %v3419, %v3418
        %v3434 = vpack.c.b16 %v3421, %v3420
        %v3435 = vpack.c.b16 %v3423, %v3422
        %v3436 = vpack.c.b16 %v3425, %v3424
        %v3437 = vpack.c.b16 %v3427, %v3426
        %v3438 = vpack.c.b16 %v3429, %v3428
        %v3439 = vpack.c.b16 %v3431, %v3430
        %3448 = vmatprep.subr.bf16.mxu0 0
        %3449 = vmatpush1.bf16.msra.mxu0 %v3432
        %3450 = vmatprep.subr.bf16.mxu0 0
        %3451 = vmatpush1.bf16.msra.mxu0 %v3433
        %3452 = vmatprep.subr.bf16.mxu0 0
        %3453 = vmatpush1.bf16.msra.mxu0 %v3434
        %3454 = vmatprep.subr.bf16.mxu0 0
        %3455 = vmatpush1.bf16.msra.mxu0 %v3435
        %3456 = vmatprep.subr.bf16.mxu0 0
        %3457 = vmatpush1.bf16.msra.mxu0 %v3436
        %3458 = vmatprep.subr.bf16.mxu0 0
        %3459 = vmatpush1.bf16.msra.mxu0 %v3437
        %3460 = vmatprep.subr.bf16.mxu0 0
        %3461 = vmatpush1.bf16.msra.mxu0 %v3438
        %3462 = vmatprep.subr.bf16.mxu0 0
        %3463 = vmatpush1.bf16.msra.mxu0 %v3439
        %3464 = vmatprep.subr.bf16.mxu0 0
        %3465 = vmatpush1.bf16.msra.mxu0 0
        %3466 = vmatprep.subr.bf16.mxu0 0
        %3467 = vmatpush1.bf16.msra.mxu0 0
        %3468 = vmatprep.subr.bf16.mxu0 0
        %3469 = vmatpush1.bf16.msra.mxu0 0
        %3470 = vmatprep.subr.bf16.mxu0 0
        %3471 = vmatpush1.bf16.msra.mxu0 0
        %3472 = vmatprep.subr.bf16.mxu0 0
        %3473 = vmatpush1.bf16.msra.mxu0 0
        %3474 = vmatprep.subr.bf16.mxu0 0
        %3475 = vmatpush1.bf16.msra.mxu0 0
        %3476 = vmatprep.subr.bf16.mxu0 0
        %3477 = vmatpush1.bf16.msra.mxu0 0
        %3478 = vmatprep.subr.bf16.mxu0 0
        %3479 = vmatpush1.bf16.msra.mxu0 0
        %3480 = vmatprep.mubr.bf16.mxu0 0
        %3481 = vmatmul.mubr.bf16.gmra.mrb[0].mxu0 %v3383
        %v3482 = vpop.f32.mrb[0].mxu0
        %v3483 = vadd.f32 0.0, %v3482
        %v3484 = vpop.f32.mrb[0].mxu0
        %v3485 = vpop.f32.mrb[0].mxu0
        %v3486 = vadd.f32 0.0, %v3485
        %v3487 = vpop.f32.mrb[0].mxu0
        %3488 = vmatprep.mubr.bf16.mxu0 0
        %3489 = vmatmul.mubr.bf16.gmra.mrb[0].mxu0 %v3385
        %v3490 = vpop.f32.mrb[0].mxu0
        %v3491 = vadd.f32 0.0, %v3490
        %v3492 = vpop.f32.mrb[0].mxu0
        %v3493 = vpop.f32.mrb[0].mxu0
        %v3494 = vadd.f32 0.0, %v3493
        %v3495 = vpop.f32.mrb[0].mxu0
        %3496 = vmatprep.mubr.bf16.mxu0 0
        %3497 = vmatmul.mubr.bf16.gmra.mrb[0].mxu0 %v3387
        %v3498 = vpop.f32.mrb[0].mxu0
        %v3499 = vadd.f32 0.0, %v3498
        %v3500 = vpop.f32.mrb[0].mxu0
        %v3501 = vpop.f32.mrb[0].mxu0
        %v3502 = vadd.f32 0.0, %v3501
        %v3503 = vpop.f32.mrb[0].mxu0
        %3504 = vmatprep.mubr.bf16.mxu0 0
        %3505 = vmatmul.mubr.bf16.gmra.mrb[0].mxu0 %v3389
        %v3506 = vpop.f32.mrb[0].mxu0
        %v3507 = vadd.f32 0.0, %v3506
        %v3508 = vpop.f32.mrb[0].mxu0
        %v3509 = vpop.f32.mrb[0].mxu0
        %v3510 = vadd.f32 0.0, %v3509
        %v3511 = vpop.f32.mrb[0].mxu0
        %3512 = vmatprep.mubr.bf16.mxu0 0
        %3513 = vmatmul.mubr.bf16.gmra.mrb[0].mxu0 %v3391
        %v3514 = vpop.f32.mrb[0].mxu0
        %v3515 = vadd.f32 0.0, %v3514
        %v3516 = vpop.f32.mrb[0].mxu0
        %v3517 = vpop.f32.mrb[0].mxu0
        %v3518 = vadd.f32 0.0, %v3517
        %v3519 = vpop.f32.mrb[0].mxu0
        %3520 = vmatprep.mubr.bf16.mxu0 0
        %3521 = vmatmul.mubr.bf16.gmra.mrb[0].mxu0 %v3393
        %v3522 = vpop.f32.mrb[0].mxu0
        %v3523 = vadd.f32 0.0, %v3522
        %v3524 = vpop.f32.mrb[0].mxu0
        %v3525 = vpop.f32.mrb[0].mxu0
        %v3526 = vadd.f32 0.0, %v3525
        %v3527 = vpop.f32.mrb[0].mxu0
        %3528 = vdwg.mxu0
        %v3530 = vshrl.u32 %v3334, 16
        %v3532 = vrot.slane %v3530, 3
        %v3533 = vshll.u32 %v3334, 16
        %v3535 = vrot.slane %v3533, 4
        %v3536 = vor.u32 %v3532, %v3535
        %v3538 = vshrl.u32 %v3335, 16
        %v3540 = vrot.slane %v3538, 3
        %v3541 = vshll.u32 %v3335, 16
        %v3543 = vrot.slane %v3541, 4
        %v3544 = vor.u32 %v3540, %v3543
        %v3545 = vsel %vm1127, %v3536, %v3544
        %v3547 = vshrl.u32 %v3336, 16
        %v3549 = vrot.slane %v3547, 3
        %v3550 = vshll.u32 %v3336, 16
        %v3552 = vrot.slane %v3550, 4
        %v3553 = vor.u32 %v3549, %v3552
        %v3554 = vsel %vm1127, %v3544, %v3553
        %v3556 = vshrl.u32 %v3337, 16
        %v3558 = vrot.slane %v3556, 3
        %v3559 = vshll.u32 %v3337, 16
        %v3561 = vrot.slane %v3559, 4
        %v3562 = vor.u32 %v3558, %v3561
        %v3563 = vsel %vm1127, %v3553, %v3562
        %v3565 = vshrl.u32 %v3338, 16
        %v3567 = vrot.slane %v3565, 3
        %v3568 = vshll.u32 %v3338, 16
        %v3570 = vrot.slane %v3568, 4
        %v3571 = vor.u32 %v3567, %v3570
        %v3572 = vsel %vm1127, %v3562, %v3571
        %v3574 = vshrl.u32 %v3339, 16
        %v3576 = vrot.slane %v3574, 3
        %v3577 = vshll.u32 %v3339, 16
        %v3579 = vrot.slane %v3577, 4
        %v3580 = vor.u32 %v3576, %v3579
        %v3581 = vsel %vm1127, %v3571, %v3580
        %v3583 = vshrl.u32 %v3340, 16
        %v3585 = vrot.slane %v3583, 3
        %v3586 = vshll.u32 %v3340, 16
        %v3588 = vrot.slane %v3586, 4
        %v3589 = vor.u32 %v3585, %v3588
        %v3590 = vsel %vm1127, %v3580, %v3589
        %v3613 = vunpack.c.l.b16 %v3341
        %v3614 = vunpack.c.l.b16 %v3342
        %v3615 = vunpack.c.l.b16 %v3343
        %v3616 = vunpack.c.l.b16 %v3344
        %v3617 = vunpack.c.l.b16 %v3345
        %v3618 = vunpack.c.l.b16 %v3346
        %v3619 = vunpack.c.l.b16 %v3347
        %v3620 = vunpack.c.l.b16 %v3348
        %v3621 = vunpack.c.l.b16 %v3349
        %v3622 = vunpack.c.l.b16 %v3350
        %v3623 = vunpack.c.l.b16 %v3351
        %v3624 = vunpack.c.l.b16 %v3352
        %v3625 = vunpack.c.l.b16 %v3353
        %v3626 = vunpack.c.l.b16 %v3354
        %v3627 = vunpack.c.l.b16 %v3355
        %v3628 = vunpack.c.l.b16 %v3356
        %v3629 = vpack.c.b16 %v3614, %v3613
        %v3630 = vpack.c.b16 %v3616, %v3615
        %v3631 = vpack.c.b16 %v3618, %v3617
        %v3632 = vpack.c.b16 %v3620, %v3619
        %v3633 = vpack.c.b16 %v3622, %v3621
        %v3634 = vpack.c.b16 %v3624, %v3623
        %v3635 = vpack.c.b16 %v3626, %v3625
        %v3636 = vpack.c.b16 %v3628, %v3627
        %3645 = vmatprep.subr.bf16.mxu0 0
        %3646 = vmatpush1.bf16.msra.mxu0 %v3629
        %3647 = vmatprep.subr.bf16.mxu0 0
        %3648 = vmatpush1.bf16.msra.mxu0 %v3630
        %3649 = vmatprep.subr.bf16.mxu0 0
        %3650 = vmatpush1.bf16.msra.mxu0 %v3631
        %3651 = vmatprep.subr.bf16.mxu0 0
        %3652 = vmatpush1.bf16.msra.mxu0 %v3632
        %3653 = vmatprep.subr.bf16.mxu0 0
        %3654 = vmatpush1.bf16.msra.mxu0 %v3633
        %3655 = vmatprep.subr.bf16.mxu0 0
        %3656 = vmatpush1.bf16.msra.mxu0 %v3634
        %3657 = vmatprep.subr.bf16.mxu0 0
        %3658 = vmatpush1.bf16.msra.mxu0 %v3635
        %3659 = vmatprep.subr.bf16.mxu0 0
        %3660 = vmatpush1.bf16.msra.mxu0 %v3636
        %3661 = vmatprep.subr.bf16.mxu0 0
        %3662 = vmatpush1.bf16.msra.mxu0 0
        %3663 = vmatprep.subr.bf16.mxu0 0
        %3664 = vmatpush1.bf16.msra.mxu0 0
        %3665 = vmatprep.subr.bf16.mxu0 0
        %3666 = vmatpush1.bf16.msra.mxu0 0
        %3667 = vmatprep.subr.bf16.mxu0 0
        %3668 = vmatpush1.bf16.msra.mxu0 0
        %3669 = vmatprep.subr.bf16.mxu0 0
        %3670 = vmatpush1.bf16.msra.mxu0 0
        %3671 = vmatprep.subr.bf16.mxu0 0
        %3672 = vmatpush1.bf16.msra.mxu0 0
        %3673 = vmatprep.subr.bf16.mxu0 0
        %3674 = vmatpush1.bf16.msra.mxu0 0
        %3675 = vmatprep.subr.bf16.mxu0 0
        %3676 = vmatpush1.bf16.msra.mxu0 0
        %3677 = vmatprep.mubr.bf16.mxu0 0
        %3678 = vmatmul.mubr.bf16.gmra.mrb[0].mxu0 %v3545
        %v3679 = vpop.f32.mrb[0].mxu0
        %v3680 = vadd.f32 %v3483, %v3679
        %v3681 = vpop.f32.mrb[0].mxu0
        %v3682 = vpop.f32.mrb[0].mxu0
        %v3683 = vadd.f32 %v3486, %v3682
        %v3684 = vpop.f32.mrb[0].mxu0
        %3685 = vmatprep.mubr.bf16.mxu0 0
        %3686 = vmatmul.mubr.bf16.gmra.mrb[0].mxu0 %v3554
        %v3687 = vpop.f32.mrb[0].mxu0
        %v3688 = vadd.f32 %v3491, %v3687
        %v3689 = vpop.f32.mrb[0].mxu0
        %v3690 = vpop.f32.mrb[0].mxu0
        %v3691 = vadd.f32 %v3494, %v3690
        %v3692 = vpop.f32.mrb[0].mxu0
        %3693 = vmatprep.mubr.bf16.mxu0 0
        %3694 = vmatmul.mubr.bf16.gmra.mrb[0].mxu0 %v3563
        %v3695 = vpop.f32.mrb[0].mxu0
        %v3696 = vadd.f32 %v3499, %v3695
        %v3697 = vpop.f32.mrb[0].mxu0
        %v3698 = vpop.f32.mrb[0].mxu0
        %v3699 = vadd.f32 %v3502, %v3698
        %v3700 = vpop.f32.mrb[0].mxu0
        %3701 = vmatprep.mubr.bf16.mxu0 0
        %3702 = vmatmul.mubr.bf16.gmra.mrb[0].mxu0 %v3572
        %v3703 = vpop.f32.mrb[0].mxu0
        %v3704 = vadd.f32 %v3507, %v3703
        %v3705 = vpop.f32.mrb[0].mxu0
        %v3706 = vpop.f32.mrb[0].mxu0
        %v3707 = vadd.f32 %v3510, %v3706
        %v3708 = vpop.f32.mrb[0].mxu0
        %3709 = vmatprep.mubr.bf16.mxu0 0
        %3710 = vmatmul.mubr.bf16.gmra.mrb[0].mxu0 %v3581
        %v3711 = vpop.f32.mrb[0].mxu0
        %v3712 = vadd.f32 %v3515, %v3711
        %v3713 = vpop.f32.mrb[0].mxu0
        %v3714 = vpop.f32.mrb[0].mxu0
        %v3715 = vadd.f32 %v3518, %v3714
        %v3716 = vpop.f32.mrb[0].mxu0
        %3717 = vmatprep.mubr.bf16.mxu0 0
        %3718 = vmatmul.mubr.bf16.gmra.mrb[0].mxu0 %v3590
        %v3719 = vpop.f32.mrb[0].mxu0
        %v3720 = vadd.f32 %v3523, %v3719
        %v3721 = vpop.f32.mrb[0].mxu0
        %v3722 = vpop.f32.mrb[0].mxu0
        %v3723 = vadd.f32 %v3526, %v3722
        %v3724 = vpop.f32.mrb[0].mxu0
        %3725 = vdwg.mxu0
        %v3726 = vld [vmem:[#allocation2 + $0x60] sm:$0x1f]
        %v3727 = vld [vmem:[%s1326] sm:$0xf]
        %v3728 = vld [vmem:[%s1326 + $0x4] sm:$0xf]
        %v3729 = vld [vmem:[%s1326 + $0x8] sm:$0xf]
        %v3730 = vld [vmem:[%s1326 + $0xc] sm:$0xf]
        %v3731 = vld [vmem:[%s1326 + $0x10] sm:$0xf]
        %v3732 = vld [vmem:[%s1326 + $0x14] sm:$0xf]
        %v3733 = vld [vmem:[%s1326 + $0x18] sm:$0xf]
        %v3734 = vld [vmem:[%s1326 + $0x1c] sm:$0xf]
        %v3735 = vld [vmem:[%s1326 + $0x20] sm:$0xf]
        %v3736 = vld [vmem:[%s1326 + $0x24] sm:$0xf]
        %v3737 = vld [vmem:[%s1326 + $0x28] sm:$0xf]
        %v3738 = vld [vmem:[%s1326 + $0x2c] sm:$0xf]
        %v3739 = vld [vmem:[%s1326 + $0x30] sm:$0xf]
        %v3740 = vld [vmem:[%s1326 + $0x34] sm:$0xf]
        %v3741 = vld [vmem:[%s1326 + $0x38] sm:$0xf]
        %v3742 = vld [vmem:[%s1326 + $0x3c] sm:$0xf]
        %v3744 = vshrl.u32 %v3357, 16
        %v3746 = vrot.slane %v3744, 4
        %v3747 = vshll.u32 %v3357, 16
        %v3749 = vrot.slane %v3747, 5
        %v3750 = vor.u32 %v3746, %v3749
        %v3751 = vrot.slane %v3538, 4
        %v3752 = vrot.slane %v3541, 5
        %v3753 = vor.u32 %v3751, %v3752
        %v3754 = vsel %vm1343, %v3750, %v3753
        %v3755 = vrot.slane %v3547, 4
        %v3756 = vrot.slane %v3550, 5
        %v3757 = vor.u32 %v3755, %v3756
        %v3758 = vsel %vm1343, %v3753, %v3757
        %v3759 = vrot.slane %v3556, 4
        %v3760 = vrot.slane %v3559, 5
        %v3761 = vor.u32 %v3759, %v3760
        %v3762 = vsel %vm1343, %v3757, %v3761
        %v3763 = vrot.slane %v3565, 4
        %v3764 = vrot.slane %v3568, 5
        %v3765 = vor.u32 %v3763, %v3764
        %v3766 = vsel %vm1343, %v3761, %v3765
        %v3767 = vrot.slane %v3574, 4
        %v3768 = vrot.slane %v3577, 5
        %v3769 = vor.u32 %v3767, %v3768
        %v3770 = vsel %vm1343, %v3765, %v3769
        %v3772 = vshrl.u32 %v3726, 16
        %v3774 = vrot.slane %v3772, 4
        %v3775 = vshll.u32 %v3726, 16
        %v3777 = vrot.slane %v3775, 5
        %v3778 = vor.u32 %v3774, %v3777
        %v3779 = vsel %vm1343, %v3769, %v3778
        %v3802 = vunpack.c.l.b16 %v3727
        %v3803 = vunpack.c.l.b16 %v3728
        %v3804 = vunpack.c.l.b16 %v3729
        %v3805 = vunpack.c.l.b16 %v3730
        %v3806 = vunpack.c.l.b16 %v3731
        %v3807 = vunpack.c.l.b16 %v3732
        %v3808 = vunpack.c.l.b16 %v3733
        %v3809 = vunpack.c.l.b16 %v3734
        %v3810 = vunpack.c.l.b16 %v3735
        %v3811 = vunpack.c.l.b16 %v3736
        %v3812 = vunpack.c.l.b16 %v3737
        %v3813 = vunpack.c.l.b16 %v3738
        %v3814 = vunpack.c.l.b16 %v3739
        %v3815 = vunpack.c.l.b16 %v3740
        %v3816 = vunpack.c.l.b16 %v3741
        %v3817 = vunpack.c.l.b16 %v3742
        %v3818 = vpack.c.b16 %v3803, %v3802
        %v3819 = vpack.c.b16 %v3805, %v3804
        %v3820 = vpack.c.b16 %v3807, %v3806
        %v3821 = vpack.c.b16 %v3809, %v3808
        %v3822 = vpack.c.b16 %v3811, %v3810
        %v3823 = vpack.c.b16 %v3813, %v3812
        %v3824 = vpack.c.b16 %v3815, %v3814
        %v3825 = vpack.c.b16 %v3817, %v3816
        %3834 = vmatprep.subr.bf16.mxu0 0
        %3835 = vmatpush1.bf16.msra.mxu0 %v3818
        %3836 = vmatprep.subr.bf16.mxu0 0
        %3837 = vmatpush1.bf16.msra.mxu0 %v3819
        %3838 = vmatprep.subr.bf16.mxu0 0
        %3839 = vmatpush1.bf16.msra.mxu0 %v3820
        %3840 = vmatprep.subr.bf16.mxu0 0
        %3841 = vmatpush1.bf16.msra.mxu0 %v3821
        %3842 = vmatprep.subr.bf16.mxu0 0
        %3843 = vmatpush1.bf16.msra.mxu0 %v3822
        %3844 = vmatprep.subr.bf16.mxu0 0
        %3845 = vmatpush1.bf16.msra.mxu0 %v3823
        %3846 = vmatprep.subr.bf16.mxu0 0
        %3847 = vmatpush1.bf16.msra.mxu0 %v3824
        %3848 = vmatprep.subr.bf16.mxu0 0
        %3849 = vmatpush1.bf16.msra.mxu0 %v3825
        %3850 = vmatprep.subr.bf16.mxu0 0
        %3851 = vmatpush1.bf16.msra.mxu0 0
        %3852 = vmatprep.subr.bf16.mxu0 0
        %3853 = vmatpush1.bf16.msra.mxu0 0
        %3854 = vmatprep.subr.bf16.mxu0 0
        %3855 = vmatpush1.bf16.msra.mxu0 0
        %3856 = vmatprep.subr.bf16.mxu0 0
        %3857 = vmatpush1.bf16.msra.mxu0 0
        %3858 = vmatprep.subr.bf16.mxu0 0
        %3859 = vmatpush1.bf16.msra.mxu0 0
        %3860 = vmatprep.subr.bf16.mxu0 0
        %3861 = vmatpush1.bf16.msra.mxu0 0
        %3862 = vmatprep.subr.bf16.mxu0 0
        %3863 = vmatpush1.bf16.msra.mxu0 0
        %3864 = vmatprep.subr.bf16.mxu0 0
        %3865 = vmatpush1.bf16.msra.mxu0 0
        %3866 = vmatprep.mubr.bf16.mxu0 0
        %3867 = vmatmul.mubr.bf16.gmra.mrb[0].mxu0 %v3754
        %v3868 = vpop.f32.mrb[0].mxu0
        %v3869 = vadd.f32 0.0, %v3868
        %v3870 = vpop.f32.mrb[0].mxu0
        %v3871 = vpop.f32.mrb[0].mxu0
        %v3872 = vadd.f32 0.0, %v3871
        %v3873 = vpop.f32.mrb[0].mxu0
        %3874 = vmatprep.mubr.bf16.mxu0 0
        %3875 = vmatmul.mubr.bf16.gmra.mrb[0].mxu0 %v3758
        %v3876 = vpop.f32.mrb[0].mxu0
        %v3877 = vadd.f32 0.0, %v3876
        %v3878 = vpop.f32.mrb[0].mxu0
        %v3879 = vpop.f32.mrb[0].mxu0
        %v3880 = vadd.f32 0.0, %v3879
        %v3881 = vpop.f32.mrb[0].mxu0
        %3882 = vmatprep.mubr.bf16.mxu0 0
        %3883 = vmatmul.mubr.bf16.gmra.mrb[0].mxu0 %v3762
        %v3884 = vpop.f32.mrb[0].mxu0
        %v3885 = vadd.f32 0.0, %v3884
        %v3886 = vpop.f32.mrb[0].mxu0
        %v3887 = vpop.f32.mrb[0].mxu0
        %v3888 = vadd.f32 0.0, %v3887
        %v3889 = vpop.f32.mrb[0].mxu0
        %3890 = vmatprep.mubr.bf16.mxu0 0
        %3891 = vmatmul.mubr.bf16.gmra.mrb[0].mxu0 %v3766
        %v3892 = vpop.f32.mrb[0].mxu0
        %v3893 = vadd.f32 0.0, %v3892
        %v3894 = vpop.f32.mrb[0].mxu0
        %v3895 = vpop.f32.mrb[0].mxu0
        %v3896 = vadd.f32 0.0, %v3895
        %v3897 = vpop.f32.mrb[0].mxu0
        %3898 = vmatprep.mubr.bf16.mxu0 0
        %3899 = vmatmul.mubr.bf16.gmra.mrb[0].mxu0 %v3770
        %v3900 = vpop.f32.mrb[0].mxu0
        %v3901 = vadd.f32 0.0, %v3900
        %v3902 = vpop.f32.mrb[0].mxu0
        %v3903 = vpop.f32.mrb[0].mxu0
        %v3904 = vadd.f32 0.0, %v3903
        %v3905 = vpop.f32.mrb[0].mxu0
        %3906 = vmatprep.mubr.bf16.mxu0 0
        %3907 = vmatmul.mubr.bf16.gmra.mrb[0].mxu0 %v3779
        %v3908 = vpop.f32.mrb[0].mxu0
        %v3909 = vadd.f32 0.0, %v3908
        %v3910 = vpop.f32.mrb[0].mxu0
        %v3911 = vpop.f32.mrb[0].mxu0
        %v3912 = vadd.f32 0.0, %v3911
        %v3913 = vpop.f32.mrb[0].mxu0
        %3914 = vdwg.mxu0
        %v3915 = vadd.f32 %v3680, %v3869
        %v3916 = vadd.f32 %v3683, %v3872
        %v3917 = vadd.f32 %v3688, %v3877
        %v3918 = vadd.f32 %v3691, %v3880
        %v3919 = vadd.f32 %v3696, %v3885
        %v3920 = vadd.f32 %v3699, %v3888
        %v3921 = vadd.f32 %v3704, %v3893
        %v3922 = vadd.f32 %v3707, %v3896
        %v3923 = vadd.f32 %v3712, %v3901
        %v3924 = vadd.f32 %v3715, %v3904
        %v3925 = vadd.f32 %v3720, %v3909
        %v3926 = vadd.f32 %v3723, %v3912
        %v3927 = vld [vmem:[#allocation2 + $0x38] sm:$0x80]
        %v3928 = vld [vmem:[#allocation2 + $0x40] sm:$0xff]
        %v3929 = vld [vmem:[#allocation2 + $0x48] sm:$0xff]
        %v3930 = vld [vmem:[#allocation2 + $0x50] sm:$0xff]
        %v3931 = vld [vmem:[#allocation2 + $0x58] sm:$0xff]
        %v3932 = vld [vmem:[#allocation2 + $0x60] sm:$0xff]
        %v3933 = vld [vmem:[#allocation2 + $0x68] sm:$0xff]
        %v3934 = vld [vmem:[%s1535] sm:$0xf]
        %v3935 = vld [vmem:[%s1535 + $0x4] sm:$0xf]
        %v3936 = vld [vmem:[%s1535 + $0x8] sm:$0xf]
        %v3937 = vld [vmem:[%s1535 + $0xc] sm:$0xf]
        %v3938 = vld [vmem:[%s1535 + $0x10] sm:$0xf]
        %v3939 = vld [vmem:[%s1535 + $0x14] sm:$0xf]
        %v3940 = vld [vmem:[%s1535 + $0x18] sm:$0xf]
        %v3941 = vld [vmem:[%s1535 + $0x1c] sm:$0xf]
        %v3942 = vld [vmem:[%s1535 + $0x20] sm:$0xf]
        %v3943 = vld [vmem:[%s1535 + $0x24] sm:$0xf]
        %v3944 = vld [vmem:[%s1535 + $0x28] sm:$0xf]
        %v3945 = vld [vmem:[%s1535 + $0x2c] sm:$0xf]
        %v3946 = vld [vmem:[%s1535 + $0x30] sm:$0xf]
        %v3947 = vld [vmem:[%s1535 + $0x34] sm:$0xf]
        %v3948 = vld [vmem:[%s1535 + $0x38] sm:$0xf]
        %v3949 = vld [vmem:[%s1535 + $0x3c] sm:$0xf]
        %v3951 = vshrl.u32 %v3927, 16
        %v3953 = vrot.slane %v3951, 7
        %v3955 = vshrl.u32 %v3928, 16
        %v3957 = vrot.slane %v3955, 7
        %v3958 = vshll.u32 %v3928, 16
        %v3960 = vor.u32 %v3957, %v3958
        %v3961 = vsel %vm1552, %v3953, %v3960
        %v3963 = vshrl.u32 %v3929, 16
        %v3965 = vrot.slane %v3963, 7
        %v3966 = vshll.u32 %v3929, 16
        %v3968 = vor.u32 %v3965, %v3966
        %v3969 = vsel %vm1552, %v3957, %v3968
        %v3971 = vshrl.u32 %v3930, 16
        %v3973 = vrot.slane %v3971, 7
        %v3974 = vshll.u32 %v3930, 16
        %v3976 = vor.u32 %v3973, %v3974
        %v3977 = vsel %vm1552, %v3965, %v3976
        %v3979 = vshrl.u32 %v3931, 16
        %v3981 = vrot.slane %v3979, 7
        %v3982 = vshll.u32 %v3931, 16
        %v3984 = vor.u32 %v3981, %v3982
        %v3985 = vsel %vm1552, %v3973, %v3984
        %v3987 = vshrl.u32 %v3932, 16
        %v3989 = vrot.slane %v3987, 7
        %v3990 = vshll.u32 %v3932, 16
        %v3992 = vor.u32 %v3989, %v3990
        %v3993 = vsel %vm1552, %v3981, %v3992
        %v3995 = vshrl.u32 %v3933, 16
        %v3997 = vrot.slane %v3995, 7
        %v3998 = vshll.u32 %v3933, 16
        %v4000 = vor.u32 %v3997, %v3998
        %v4001 = vsel %vm1552, %v3989, %v4000
        %v4024 = vunpack.c.l.b16 %v3934
        %v4025 = vunpack.c.l.b16 %v3935
        %v4026 = vunpack.c.l.b16 %v3936
        %v4027 = vunpack.c.l.b16 %v3937
        %v4028 = vunpack.c.l.b16 %v3938
        %v4029 = vunpack.c.l.b16 %v3939
        %v4030 = vunpack.c.l.b16 %v3940
        %v4031 = vunpack.c.l.b16 %v3941
        %v4032 = vunpack.c.l.b16 %v3942
        %v4033 = vunpack.c.l.b16 %v3943
        %v4034 = vunpack.c.l.b16 %v3944
        %v4035 = vunpack.c.l.b16 %v3945
        %v4036 = vunpack.c.l.b16 %v3946
        %v4037 = vunpack.c.l.b16 %v3947
        %v4038 = vunpack.c.l.b16 %v3948
        %v4039 = vunpack.c.l.b16 %v3949
        %v4040 = vpack.c.b16 %v4025, %v4024
        %v4041 = vpack.c.b16 %v4027, %v4026
        %v4042 = vpack.c.b16 %v4029, %v4028
        %v4043 = vpack.c.b16 %v4031, %v4030
        %v4044 = vpack.c.b16 %v4033, %v4032
        %v4045 = vpack.c.b16 %v4035, %v4034
        %v4046 = vpack.c.b16 %v4037, %v4036
        %v4047 = vpack.c.b16 %v4039, %v4038
        %4056 = vmatprep.subr.bf16.mxu0 0
        %4057 = vmatpush1.bf16.msra.mxu0 %v4040
        %4058 = vmatprep.subr.bf16.mxu0 0
        %4059 = vmatpush1.bf16.msra.mxu0 %v4041
        %4060 = vmatprep.subr.bf16.mxu0 0
        %4061 = vmatpush1.bf16.msra.mxu0 %v4042
        %4062 = vmatprep.subr.bf16.mxu0 0
        %4063 = vmatpush1.bf16.msra.mxu0 %v4043
        %4064 = vmatprep.subr.bf16.mxu0 0
        %4065 = vmatpush1.bf16.msra.mxu0 %v4044
        %4066 = vmatprep.subr.bf16.mxu0 0
        %4067 = vmatpush1.bf16.msra.mxu0 %v4045
        %4068 = vmatprep.subr.bf16.mxu0 0
        %4069 = vmatpush1.bf16.msra.mxu0 %v4046
        %4070 = vmatprep.subr.bf16.mxu0 0
        %4071 = vmatpush1.bf16.msra.mxu0 %v4047
        %4072 = vmatprep.subr.bf16.mxu0 0
        %4073 = vmatpush1.bf16.msra.mxu0 0
        %4074 = vmatprep.subr.bf16.mxu0 0
        %4075 = vmatpush1.bf16.msra.mxu0 0
        %4076 = vmatprep.subr.bf16.mxu0 0
        %4077 = vmatpush1.bf16.msra.mxu0 0
        %4078 = vmatprep.subr.bf16.mxu0 0
        %4079 = vmatpush1.bf16.msra.mxu0 0
        %4080 = vmatprep.subr.bf16.mxu0 0
        %4081 = vmatpush1.bf16.msra.mxu0 0
        %4082 = vmatprep.subr.bf16.mxu0 0
        %4083 = vmatpush1.bf16.msra.mxu0 0
        %4084 = vmatprep.subr.bf16.mxu0 0
        %4085 = vmatpush1.bf16.msra.mxu0 0
        %4086 = vmatprep.subr.bf16.mxu0 0
        %4087 = vmatpush1.bf16.msra.mxu0 0
        %4088 = vmatprep.mubr.bf16.mxu0 0
        %4089 = vmatmul.mubr.bf16.gmra.mrb[0].mxu0 %v3961
        %v4090 = vpop.f32.mrb[0].mxu0
        %v4091 = vadd.f32 0.0, %v4090
        %v4092 = vpop.f32.mrb[0].mxu0
        %v4093 = vpop.f32.mrb[0].mxu0
        %v4094 = vadd.f32 0.0, %v4093
        %v4095 = vpop.f32.mrb[0].mxu0
        %4096 = vmatprep.mubr.bf16.mxu0 0
        %4097 = vmatmul.mubr.bf16.gmra.mrb[0].mxu0 %v3969
        %v4098 = vpop.f32.mrb[0].mxu0
        %v4099 = vadd.f32 0.0, %v4098
        %v4100 = vpop.f32.mrb[0].mxu0
        %v4101 = vpop.f32.mrb[0].mxu0
        %v4102 = vadd.f32 0.0, %v4101
        %v4103 = vpop.f32.mrb[0].mxu0
        %4104 = vmatprep.mubr.bf16.mxu0 0
        %4105 = vmatmul.mubr.bf16.gmra.mrb[0].mxu0 %v3977
        %v4106 = vpop.f32.mrb[0].mxu0
        %v4107 = vadd.f32 0.0, %v4106
        %v4108 = vpop.f32.mrb[0].mxu0
        %v4109 = vpop.f32.mrb[0].mxu0
        %v4110 = vadd.f32 0.0, %v4109
        %v4111 = vpop.f32.mrb[0].mxu0
        %4112 = vmatprep.mubr.bf16.mxu0 0
        %4113 = vmatmul.mubr.bf16.gmra.mrb[0].mxu0 %v3985
        %v4114 = vpop.f32.mrb[0].mxu0
        %v4115 = vadd.f32 0.0, %v4114
        %v4116 = vpop.f32.mrb[0].mxu0
        %v4117 = vpop.f32.mrb[0].mxu0
        %v4118 = vadd.f32 0.0, %v4117
        %v4119 = vpop.f32.mrb[0].mxu0
        %4120 = vmatprep.mubr.bf16.mxu0 0
        %4121 = vmatmul.mubr.bf16.gmra.mrb[0].mxu0 %v3993
        %v4122 = vpop.f32.mrb[0].mxu0
        %v4123 = vadd.f32 0.0, %v4122
        %v4124 = vpop.f32.mrb[0].mxu0
        %v4125 = vpop.f32.mrb[0].mxu0
        %v4126 = vadd.f32 0.0, %v4125
        %v4127 = vpop.f32.mrb[0].mxu0
        %4128 = vmatprep.mubr.bf16.mxu0 0
        %4129 = vmatmul.mubr.bf16.gmra.mrb[0].mxu0 %v4001
        %v4130 = vpop.f32.mrb[0].mxu0
        %v4131 = vadd.f32 0.0, %v4130
        %v4132 = vpop.f32.mrb[0].mxu0
        %v4133 = vpop.f32.mrb[0].mxu0
        %v4134 = vadd.f32 0.0, %v4133
        %v4135 = vpop.f32.mrb[0].mxu0
        %4136 = vdwg.mxu0
        %v4137 = vadd.f32 %v3915, %v4091
        %v4138 = vadd.f32 %v3916, %v4094
        %v4139 = vadd.f32 %v3917, %v4099
        %v4140 = vadd.f32 %v3918, %v4102
        %v4141 = vadd.f32 %v3919, %v4107
        %v4142 = vadd.f32 %v3920, %v4110
        %v4143 = vadd.f32 %v3921, %v4115
        %v4144 = vadd.f32 %v3922, %v4118
        %v4145 = vadd.f32 %v3923, %v4123
        %v4146 = vadd.f32 %v3924, %v4126
        %v4147 = vadd.f32 %v3925, %v4131
        %v4148 = vadd.f32 %v3926, %v4134
        %v4149 = vld [vmem:[%s1752] sm:$0xf]
        %v4150 = vld [vmem:[%s1752 + $0x4] sm:$0xf]
        %v4151 = vld [vmem:[%s1752 + $0x8] sm:$0xf]
        %v4152 = vld [vmem:[%s1752 + $0xc] sm:$0xf]
        %v4153 = vld [vmem:[%s1752 + $0x10] sm:$0xf]
        %v4154 = vld [vmem:[%s1752 + $0x14] sm:$0xf]
        %v4155 = vld [vmem:[%s1752 + $0x18] sm:$0xf]
        %v4156 = vld [vmem:[%s1752 + $0x1c] sm:$0xf]
        %v4157 = vld [vmem:[%s1752 + $0x20] sm:$0xf]
        %v4158 = vld [vmem:[%s1752 + $0x24] sm:$0xf]
        %v4159 = vld [vmem:[%s1752 + $0x28] sm:$0xf]
        %v4160 = vld [vmem:[%s1752 + $0x2c] sm:$0xf]
        %v4161 = vld [vmem:[%s1752 + $0x30] sm:$0xf]
        %v4162 = vld [vmem:[%s1752 + $0x34] sm:$0xf]
        %v4163 = vld [vmem:[%s1752 + $0x38] sm:$0xf]
        %v4164 = vld [vmem:[%s1752 + $0x3c] sm:$0xf]
        %v4181 = vunpack.c.l.b16 %v4149
        %v4182 = vunpack.c.l.b16 %v4150
        %v4183 = vunpack.c.l.b16 %v4151
        %v4184 = vunpack.c.l.b16 %v4152
        %v4185 = vunpack.c.l.b16 %v4153
        %v4186 = vunpack.c.l.b16 %v4154
        %v4187 = vunpack.c.l.b16 %v4155
        %v4188 = vunpack.c.l.b16 %v4156
        %v4189 = vunpack.c.l.b16 %v4157
        %v4190 = vunpack.c.l.b16 %v4158
        %v4191 = vunpack.c.l.b16 %v4159
        %v4192 = vunpack.c.l.b16 %v4160
        %v4193 = vunpack.c.l.b16 %v4161
        %v4194 = vunpack.c.l.b16 %v4162
        %v4195 = vunpack.c.l.b16 %v4163
        %v4196 = vunpack.c.l.b16 %v4164
        %v4197 = vpack.c.b16 %v4182, %v4181
        %v4198 = vpack.c.b16 %v4184, %v4183
        %v4199 = vpack.c.b16 %v4186, %v4185
        %v4200 = vpack.c.b16 %v4188, %v4187
        %v4201 = vpack.c.b16 %v4190, %v4189
        %v4202 = vpack.c.b16 %v4192, %v4191
        %v4203 = vpack.c.b16 %v4194, %v4193
        %v4204 = vpack.c.b16 %v4196, %v4195
        %4213 = vmatprep.subr.bf16.mxu0 0
        %4214 = vmatpush1.bf16.msra.mxu0 %v4197
        %4215 = vmatprep.subr.bf16.mxu0 0
        %4216 = vmatpush1.bf16.msra.mxu0 %v4198
        %4217 = vmatprep.subr.bf16.mxu0 0
        %4218 = vmatpush1.bf16.msra.mxu0 %v4199
        %4219 = vmatprep.subr.bf16.mxu0 0
        %4220 = vmatpush1.bf16.msra.mxu0 %v4200
        %4221 = vmatprep.subr.bf16.mxu0 0
        %4222 = vmatpush1.bf16.msra.mxu0 %v4201
        %4223 = vmatprep.subr.bf16.mxu0 0
        %4224 = vmatpush1.bf16.msra.mxu0 %v4202
        %4225 = vmatprep.subr.bf16.mxu0 0
        %4226 = vmatpush1.bf16.msra.mxu0 %v4203
        %4227 = vmatprep.subr.bf16.mxu0 0
        %4228 = vmatpush1.bf16.msra.mxu0 %v4204
        %4229 = vmatprep.subr.bf16.mxu0 0
        %4230 = vmatpush1.bf16.msra.mxu0 0
        %4231 = vmatprep.subr.bf16.mxu0 0
        %4232 = vmatpush1.bf16.msra.mxu0 0
        %4233 = vmatprep.subr.bf16.mxu0 0
        %4234 = vmatpush1.bf16.msra.mxu0 0
        %4235 = vmatprep.subr.bf16.mxu0 0
        %4236 = vmatpush1.bf16.msra.mxu0 0
        %4237 = vmatprep.subr.bf16.mxu0 0
        %4238 = vmatpush1.bf16.msra.mxu0 0
        %4239 = vmatprep.subr.bf16.mxu0 0
        %4240 = vmatpush1.bf16.msra.mxu0 0
        %4241 = vmatprep.subr.bf16.mxu0 0
        %4242 = vmatpush1.bf16.msra.mxu0 0
        %4243 = vmatprep.subr.bf16.mxu0 0
        %4244 = vmatpush1.bf16.msra.mxu0 0
        %4245 = vmatprep.mubr.bf16.mxu0 0
        %4246 = vmatmul.mubr.bf16.gmra.mrb[0].mxu0 %v3928
        %v4247 = vpop.f32.mrb[0].mxu0
        %v4248 = vadd.f32 0.0, %v4247
        %v4249 = vpop.f32.mrb[0].mxu0
        %v4250 = vpop.f32.mrb[0].mxu0
        %v4251 = vadd.f32 0.0, %v4250
        %v4252 = vpop.f32.mrb[0].mxu0
        %4253 = vmatprep.mubr.bf16.mxu0 0
        %4254 = vmatmul.mubr.bf16.gmra.mrb[0].mxu0 %v3929
        %v4255 = vpop.f32.mrb[0].mxu0
        %v4256 = vadd.f32 0.0, %v4255
        %v4257 = vpop.f32.mrb[0].mxu0
        %v4258 = vpop.f32.mrb[0].mxu0
        %v4259 = vadd.f32 0.0, %v4258
        %v4260 = vpop.f32.mrb[0].mxu0
        %4261 = vmatprep.mubr.bf16.mxu0 0
        %4262 = vmatmul.mubr.bf16.gmra.mrb[0].mxu0 %v3930
        %v4263 = vpop.f32.mrb[0].mxu0
        %v4264 = vadd.f32 0.0, %v4263
        %v4265 = vpop.f32.mrb[0].mxu0
        %v4266 = vpop.f32.mrb[0].mxu0
        %v4267 = vadd.f32 0.0, %v4266
        %v4268 = vpop.f32.mrb[0].mxu0
        %4269 = vmatprep.mubr.bf16.mxu0 0
        %4270 = vmatmul.mubr.bf16.gmra.mrb[0].mxu0 %v3931
        %v4271 = vpop.f32.mrb[0].mxu0
        %v4272 = vadd.f32 0.0, %v4271
        %v4273 = vpop.f32.mrb[0].mxu0
        %v4274 = vpop.f32.mrb[0].mxu0
        %v4275 = vadd.f32 0.0, %v4274
        %v4276 = vpop.f32.mrb[0].mxu0
        %4277 = vmatprep.mubr.bf16.mxu0 0
        %4278 = vmatmul.mubr.bf16.gmra.mrb[0].mxu0 %v3932
        %v4279 = vpop.f32.mrb[0].mxu0
        %v4280 = vadd.f32 0.0, %v4279
        %v4281 = vpop.f32.mrb[0].mxu0
        %v4282 = vpop.f32.mrb[0].mxu0
        %v4283 = vadd.f32 0.0, %v4282
        %v4284 = vpop.f32.mrb[0].mxu0
        %4285 = vmatprep.mubr.bf16.mxu0 0
        %4286 = vmatmul.mubr.bf16.gmra.mrb[0].mxu0 %v3933
        %v4287 = vpop.f32.mrb[0].mxu0
        %v4288 = vadd.f32 0.0, %v4287
        %v4289 = vpop.f32.mrb[0].mxu0
        %v4290 = vpop.f32.mrb[0].mxu0
        %v4291 = vadd.f32 0.0, %v4290
        %v4292 = vpop.f32.mrb[0].mxu0
        %4293 = vdwg.mxu0
        %v4294 = vadd.f32 %v4137, %v4248
        %v4295 = vadd.f32 %v4138, %v4251
        %v4296 = vadd.f32 %v4139, %v4256
        %v4297 = vadd.f32 %v4140, %v4259
        %v4298 = vadd.f32 %v4141, %v4264
        %v4299 = vadd.f32 %v4142, %v4267
        %v4300 = vadd.f32 %v4143, %v4272
        %v4301 = vadd.f32 %v4144, %v4275
        %v4302 = vadd.f32 %v4145, %v4280
        %v4303 = vadd.f32 %v4146, %v4283
        %v4304 = vadd.f32 %v4147, %v4288
        %v4305 = vadd.f32 %v4148, %v4291
        %v4306 = vld [vmem:[#allocation2 + $0x40] sm:$0xff]
        %v4307 = vld [vmem:[#allocation2 + $0x48] sm:$0xff]
        %v4308 = vld [vmem:[#allocation2 + $0x50] sm:$0xff]
        %v4309 = vld [vmem:[#allocation2 + $0x58] sm:$0xff]
        %v4310 = vld [vmem:[#allocation2 + $0x60] sm:$0xff]
        %v4311 = vld [vmem:[#allocation2 + $0x68] sm:$0xff]
        %v4312 = vld [vmem:[#allocation2 + $0x70] sm:$0x1]
        %v4313 = vld [vmem:[%s1917] sm:$0xf]
        %v4314 = vld [vmem:[%s1917 + $0x4] sm:$0xf]
        %v4315 = vld [vmem:[%s1917 + $0x8] sm:$0xf]
        %v4316 = vld [vmem:[%s1917 + $0xc] sm:$0xf]
        %v4317 = vld [vmem:[%s1917 + $0x10] sm:$0xf]
        %v4318 = vld [vmem:[%s1917 + $0x14] sm:$0xf]
        %v4319 = vld [vmem:[%s1917 + $0x18] sm:$0xf]
        %v4320 = vld [vmem:[%s1917 + $0x1c] sm:$0xf]
        %v4321 = vld [vmem:[%s1917 + $0x20] sm:$0xf]
        %v4322 = vld [vmem:[%s1917 + $0x24] sm:$0xf]
        %v4323 = vld [vmem:[%s1917 + $0x28] sm:$0xf]
        %v4324 = vld [vmem:[%s1917 + $0x2c] sm:$0xf]
        %v4325 = vld [vmem:[%s1917 + $0x30] sm:$0xf]
        %v4326 = vld [vmem:[%s1917 + $0x34] sm:$0xf]
        %v4327 = vld [vmem:[%s1917 + $0x38] sm:$0xf]
        %v4328 = vld [vmem:[%s1917 + $0x3c] sm:$0xf]
        %v4330 = vshrl.u32 %v4306, 16
        %v4332 = vshll.u32 %v4306, 16
        %v4334 = vrot.slane %v4332, 1
        %v4335 = vor.u32 %v4330, %v4334
        %v4337 = vshll.u32 %v4307, 16
        %v4339 = vrot.slane %v4337, 1
        %v4340 = vsel %vm1934, %v4335, %v4339
        %v4341 = vshrl.u32 %v4307, 16
        %v4343 = vor.u32 %v4341, %v4339
        %v4345 = vshll.u32 %v4308, 16
        %v4347 = vrot.slane %v4345, 1
        %v4348 = vsel %vm1934, %v4343, %v4347
        %v4349 = vshrl.u32 %v4308, 16
        %v4351 = vor.u32 %v4349, %v4347
        %v4353 = vshll.u32 %v4309, 16
        %v4355 = vrot.slane %v4353, 1
        %v4356 = vsel %vm1934, %v4351, %v4355
        %v4357 = vshrl.u32 %v4309, 16
        %v4359 = vor.u32 %v4357, %v4355
        %v4361 = vshll.u32 %v4310, 16
        %v4363 = vrot.slane %v4361, 1
        %v4364 = vsel %vm1934, %v4359, %v4363
        %v4365 = vshrl.u32 %v4310, 16
        %v4367 = vor.u32 %v4365, %v4363
        %v4369 = vshll.u32 %v4311, 16
        %v4371 = vrot.slane %v4369, 1
        %v4372 = vsel %vm1934, %v4367, %v4371
        %v4373 = vshrl.u32 %v4311, 16
        %v4375 = vor.u32 %v4373, %v4371
        %v4377 = vshll.u32 %v4312, 16
        %v4379 = vrot.slane %v4377, 1
        %v4380 = vsel %vm1934, %v4375, %v4379
        %v4403 = vunpack.c.l.b16 %v4313
        %v4404 = vunpack.c.l.b16 %v4314
        %v4405 = vunpack.c.l.b16 %v4315
        %v4406 = vunpack.c.l.b16 %v4316
        %v4407 = vunpack.c.l.b16 %v4317
        %v4408 = vunpack.c.l.b16 %v4318
        %v4409 = vunpack.c.l.b16 %v4319
        %v4410 = vunpack.c.l.b16 %v4320
        %v4411 = vunpack.c.l.b16 %v4321
        %v4412 = vunpack.c.l.b16 %v4322
        %v4413 = vunpack.c.l.b16 %v4323
        %v4414 = vunpack.c.l.b16 %v4324
        %v4415 = vunpack.c.l.b16 %v4325
        %v4416 = vunpack.c.l.b16 %v4326
        %v4417 = vunpack.c.l.b16 %v4327
        %v4418 = vunpack.c.l.b16 %v4328
        %v4419 = vpack.c.b16 %v4404, %v4403
        %v4420 = vpack.c.b16 %v4406, %v4405
        %v4421 = vpack.c.b16 %v4408, %v4407
        %v4422 = vpack.c.b16 %v4410, %v4409
        %v4423 = vpack.c.b16 %v4412, %v4411
        %v4424 = vpack.c.b16 %v4414, %v4413
        %v4425 = vpack.c.b16 %v4416, %v4415
        %v4426 = vpack.c.b16 %v4418, %v4417
        %4435 = vmatprep.subr.bf16.mxu0 0
        %4436 = vmatpush1.bf16.msra.mxu0 %v4419
        %4437 = vmatprep.subr.bf16.mxu0 0
        %4438 = vmatpush1.bf16.msra.mxu0 %v4420
        %4439 = vmatprep.subr.bf16.mxu0 0
        %4440 = vmatpush1.bf16.msra.mxu0 %v4421
        %4441 = vmatprep.subr.bf16.mxu0 0
        %4442 = vmatpush1.bf16.msra.mxu0 %v4422
        %4443 = vmatprep.subr.bf16.mxu0 0
        %4444 = vmatpush1.bf16.msra.mxu0 %v4423
        %4445 = vmatprep.subr.bf16.mxu0 0
        %4446 = vmatpush1.bf16.msra.mxu0 %v4424
        %4447 = vmatprep.subr.bf16.mxu0 0
        %4448 = vmatpush1.bf16.msra.mxu0 %v4425
        %4449 = vmatprep.subr.bf16.mxu0 0
        %4450 = vmatpush1.bf16.msra.mxu0 %v4426
        %4451 = vmatprep.subr.bf16.mxu0 0
        %4452 = vmatpush1.bf16.msra.mxu0 0
        %4453 = vmatprep.subr.bf16.mxu0 0
        %4454 = vmatpush1.bf16.msra.mxu0 0
        %4455 = vmatprep.subr.bf16.mxu0 0
        %4456 = vmatpush1.bf16.msra.mxu0 0
        %4457 = vmatprep.subr.bf16.mxu0 0
        %4458 = vmatpush1.bf16.msra.mxu0 0
        %4459 = vmatprep.subr.bf16.mxu0 0
        %4460 = vmatpush1.bf16.msra.mxu0 0
        %4461 = vmatprep.subr.bf16.mxu0 0
        %4462 = vmatpush1.bf16.msra.mxu0 0
        %4463 = vmatprep.subr.bf16.mxu0 0
        %4464 = vmatpush1.bf16.msra.mxu0 0
        %4465 = vmatprep.subr.bf16.mxu0 0
        %4466 = vmatpush1.bf16.msra.mxu0 0
        %4467 = vmatprep.mubr.bf16.mxu0 0
        %4468 = vmatmul.mubr.bf16.gmra.mrb[0].mxu0 %v4340
        %v4469 = vpop.f32.mrb[0].mxu0
        %v4470 = vadd.f32 0.0, %v4469
        %v4471 = vpop.f32.mrb[0].mxu0
        %v4472 = vpop.f32.mrb[0].mxu0
        %v4473 = vadd.f32 0.0, %v4472
        %v4474 = vpop.f32.mrb[0].mxu0
        %4475 = vmatprep.mubr.bf16.mxu0 0
        %4476 = vmatmul.mubr.bf16.gmra.mrb[0].mxu0 %v4348
        %v4477 = vpop.f32.mrb[0].mxu0
        %v4478 = vadd.f32 0.0, %v4477
        %v4479 = vpop.f32.mrb[0].mxu0
        %v4480 = vpop.f32.mrb[0].mxu0
        %v4481 = vadd.f32 0.0, %v4480
        %v4482 = vpop.f32.mrb[0].mxu0
        %4483 = vmatprep.mubr.bf16.mxu0 0
        %4484 = vmatmul.mubr.bf16.gmra.mrb[0].mxu0 %v4356
        %v4485 = vpop.f32.mrb[0].mxu0
        %v4486 = vadd.f32 0.0, %v4485
        %v4487 = vpop.f32.mrb[0].mxu0
        %v4488 = vpop.f32.mrb[0].mxu0
        %v4489 = vadd.f32 0.0, %v4488
        %v4490 = vpop.f32.mrb[0].mxu0
        %4491 = vmatprep.mubr.bf16.mxu0 0
        %4492 = vmatmul.mubr.bf16.gmra.mrb[0].mxu0 %v4364
        %v4493 = vpop.f32.mrb[0].mxu0
        %v4494 = vadd.f32 0.0, %v4493
        %v4495 = vpop.f32.mrb[0].mxu0
        %v4496 = vpop.f32.mrb[0].mxu0
        %v4497 = vadd.f32 0.0, %v4496
        %v4498 = vpop.f32.mrb[0].mxu0
        %4499 = vmatprep.mubr.bf16.mxu0 0
        %4500 = vmatmul.mubr.bf16.gmra.mrb[0].mxu0 %v4372
        %v4501 = vpop.f32.mrb[0].mxu0
        %v4502 = vadd.f32 0.0, %v4501
        %v4503 = vpop.f32.mrb[0].mxu0
        %v4504 = vpop.f32.mrb[0].mxu0
        %v4505 = vadd.f32 0.0, %v4504
        %v4506 = vpop.f32.mrb[0].mxu0
        %4507 = vmatprep.mubr.bf16.mxu0 0
        %4508 = vmatmul.mubr.bf16.gmra.mrb[0].mxu0 %v4380
        %v4509 = vpop.f32.mrb[0].mxu0
        %v4510 = vadd.f32 0.0, %v4509
        %v4511 = vpop.f32.mrb[0].mxu0
        %v4512 = vpop.f32.mrb[0].mxu0
        %v4513 = vadd.f32 0.0, %v4512
        %v4514 = vpop.f32.mrb[0].mxu0
        %4515 = vdwg.mxu0
        %v4516 = vadd.f32 %v4294, %v4470
        %v4517 = vadd.f32 %v4295, %v4473
        %v4518 = vadd.f32 %v4296, %v4478
        %v4519 = vadd.f32 %v4297, %v4481
        %v4520 = vadd.f32 %v4298, %v4486
        %v4521 = vadd.f32 %v4299, %v4489
        %v4522 = vadd.f32 %v4300, %v4494
        %v4523 = vadd.f32 %v4301, %v4497
        %v4524 = vadd.f32 %v4302, %v4502
        %v4525 = vadd.f32 %v4303, %v4505
        %v4526 = vadd.f32 %v4304, %v4510
        %v4527 = vadd.f32 %v4305, %v4513
        %v4528 = vld [vmem:[#allocation2 + $0x48] sm:$0xf8]
        %v4529 = vld [vmem:[#allocation2 + $0x50] sm:$0xff]
        %v4530 = vld [vmem:[#allocation2 + $0x58] sm:$0xff]
        %v4531 = vld [vmem:[#allocation2 + $0x60] sm:$0xff]
        %v4532 = vld [vmem:[#allocation2 + $0x68] sm:$0xff]
        %v4533 = vld [vmem:[#allocation2 + $0x70] sm:$0xff]
        %v4534 = vld [vmem:[#allocation2 + $0x78] sm:$0xf]
        %v4535 = vld [vmem:[%s2141] sm:$0xf]
        %v4536 = vld [vmem:[%s2141 + $0x4] sm:$0xf]
        %v4537 = vld [vmem:[%s2141 + $0x8] sm:$0xf]
        %v4538 = vld [vmem:[%s2141 + $0xc] sm:$0xf]
        %v4539 = vld [vmem:[%s2141 + $0x10] sm:$0xf]
        %v4540 = vld [vmem:[%s2141 + $0x14] sm:$0xf]
        %v4541 = vld [vmem:[%s2141 + $0x18] sm:$0xf]
        %v4542 = vld [vmem:[%s2141 + $0x1c] sm:$0xf]
        %v4543 = vld [vmem:[%s2141 + $0x20] sm:$0xf]
        %v4544 = vld [vmem:[%s2141 + $0x24] sm:$0xf]
        %v4545 = vld [vmem:[%s2141 + $0x28] sm:$0xf]
        %v4546 = vld [vmem:[%s2141 + $0x2c] sm:$0xf]
        %v4547 = vld [vmem:[%s2141 + $0x30] sm:$0xf]
        %v4548 = vld [vmem:[%s2141 + $0x34] sm:$0xf]
        %v4549 = vld [vmem:[%s2141 + $0x38] sm:$0xf]
        %v4550 = vld [vmem:[%s2141 + $0x3c] sm:$0xf]
        %v4552 = vshrl.u32 %v4528, 16
        %v4554 = vrot.slane %v4552, 3
        %v4555 = vshll.u32 %v4528, 16
        %v4557 = vrot.slane %v4555, 4
        %v4558 = vor.u32 %v4554, %v4557
        %v4560 = vshrl.u32 %v4529, 16
        %v4562 = vrot.slane %v4560, 3
        %v4563 = vshll.u32 %v4529, 16
        %v4565 = vrot.slane %v4563, 4
        %v4566 = vor.u32 %v4562, %v4565
        %v4567 = vsel %vm1127, %v4558, %v4566
        %v4569 = vshrl.u32 %v4530, 16
        %v4571 = vrot.slane %v4569, 3
        %v4572 = vshll.u32 %v4530, 16
        %v4574 = vrot.slane %v4572, 4
        %v4575 = vor.u32 %v4571, %v4574
        %v4576 = vsel %vm1127, %v4566, %v4575
        %v4578 = vshrl.u32 %v4531, 16
        %v4580 = vrot.slane %v4578, 3
        %v4581 = vshll.u32 %v4531, 16
        %v4583 = vrot.slane %v4581, 4
        %v4584 = vor.u32 %v4580, %v4583
        %v4585 = vsel %vm1127, %v4575, %v4584
        %v4587 = vshrl.u32 %v4532, 16
        %v4589 = vrot.slane %v4587, 3
        %v4590 = vshll.u32 %v4532, 16
        %v4592 = vrot.slane %v4590, 4
        %v4593 = vor.u32 %v4589, %v4592
        %v4594 = vsel %vm1127, %v4584, %v4593
        %v4596 = vshrl.u32 %v4533, 16
        %v4598 = vrot.slane %v4596, 3
        %v4599 = vshll.u32 %v4533, 16
        %v4601 = vrot.slane %v4599, 4
        %v4602 = vor.u32 %v4598, %v4601
        %v4603 = vsel %vm1127, %v4593, %v4602
        %v4605 = vshrl.u32 %v4534, 16
        %v4607 = vrot.slane %v4605, 3
        %v4608 = vshll.u32 %v4534, 16
        %v4610 = vrot.slane %v4608, 4
        %v4611 = vor.u32 %v4607, %v4610
        %v4612 = vsel %vm1127, %v4602, %v4611
        %v4635 = vunpack.c.l.b16 %v4535
        %v4636 = vunpack.c.l.b16 %v4536
        %v4637 = vunpack.c.l.b16 %v4537
        %v4638 = vunpack.c.l.b16 %v4538
        %v4639 = vunpack.c.l.b16 %v4539
        %v4640 = vunpack.c.l.b16 %v4540
        %v4641 = vunpack.c.l.b16 %v4541
        %v4642 = vunpack.c.l.b16 %v4542
        %v4643 = vunpack.c.l.b16 %v4543
        %v4644 = vunpack.c.l.b16 %v4544
        %v4645 = vunpack.c.l.b16 %v4545
        %v4646 = vunpack.c.l.b16 %v4546
        %v4647 = vunpack.c.l.b16 %v4547
        %v4648 = vunpack.c.l.b16 %v4548
        %v4649 = vunpack.c.l.b16 %v4549
        %v4650 = vunpack.c.l.b16 %v4550
        %v4651 = vpack.c.b16 %v4636, %v4635
        %v4652 = vpack.c.b16 %v4638, %v4637
        %v4653 = vpack.c.b16 %v4640, %v4639
        %v4654 = vpack.c.b16 %v4642, %v4641
        %v4655 = vpack.c.b16 %v4644, %v4643
        %v4656 = vpack.c.b16 %v4646, %v4645
        %v4657 = vpack.c.b16 %v4648, %v4647
        %v4658 = vpack.c.b16 %v4650, %v4649
        %4667 = vmatprep.subr.bf16.mxu0 0
        %4668 = vmatpush1.bf16.msra.mxu0 %v4651
        %4669 = vmatprep.subr.bf16.mxu0 0
        %4670 = vmatpush1.bf16.msra.mxu0 %v4652
        %4671 = vmatprep.subr.bf16.mxu0 0
        %4672 = vmatpush1.bf16.msra.mxu0 %v4653
        %4673 = vmatprep.subr.bf16.mxu0 0
        %4674 = vmatpush1.bf16.msra.mxu0 %v4654
        %4675 = vmatprep.subr.bf16.mxu0 0
        %4676 = vmatpush1.bf16.msra.mxu0 %v4655
        %4677 = vmatprep.subr.bf16.mxu0 0
        %4678 = vmatpush1.bf16.msra.mxu0 %v4656
        %4679 = vmatprep.subr.bf16.mxu0 0
        %4680 = vmatpush1.bf16.msra.mxu0 %v4657
        %4681 = vmatprep.subr.bf16.mxu0 0
        %4682 = vmatpush1.bf16.msra.mxu0 %v4658
        %4683 = vmatprep.subr.bf16.mxu0 0
        %4684 = vmatpush1.bf16.msra.mxu0 0
        %4685 = vmatprep.subr.bf16.mxu0 0
        %4686 = vmatpush1.bf16.msra.mxu0 0
        %4687 = vmatprep.subr.bf16.mxu0 0
        %4688 = vmatpush1.bf16.msra.mxu0 0
        %4689 = vmatprep.subr.bf16.mxu0 0
        %4690 = vmatpush1.bf16.msra.mxu0 0
        %4691 = vmatprep.subr.bf16.mxu0 0
        %4692 = vmatpush1.bf16.msra.mxu0 0
        %4693 = vmatprep.subr.bf16.mxu0 0
        %4694 = vmatpush1.bf16.msra.mxu0 0
        %4695 = vmatprep.subr.bf16.mxu0 0
        %4696 = vmatpush1.bf16.msra.mxu0 0
        %4697 = vmatprep.subr.bf16.mxu0 0
        %4698 = vmatpush1.bf16.msra.mxu0 0
        %4699 = vmatprep.mubr.bf16.mxu0 0
        %4700 = vmatmul.mubr.bf16.gmra.mrb[0].mxu0 %v4567
        %v4701 = vpop.f32.mrb[0].mxu0
        %v4702 = vadd.f32 0.0, %v4701
        %v4703 = vpop.f32.mrb[0].mxu0
        %v4704 = vpop.f32.mrb[0].mxu0
        %v4705 = vadd.f32 0.0, %v4704
        %v4706 = vpop.f32.mrb[0].mxu0
        %4707 = vmatprep.mubr.bf16.mxu0 0
        %4708 = vmatmul.mubr.bf16.gmra.mrb[0].mxu0 %v4576
        %v4709 = vpop.f32.mrb[0].mxu0
        %v4710 = vadd.f32 0.0, %v4709
        %v4711 = vpop.f32.mrb[0].mxu0
        %v4712 = vpop.f32.mrb[0].mxu0
        %v4713 = vadd.f32 0.0, %v4712
        %v4714 = vpop.f32.mrb[0].mxu0
        %4715 = vmatprep.mubr.bf16.mxu0 0
        %4716 = vmatmul.mubr.bf16.gmra.mrb[0].mxu0 %v4585
        %v4717 = vpop.f32.mrb[0].mxu0
        %v4718 = vadd.f32 0.0, %v4717
        %v4719 = vpop.f32.mrb[0].mxu0
        %v4720 = vpop.f32.mrb[0].mxu0
        %v4721 = vadd.f32 0.0, %v4720
        %v4722 = vpop.f32.mrb[0].mxu0
        %4723 = vmatprep.mubr.bf16.mxu0 0
        %4724 = vmatmul.mubr.bf16.gmra.mrb[0].mxu0 %v4594
        %v4725 = vpop.f32.mrb[0].mxu0
        %v4726 = vadd.f32 0.0, %v4725
        %v4727 = vpop.f32.mrb[0].mxu0
        %v4728 = vpop.f32.mrb[0].mxu0
        %v4729 = vadd.f32 0.0, %v4728
        %v4730 = vpop.f32.mrb[0].mxu0
        %4731 = vmatprep.mubr.bf16.mxu0 0
        %4732 = vmatmul.mubr.bf16.gmra.mrb[0].mxu0 %v4603
        %v4733 = vpop.f32.mrb[0].mxu0
        %v4734 = vadd.f32 0.0, %v4733
        %v4735 = vpop.f32.mrb[0].mxu0
        %v4736 = vpop.f32.mrb[0].mxu0
        %v4737 = vadd.f32 0.0, %v4736
        %v4738 = vpop.f32.mrb[0].mxu0
        %4739 = vmatprep.mubr.bf16.mxu0 0
        %4740 = vmatmul.mubr.bf16.gmra.mrb[0].mxu0 %v4612
        %v4741 = vpop.f32.mrb[0].mxu0
        %v4742 = vadd.f32 0.0, %v4741
        %v4743 = vpop.f32.mrb[0].mxu0
        %v4744 = vpop.f32.mrb[0].mxu0
        %v4745 = vadd.f32 0.0, %v4744
        %v4746 = vpop.f32.mrb[0].mxu0
        %4747 = vdwg.mxu0
        %v4748 = vadd.f32 %v4516, %v4702
        %v4749 = vadd.f32 %v4517, %v4705
        %v4750 = vadd.f32 %v4518, %v4710
        %v4751 = vadd.f32 %v4519, %v4713
        %v4752 = vadd.f32 %v4520, %v4718
        %v4753 = vadd.f32 %v4521, %v4721
        %v4754 = vadd.f32 %v4522, %v4726
        %v4755 = vadd.f32 %v4523, %v4729
        %v4756 = vadd.f32 %v4524, %v4734
        %v4757 = vadd.f32 %v4525, %v4737
        %v4758 = vadd.f32 %v4526, %v4742
        %v4759 = vadd.f32 %v4527, %v4745
        %v4760 = vld [vmem:[#allocation2 + $0x48] sm:$0xf0]
        %v4761 = vld [vmem:[%s2368] sm:$0xf]
        %v4762 = vld [vmem:[%s2368 + $0x4] sm:$0xf]
        %v4763 = vld [vmem:[%s2368 + $0x8] sm:$0xf]
        %v4764 = vld [vmem:[%s2368 + $0xc] sm:$0xf]
        %v4765 = vld [vmem:[%s2368 + $0x10] sm:$0xf]
        %v4766 = vld [vmem:[%s2368 + $0x14] sm:$0xf]
        %v4767 = vld [vmem:[%s2368 + $0x18] sm:$0xf]
        %v4768 = vld [vmem:[%s2368 + $0x1c] sm:$0xf]
        %v4769 = vld [vmem:[%s2368 + $0x20] sm:$0xf]
        %v4770 = vld [vmem:[%s2368 + $0x24] sm:$0xf]
        %v4771 = vld [vmem:[%s2368 + $0x28] sm:$0xf]
        %v4772 = vld [vmem:[%s2368 + $0x2c] sm:$0xf]
        %v4773 = vld [vmem:[%s2368 + $0x30] sm:$0xf]
        %v4774 = vld [vmem:[%s2368 + $0x34] sm:$0xf]
        %v4775 = vld [vmem:[%s2368 + $0x38] sm:$0xf]
        %v4776 = vld [vmem:[%s2368 + $0x3c] sm:$0xf]
        %v4784 = vrot.slane %v4760, 4
        %v4785 = vrot.slane %v4529, 4
        %v4786 = vsel %vm978, %v4784, %v4785
        %v4787 = vrot.slane %v4530, 4
        %v4788 = vsel %vm978, %v4785, %v4787
        %v4789 = vrot.slane %v4531, 4
        %v4790 = vsel %vm978, %v4787, %v4789
        %v4791 = vrot.slane %v4532, 4
        %v4792 = vsel %vm978, %v4789, %v4791
        %v4793 = vrot.slane %v4533, 4
        %v4794 = vsel %vm978, %v4791, %v4793
        %v4795 = vrot.slane %v4534, 4
        %v4796 = vsel %vm978, %v4793, %v4795
        %v4819 = vunpack.c.l.b16 %v4761
        %v4820 = vunpack.c.l.b16 %v4762
        %v4821 = vunpack.c.l.b16 %v4763
        %v4822 = vunpack.c.l.b16 %v4764
        %v4823 = vunpack.c.l.b16 %v4765
        %v4824 = vunpack.c.l.b16 %v4766
        %v4825 = vunpack.c.l.b16 %v4767
        %v4826 = vunpack.c.l.b16 %v4768
        %v4827 = vunpack.c.l.b16 %v4769
        %v4828 = vunpack.c.l.b16 %v4770
        %v4829 = vunpack.c.l.b16 %v4771
        %v4830 = vunpack.c.l.b16 %v4772
        %v4831 = vunpack.c.l.b16 %v4773
        %v4832 = vunpack.c.l.b16 %v4774
        %v4833 = vunpack.c.l.b16 %v4775
        %v4834 = vunpack.c.l.b16 %v4776
        %v4835 = vpack.c.b16 %v4820, %v4819
        %v4836 = vpack.c.b16 %v4822, %v4821
        %v4837 = vpack.c.b16 %v4824, %v4823
        %v4838 = vpack.c.b16 %v4826, %v4825
        %v4839 = vpack.c.b16 %v4828, %v4827
        %v4840 = vpack.c.b16 %v4830, %v4829
        %v4841 = vpack.c.b16 %v4832, %v4831
        %v4842 = vpack.c.b16 %v4834, %v4833
        %4851 = vmatprep.subr.bf16.mxu0 0
        %4852 = vmatpush1.bf16.msra.mxu0 %v4835
        %4853 = vmatprep.subr.bf16.mxu0 0
        %4854 = vmatpush1.bf16.msra.mxu0 %v4836
        %4855 = vmatprep.subr.bf16.mxu0 0
        %4856 = vmatpush1.bf16.msra.mxu0 %v4837
        %4857 = vmatprep.subr.bf16.mxu0 0
        %4858 = vmatpush1.bf16.msra.mxu0 %v4838
        %4859 = vmatprep.subr.bf16.mxu0 0
        %4860 = vmatpush1.bf16.msra.mxu0 %v4839
        %4861 = vmatprep.subr.bf16.mxu0 0
        %4862 = vmatpush1.bf16.msra.mxu0 %v4840
        %4863 = vmatprep.subr.bf16.mxu0 0
        %4864 = vmatpush1.bf16.msra.mxu0 %v4841
        %4865 = vmatprep.subr.bf16.mxu0 0
        %4866 = vmatpush1.bf16.msra.mxu0 %v4842
        %4867 = vmatprep.subr.bf16.mxu0 0
        %4868 = vmatpush1.bf16.msra.mxu0 0
        %4869 = vmatprep.subr.bf16.mxu0 0
        %4870 = vmatpush1.bf16.msra.mxu0 0
        %4871 = vmatprep.subr.bf16.mxu0 0
        %4872 = vmatpush1.bf16.msra.mxu0 0
        %4873 = vmatprep.subr.bf16.mxu0 0
        %4874 = vmatpush1.bf16.msra.mxu0 0
        %4875 = vmatprep.subr.bf16.mxu0 0
        %4876 = vmatpush1.bf16.msra.mxu0 0
        %4877 = vmatprep.subr.bf16.mxu0 0
        %4878 = vmatpush1.bf16.msra.mxu0 0
        %4879 = vmatprep.subr.bf16.mxu0 0
        %4880 = vmatpush1.bf16.msra.mxu0 0
        %4881 = vmatprep.subr.bf16.mxu0 0
        %4882 = vmatpush1.bf16.msra.mxu0 0
        %4883 = vmatprep.mubr.bf16.mxu0 0
        %4884 = vmatmul.mubr.bf16.gmra.mrb[0].mxu0 %v4786
        %v4885 = vpop.f32.mrb[0].mxu0
        %v4886 = vadd.f32 0.0, %v4885
        %v4887 = vpop.f32.mrb[0].mxu0
        %v4888 = vpop.f32.mrb[0].mxu0
        %v4889 = vadd.f32 0.0, %v4888
        %v4890 = vpop.f32.mrb[0].mxu0
        %4891 = vmatprep.mubr.bf16.mxu0 0
        %4892 = vmatmul.mubr.bf16.gmra.mrb[0].mxu0 %v4788
        %v4893 = vpop.f32.mrb[0].mxu0
        %v4894 = vadd.f32 0.0, %v4893
        %v4895 = vpop.f32.mrb[0].mxu0
        %v4896 = vpop.f32.mrb[0].mxu0
        %v4897 = vadd.f32 0.0, %v4896
        %v4898 = vpop.f32.mrb[0].mxu0
        %4899 = vmatprep.mubr.bf16.mxu0 0
        %4900 = vmatmul.mubr.bf16.gmra.mrb[0].mxu0 %v4790
        %v4901 = vpop.f32.mrb[0].mxu0
        %v4902 = vadd.f32 0.0, %v4901
        %v4903 = vpop.f32.mrb[0].mxu0
        %v4904 = vpop.f32.mrb[0].mxu0
        %v4905 = vadd.f32 0.0, %v4904
        %v4906 = vpop.f32.mrb[0].mxu0
        %4907 = vmatprep.mubr.bf16.mxu0 0
        %4908 = vmatmul.mubr.bf16.gmra.mrb[0].mxu0 %v4792
        %v4909 = vpop.f32.mrb[0].mxu0
        %v4910 = vadd.f32 0.0, %v4909
        %v4911 = vpop.f32.mrb[0].mxu0
        %v4912 = vpop.f32.mrb[0].mxu0
        %v4913 = vadd.f32 0.0, %v4912
        %v4914 = vpop.f32.mrb[0].mxu0
        %4915 = vmatprep.mubr.bf16.mxu0 0
        %4916 = vmatmul.mubr.bf16.gmra.mrb[0].mxu0 %v4794
        %v4917 = vpop.f32.mrb[0].mxu0
        %v4918 = vadd.f32 0.0, %v4917
        %v4919 = vpop.f32.mrb[0].mxu0
        %v4920 = vpop.f32.mrb[0].mxu0
        %v4921 = vadd.f32 0.0, %v4920
        %v4922 = vpop.f32.mrb[0].mxu0
        %4923 = vmatprep.mubr.bf16.mxu0 0
        %4924 = vmatmul.mubr.bf16.gmra.mrb[0].mxu0 %v4796
        %v4925 = vpop.f32.mrb[0].mxu0
        %v4926 = vadd.f32 0.0, %v4925
        %v4927 = vpop.f32.mrb[0].mxu0
        %v4928 = vpop.f32.mrb[0].mxu0
        %v4929 = vadd.f32 0.0, %v4928
        %v4930 = vpop.f32.mrb[0].mxu0
        %4931 = vdwg.mxu0
        %v4932 = vadd.f32 %v4748, %v4886
        %v4933 = vadd.f32 %v4749, %v4889
        %v4934 = vadd.f32 %v4750, %v4894
        %v4935 = vadd.f32 %v4751, %v4897
        %v4936 = vadd.f32 %v4752, %v4902
        %v4937 = vadd.f32 %v4753, %v4905
        %v4938 = vadd.f32 %v4754, %v4910
        %v4939 = vadd.f32 %v4755, %v4913
        %v4940 = vadd.f32 %v4756, %v4918
        %v4941 = vadd.f32 %v4757, %v4921
        %v4942 = vadd.f32 %v4758, %v4926
        %v4943 = vadd.f32 %v4759, %v4929
        %v4944 = vld [vmem:[#allocation2 + $0x78] sm:$0x1f]
        %v4945 = vld [vmem:[%s2553] sm:$0xf]
        %v4946 = vld [vmem:[%s2553 + $0x4] sm:$0xf]
        %v4947 = vld [vmem:[%s2553 + $0x8] sm:$0xf]
        %v4948 = vld [vmem:[%s2553 + $0xc] sm:$0xf]
        %v4949 = vld [vmem:[%s2553 + $0x10] sm:$0xf]
        %v4950 = vld [vmem:[%s2553 + $0x14] sm:$0xf]
        %v4951 = vld [vmem:[%s2553 + $0x18] sm:$0xf]
        %v4952 = vld [vmem:[%s2553 + $0x1c] sm:$0xf]
        %v4953 = vld [vmem:[%s2553 + $0x20] sm:$0xf]
        %v4954 = vld [vmem:[%s2553 + $0x24] sm:$0xf]
        %v4955 = vld [vmem:[%s2553 + $0x28] sm:$0xf]
        %v4956 = vld [vmem:[%s2553 + $0x2c] sm:$0xf]
        %v4957 = vld [vmem:[%s2553 + $0x30] sm:$0xf]
        %v4958 = vld [vmem:[%s2553 + $0x34] sm:$0xf]
        %v4959 = vld [vmem:[%s2553 + $0x38] sm:$0xf]
        %v4960 = vld [vmem:[%s2553 + $0x3c] sm:$0xf]
        %v4962 = vshrl.u32 %v4760, 16
        %v4964 = vrot.slane %v4962, 4
        %v4965 = vshll.u32 %v4760, 16
        %v4967 = vrot.slane %v4965, 5
        %v4968 = vor.u32 %v4964, %v4967
        %v4969 = vrot.slane %v4560, 4
        %v4970 = vrot.slane %v4563, 5
        %v4971 = vor.u32 %v4969, %v4970
        %v4972 = vsel %vm1343, %v4968, %v4971
        %v4973 = vrot.slane %v4569, 4
        %v4974 = vrot.slane %v4572, 5
        %v4975 = vor.u32 %v4973, %v4974
        %v4976 = vsel %vm1343, %v4971, %v4975
        %v4977 = vrot.slane %v4578, 4
        %v4978 = vrot.slane %v4581, 5
        %v4979 = vor.u32 %v4977, %v4978
        %v4980 = vsel %vm1343, %v4975, %v4979
        %v4981 = vrot.slane %v4587, 4
        %v4982 = vrot.slane %v4590, 5
        %v4983 = vor.u32 %v4981, %v4982
        %v4984 = vsel %vm1343, %v4979, %v4983
        %v4985 = vrot.slane %v4596, 4
        %v4986 = vrot.slane %v4599, 5
        %v4987 = vor.u32 %v4985, %v4986
        %v4988 = vsel %vm1343, %v4983, %v4987
        %v4990 = vshrl.u32 %v4944, 16
        %v4992 = vrot.slane %v4990, 4
        %v4993 = vshll.u32 %v4944, 16
        %v4995 = vrot.slane %v4993, 5
        %v4996 = vor.u32 %v4992, %v4995
        %v4997 = vsel %vm1343, %v4987, %v4996
        %v5020 = vunpack.c.l.b16 %v4945
        %v5021 = vunpack.c.l.b16 %v4946
        %v5022 = vunpack.c.l.b16 %v4947
        %v5023 = vunpack.c.l.b16 %v4948
        %v5024 = vunpack.c.l.b16 %v4949
        %v5025 = vunpack.c.l.b16 %v4950
        %v5026 = vunpack.c.l.b16 %v4951
        %v5027 = vunpack.c.l.b16 %v4952
        %v5028 = vunpack.c.l.b16 %v4953
        %v5029 = vunpack.c.l.b16 %v4954
        %v5030 = vunpack.c.l.b16 %v4955
        %v5031 = vunpack.c.l.b16 %v4956
        %v5032 = vunpack.c.l.b16 %v4957
        %v5033 = vunpack.c.l.b16 %v4958
        %v5034 = vunpack.c.l.b16 %v4959
        %v5035 = vunpack.c.l.b16 %v4960
        %v5036 = vpack.c.b16 %v5021, %v5020
        %v5037 = vpack.c.b16 %v5023, %v5022
        %v5038 = vpack.c.b16 %v5025, %v5024
        %v5039 = vpack.c.b16 %v5027, %v5026
        %v5040 = vpack.c.b16 %v5029, %v5028
        %v5041 = vpack.c.b16 %v5031, %v5030
        %v5042 = vpack.c.b16 %v5033, %v5032
        %v5043 = vpack.c.b16 %v5035, %v5034
        %5052 = vmatprep.subr.bf16.mxu0 0
        %5053 = vmatpush1.bf16.msra.mxu0 %v5036
        %5054 = vmatprep.subr.bf16.mxu0 0
        %5055 = vmatpush1.bf16.msra.mxu0 %v5037
        %5056 = vmatprep.subr.bf16.mxu0 0
        %5057 = vmatpush1.bf16.msra.mxu0 %v5038
        %5058 = vmatprep.subr.bf16.mxu0 0
        %5059 = vmatpush1.bf16.msra.mxu0 %v5039
        %5060 = vmatprep.subr.bf16.mxu0 0
        %5061 = vmatpush1.bf16.msra.mxu0 %v5040
        %5062 = vmatprep.subr.bf16.mxu0 0
        %5063 = vmatpush1.bf16.msra.mxu0 %v5041
        %5064 = vmatprep.subr.bf16.mxu0 0
        %5065 = vmatpush1.bf16.msra.mxu0 %v5042
        %5066 = vmatprep.subr.bf16.mxu0 0
        %5067 = vmatpush1.bf16.msra.mxu0 %v5043
        %5068 = vmatprep.subr.bf16.mxu0 0
        %5069 = vmatpush1.bf16.msra.mxu0 0
        %5070 = vmatprep.subr.bf16.mxu0 0
        %5071 = vmatpush1.bf16.msra.mxu0 0
        %5072 = vmatprep.subr.bf16.mxu0 0
        %5073 = vmatpush1.bf16.msra.mxu0 0
        %5074 = vmatprep.subr.bf16.mxu0 0
        %5075 = vmatpush1.bf16.msra.mxu0 0
        %5076 = vmatprep.subr.bf16.mxu0 0
        %5077 = vmatpush1.bf16.msra.mxu0 0
        %5078 = vmatprep.subr.bf16.mxu0 0
        %5079 = vmatpush1.bf16.msra.mxu0 0
        %5080 = vmatprep.subr.bf16.mxu0 0
        %5081 = vmatpush1.bf16.msra.mxu0 0
        %5082 = vmatprep.subr.bf16.mxu0 0
        %5083 = vmatpush1.bf16.msra.mxu0 0
        %5084 = vmatprep.mubr.bf16.mxu0 0
        %5085 = vmatmul.mubr.bf16.gmra.mrb[0].mxu0 %v4972
        %v5086 = vpop.f32.mrb[0].mxu0
        %v5087 = vadd.f32 0.0, %v5086
        %v5088 = vpop.f32.mrb[0].mxu0
        %v5089 = vpop.f32.mrb[0].mxu0
        %v5090 = vadd.f32 0.0, %v5089
        %v5091 = vpop.f32.mrb[0].mxu0
        %5092 = vmatprep.mubr.bf16.mxu0 0
        %5093 = vmatmul.mubr.bf16.gmra.mrb[0].mxu0 %v4976
        %v5094 = vpop.f32.mrb[0].mxu0
        %v5095 = vadd.f32 0.0, %v5094
        %v5096 = vpop.f32.mrb[0].mxu0
        %v5097 = vpop.f32.mrb[0].mxu0
        %v5098 = vadd.f32 0.0, %v5097
        %v5099 = vpop.f32.mrb[0].mxu0
        %5100 = vmatprep.mubr.bf16.mxu0 0
        %5101 = vmatmul.mubr.bf16.gmra.mrb[0].mxu0 %v4980
        %v5102 = vpop.f32.mrb[0].mxu0
        %v5103 = vadd.f32 0.0, %v5102
        %v5104 = vpop.f32.mrb[0].mxu0
        %v5105 = vpop.f32.mrb[0].mxu0
        %v5106 = vadd.f32 0.0, %v5105
        %v5107 = vpop.f32.mrb[0].mxu0
        %5108 = vmatprep.mubr.bf16.mxu0 0
        %5109 = vmatmul.mubr.bf16.gmra.mrb[0].mxu0 %v4984
        %v5110 = vpop.f32.mrb[0].mxu0
        %v5111 = vadd.f32 0.0, %v5110
        %v5112 = vpop.f32.mrb[0].mxu0
        %v5113 = vpop.f32.mrb[0].mxu0
        %v5114 = vadd.f32 0.0, %v5113
        %v5115 = vpop.f32.mrb[0].mxu0
        %5116 = vmatprep.mubr.bf16.mxu0 0
        %5117 = vmatmul.mubr.bf16.gmra.mrb[0].mxu0 %v4988
        %v5118 = vpop.f32.mrb[0].mxu0
        %v5119 = vadd.f32 0.0, %v5118
        %v5120 = vpop.f32.mrb[0].mxu0
        %v5121 = vpop.f32.mrb[0].mxu0
        %v5122 = vadd.f32 0.0, %v5121
        %v5123 = vpop.f32.mrb[0].mxu0
        %5124 = vmatprep.mubr.bf16.mxu0 0
        %5125 = vmatmul.mubr.bf16.gmra.mrb[0].mxu0 %v4997
        %v5126 = vpop.f32.mrb[0].mxu0
        %v5127 = vadd.f32 0.0, %v5126
        %v5128 = vpop.f32.mrb[0].mxu0
        %v5129 = vpop.f32.mrb[0].mxu0
        %v5130 = vadd.f32 0.0, %v5129
        %v5131 = vpop.f32.mrb[0].mxu0
        %5132 = vdwg.mxu0
        %v5133 = vadd.f32 %v4932, %v5087
        %v5134 = vadd.f32 %v4933, %v5090
        %v5135 = vadd.f32 %v4934, %v5095
        %v5136 = vadd.f32 %v4935, %v5098
        %v5137 = vadd.f32 %v4936, %v5103
        %v5138 = vadd.f32 %v4937, %v5106
        %v5139 = vadd.f32 %v4938, %v5111
        %v5140 = vadd.f32 %v4939, %v5114
        %v5141 = vadd.f32 %v4940, %v5119
        %v5142 = vadd.f32 %v4941, %v5122
        %v5143 = vadd.f32 %v4942, %v5127
        %v5144 = vadd.f32 %v4943, %v5130
        %v5145 = vmul.f32 %v5133, %v2757
        %v5146 = vmul.f32 %v5134, %v2757
        %v5147 = vmul.f32 %v5135, %v2757
        %v5148 = vmul.f32 %v5136, %v2757
        %v5149 = vmul.f32 %v5137, %v2757
        %v5150 = vmul.f32 %v5138, %v2757
        %v5151 = vmul.f32 %v5139, %v2757
        %v5152 = vmul.f32 %v5140, %v2757
        %v5153 = vmul.f32 %v5141, %v2757
        %v5154 = vmul.f32 %v5142, %v2757
        %v5155 = vmul.f32 %v5143, %v2757
        %v5156 = vmul.f32 %v5144, %v2757
        %v5157 = vadd.f32 %v5145, %v2773
        %v5158 = vadd.f32 %v5146, %v2773
        %v5159 = vadd.f32 %v5147, %v2773
        %v5160 = vadd.f32 %v5148, %v2773
        %v5161 = vadd.f32 %v5149, %v2773
        %v5162 = vadd.f32 %v5150, %v2773
        %v5163 = vadd.f32 %v5151, %v2773
        %v5164 = vadd.f32 %v5152, %v2773
        %v5165 = vadd.f32 %v5153, %v2773
        %v5166 = vadd.f32 %v5154, %v2773
        %v5167 = vadd.f32 %v5155, %v2773
        %v5168 = vadd.f32 %v5156, %v2773
        %v5169 = vmax.f32 %v5157, 0.0
        %v5170 = vmax.f32 %v5158, 0.0
        %v5171 = vmax.f32 %v5159, 0.0
        %v5172 = vmax.f32 %v5160, 0.0
        %v5173 = vmax.f32 %v5161, 0.0
        %v5174 = vmax.f32 %v5162, 0.0
        %v5175 = vmax.f32 %v5163, 0.0
        %v5176 = vmax.f32 %v5164, 0.0
        %v5177 = vmax.f32 %v5165, 0.0
        %v5178 = vmax.f32 %v5166, 0.0
        %v5179 = vmax.f32 %v5167, 0.0
        %v5180 = vmax.f32 %v5168, 0.0
        %v5181 = vld [vmem:[%s333 + $0x30] sm:$0xf]
        %v5182 = vld [vmem:[%s333 + $0x34] sm:$0xf]
        %v5183 = vld [vmem:[%s333 + $0x38] sm:$0xf]
        %v5184 = vld [vmem:[%s333 + $0x3c] sm:$0xf]
        %v5185 = vld [vmem:[%s333 + $0x40] sm:$0xf]
        %v5186 = vld [vmem:[%s333 + $0x44] sm:$0xf]
        %v5187 = vld [vmem:[%s333 + $0x48] sm:$0xf]
        %v5188 = vld [vmem:[%s333 + $0x4c] sm:$0xf]
        %v5189 = vld [vmem:[%s333 + $0x50] sm:$0xf]
        %v5190 = vld [vmem:[%s333 + $0x54] sm:$0xf]
        %v5191 = vld [vmem:[%s333 + $0x58] sm:$0xf]
        %v5192 = vld [vmem:[%s333 + $0x5c] sm:$0xf]
        %v5193 = vld [vmem:[#allocation11] sm:$0xf]
        %v5194 = vld [vmem:[#allocation11 + $0x4] sm:$0xf]
        %v5195 = vld [vmem:[#allocation11 + $0x8] sm:$0xf]
        %v5196 = vld [vmem:[#allocation11 + $0xc] sm:$0xf]
        %v5197 = vld [vmem:[#allocation11 + $0x10] sm:$0xf]
        %v5198 = vld [vmem:[#allocation11 + $0x14] sm:$0xf]
        %v5199 = vld [vmem:[#allocation11 + $0x18] sm:$0xf]
        %v5200 = vld [vmem:[#allocation11 + $0x1c] sm:$0xf]
        %v5201 = vld [vmem:[#allocation11 + $0x20] sm:$0xf]
        %v5202 = vld [vmem:[#allocation11 + $0x24] sm:$0xf]
        %v5203 = vld [vmem:[#allocation11 + $0x28] sm:$0xf]
        %v5204 = vld [vmem:[#allocation11 + $0x2c] sm:$0xf]
        %v5205 = vld [vmem:[#allocation11 + $0x30] sm:$0xf]
        %v5206 = vld [vmem:[#allocation11 + $0x34] sm:$0xf]
        %v5207 = vld [vmem:[#allocation11 + $0x38] sm:$0xf]
        %v5208 = vld [vmem:[#allocation11 + $0x3c] sm:$0xf]
        %v5221 = vunpack.c.l.b16 %v5181
        %v5222 = vunpack.c.l.b16 %v5182
        %v5223 = vunpack.c.l.b16 %v5183
        %v5224 = vunpack.c.l.b16 %v5184
        %v5225 = vunpack.c.l.b16 %v5185
        %v5226 = vunpack.c.l.b16 %v5186
        %v5227 = vunpack.c.l.b16 %v5187
        %v5228 = vunpack.c.l.b16 %v5188
        %v5229 = vunpack.c.l.b16 %v5189
        %v5230 = vunpack.c.l.b16 %v5190
        %v5231 = vunpack.c.l.b16 %v5191
        %v5232 = vunpack.c.l.b16 %v5192
        %v5233 = vpack.c.b16 %v5222, %v5221
        %v5234 = vpack.c.b16 %v5224, %v5223
        %v5235 = vpack.c.b16 %v5226, %v5225
        %v5236 = vpack.c.b16 %v5228, %v5227
        %v5237 = vpack.c.b16 %v5230, %v5229
        %v5238 = vpack.c.b16 %v5232, %v5231
        %v5261 = vunpack.c.l.b16 %v5193
        %v5262 = vunpack.c.l.b16 %v5194
        %v5263 = vunpack.c.l.b16 %v5195
        %v5264 = vunpack.c.l.b16 %v5196
        %v5265 = vunpack.c.l.b16 %v5197
        %v5266 = vunpack.c.l.b16 %v5198
        %v5267 = vunpack.c.l.b16 %v5199
        %v5268 = vunpack.c.l.b16 %v5200
        %v5269 = vunpack.c.l.b16 %v5201
        %v5270 = vunpack.c.l.b16 %v5202
        %v5271 = vunpack.c.l.b16 %v5203
        %v5272 = vunpack.c.l.b16 %v5204
        %v5273 = vunpack.c.l.b16 %v5205
        %v5274 = vunpack.c.l.b16 %v5206
        %v5275 = vunpack.c.l.b16 %v5207
        %v5276 = vunpack.c.l.b16 %v5208
        %v5277 = vpack.c.b16 %v5262, %v5261
        %v5278 = vpack.c.b16 %v5264, %v5263
        %v5279 = vpack.c.b16 %v5266, %v5265
        %v5280 = vpack.c.b16 %v5268, %v5267
        %v5281 = vpack.c.b16 %v5270, %v5269
        %v5282 = vpack.c.b16 %v5272, %v5271
        %v5283 = vpack.c.b16 %v5274, %v5273
        %v5284 = vpack.c.b16 %v5276, %v5275
        %5293 = vmatprep.subr.bf16.mxu0 0
        %5294 = vmatpush1.bf16.msra.mxu0 %v5277
        %5295 = vmatprep.subr.bf16.mxu0 0
        %5296 = vmatpush1.bf16.msra.mxu0 %v5278
        %5297 = vmatprep.subr.bf16.mxu0 0
        %5298 = vmatpush1.bf16.msra.mxu0 %v5279
        %5299 = vmatprep.subr.bf16.mxu0 0
        %5300 = vmatpush1.bf16.msra.mxu0 %v5280
        %5301 = vmatprep.subr.bf16.mxu0 0
        %5302 = vmatpush1.bf16.msra.mxu0 %v5281
        %5303 = vmatprep.subr.bf16.mxu0 0
        %5304 = vmatpush1.bf16.msra.mxu0 %v5282
        %5305 = vmatprep.subr.bf16.mxu0 0
        %5306 = vmatpush1.bf16.msra.mxu0 %v5283
        %5307 = vmatprep.subr.bf16.mxu0 0
        %5308 = vmatpush1.bf16.msra.mxu0 %v5284
        %5309 = vmatprep.subr.bf16.mxu0 0
        %5310 = vmatpush1.bf16.msra.mxu0 0
        %5311 = vmatprep.subr.bf16.mxu0 0
        %5312 = vmatpush1.bf16.msra.mxu0 0
        %5313 = vmatprep.subr.bf16.mxu0 0
        %5314 = vmatpush1.bf16.msra.mxu0 0
        %5315 = vmatprep.subr.bf16.mxu0 0
        %5316 = vmatpush1.bf16.msra.mxu0 0
        %5317 = vmatprep.subr.bf16.mxu0 0
        %5318 = vmatpush1.bf16.msra.mxu0 0
        %5319 = vmatprep.subr.bf16.mxu0 0
        %5320 = vmatpush1.bf16.msra.mxu0 0
        %5321 = vmatprep.subr.bf16.mxu0 0
        %5322 = vmatpush1.bf16.msra.mxu0 0
        %5323 = vmatprep.subr.bf16.mxu0 0
        %5324 = vmatpush1.bf16.msra.mxu0 0
        %5325 = vmatprep.mubr.bf16.mxu0 0
        %5326 = vmatmul.mubr.bf16.gmra.mrb[0].mxu0 %v5233
        %v5327 = vpop.f32.mrb[0].mxu0
        %v5328 = vadd.f32 %v2830, %v5327
        %v5329 = vpop.f32.mrb[0].mxu0
        %v5330 = vpop.f32.mrb[0].mxu0
        %v5331 = vadd.f32 %v2830, %v5330
        %v5332 = vpop.f32.mrb[0].mxu0
        %5333 = vmatprep.mubr.bf16.mxu0 0
        %5334 = vmatmul.mubr.bf16.gmra.mrb[0].mxu0 %v5234
        %v5335 = vpop.f32.mrb[0].mxu0
        %v5336 = vadd.f32 %v2830, %v5335
        %v5337 = vpop.f32.mrb[0].mxu0
        %v5338 = vpop.f32.mrb[0].mxu0
        %v5339 = vadd.f32 %v2830, %v5338
        %v5340 = vpop.f32.mrb[0].mxu0
        %5341 = vmatprep.mubr.bf16.mxu0 0
        %5342 = vmatmul.mubr.bf16.gmra.mrb[0].mxu0 %v5235
        %v5343 = vpop.f32.mrb[0].mxu0
        %v5344 = vadd.f32 %v2830, %v5343
        %v5345 = vpop.f32.mrb[0].mxu0
        %v5346 = vpop.f32.mrb[0].mxu0
        %v5347 = vadd.f32 %v2830, %v5346
        %v5348 = vpop.f32.mrb[0].mxu0
        %5349 = vmatprep.mubr.bf16.mxu0 0
        %5350 = vmatmul.mubr.bf16.gmra.mrb[0].mxu0 %v5236
        %v5351 = vpop.f32.mrb[0].mxu0
        %v5352 = vadd.f32 %v2830, %v5351
        %v5353 = vpop.f32.mrb[0].mxu0
        %v5354 = vpop.f32.mrb[0].mxu0
        %v5355 = vadd.f32 %v2830, %v5354
        %v5356 = vpop.f32.mrb[0].mxu0
        %5357 = vmatprep.mubr.bf16.mxu0 0
        %5358 = vmatmul.mubr.bf16.gmra.mrb[0].mxu0 %v5237
        %v5359 = vpop.f32.mrb[0].mxu0
        %v5360 = vadd.f32 %v2830, %v5359
        %v5361 = vpop.f32.mrb[0].mxu0
        %v5362 = vpop.f32.mrb[0].mxu0
        %v5363 = vadd.f32 %v2830, %v5362
        %v5364 = vpop.f32.mrb[0].mxu0
        %5365 = vmatprep.mubr.bf16.mxu0 0
        %5366 = vmatmul.mubr.bf16.gmra.mrb[0].mxu0 %v5238
        %v5367 = vpop.f32.mrb[0].mxu0
        %v5368 = vadd.f32 %v2830, %v5367
        %v5369 = vpop.f32.mrb[0].mxu0
        %v5370 = vpop.f32.mrb[0].mxu0
        %v5371 = vadd.f32 %v2830, %v5370
        %v5372 = vpop.f32.mrb[0].mxu0
        %5373 = vdwg.mxu0
        %v5374 = vadd.f32 %v5169, %v5328
        %v5375 = vadd.f32 %v5170, %v5331
        %v5376 = vadd.f32 %v5171, %v5336
        %v5377 = vadd.f32 %v5172, %v5339
        %v5378 = vadd.f32 %v5173, %v5344
        %v5379 = vadd.f32 %v5174, %v5347
        %v5380 = vadd.f32 %v5175, %v5352
        %v5381 = vadd.f32 %v5176, %v5355
        %v5382 = vadd.f32 %v5177, %v5360
        %v5383 = vadd.f32 %v5178, %v5363
        %v5384 = vadd.f32 %v5179, %v5368
        %v5385 = vadd.f32 %v5180, %v5371
        %v5386 = vpack.c.bf16 %v5375, %v5374
        %v5387 = vpack.c.bf16 %v5377, %v5376
        %v5388 = vpack.c.bf16 %v5379, %v5378
        %v5389 = vpack.c.bf16 %v5381, %v5380
        %v5390 = vpack.c.bf16 %v5383, %v5382
        %v5391 = vpack.c.bf16 %v5385, %v5384
        %v5398 = vunpack.c.l.b16 %v5386
        %v5399 = vunpack.c.h.b16 %v5386
        %v5400 = vunpack.c.l.b16 %v5387
        %v5401 = vunpack.c.h.b16 %v5387
        %v5402 = vunpack.c.l.b16 %v5388
        %v5403 = vunpack.c.h.b16 %v5388
        %v5404 = vunpack.c.l.b16 %v5389
        %v5405 = vunpack.c.h.b16 %v5389
        %v5406 = vunpack.c.l.b16 %v5390
        %v5407 = vunpack.c.h.b16 %v5390
        %v5408 = vunpack.c.l.b16 %v5391
        %v5409 = vunpack.c.h.b16 %v5391
        %v5410 = vpack.c.b16 %v5398, %v5398
        %v5411 = vpack.c.b16 %v5399, %v5399
        %v5412 = vpack.c.b16 %v5400, %v5400
        %v5413 = vpack.c.b16 %v5401, %v5401
        %v5414 = vpack.c.b16 %v5402, %v5402
        %v5415 = vpack.c.b16 %v5403, %v5403
        %v5416 = vpack.c.b16 %v5404, %v5404
        %v5417 = vpack.c.b16 %v5405, %v5405
        %v5418 = vpack.c.b16 %v5406, %v5406
        %v5419 = vpack.c.b16 %v5407, %v5407
        %v5420 = vpack.c.b16 %v5408, %v5408
        %v5421 = vpack.c.b16 %v5409, %v5409
        %5434 = vst [vmem:[%s381 + $0x30] sm:$0xf] %v5410
        %5435 = vst [vmem:[%s381 + $0x34] sm:$0xf] %v5411
        %5436 = vst [vmem:[%s381 + $0x38] sm:$0xf] %v5412
        %5437 = vst [vmem:[%s381 + $0x3c] sm:$0xf] %v5413
        %5438 = vst [vmem:[%s381 + $0x40] sm:$0xf] %v5414
        %5439 = vst [vmem:[%s381 + $0x44] sm:$0xf] %v5415
        %5440 = vst [vmem:[%s381 + $0x48] sm:$0xf] %v5416
        %5441 = vst [vmem:[%s381 + $0x4c] sm:$0xf] %v5417
        %5442 = vst [vmem:[%s381 + $0x50] sm:$0xf] %v5418
        %5443 = vst [vmem:[%s381 + $0x54] sm:$0xf] %v5419
        %5444 = vst [vmem:[%s381 + $0x58] sm:$0xf] %v5420
        %5445 = vst [vmem:[%s381 + $0x5c] sm:$0xf] %v5421
        %v5446 = vld [vmem:[%s333 + $0x90] sm:$0xf]
        %v5447 = vld [vmem:[%s333 + $0x94] sm:$0xf]
        %v5448 = vld [vmem:[%s333 + $0x98] sm:$0xf]
        %v5449 = vld [vmem:[%s333 + $0x9c] sm:$0xf]
        %v5450 = vld [vmem:[%s333 + $0xa0] sm:$0xf]
        %v5451 = vld [vmem:[%s333 + $0xa4] sm:$0xf]
        %v5452 = vld [vmem:[%s333 + $0xa8] sm:$0xf]
        %v5453 = vld [vmem:[%s333 + $0xac] sm:$0xf]
        %v5454 = vld [vmem:[%s333 + $0xb0] sm:$0xf]
        %v5455 = vld [vmem:[%s333 + $0xb4] sm:$0xf]
        %v5456 = vld [vmem:[%s333 + $0xb8] sm:$0xf]
        %v5457 = vld [vmem:[%s333 + $0xbc] sm:$0xf]
        %v5458 = vld [vmem:[#allocation8] sm:$0xf]
        %v5459 = vld [vmem:[#allocation8 + $0x4] sm:$0xf]
        %v5460 = vld [vmem:[#allocation8 + $0x8] sm:$0xf]
        %v5461 = vld [vmem:[#allocation8 + $0xc] sm:$0xf]
        %v5462 = vld [vmem:[#allocation8 + $0x10] sm:$0xf]
        %v5463 = vld [vmem:[#allocation8 + $0x14] sm:$0xf]
        %v5464 = vld [vmem:[#allocation8 + $0x18] sm:$0xf]
        %v5465 = vld [vmem:[#allocation8 + $0x1c] sm:$0xf]
        %v5466 = vld [vmem:[#allocation8 + $0x20] sm:$0xf]
        %v5467 = vld [vmem:[#allocation8 + $0x24] sm:$0xf]
        %v5468 = vld [vmem:[#allocation8 + $0x28] sm:$0xf]
        %v5469 = vld [vmem:[#allocation8 + $0x2c] sm:$0xf]
        %v5470 = vld [vmem:[#allocation8 + $0x30] sm:$0xf]
        %v5471 = vld [vmem:[#allocation8 + $0x34] sm:$0xf]
        %v5472 = vld [vmem:[#allocation8 + $0x38] sm:$0xf]
        %v5473 = vld [vmem:[#allocation8 + $0x3c] sm:$0xf]
        %v5486 = vunpack.c.l.b16 %v5446
        %v5487 = vunpack.c.l.b16 %v5447
        %v5488 = vunpack.c.l.b16 %v5448
        %v5489 = vunpack.c.l.b16 %v5449
        %v5490 = vunpack.c.l.b16 %v5450
        %v5491 = vunpack.c.l.b16 %v5451
        %v5492 = vunpack.c.l.b16 %v5452
        %v5493 = vunpack.c.l.b16 %v5453
        %v5494 = vunpack.c.l.b16 %v5454
        %v5495 = vunpack.c.l.b16 %v5455
        %v5496 = vunpack.c.l.b16 %v5456
        %v5497 = vunpack.c.l.b16 %v5457
        %v5498 = vpack.c.b16 %v5487, %v5486
        %v5499 = vpack.c.b16 %v5489, %v5488
        %v5500 = vpack.c.b16 %v5491, %v5490
        %v5501 = vpack.c.b16 %v5493, %v5492
        %v5502 = vpack.c.b16 %v5495, %v5494
        %v5503 = vpack.c.b16 %v5497, %v5496
        %v5526 = vunpack.c.l.b16 %v5458
        %v5527 = vunpack.c.l.b16 %v5459
        %v5528 = vunpack.c.l.b16 %v5460
        %v5529 = vunpack.c.l.b16 %v5461
        %v5530 = vunpack.c.l.b16 %v5462
        %v5531 = vunpack.c.l.b16 %v5463
        %v5532 = vunpack.c.l.b16 %v5464
        %v5533 = vunpack.c.l.b16 %v5465
        %v5534 = vunpack.c.l.b16 %v5466
        %v5535 = vunpack.c.l.b16 %v5467
        %v5536 = vunpack.c.l.b16 %v5468
        %v5537 = vunpack.c.l.b16 %v5469
        %v5538 = vunpack.c.l.b16 %v5470
        %v5539 = vunpack.c.l.b16 %v5471
        %v5540 = vunpack.c.l.b16 %v5472
        %v5541 = vunpack.c.l.b16 %v5473
        %v5542 = vpack.c.b16 %v5527, %v5526
        %v5543 = vpack.c.b16 %v5529, %v5528
        %v5544 = vpack.c.b16 %v5531, %v5530
        %v5545 = vpack.c.b16 %v5533, %v5532
        %v5546 = vpack.c.b16 %v5535, %v5534
        %v5547 = vpack.c.b16 %v5537, %v5536
        %v5548 = vpack.c.b16 %v5539, %v5538
        %v5549 = vpack.c.b16 %v5541, %v5540
        %5558 = vmatprep.subr.bf16.mxu0 0
        %5559 = vmatpush1.bf16.msra.mxu0 %v5542
        %5560 = vmatprep.subr.bf16.mxu0 0
        %5561 = vmatpush1.bf16.msra.mxu0 %v5543
        %5562 = vmatprep.subr.bf16.mxu0 0
        %5563 = vmatpush1.bf16.msra.mxu0 %v5544
        %5564 = vmatprep.subr.bf16.mxu0 0
        %5565 = vmatpush1.bf16.msra.mxu0 %v5545
        %5566 = vmatprep.subr.bf16.mxu0 0
        %5567 = vmatpush1.bf16.msra.mxu0 %v5546
        %5568 = vmatprep.subr.bf16.mxu0 0
        %5569 = vmatpush1.bf16.msra.mxu0 %v5547
        %5570 = vmatprep.subr.bf16.mxu0 0
        %5571 = vmatpush1.bf16.msra.mxu0 %v5548
        %5572 = vmatprep.subr.bf16.mxu0 0
        %5573 = vmatpush1.bf16.msra.mxu0 %v5549
        %5574 = vmatprep.subr.bf16.mxu0 0
        %5575 = vmatpush1.bf16.msra.mxu0 0
        %5576 = vmatprep.subr.bf16.mxu0 0
        %5577 = vmatpush1.bf16.msra.mxu0 0
        %5578 = vmatprep.subr.bf16.mxu0 0
        %5579 = vmatpush1.bf16.msra.mxu0 0
        %5580 = vmatprep.subr.bf16.mxu0 0
        %5581 = vmatpush1.bf16.msra.mxu0 0
        %5582 = vmatprep.subr.bf16.mxu0 0
        %5583 = vmatpush1.bf16.msra.mxu0 0
        %5584 = vmatprep.subr.bf16.mxu0 0
        %5585 = vmatpush1.bf16.msra.mxu0 0
        %5586 = vmatprep.subr.bf16.mxu0 0
        %5587 = vmatpush1.bf16.msra.mxu0 0
        %5588 = vmatprep.subr.bf16.mxu0 0
        %5589 = vmatpush1.bf16.msra.mxu0 0
        %5590 = vmatprep.mubr.bf16.mxu0 0
        %5591 = vmatmul.mubr.bf16.gmra.mrb[0].mxu0 %v5498
        %v5592 = vpop.f32.mrb[0].mxu0
        %v5593 = vadd.f32 0.0, %v5592
        %v5594 = vpop.f32.mrb[0].mxu0
        %v5595 = vpop.f32.mrb[0].mxu0
        %v5596 = vadd.f32 0.0, %v5595
        %v5597 = vpop.f32.mrb[0].mxu0
        %5598 = vmatprep.mubr.bf16.mxu0 0
        %5599 = vmatmul.mubr.bf16.gmra.mrb[0].mxu0 %v5499
        %v5600 = vpop.f32.mrb[0].mxu0
        %v5601 = vadd.f32 0.0, %v5600
        %v5602 = vpop.f32.mrb[0].mxu0
        %v5603 = vpop.f32.mrb[0].mxu0
        %v5604 = vadd.f32 0.0, %v5603
        %v5605 = vpop.f32.mrb[0].mxu0
        %5606 = vmatprep.mubr.bf16.mxu0 0
        %5607 = vmatmul.mubr.bf16.gmra.mrb[0].mxu0 %v5500
        %v5608 = vpop.f32.mrb[0].mxu0
        %v5609 = vadd.f32 0.0, %v5608
        %v5610 = vpop.f32.mrb[0].mxu0
        %v5611 = vpop.f32.mrb[0].mxu0
        %v5612 = vadd.f32 0.0, %v5611
        %v5613 = vpop.f32.mrb[0].mxu0
        %5614 = vmatprep.mubr.bf16.mxu0 0
        %5615 = vmatmul.mubr.bf16.gmra.mrb[0].mxu0 %v5501
        %v5616 = vpop.f32.mrb[0].mxu0
        %v5617 = vadd.f32 0.0, %v5616
        %v5618 = vpop.f32.mrb[0].mxu0
        %v5619 = vpop.f32.mrb[0].mxu0
        %v5620 = vadd.f32 0.0, %v5619
        %v5621 = vpop.f32.mrb[0].mxu0
        %5622 = vmatprep.mubr.bf16.mxu0 0
        %5623 = vmatmul.mubr.bf16.gmra.mrb[0].mxu0 %v5502
        %v5624 = vpop.f32.mrb[0].mxu0
        %v5625 = vadd.f32 0.0, %v5624
        %v5626 = vpop.f32.mrb[0].mxu0
        %v5627 = vpop.f32.mrb[0].mxu0
        %v5628 = vadd.f32 0.0, %v5627
        %v5629 = vpop.f32.mrb[0].mxu0
        %5630 = vmatprep.mubr.bf16.mxu0 0
        %5631 = vmatmul.mubr.bf16.gmra.mrb[0].mxu0 %v5503
        %v5632 = vpop.f32.mrb[0].mxu0
        %v5633 = vadd.f32 0.0, %v5632
        %v5634 = vpop.f32.mrb[0].mxu0
        %v5635 = vpop.f32.mrb[0].mxu0
        %v5636 = vadd.f32 0.0, %v5635
        %v5637 = vpop.f32.mrb[0].mxu0
        %5638 = vdwg.mxu0
        %v5639 = vmul.f32 %v5593, %v588
        %v5640 = vmul.f32 %v5596, %v588
        %v5641 = vmul.f32 %v5601, %v588
        %v5642 = vmul.f32 %v5604, %v588
        %v5643 = vmul.f32 %v5609, %v588
        %v5644 = vmul.f32 %v5612, %v588
        %v5645 = vmul.f32 %v5617, %v588
        %v5646 = vmul.f32 %v5620, %v588
        %v5647 = vmul.f32 %v5625, %v588
        %v5648 = vmul.f32 %v5628, %v588
        %v5649 = vmul.f32 %v5633, %v588
        %v5650 = vmul.f32 %v5636, %v588
        %v5651 = vadd.f32 %v5639, %v604
        %v5652 = vadd.f32 %v5640, %v604
        %v5653 = vadd.f32 %v5641, %v604
        %v5654 = vadd.f32 %v5642, %v604
        %v5655 = vadd.f32 %v5643, %v604
        %v5656 = vadd.f32 %v5644, %v604
        %v5657 = vadd.f32 %v5645, %v604
        %v5658 = vadd.f32 %v5646, %v604
        %v5659 = vadd.f32 %v5647, %v604
        %v5660 = vadd.f32 %v5648, %v604
        %v5661 = vadd.f32 %v5649, %v604
        %v5662 = vadd.f32 %v5650, %v604
        %v5663 = vmax.f32 %v5651, 0.0
        %v5664 = vmax.f32 %v5652, 0.0
        %v5665 = vmax.f32 %v5653, 0.0
        %v5666 = vmax.f32 %v5654, 0.0
        %v5667 = vmax.f32 %v5655, 0.0
        %v5668 = vmax.f32 %v5656, 0.0
        %v5669 = vmax.f32 %v5657, 0.0
        %v5670 = vmax.f32 %v5658, 0.0
        %v5671 = vmax.f32 %v5659, 0.0
        %v5672 = vmax.f32 %v5660, 0.0
        %v5673 = vmax.f32 %v5661, 0.0
        %v5674 = vmax.f32 %v5662, 0.0
        %v5675 = vld [vmem:[#allocation6] sm:$0xff]
        %v5676 = vld [vmem:[#allocation6 + $0x8] sm:$0xff]
        %v5677 = vld [vmem:[#allocation6 + $0x10] sm:$0xff]
        %v5678 = vld [vmem:[#allocation6 + $0x18] sm:$0xff]
        %v5679 = vld [vmem:[#allocation6 + $0x20] sm:$0xff]
        %v5680 = vld [vmem:[#allocation6 + $0x28] sm:$0xff]
        %v5681 = vld [vmem:[#allocation6 + $0x30] sm:$0xff]
        %v5682 = vld [vmem:[#allocation6 + $0x38] sm:$0xff]
        %v5683 = vld [vmem:[#allocation6 + $0x40] sm:$0xff]
        %v5684 = vld [vmem:[#allocation6 + $0x48] sm:$0xff]
        %v5685 = vld [vmem:[#allocation6 + $0x50] sm:$0xff]
        %v5686 = vld [vmem:[#allocation6 + $0x58] sm:$0xff]
        %v5687 = vmul.f32 %v5663, %v5675
        %v5688 = vmul.f32 %v5664, %v5676
        %v5689 = vmul.f32 %v5665, %v5677
        %v5690 = vmul.f32 %v5666, %v5678
        %v5691 = vmul.f32 %v5667, %v5679
        %v5692 = vmul.f32 %v5668, %v5680
        %v5693 = vmul.f32 %v5669, %v5681
        %v5694 = vmul.f32 %v5670, %v5682
        %v5695 = vmul.f32 %v5671, %v5683
        %v5696 = vmul.f32 %v5672, %v5684
        %v5697 = vmul.f32 %v5673, %v5685
        %v5698 = vmul.f32 %v5674, %v5686
        %v5699 = vpack.c.bf16 %v5688, %v5687
        %v5700 = vpack.c.bf16 %v5690, %v5689
        %v5701 = vpack.c.bf16 %v5692, %v5691
        %v5702 = vpack.c.bf16 %v5694, %v5693
        %v5703 = vpack.c.bf16 %v5696, %v5695
        %v5704 = vpack.c.bf16 %v5698, %v5697
        %5705 = vst [vmem:[#allocation2 + $0xa0] sm:$0xff] %v5699
        %5706 = vst [vmem:[#allocation2 + $0xa8] sm:$0xff] %v5700
        %5707 = vst [vmem:[#allocation2 + $0xb0] sm:$0xff] %v5701
        %5708 = vst [vmem:[#allocation2 + $0xb8] sm:$0xff] %v5702
        %5709 = vst [vmem:[#allocation2 + $0xc0] sm:$0xff] %v5703
        %5710 = vst [vmem:[#allocation2 + $0xc8] sm:$0xff] %v5704
        %v5711 = vld [vmem:[#allocation2 + $0x60] sm:$0xf8]
        %v5712 = vld [vmem:[#allocation2 + $0x68] sm:$0xff]
        %v5713 = vld [vmem:[#allocation2 + $0x70] sm:$0xff]
        %v5714 = vld [vmem:[#allocation2 + $0x78] sm:$0xff]
        %v5715 = vld [vmem:[#allocation2 + $0x80] sm:$0xff]
        %v5716 = vld [vmem:[#allocation2 + $0x88] sm:$0xff]
        %v5717 = vld [vmem:[#allocation2 + $0x90] sm:$0xf]
        %v5718 = vld [vmem:[#allocation9] sm:$0xf]
        %v5719 = vld [vmem:[#allocation9 + $0x4] sm:$0xf]
        %v5720 = vld [vmem:[#allocation9 + $0x8] sm:$0xf]
        %v5721 = vld [vmem:[#allocation9 + $0xc] sm:$0xf]
        %v5722 = vld [vmem:[#allocation9 + $0x10] sm:$0xf]
        %v5723 = vld [vmem:[#allocation9 + $0x14] sm:$0xf]
        %v5724 = vld [vmem:[#allocation9 + $0x18] sm:$0xf]
        %v5725 = vld [vmem:[#allocation9 + $0x1c] sm:$0xf]
        %v5726 = vld [vmem:[#allocation9 + $0x20] sm:$0xf]
        %v5727 = vld [vmem:[#allocation9 + $0x24] sm:$0xf]
        %v5728 = vld [vmem:[#allocation9 + $0x28] sm:$0xf]
        %v5729 = vld [vmem:[#allocation9 + $0x2c] sm:$0xf]
        %v5730 = vld [vmem:[#allocation9 + $0x30] sm:$0xf]
        %v5731 = vld [vmem:[#allocation9 + $0x34] sm:$0xf]
        %v5732 = vld [vmem:[#allocation9 + $0x38] sm:$0xf]
        %v5733 = vld [vmem:[#allocation9 + $0x3c] sm:$0xf]
        %v5734 = vld [vmem:[#allocation2 + $0x60] sm:$0xf0]
        %v5735 = vld [vmem:[%s954] sm:$0xf]
        %v5736 = vld [vmem:[%s954 + $0x4] sm:$0xf]
        %v5737 = vld [vmem:[%s954 + $0x8] sm:$0xf]
        %v5738 = vld [vmem:[%s954 + $0xc] sm:$0xf]
        %v5739 = vld [vmem:[%s954 + $0x10] sm:$0xf]
        %v5740 = vld [vmem:[%s954 + $0x14] sm:$0xf]
        %v5741 = vld [vmem:[%s954 + $0x18] sm:$0xf]
        %v5742 = vld [vmem:[%s954 + $0x1c] sm:$0xf]
        %v5743 = vld [vmem:[%s954 + $0x20] sm:$0xf]
        %v5744 = vld [vmem:[%s954 + $0x24] sm:$0xf]
        %v5745 = vld [vmem:[%s954 + $0x28] sm:$0xf]
        %v5746 = vld [vmem:[%s954 + $0x2c] sm:$0xf]
        %v5747 = vld [vmem:[%s954 + $0x30] sm:$0xf]
        %v5748 = vld [vmem:[%s954 + $0x34] sm:$0xf]
        %v5749 = vld [vmem:[%s954 + $0x38] sm:$0xf]
        %v5750 = vld [vmem:[%s954 + $0x3c] sm:$0xf]
        %v5758 = vrot.slane %v5734, 4
        %v5759 = vrot.slane %v5712, 4
        %v5760 = vsel %vm978, %v5758, %v5759
        %v5761 = vrot.slane %v5713, 4
        %v5762 = vsel %vm978, %v5759, %v5761
        %v5763 = vrot.slane %v5714, 4
        %v5764 = vsel %vm978, %v5761, %v5763
        %v5765 = vrot.slane %v5715, 4
        %v5766 = vsel %vm978, %v5763, %v5765
        %v5767 = vrot.slane %v5716, 4
        %v5768 = vsel %vm978, %v5765, %v5767
        %v5769 = vrot.slane %v5717, 4
        %v5770 = vsel %vm978, %v5767, %v5769
        %v5793 = vunpack.c.l.b16 %v5735
        %v5794 = vunpack.c.l.b16 %v5736
        %v5795 = vunpack.c.l.b16 %v5737
        %v5796 = vunpack.c.l.b16 %v5738
        %v5797 = vunpack.c.l.b16 %v5739
        %v5798 = vunpack.c.l.b16 %v5740
        %v5799 = vunpack.c.l.b16 %v5741
        %v5800 = vunpack.c.l.b16 %v5742
        %v5801 = vunpack.c.l.b16 %v5743
        %v5802 = vunpack.c.l.b16 %v5744
        %v5803 = vunpack.c.l.b16 %v5745
        %v5804 = vunpack.c.l.b16 %v5746
        %v5805 = vunpack.c.l.b16 %v5747
        %v5806 = vunpack.c.l.b16 %v5748
        %v5807 = vunpack.c.l.b16 %v5749
        %v5808 = vunpack.c.l.b16 %v5750
        %v5809 = vpack.c.b16 %v5794, %v5793
        %v5810 = vpack.c.b16 %v5796, %v5795
        %v5811 = vpack.c.b16 %v5798, %v5797
        %v5812 = vpack.c.b16 %v5800, %v5799
        %v5813 = vpack.c.b16 %v5802, %v5801
        %v5814 = vpack.c.b16 %v5804, %v5803
        %v5815 = vpack.c.b16 %v5806, %v5805
        %v5816 = vpack.c.b16 %v5808, %v5807
        %5825 = vmatprep.subr.bf16.mxu0 0
        %5826 = vmatpush1.bf16.msra.mxu0 %v5809
        %5827 = vmatprep.subr.bf16.mxu0 0
        %5828 = vmatpush1.bf16.msra.mxu0 %v5810
        %5829 = vmatprep.subr.bf16.mxu0 0
        %5830 = vmatpush1.bf16.msra.mxu0 %v5811
        %5831 = vmatprep.subr.bf16.mxu0 0
        %5832 = vmatpush1.bf16.msra.mxu0 %v5812
        %5833 = vmatprep.subr.bf16.mxu0 0
        %5834 = vmatpush1.bf16.msra.mxu0 %v5813
        %5835 = vmatprep.subr.bf16.mxu0 0
        %5836 = vmatpush1.bf16.msra.mxu0 %v5814
        %5837 = vmatprep.subr.bf16.mxu0 0
        %5838 = vmatpush1.bf16.msra.mxu0 %v5815
        %5839 = vmatprep.subr.bf16.mxu0 0
        %5840 = vmatpush1.bf16.msra.mxu0 %v5816
        %5841 = vmatprep.subr.bf16.mxu0 0
        %5842 = vmatpush1.bf16.msra.mxu0 0
        %5843 = vmatprep.subr.bf16.mxu0 0
        %5844 = vmatpush1.bf16.msra.mxu0 0
        %5845 = vmatprep.subr.bf16.mxu0 0
        %5846 = vmatpush1.bf16.msra.mxu0 0
        %5847 = vmatprep.subr.bf16.mxu0 0
        %5848 = vmatpush1.bf16.msra.mxu0 0
        %5849 = vmatprep.subr.bf16.mxu0 0
        %5850 = vmatpush1.bf16.msra.mxu0 0
        %5851 = vmatprep.subr.bf16.mxu0 0
        %5852 = vmatpush1.bf16.msra.mxu0 0
        %5853 = vmatprep.subr.bf16.mxu0 0
        %5854 = vmatpush1.bf16.msra.mxu0 0
        %5855 = vmatprep.subr.bf16.mxu0 0
        %5856 = vmatpush1.bf16.msra.mxu0 0
        %5857 = vmatprep.mubr.bf16.mxu0 0
        %5858 = vmatmul.mubr.bf16.gmra.mrb[0].mxu0 %v5760
        %v5859 = vpop.f32.mrb[0].mxu0
        %v5860 = vadd.f32 0.0, %v5859
        %v5861 = vpop.f32.mrb[0].mxu0
        %v5862 = vpop.f32.mrb[0].mxu0
        %v5863 = vadd.f32 0.0, %v5862
        %v5864 = vpop.f32.mrb[0].mxu0
        %5865 = vmatprep.mubr.bf16.mxu0 0
        %5866 = vmatmul.mubr.bf16.gmra.mrb[0].mxu0 %v5762
        %v5867 = vpop.f32.mrb[0].mxu0
        %v5868 = vadd.f32 0.0, %v5867
        %v5869 = vpop.f32.mrb[0].mxu0
        %v5870 = vpop.f32.mrb[0].mxu0
        %v5871 = vadd.f32 0.0, %v5870
        %v5872 = vpop.f32.mrb[0].mxu0
        %5873 = vmatprep.mubr.bf16.mxu0 0
        %5874 = vmatmul.mubr.bf16.gmra.mrb[0].mxu0 %v5764
        %v5875 = vpop.f32.mrb[0].mxu0
        %v5876 = vadd.f32 0.0, %v5875
        %v5877 = vpop.f32.mrb[0].mxu0
        %v5878 = vpop.f32.mrb[0].mxu0
        %v5879 = vadd.f32 0.0, %v5878
        %v5880 = vpop.f32.mrb[0].mxu0
        %5881 = vmatprep.mubr.bf16.mxu0 0
        %5882 = vmatmul.mubr.bf16.gmra.mrb[0].mxu0 %v5766
        %v5883 = vpop.f32.mrb[0].mxu0
        %v5884 = vadd.f32 0.0, %v5883
        %v5885 = vpop.f32.mrb[0].mxu0
        %v5886 = vpop.f32.mrb[0].mxu0
        %v5887 = vadd.f32 0.0, %v5886
        %v5888 = vpop.f32.mrb[0].mxu0
        %5889 = vmatprep.mubr.bf16.mxu0 0
        %5890 = vmatmul.mubr.bf16.gmra.mrb[0].mxu0 %v5768
        %v5891 = vpop.f32.mrb[0].mxu0
        %v5892 = vadd.f32 0.0, %v5891
        %v5893 = vpop.f32.mrb[0].mxu0
        %v5894 = vpop.f32.mrb[0].mxu0
        %v5895 = vadd.f32 0.0, %v5894
        %v5896 = vpop.f32.mrb[0].mxu0
        %5897 = vmatprep.mubr.bf16.mxu0 0
        %5898 = vmatmul.mubr.bf16.gmra.mrb[0].mxu0 %v5770
        %v5899 = vpop.f32.mrb[0].mxu0
        %v5900 = vadd.f32 0.0, %v5899
        %v5901 = vpop.f32.mrb[0].mxu0
        %v5902 = vpop.f32.mrb[0].mxu0
        %v5903 = vadd.f32 0.0, %v5902
        %v5904 = vpop.f32.mrb[0].mxu0
        %5905 = vdwg.mxu0
        %v5907 = vshrl.u32 %v5711, 16
        %v5909 = vrot.slane %v5907, 3
        %v5910 = vshll.u32 %v5711, 16
        %v5912 = vrot.slane %v5910, 4
        %v5913 = vor.u32 %v5909, %v5912
        %v5915 = vshrl.u32 %v5712, 16
        %v5917 = vrot.slane %v5915, 3
        %v5918 = vshll.u32 %v5712, 16
        %v5920 = vrot.slane %v5918, 4
        %v5921 = vor.u32 %v5917, %v5920
        %v5922 = vsel %vm1127, %v5913, %v5921
        %v5924 = vshrl.u32 %v5713, 16
        %v5926 = vrot.slane %v5924, 3
        %v5927 = vshll.u32 %v5713, 16
        %v5929 = vrot.slane %v5927, 4
        %v5930 = vor.u32 %v5926, %v5929
        %v5931 = vsel %vm1127, %v5921, %v5930
        %v5933 = vshrl.u32 %v5714, 16
        %v5935 = vrot.slane %v5933, 3
        %v5936 = vshll.u32 %v5714, 16
        %v5938 = vrot.slane %v5936, 4
        %v5939 = vor.u32 %v5935, %v5938
        %v5940 = vsel %vm1127, %v5930, %v5939
        %v5942 = vshrl.u32 %v5715, 16
        %v5944 = vrot.slane %v5942, 3
        %v5945 = vshll.u32 %v5715, 16
        %v5947 = vrot.slane %v5945, 4
        %v5948 = vor.u32 %v5944, %v5947
        %v5949 = vsel %vm1127, %v5939, %v5948
        %v5951 = vshrl.u32 %v5716, 16
        %v5953 = vrot.slane %v5951, 3
        %v5954 = vshll.u32 %v5716, 16
        %v5956 = vrot.slane %v5954, 4
        %v5957 = vor.u32 %v5953, %v5956
        %v5958 = vsel %vm1127, %v5948, %v5957
        %v5960 = vshrl.u32 %v5717, 16
        %v5962 = vrot.slane %v5960, 3
        %v5963 = vshll.u32 %v5717, 16
        %v5965 = vrot.slane %v5963, 4
        %v5966 = vor.u32 %v5962, %v5965
        %v5967 = vsel %vm1127, %v5957, %v5966
        %v5990 = vunpack.c.l.b16 %v5718
        %v5991 = vunpack.c.l.b16 %v5719
        %v5992 = vunpack.c.l.b16 %v5720
        %v5993 = vunpack.c.l.b16 %v5721
        %v5994 = vunpack.c.l.b16 %v5722
        %v5995 = vunpack.c.l.b16 %v5723
        %v5996 = vunpack.c.l.b16 %v5724
        %v5997 = vunpack.c.l.b16 %v5725
        %v5998 = vunpack.c.l.b16 %v5726
        %v5999 = vunpack.c.l.b16 %v5727
        %v6000 = vunpack.c.l.b16 %v5728
        %v6001 = vunpack.c.l.b16 %v5729
        %v6002 = vunpack.c.l.b16 %v5730
        %v6003 = vunpack.c.l.b16 %v5731
        %v6004 = vunpack.c.l.b16 %v5732
        %v6005 = vunpack.c.l.b16 %v5733
        %v6006 = vpack.c.b16 %v5991, %v5990
        %v6007 = vpack.c.b16 %v5993, %v5992
        %v6008 = vpack.c.b16 %v5995, %v5994
        %v6009 = vpack.c.b16 %v5997, %v5996
        %v6010 = vpack.c.b16 %v5999, %v5998
        %v6011 = vpack.c.b16 %v6001, %v6000
        %v6012 = vpack.c.b16 %v6003, %v6002
        %v6013 = vpack.c.b16 %v6005, %v6004
        %6022 = vmatprep.subr.bf16.mxu0 0
        %6023 = vmatpush1.bf16.msra.mxu0 %v6006
        %6024 = vmatprep.subr.bf16.mxu0 0
        %6025 = vmatpush1.bf16.msra.mxu0 %v6007
        %6026 = vmatprep.subr.bf16.mxu0 0
        %6027 = vmatpush1.bf16.msra.mxu0 %v6008
        %6028 = vmatprep.subr.bf16.mxu0 0
        %6029 = vmatpush1.bf16.msra.mxu0 %v6009
        %6030 = vmatprep.subr.bf16.mxu0 0
        %6031 = vmatpush1.bf16.msra.mxu0 %v6010
        %6032 = vmatprep.subr.bf16.mxu0 0
        %6033 = vmatpush1.bf16.msra.mxu0 %v6011
        %6034 = vmatprep.subr.bf16.mxu0 0
        %6035 = vmatpush1.bf16.msra.mxu0 %v6012
        %6036 = vmatprep.subr.bf16.mxu0 0
        %6037 = vmatpush1.bf16.msra.mxu0 %v6013
        %6038 = vmatprep.subr.bf16.mxu0 0
        %6039 = vmatpush1.bf16.msra.mxu0 0
        %6040 = vmatprep.subr.bf16.mxu0 0
        %6041 = vmatpush1.bf16.msra.mxu0 0
        %6042 = vmatprep.subr.bf16.mxu0 0
        %6043 = vmatpush1.bf16.msra.mxu0 0
        %6044 = vmatprep.subr.bf16.mxu0 0
        %6045 = vmatpush1.bf16.msra.mxu0 0
        %6046 = vmatprep.subr.bf16.mxu0 0
        %6047 = vmatpush1.bf16.msra.mxu0 0
        %6048 = vmatprep.subr.bf16.mxu0 0
        %6049 = vmatpush1.bf16.msra.mxu0 0
        %6050 = vmatprep.subr.bf16.mxu0 0
        %6051 = vmatpush1.bf16.msra.mxu0 0
        %6052 = vmatprep.subr.bf16.mxu0 0
        %6053 = vmatpush1.bf16.msra.mxu0 0
        %6054 = vmatprep.mubr.bf16.mxu0 0
        %6055 = vmatmul.mubr.bf16.gmra.mrb[0].mxu0 %v5922
        %v6056 = vpop.f32.mrb[0].mxu0
        %v6057 = vadd.f32 %v5860, %v6056
        %v6058 = vpop.f32.mrb[0].mxu0
        %v6059 = vpop.f32.mrb[0].mxu0
        %v6060 = vadd.f32 %v5863, %v6059
        %v6061 = vpop.f32.mrb[0].mxu0
        %6062 = vmatprep.mubr.bf16.mxu0 0
        %6063 = vmatmul.mubr.bf16.gmra.mrb[0].mxu0 %v5931
        %v6064 = vpop.f32.mrb[0].mxu0
        %v6065 = vadd.f32 %v5868, %v6064
        %v6066 = vpop.f32.mrb[0].mxu0
        %v6067 = vpop.f32.mrb[0].mxu0
        %v6068 = vadd.f32 %v5871, %v6067
        %v6069 = vpop.f32.mrb[0].mxu0
        %6070 = vmatprep.mubr.bf16.mxu0 0
        %6071 = vmatmul.mubr.bf16.gmra.mrb[0].mxu0 %v5940
        %v6072 = vpop.f32.mrb[0].mxu0
        %v6073 = vadd.f32 %v5876, %v6072
        %v6074 = vpop.f32.mrb[0].mxu0
        %v6075 = vpop.f32.mrb[0].mxu0
        %v6076 = vadd.f32 %v5879, %v6075
        %v6077 = vpop.f32.mrb[0].mxu0
        %6078 = vmatprep.mubr.bf16.mxu0 0
        %6079 = vmatmul.mubr.bf16.gmra.mrb[0].mxu0 %v5949
        %v6080 = vpop.f32.mrb[0].mxu0
        %v6081 = vadd.f32 %v5884, %v6080
        %v6082 = vpop.f32.mrb[0].mxu0
        %v6083 = vpop.f32.mrb[0].mxu0
        %v6084 = vadd.f32 %v5887, %v6083
        %v6085 = vpop.f32.mrb[0].mxu0
        %6086 = vmatprep.mubr.bf16.mxu0 0
        %6087 = vmatmul.mubr.bf16.gmra.mrb[0].mxu0 %v5958
        %v6088 = vpop.f32.mrb[0].mxu0
        %v6089 = vadd.f32 %v5892, %v6088
        %v6090 = vpop.f32.mrb[0].mxu0
        %v6091 = vpop.f32.mrb[0].mxu0
        %v6092 = vadd.f32 %v5895, %v6091
        %v6093 = vpop.f32.mrb[0].mxu0
        %6094 = vmatprep.mubr.bf16.mxu0 0
        %6095 = vmatmul.mubr.bf16.gmra.mrb[0].mxu0 %v5967
        %v6096 = vpop.f32.mrb[0].mxu0
        %v6097 = vadd.f32 %v5900, %v6096
        %v6098 = vpop.f32.mrb[0].mxu0
        %v6099 = vpop.f32.mrb[0].mxu0
        %v6100 = vadd.f32 %v5903, %v6099
        %v6101 = vpop.f32.mrb[0].mxu0
        %6102 = vdwg.mxu0
        %v6103 = vld [vmem:[#allocation2 + $0x90] sm:$0x1f]
        %v6104 = vld [vmem:[%s1326] sm:$0xf]
        %v6105 = vld [vmem:[%s1326 + $0x4] sm:$0xf]
        %v6106 = vld [vmem:[%s1326 + $0x8] sm:$0xf]
        %v6107 = vld [vmem:[%s1326 + $0xc] sm:$0xf]
        %v6108 = vld [vmem:[%s1326 + $0x10] sm:$0xf]
        %v6109 = vld [vmem:[%s1326 + $0x14] sm:$0xf]
        %v6110 = vld [vmem:[%s1326 + $0x18] sm:$0xf]
        %v6111 = vld [vmem:[%s1326 + $0x1c] sm:$0xf]
        %v6112 = vld [vmem:[%s1326 + $0x20] sm:$0xf]
        %v6113 = vld [vmem:[%s1326 + $0x24] sm:$0xf]
        %v6114 = vld [vmem:[%s1326 + $0x28] sm:$0xf]
        %v6115 = vld [vmem:[%s1326 + $0x2c] sm:$0xf]
        %v6116 = vld [vmem:[%s1326 + $0x30] sm:$0xf]
        %v6117 = vld [vmem:[%s1326 + $0x34] sm:$0xf]
        %v6118 = vld [vmem:[%s1326 + $0x38] sm:$0xf]
        %v6119 = vld [vmem:[%s1326 + $0x3c] sm:$0xf]
        %v6121 = vshrl.u32 %v5734, 16
        %v6123 = vrot.slane %v6121, 4
        %v6124 = vshll.u32 %v5734, 16
        %v6126 = vrot.slane %v6124, 5
        %v6127 = vor.u32 %v6123, %v6126
        %v6128 = vrot.slane %v5915, 4
        %v6129 = vrot.slane %v5918, 5
        %v6130 = vor.u32 %v6128, %v6129
        %v6131 = vsel %vm1343, %v6127, %v6130
        %v6132 = vrot.slane %v5924, 4
        %v6133 = vrot.slane %v5927, 5
        %v6134 = vor.u32 %v6132, %v6133
        %v6135 = vsel %vm1343, %v6130, %v6134
        %v6136 = vrot.slane %v5933, 4
        %v6137 = vrot.slane %v5936, 5
        %v6138 = vor.u32 %v6136, %v6137
        %v6139 = vsel %vm1343, %v6134, %v6138
        %v6140 = vrot.slane %v5942, 4
        %v6141 = vrot.slane %v5945, 5
        %v6142 = vor.u32 %v6140, %v6141
        %v6143 = vsel %vm1343, %v6138, %v6142
        %v6144 = vrot.slane %v5951, 4
        %v6145 = vrot.slane %v5954, 5
        %v6146 = vor.u32 %v6144, %v6145
        %v6147 = vsel %vm1343, %v6142, %v6146
        %v6149 = vshrl.u32 %v6103, 16
        %v6151 = vrot.slane %v6149, 4
        %v6152 = vshll.u32 %v6103, 16
        %v6154 = vrot.slane %v6152, 5
        %v6155 = vor.u32 %v6151, %v6154
        %v6156 = vsel %vm1343, %v6146, %v6155
        %v6179 = vunpack.c.l.b16 %v6104
        %v6180 = vunpack.c.l.b16 %v6105
        %v6181 = vunpack.c.l.b16 %v6106
        %v6182 = vunpack.c.l.b16 %v6107
        %v6183 = vunpack.c.l.b16 %v6108
        %v6184 = vunpack.c.l.b16 %v6109
        %v6185 = vunpack.c.l.b16 %v6110
        %v6186 = vunpack.c.l.b16 %v6111
        %v6187 = vunpack.c.l.b16 %v6112
        %v6188 = vunpack.c.l.b16 %v6113
        %v6189 = vunpack.c.l.b16 %v6114
        %v6190 = vunpack.c.l.b16 %v6115
        %v6191 = vunpack.c.l.b16 %v6116
        %v6192 = vunpack.c.l.b16 %v6117
        %v6193 = vunpack.c.l.b16 %v6118
        %v6194 = vunpack.c.l.b16 %v6119
        %v6195 = vpack.c.b16 %v6180, %v6179
        %v6196 = vpack.c.b16 %v6182, %v6181
        %v6197 = vpack.c.b16 %v6184, %v6183
        %v6198 = vpack.c.b16 %v6186, %v6185
        %v6199 = vpack.c.b16 %v6188, %v6187
        %v6200 = vpack.c.b16 %v6190, %v6189
        %v6201 = vpack.c.b16 %v6192, %v6191
        %v6202 = vpack.c.b16 %v6194, %v6193
        %6211 = vmatprep.subr.bf16.mxu0 0
        %6212 = vmatpush1.bf16.msra.mxu0 %v6195
        %6213 = vmatprep.subr.bf16.mxu0 0
        %6214 = vmatpush1.bf16.msra.mxu0 %v6196
        %6215 = vmatprep.subr.bf16.mxu0 0
        %6216 = vmatpush1.bf16.msra.mxu0 %v6197
        %6217 = vmatprep.subr.bf16.mxu0 0
        %6218 = vmatpush1.bf16.msra.mxu0 %v6198
        %6219 = vmatprep.subr.bf16.mxu0 0
        %6220 = vmatpush1.bf16.msra.mxu0 %v6199
        %6221 = vmatprep.subr.bf16.mxu0 0
        %6222 = vmatpush1.bf16.msra.mxu0 %v6200
        %6223 = vmatprep.subr.bf16.mxu0 0
        %6224 = vmatpush1.bf16.msra.mxu0 %v6201
        %6225 = vmatprep.subr.bf16.mxu0 0
        %6226 = vmatpush1.bf16.msra.mxu0 %v6202
        %6227 = vmatprep.subr.bf16.mxu0 0
        %6228 = vmatpush1.bf16.msra.mxu0 0
        %6229 = vmatprep.subr.bf16.mxu0 0
        %6230 = vmatpush1.bf16.msra.mxu0 0
        %6231 = vmatprep.subr.bf16.mxu0 0
        %6232 = vmatpush1.bf16.msra.mxu0 0
        %6233 = vmatprep.subr.bf16.mxu0 0
        %6234 = vmatpush1.bf16.msra.mxu0 0
        %6235 = vmatprep.subr.bf16.mxu0 0
        %6236 = vmatpush1.bf16.msra.mxu0 0
        %6237 = vmatprep.subr.bf16.mxu0 0
        %6238 = vmatpush1.bf16.msra.mxu0 0
        %6239 = vmatprep.subr.bf16.mxu0 0
        %6240 = vmatpush1.bf16.msra.mxu0 0
        %6241 = vmatprep.subr.bf16.mxu0 0
        %6242 = vmatpush1.bf16.msra.mxu0 0
        %6243 = vmatprep.mubr.bf16.mxu0 0
        %6244 = vmatmul.mubr.bf16.gmra.mrb[0].mxu0 %v6131
        %v6245 = vpop.f32.mrb[0].mxu0
        %v6246 = vadd.f32 0.0, %v6245
        %v6247 = vpop.f32.mrb[0].mxu0
        %v6248 = vpop.f32.mrb[0].mxu0
        %v6249 = vadd.f32 0.0, %v6248
        %v6250 = vpop.f32.mrb[0].mxu0
        %6251 = vmatprep.mubr.bf16.mxu0 0
        %6252 = vmatmul.mubr.bf16.gmra.mrb[0].mxu0 %v6135
        %v6253 = vpop.f32.mrb[0].mxu0
        %v6254 = vadd.f32 0.0, %v6253
        %v6255 = vpop.f32.mrb[0].mxu0
        %v6256 = vpop.f32.mrb[0].mxu0
        %v6257 = vadd.f32 0.0, %v6256
        %v6258 = vpop.f32.mrb[0].mxu0
        %6259 = vmatprep.mubr.bf16.mxu0 0
        %6260 = vmatmul.mubr.bf16.gmra.mrb[0].mxu0 %v6139
        %v6261 = vpop.f32.mrb[0].mxu0
        %v6262 = vadd.f32 0.0, %v6261
        %v6263 = vpop.f32.mrb[0].mxu0
        %v6264 = vpop.f32.mrb[0].mxu0
        %v6265 = vadd.f32 0.0, %v6264
        %v6266 = vpop.f32.mrb[0].mxu0
        %6267 = vmatprep.mubr.bf16.mxu0 0
        %6268 = vmatmul.mubr.bf16.gmra.mrb[0].mxu0 %v6143
        %v6269 = vpop.f32.mrb[0].mxu0
        %v6270 = vadd.f32 0.0, %v6269
        %v6271 = vpop.f32.mrb[0].mxu0
        %v6272 = vpop.f32.mrb[0].mxu0
        %v6273 = vadd.f32 0.0, %v6272
        %v6274 = vpop.f32.mrb[0].mxu0
        %6275 = vmatprep.mubr.bf16.mxu0 0
        %6276 = vmatmul.mubr.bf16.gmra.mrb[0].mxu0 %v6147
        %v6277 = vpop.f32.mrb[0].mxu0
        %v6278 = vadd.f32 0.0, %v6277
        %v6279 = vpop.f32.mrb[0].mxu0
        %v6280 = vpop.f32.mrb[0].mxu0
        %v6281 = vadd.f32 0.0, %v6280
        %v6282 = vpop.f32.mrb[0].mxu0
        %6283 = vmatprep.mubr.bf16.mxu0 0
        %6284 = vmatmul.mubr.bf16.gmra.mrb[0].mxu0 %v6156
        %v6285 = vpop.f32.mrb[0].mxu0
        %v6286 = vadd.f32 0.0, %v6285
        %v6287 = vpop.f32.mrb[0].mxu0
        %v6288 = vpop.f32.mrb[0].mxu0
        %v6289 = vadd.f32 0.0, %v6288
        %v6290 = vpop.f32.mrb[0].mxu0
        %6291 = vdwg.mxu0
        %v6292 = vadd.f32 %v6057, %v6246
        %v6293 = vadd.f32 %v6060, %v6249
        %v6294 = vadd.f32 %v6065, %v6254
        %v6295 = vadd.f32 %v6068, %v6257
        %v6296 = vadd.f32 %v6073, %v6262
        %v6297 = vadd.f32 %v6076, %v6265
        %v6298 = vadd.f32 %v6081, %v6270
        %v6299 = vadd.f32 %v6084, %v6273
        %v6300 = vadd.f32 %v6089, %v6278
        %v6301 = vadd.f32 %v6092, %v6281
        %v6302 = vadd.f32 %v6097, %v6286
        %v6303 = vadd.f32 %v6100, %v6289
        %v6304 = vld [vmem:[#allocation2 + $0x68] sm:$0x80]
        %v6305 = vld [vmem:[#allocation2 + $0x70] sm:$0xff]
        %v6306 = vld [vmem:[#allocation2 + $0x78] sm:$0xff]
        %v6307 = vld [vmem:[#allocation2 + $0x80] sm:$0xff]
        %v6308 = vld [vmem:[#allocation2 + $0x88] sm:$0xff]
        %v6309 = vld [vmem:[#allocation2 + $0x90] sm:$0xff]
        %v6310 = vld [vmem:[#allocation2 + $0x98] sm:$0xff]
        %v6311 = vld [vmem:[%s1535] sm:$0xf]
        %v6312 = vld [vmem:[%s1535 + $0x4] sm:$0xf]
        %v6313 = vld [vmem:[%s1535 + $0x8] sm:$0xf]
        %v6314 = vld [vmem:[%s1535 + $0xc] sm:$0xf]
        %v6315 = vld [vmem:[%s1535 + $0x10] sm:$0xf]
        %v6316 = vld [vmem:[%s1535 + $0x14] sm:$0xf]
        %v6317 = vld [vmem:[%s1535 + $0x18] sm:$0xf]
        %v6318 = vld [vmem:[%s1535 + $0x1c] sm:$0xf]
        %v6319 = vld [vmem:[%s1535 + $0x20] sm:$0xf]
        %v6320 = vld [vmem:[%s1535 + $0x24] sm:$0xf]
        %v6321 = vld [vmem:[%s1535 + $0x28] sm:$0xf]
        %v6322 = vld [vmem:[%s1535 + $0x2c] sm:$0xf]
        %v6323 = vld [vmem:[%s1535 + $0x30] sm:$0xf]
        %v6324 = vld [vmem:[%s1535 + $0x34] sm:$0xf]
        %v6325 = vld [vmem:[%s1535 + $0x38] sm:$0xf]
        %v6326 = vld [vmem:[%s1535 + $0x3c] sm:$0xf]
        %v6328 = vshrl.u32 %v6304, 16
        %v6330 = vrot.slane %v6328, 7
        %v6332 = vshrl.u32 %v6305, 16
        %v6334 = vrot.slane %v6332, 7
        %v6335 = vshll.u32 %v6305, 16
        %v6337 = vor.u32 %v6334, %v6335
        %v6338 = vsel %vm1552, %v6330, %v6337
        %v6340 = vshrl.u32 %v6306, 16
        %v6342 = vrot.slane %v6340, 7
        %v6343 = vshll.u32 %v6306, 16
        %v6345 = vor.u32 %v6342, %v6343
        %v6346 = vsel %vm1552, %v6334, %v6345
        %v6348 = vshrl.u32 %v6307, 16
        %v6350 = vrot.slane %v6348, 7
        %v6351 = vshll.u32 %v6307, 16
        %v6353 = vor.u32 %v6350, %v6351
        %v6354 = vsel %vm1552, %v6342, %v6353
        %v6356 = vshrl.u32 %v6308, 16
        %v6358 = vrot.slane %v6356, 7
        %v6359 = vshll.u32 %v6308, 16
        %v6361 = vor.u32 %v6358, %v6359
        %v6362 = vsel %vm1552, %v6350, %v6361
        %v6364 = vshrl.u32 %v6309, 16
        %v6366 = vrot.slane %v6364, 7
        %v6367 = vshll.u32 %v6309, 16
        %v6369 = vor.u32 %v6366, %v6367
        %v6370 = vsel %vm1552, %v6358, %v6369
        %v6372 = vshrl.u32 %v6310, 16
        %v6374 = vrot.slane %v6372, 7
        %v6375 = vshll.u32 %v6310, 16
        %v6377 = vor.u32 %v6374, %v6375
        %v6378 = vsel %vm1552, %v6366, %v6377
        %v6401 = vunpack.c.l.b16 %v6311
        %v6402 = vunpack.c.l.b16 %v6312
        %v6403 = vunpack.c.l.b16 %v6313
        %v6404 = vunpack.c.l.b16 %v6314
        %v6405 = vunpack.c.l.b16 %v6315
        %v6406 = vunpack.c.l.b16 %v6316
        %v6407 = vunpack.c.l.b16 %v6317
        %v6408 = vunpack.c.l.b16 %v6318
        %v6409 = vunpack.c.l.b16 %v6319
        %v6410 = vunpack.c.l.b16 %v6320
        %v6411 = vunpack.c.l.b16 %v6321
        %v6412 = vunpack.c.l.b16 %v6322
        %v6413 = vunpack.c.l.b16 %v6323
        %v6414 = vunpack.c.l.b16 %v6324
        %v6415 = vunpack.c.l.b16 %v6325
        %v6416 = vunpack.c.l.b16 %v6326
        %v6417 = vpack.c.b16 %v6402, %v6401
        %v6418 = vpack.c.b16 %v6404, %v6403
        %v6419 = vpack.c.b16 %v6406, %v6405
        %v6420 = vpack.c.b16 %v6408, %v6407
        %v6421 = vpack.c.b16 %v6410, %v6409
        %v6422 = vpack.c.b16 %v6412, %v6411
        %v6423 = vpack.c.b16 %v6414, %v6413
        %v6424 = vpack.c.b16 %v6416, %v6415
        %6433 = vmatprep.subr.bf16.mxu0 0
        %6434 = vmatpush1.bf16.msra.mxu0 %v6417
        %6435 = vmatprep.subr.bf16.mxu0 0
        %6436 = vmatpush1.bf16.msra.mxu0 %v6418
        %6437 = vmatprep.subr.bf16.mxu0 0
        %6438 = vmatpush1.bf16.msra.mxu0 %v6419
        %6439 = vmatprep.subr.bf16.mxu0 0
        %6440 = vmatpush1.bf16.msra.mxu0 %v6420
        %6441 = vmatprep.subr.bf16.mxu0 0
        %6442 = vmatpush1.bf16.msra.mxu0 %v6421
        %6443 = vmatprep.subr.bf16.mxu0 0
        %6444 = vmatpush1.bf16.msra.mxu0 %v6422
        %6445 = vmatprep.subr.bf16.mxu0 0
        %6446 = vmatpush1.bf16.msra.mxu0 %v6423
        %6447 = vmatprep.subr.bf16.mxu0 0
        %6448 = vmatpush1.bf16.msra.mxu0 %v6424
        %6449 = vmatprep.subr.bf16.mxu0 0
        %6450 = vmatpush1.bf16.msra.mxu0 0
        %6451 = vmatprep.subr.bf16.mxu0 0
        %6452 = vmatpush1.bf16.msra.mxu0 0
        %6453 = vmatprep.subr.bf16.mxu0 0
        %6454 = vmatpush1.bf16.msra.mxu0 0
        %6455 = vmatprep.subr.bf16.mxu0 0
        %6456 = vmatpush1.bf16.msra.mxu0 0
        %6457 = vmatprep.subr.bf16.mxu0 0
        %6458 = vmatpush1.bf16.msra.mxu0 0
        %6459 = vmatprep.subr.bf16.mxu0 0
        %6460 = vmatpush1.bf16.msra.mxu0 0
        %6461 = vmatprep.subr.bf16.mxu0 0
        %6462 = vmatpush1.bf16.msra.mxu0 0
        %6463 = vmatprep.subr.bf16.mxu0 0
        %6464 = vmatpush1.bf16.msra.mxu0 0
        %6465 = vmatprep.mubr.bf16.mxu0 0
        %6466 = vmatmul.mubr.bf16.gmra.mrb[0].mxu0 %v6338
        %v6467 = vpop.f32.mrb[0].mxu0
        %v6468 = vadd.f32 0.0, %v6467
        %v6469 = vpop.f32.mrb[0].mxu0
        %v6470 = vpop.f32.mrb[0].mxu0
        %v6471 = vadd.f32 0.0, %v6470
        %v6472 = vpop.f32.mrb[0].mxu0
        %6473 = vmatprep.mubr.bf16.mxu0 0
        %6474 = vmatmul.mubr.bf16.gmra.mrb[0].mxu0 %v6346
        %v6475 = vpop.f32.mrb[0].mxu0
        %v6476 = vadd.f32 0.0, %v6475
        %v6477 = vpop.f32.mrb[0].mxu0
        %v6478 = vpop.f32.mrb[0].mxu0
        %v6479 = vadd.f32 0.0, %v6478
        %v6480 = vpop.f32.mrb[0].mxu0
        %6481 = vmatprep.mubr.bf16.mxu0 0
        %6482 = vmatmul.mubr.bf16.gmra.mrb[0].mxu0 %v6354
        %v6483 = vpop.f32.mrb[0].mxu0
        %v6484 = vadd.f32 0.0, %v6483
        %v6485 = vpop.f32.mrb[0].mxu0
        %v6486 = vpop.f32.mrb[0].mxu0
        %v6487 = vadd.f32 0.0, %v6486
        %v6488 = vpop.f32.mrb[0].mxu0
        %6489 = vmatprep.mubr.bf16.mxu0 0
        %6490 = vmatmul.mubr.bf16.gmra.mrb[0].mxu0 %v6362
        %v6491 = vpop.f32.mrb[0].mxu0
        %v6492 = vadd.f32 0.0, %v6491
        %v6493 = vpop.f32.mrb[0].mxu0
        %v6494 = vpop.f32.mrb[0].mxu0
        %v6495 = vadd.f32 0.0, %v6494
        %v6496 = vpop.f32.mrb[0].mxu0
        %6497 = vmatprep.mubr.bf16.mxu0 0
        %6498 = vmatmul.mubr.bf16.gmra.mrb[0].mxu0 %v6370
        %v6499 = vpop.f32.mrb[0].mxu0
        %v6500 = vadd.f32 0.0, %v6499
        %v6501 = vpop.f32.mrb[0].mxu0
        %v6502 = vpop.f32.mrb[0].mxu0
        %v6503 = vadd.f32 0.0, %v6502
        %v6504 = vpop.f32.mrb[0].mxu0
        %6505 = vmatprep.mubr.bf16.mxu0 0
        %6506 = vmatmul.mubr.bf16.gmra.mrb[0].mxu0 %v6378
        %v6507 = vpop.f32.mrb[0].mxu0
        %v6508 = vadd.f32 0.0, %v6507
        %v6509 = vpop.f32.mrb[0].mxu0
        %v6510 = vpop.f32.mrb[0].mxu0
        %v6511 = vadd.f32 0.0, %v6510
        %v6512 = vpop.f32.mrb[0].mxu0
        %6513 = vdwg.mxu0
        %v6514 = vadd.f32 %v6292, %v6468
        %v6515 = vadd.f32 %v6293, %v6471
        %v6516 = vadd.f32 %v6294, %v6476
        %v6517 = vadd.f32 %v6295, %v6479
        %v6518 = vadd.f32 %v6296, %v6484
        %v6519 = vadd.f32 %v6297, %v6487
        %v6520 = vadd.f32 %v6298, %v6492
        %v6521 = vadd.f32 %v6299, %v6495
        %v6522 = vadd.f32 %v6300, %v6500
        %v6523 = vadd.f32 %v6301, %v6503
        %v6524 = vadd.f32 %v6302, %v6508
        %v6525 = vadd.f32 %v6303, %v6511
        %v6526 = vld [vmem:[%s1752] sm:$0xf]
        %v6527 = vld [vmem:[%s1752 + $0x4] sm:$0xf]
        %v6528 = vld [vmem:[%s1752 + $0x8] sm:$0xf]
        %v6529 = vld [vmem:[%s1752 + $0xc] sm:$0xf]
        %v6530 = vld [vmem:[%s1752 + $0x10] sm:$0xf]
        %v6531 = vld [vmem:[%s1752 + $0x14] sm:$0xf]
        %v6532 = vld [vmem:[%s1752 + $0x18] sm:$0xf]
        %v6533 = vld [vmem:[%s1752 + $0x1c] sm:$0xf]
        %v6534 = vld [vmem:[%s1752 + $0x20] sm:$0xf]
        %v6535 = vld [vmem:[%s1752 + $0x24] sm:$0xf]
        %v6536 = vld [vmem:[%s1752 + $0x28] sm:$0xf]
        %v6537 = vld [vmem:[%s1752 + $0x2c] sm:$0xf]
        %v6538 = vld [vmem:[%s1752 + $0x30] sm:$0xf]
        %v6539 = vld [vmem:[%s1752 + $0x34] sm:$0xf]
        %v6540 = vld [vmem:[%s1752 + $0x38] sm:$0xf]
        %v6541 = vld [vmem:[%s1752 + $0x3c] sm:$0xf]
        %v6558 = vunpack.c.l.b16 %v6526
        %v6559 = vunpack.c.l.b16 %v6527
        %v6560 = vunpack.c.l.b16 %v6528
        %v6561 = vunpack.c.l.b16 %v6529
        %v6562 = vunpack.c.l.b16 %v6530
        %v6563 = vunpack.c.l.b16 %v6531
        %v6564 = vunpack.c.l.b16 %v6532
        %v6565 = vunpack.c.l.b16 %v6533
        %v6566 = vunpack.c.l.b16 %v6534
        %v6567 = vunpack.c.l.b16 %v6535
        %v6568 = vunpack.c.l.b16 %v6536
        %v6569 = vunpack.c.l.b16 %v6537
        %v6570 = vunpack.c.l.b16 %v6538
        %v6571 = vunpack.c.l.b16 %v6539
        %v6572 = vunpack.c.l.b16 %v6540
        %v6573 = vunpack.c.l.b16 %v6541
        %v6574 = vpack.c.b16 %v6559, %v6558
        %v6575 = vpack.c.b16 %v6561, %v6560
        %v6576 = vpack.c.b16 %v6563, %v6562
        %v6577 = vpack.c.b16 %v6565, %v6564
        %v6578 = vpack.c.b16 %v6567, %v6566
        %v6579 = vpack.c.b16 %v6569, %v6568
        %v6580 = vpack.c.b16 %v6571, %v6570
        %v6581 = vpack.c.b16 %v6573, %v6572
        %6590 = vmatprep.subr.bf16.mxu0 0
        %6591 = vmatpush1.bf16.msra.mxu0 %v6574
        %6592 = vmatprep.subr.bf16.mxu0 0
        %6593 = vmatpush1.bf16.msra.mxu0 %v6575
        %6594 = vmatprep.subr.bf16.mxu0 0
        %6595 = vmatpush1.bf16.msra.mxu0 %v6576
        %6596 = vmatprep.subr.bf16.mxu0 0
        %6597 = vmatpush1.bf16.msra.mxu0 %v6577
        %6598 = vmatprep.subr.bf16.mxu0 0
        %6599 = vmatpush1.bf16.msra.mxu0 %v6578
        %6600 = vmatprep.subr.bf16.mxu0 0
        %6601 = vmatpush1.bf16.msra.mxu0 %v6579
        %6602 = vmatprep.subr.bf16.mxu0 0
        %6603 = vmatpush1.bf16.msra.mxu0 %v6580
        %6604 = vmatprep.subr.bf16.mxu0 0
        %6605 = vmatpush1.bf16.msra.mxu0 %v6581
        %6606 = vmatprep.subr.bf16.mxu0 0
        %6607 = vmatpush1.bf16.msra.mxu0 0
        %6608 = vmatprep.subr.bf16.mxu0 0
        %6609 = vmatpush1.bf16.msra.mxu0 0
        %6610 = vmatprep.subr.bf16.mxu0 0
        %6611 = vmatpush1.bf16.msra.mxu0 0
        %6612 = vmatprep.subr.bf16.mxu0 0
        %6613 = vmatpush1.bf16.msra.mxu0 0
        %6614 = vmatprep.subr.bf16.mxu0 0
        %6615 = vmatpush1.bf16.msra.mxu0 0
        %6616 = vmatprep.subr.bf16.mxu0 0
        %6617 = vmatpush1.bf16.msra.mxu0 0
        %6618 = vmatprep.subr.bf16.mxu0 0
        %6619 = vmatpush1.bf16.msra.mxu0 0
        %6620 = vmatprep.subr.bf16.mxu0 0
        %6621 = vmatpush1.bf16.msra.mxu0 0
        %6622 = vmatprep.mubr.bf16.mxu0 0
        %6623 = vmatmul.mubr.bf16.gmra.mrb[0].mxu0 %v6305
        %v6624 = vpop.f32.mrb[0].mxu0
        %v6625 = vadd.f32 0.0, %v6624
        %v6626 = vpop.f32.mrb[0].mxu0
        %v6627 = vpop.f32.mrb[0].mxu0
        %v6628 = vadd.f32 0.0, %v6627
        %v6629 = vpop.f32.mrb[0].mxu0
        %6630 = vmatprep.mubr.bf16.mxu0 0
        %6631 = vmatmul.mubr.bf16.gmra.mrb[0].mxu0 %v6306
        %v6632 = vpop.f32.mrb[0].mxu0
        %v6633 = vadd.f32 0.0, %v6632
        %v6634 = vpop.f32.mrb[0].mxu0
        %v6635 = vpop.f32.mrb[0].mxu0
        %v6636 = vadd.f32 0.0, %v6635
        %v6637 = vpop.f32.mrb[0].mxu0
        %6638 = vmatprep.mubr.bf16.mxu0 0
        %6639 = vmatmul.mubr.bf16.gmra.mrb[0].mxu0 %v6307
        %v6640 = vpop.f32.mrb[0].mxu0
        %v6641 = vadd.f32 0.0, %v6640
        %v6642 = vpop.f32.mrb[0].mxu0
        %v6643 = vpop.f32.mrb[0].mxu0
        %v6644 = vadd.f32 0.0, %v6643
        %v6645 = vpop.f32.mrb[0].mxu0
        %6646 = vmatprep.mubr.bf16.mxu0 0
        %6647 = vmatmul.mubr.bf16.gmra.mrb[0].mxu0 %v6308
        %v6648 = vpop.f32.mrb[0].mxu0
        %v6649 = vadd.f32 0.0, %v6648
        %v6650 = vpop.f32.mrb[0].mxu0
        %v6651 = vpop.f32.mrb[0].mxu0
        %v6652 = vadd.f32 0.0, %v6651
        %v6653 = vpop.f32.mrb[0].mxu0
        %6654 = vmatprep.mubr.bf16.mxu0 0
        %6655 = vmatmul.mubr.bf16.gmra.mrb[0].mxu0 %v6309
        %v6656 = vpop.f32.mrb[0].mxu0
        %v6657 = vadd.f32 0.0, %v6656
        %v6658 = vpop.f32.mrb[0].mxu0
        %v6659 = vpop.f32.mrb[0].mxu0
        %v6660 = vadd.f32 0.0, %v6659
        %v6661 = vpop.f32.mrb[0].mxu0
        %6662 = vmatprep.mubr.bf16.mxu0 0
        %6663 = vmatmul.mubr.bf16.gmra.mrb[0].mxu0 %v6310
        %v6664 = vpop.f32.mrb[0].mxu0
        %v6665 = vadd.f32 0.0, %v6664
        %v6666 = vpop.f32.mrb[0].mxu0
        %v6667 = vpop.f32.mrb[0].mxu0
        %v6668 = vadd.f32 0.0, %v6667
        %v6669 = vpop.f32.mrb[0].mxu0
        %6670 = vdwg.mxu0
        %v6671 = vadd.f32 %v6514, %v6625
        %v6672 = vadd.f32 %v6515, %v6628
        %v6673 = vadd.f32 %v6516, %v6633
        %v6674 = vadd.f32 %v6517, %v6636
        %v6675 = vadd.f32 %v6518, %v6641
        %v6676 = vadd.f32 %v6519, %v6644
        %v6677 = vadd.f32 %v6520, %v6649
        %v6678 = vadd.f32 %v6521, %v6652
        %v6679 = vadd.f32 %v6522, %v6657
        %v6680 = vadd.f32 %v6523, %v6660
        %v6681 = vadd.f32 %v6524, %v6665
        %v6682 = vadd.f32 %v6525, %v6668
        %v6683 = vld [vmem:[#allocation2 + $0x70] sm:$0xff]
        %v6684 = vld [vmem:[#allocation2 + $0x78] sm:$0xff]
        %v6685 = vld [vmem:[#allocation2 + $0x80] sm:$0xff]
        %v6686 = vld [vmem:[#allocation2 + $0x88] sm:$0xff]
        %v6687 = vld [vmem:[#allocation2 + $0x90] sm:$0xff]
        %v6688 = vld [vmem:[#allocation2 + $0x98] sm:$0xff]
        %v6689 = vld [vmem:[#allocation2 + $0xa0] sm:$0x1]
        %v6690 = vld [vmem:[%s1917] sm:$0xf]
        %v6691 = vld [vmem:[%s1917 + $0x4] sm:$0xf]
        %v6692 = vld [vmem:[%s1917 + $0x8] sm:$0xf]
        %v6693 = vld [vmem:[%s1917 + $0xc] sm:$0xf]
        %v6694 = vld [vmem:[%s1917 + $0x10] sm:$0xf]
        %v6695 = vld [vmem:[%s1917 + $0x14] sm:$0xf]
        %v6696 = vld [vmem:[%s1917 + $0x18] sm:$0xf]
        %v6697 = vld [vmem:[%s1917 + $0x1c] sm:$0xf]
        %v6698 = vld [vmem:[%s1917 + $0x20] sm:$0xf]
        %v6699 = vld [vmem:[%s1917 + $0x24] sm:$0xf]
        %v6700 = vld [vmem:[%s1917 + $0x28] sm:$0xf]
        %v6701 = vld [vmem:[%s1917 + $0x2c] sm:$0xf]
        %v6702 = vld [vmem:[%s1917 + $0x30] sm:$0xf]
        %v6703 = vld [vmem:[%s1917 + $0x34] sm:$0xf]
        %v6704 = vld [vmem:[%s1917 + $0x38] sm:$0xf]
        %v6705 = vld [vmem:[%s1917 + $0x3c] sm:$0xf]
        %v6707 = vshrl.u32 %v6683, 16
        %v6709 = vshll.u32 %v6683, 16
        %v6711 = vrot.slane %v6709, 1
        %v6712 = vor.u32 %v6707, %v6711
        %v6714 = vshll.u32 %v6684, 16
        %v6716 = vrot.slane %v6714, 1
        %v6717 = vsel %vm1934, %v6712, %v6716
        %v6718 = vshrl.u32 %v6684, 16
        %v6720 = vor.u32 %v6718, %v6716
        %v6722 = vshll.u32 %v6685, 16
        %v6724 = vrot.slane %v6722, 1
        %v6725 = vsel %vm1934, %v6720, %v6724
        %v6726 = vshrl.u32 %v6685, 16
        %v6728 = vor.u32 %v6726, %v6724
        %v6730 = vshll.u32 %v6686, 16
        %v6732 = vrot.slane %v6730, 1
        %v6733 = vsel %vm1934, %v6728, %v6732
        %v6734 = vshrl.u32 %v6686, 16
        %v6736 = vor.u32 %v6734, %v6732
        %v6738 = vshll.u32 %v6687, 16
        %v6740 = vrot.slane %v6738, 1
        %v6741 = vsel %vm1934, %v6736, %v6740
        %v6742 = vshrl.u32 %v6687, 16
        %v6744 = vor.u32 %v6742, %v6740
        %v6746 = vshll.u32 %v6688, 16
        %v6748 = vrot.slane %v6746, 1
        %v6749 = vsel %vm1934, %v6744, %v6748
        %v6750 = vshrl.u32 %v6688, 16
        %v6752 = vor.u32 %v6750, %v6748
        %v6754 = vshll.u32 %v6689, 16
        %v6756 = vrot.slane %v6754, 1
        %v6757 = vsel %vm1934, %v6752, %v6756
        %v6780 = vunpack.c.l.b16 %v6690
        %v6781 = vunpack.c.l.b16 %v6691
        %v6782 = vunpack.c.l.b16 %v6692
        %v6783 = vunpack.c.l.b16 %v6693
        %v6784 = vunpack.c.l.b16 %v6694
        %v6785 = vunpack.c.l.b16 %v6695
        %v6786 = vunpack.c.l.b16 %v6696
        %v6787 = vunpack.c.l.b16 %v6697
        %v6788 = vunpack.c.l.b16 %v6698
        %v6789 = vunpack.c.l.b16 %v6699
        %v6790 = vunpack.c.l.b16 %v6700
        %v6791 = vunpack.c.l.b16 %v6701
        %v6792 = vunpack.c.l.b16 %v6702
        %v6793 = vunpack.c.l.b16 %v6703
        %v6794 = vunpack.c.l.b16 %v6704
        %v6795 = vunpack.c.l.b16 %v6705
        %v6796 = vpack.c.b16 %v6781, %v6780
        %v6797 = vpack.c.b16 %v6783, %v6782
        %v6798 = vpack.c.b16 %v6785, %v6784
        %v6799 = vpack.c.b16 %v6787, %v6786
        %v6800 = vpack.c.b16 %v6789, %v6788
        %v6801 = vpack.c.b16 %v6791, %v6790
        %v6802 = vpack.c.b16 %v6793, %v6792
        %v6803 = vpack.c.b16 %v6795, %v6794
        %6812 = vmatprep.subr.bf16.mxu0 0
        %6813 = vmatpush1.bf16.msra.mxu0 %v6796
        %6814 = vmatprep.subr.bf16.mxu0 0
        %6815 = vmatpush1.bf16.msra.mxu0 %v6797
        %6816 = vmatprep.subr.bf16.mxu0 0
        %6817 = vmatpush1.bf16.msra.mxu0 %v6798
        %6818 = vmatprep.subr.bf16.mxu0 0
        %6819 = vmatpush1.bf16.msra.mxu0 %v6799
        %6820 = vmatprep.subr.bf16.mxu0 0
        %6821 = vmatpush1.bf16.msra.mxu0 %v6800
        %6822 = vmatprep.subr.bf16.mxu0 0
        %6823 = vmatpush1.bf16.msra.mxu0 %v6801
        %6824 = vmatprep.subr.bf16.mxu0 0
        %6825 = vmatpush1.bf16.msra.mxu0 %v6802
        %6826 = vmatprep.subr.bf16.mxu0 0
        %6827 = vmatpush1.bf16.msra.mxu0 %v6803
        %6828 = vmatprep.subr.bf16.mxu0 0
        %6829 = vmatpush1.bf16.msra.mxu0 0
        %6830 = vmatprep.subr.bf16.mxu0 0
        %6831 = vmatpush1.bf16.msra.mxu0 0
        %6832 = vmatprep.subr.bf16.mxu0 0
        %6833 = vmatpush1.bf16.msra.mxu0 0
        %6834 = vmatprep.subr.bf16.mxu0 0
        %6835 = vmatpush1.bf16.msra.mxu0 0
        %6836 = vmatprep.subr.bf16.mxu0 0
        %6837 = vmatpush1.bf16.msra.mxu0 0
        %6838 = vmatprep.subr.bf16.mxu0 0
        %6839 = vmatpush1.bf16.msra.mxu0 0
        %6840 = vmatprep.subr.bf16.mxu0 0
        %6841 = vmatpush1.bf16.msra.mxu0 0
        %6842 = vmatprep.subr.bf16.mxu0 0
        %6843 = vmatpush1.bf16.msra.mxu0 0
        %6844 = vmatprep.mubr.bf16.mxu0 0
        %6845 = vmatmul.mubr.bf16.gmra.mrb[0].mxu0 %v6717
        %v6846 = vpop.f32.mrb[0].mxu0
        %v6847 = vadd.f32 0.0, %v6846
        %v6848 = vpop.f32.mrb[0].mxu0
        %v6849 = vpop.f32.mrb[0].mxu0
        %v6850 = vadd.f32 0.0, %v6849
        %v6851 = vpop.f32.mrb[0].mxu0
        %6852 = vmatprep.mubr.bf16.mxu0 0
        %6853 = vmatmul.mubr.bf16.gmra.mrb[0].mxu0 %v6725
        %v6854 = vpop.f32.mrb[0].mxu0
        %v6855 = vadd.f32 0.0, %v6854
        %v6856 = vpop.f32.mrb[0].mxu0
        %v6857 = vpop.f32.mrb[0].mxu0
        %v6858 = vadd.f32 0.0, %v6857
        %v6859 = vpop.f32.mrb[0].mxu0
        %6860 = vmatprep.mubr.bf16.mxu0 0
        %6861 = vmatmul.mubr.bf16.gmra.mrb[0].mxu0 %v6733
        %v6862 = vpop.f32.mrb[0].mxu0
        %v6863 = vadd.f32 0.0, %v6862
        %v6864 = vpop.f32.mrb[0].mxu0
        %v6865 = vpop.f32.mrb[0].mxu0
        %v6866 = vadd.f32 0.0, %v6865
        %v6867 = vpop.f32.mrb[0].mxu0
        %6868 = vmatprep.mubr.bf16.mxu0 0
        %6869 = vmatmul.mubr.bf16.gmra.mrb[0].mxu0 %v6741
        %v6870 = vpop.f32.mrb[0].mxu0
        %v6871 = vadd.f32 0.0, %v6870
        %v6872 = vpop.f32.mrb[0].mxu0
        %v6873 = vpop.f32.mrb[0].mxu0
        %v6874 = vadd.f32 0.0, %v6873
        %v6875 = vpop.f32.mrb[0].mxu0
        %6876 = vmatprep.mubr.bf16.mxu0 0
        %6877 = vmatmul.mubr.bf16.gmra.mrb[0].mxu0 %v6749
        %v6878 = vpop.f32.mrb[0].mxu0
        %v6879 = vadd.f32 0.0, %v6878
        %v6880 = vpop.f32.mrb[0].mxu0
        %v6881 = vpop.f32.mrb[0].mxu0
        %v6882 = vadd.f32 0.0, %v6881
        %v6883 = vpop.f32.mrb[0].mxu0
        %6884 = vmatprep.mubr.bf16.mxu0 0
        %6885 = vmatmul.mubr.bf16.gmra.mrb[0].mxu0 %v6757
        %v6886 = vpop.f32.mrb[0].mxu0
        %v6887 = vadd.f32 0.0, %v6886
        %v6888 = vpop.f32.mrb[0].mxu0
        %v6889 = vpop.f32.mrb[0].mxu0
        %v6890 = vadd.f32 0.0, %v6889
        %v6891 = vpop.f32.mrb[0].mxu0
        %6892 = vdwg.mxu0
        %v6893 = vadd.f32 %v6671, %v6847
        %v6894 = vadd.f32 %v6672, %v6850
        %v6895 = vadd.f32 %v6673, %v6855
        %v6896 = vadd.f32 %v6674, %v6858
        %v6897 = vadd.f32 %v6675, %v6863
        %v6898 = vadd.f32 %v6676, %v6866
        %v6899 = vadd.f32 %v6677, %v6871
        %v6900 = vadd.f32 %v6678, %v6874
        %v6901 = vadd.f32 %v6679, %v6879
        %v6902 = vadd.f32 %v6680, %v6882
        %v6903 = vadd.f32 %v6681, %v6887
        %v6904 = vadd.f32 %v6682, %v6890
        %v6905 = vld [vmem:[#allocation2 + $0x78] sm:$0xf8]
        %v6906 = vld [vmem:[#allocation2 + $0x80] sm:$0xff]
        %v6907 = vld [vmem:[#allocation2 + $0x88] sm:$0xff]
        %v6908 = vld [vmem:[#allocation2 + $0x90] sm:$0xff]
        %v6909 = vld [vmem:[#allocation2 + $0x98] sm:$0xff]
        %v6910 = vld [vmem:[#allocation2 + $0xa0] sm:$0xff]
        %v6911 = vld [vmem:[#allocation2 + $0xa8] sm:$0xf]
        %v6912 = vld [vmem:[%s2141] sm:$0xf]
        %v6913 = vld [vmem:[%s2141 + $0x4] sm:$0xf]
        %v6914 = vld [vmem:[%s2141 + $0x8] sm:$0xf]
        %v6915 = vld [vmem:[%s2141 + $0xc] sm:$0xf]
        %v6916 = vld [vmem:[%s2141 + $0x10] sm:$0xf]
        %v6917 = vld [vmem:[%s2141 + $0x14] sm:$0xf]
        %v6918 = vld [vmem:[%s2141 + $0x18] sm:$0xf]
        %v6919 = vld [vmem:[%s2141 + $0x1c] sm:$0xf]
        %v6920 = vld [vmem:[%s2141 + $0x20] sm:$0xf]
        %v6921 = vld [vmem:[%s2141 + $0x24] sm:$0xf]
        %v6922 = vld [vmem:[%s2141 + $0x28] sm:$0xf]
        %v6923 = vld [vmem:[%s2141 + $0x2c] sm:$0xf]
        %v6924 = vld [vmem:[%s2141 + $0x30] sm:$0xf]
        %v6925 = vld [vmem:[%s2141 + $0x34] sm:$0xf]
        %v6926 = vld [vmem:[%s2141 + $0x38] sm:$0xf]
        %v6927 = vld [vmem:[%s2141 + $0x3c] sm:$0xf]
        %v6929 = vshrl.u32 %v6905, 16
        %v6931 = vrot.slane %v6929, 3
        %v6932 = vshll.u32 %v6905, 16
        %v6934 = vrot.slane %v6932, 4
        %v6935 = vor.u32 %v6931, %v6934
        %v6937 = vshrl.u32 %v6906, 16
        %v6939 = vrot.slane %v6937, 3
        %v6940 = vshll.u32 %v6906, 16
        %v6942 = vrot.slane %v6940, 4
        %v6943 = vor.u32 %v6939, %v6942
        %v6944 = vsel %vm1127, %v6935, %v6943
        %v6946 = vshrl.u32 %v6907, 16
        %v6948 = vrot.slane %v6946, 3
        %v6949 = vshll.u32 %v6907, 16
        %v6951 = vrot.slane %v6949, 4
        %v6952 = vor.u32 %v6948, %v6951
        %v6953 = vsel %vm1127, %v6943, %v6952
        %v6955 = vshrl.u32 %v6908, 16
        %v6957 = vrot.slane %v6955, 3
        %v6958 = vshll.u32 %v6908, 16
        %v6960 = vrot.slane %v6958, 4
        %v6961 = vor.u32 %v6957, %v6960
        %v6962 = vsel %vm1127, %v6952, %v6961
        %v6964 = vshrl.u32 %v6909, 16
        %v6966 = vrot.slane %v6964, 3
        %v6967 = vshll.u32 %v6909, 16
        %v6969 = vrot.slane %v6967, 4
        %v6970 = vor.u32 %v6966, %v6969
        %v6971 = vsel %vm1127, %v6961, %v6970
        %v6973 = vshrl.u32 %v6910, 16
        %v6975 = vrot.slane %v6973, 3
        %v6976 = vshll.u32 %v6910, 16
        %v6978 = vrot.slane %v6976, 4
        %v6979 = vor.u32 %v6975, %v6978
        %v6980 = vsel %vm1127, %v6970, %v6979
        %v6982 = vshrl.u32 %v6911, 16
        %v6984 = vrot.slane %v6982, 3
        %v6985 = vshll.u32 %v6911, 16
        %v6987 = vrot.slane %v6985, 4
        %v6988 = vor.u32 %v6984, %v6987
        %v6989 = vsel %vm1127, %v6979, %v6988
        %v7012 = vunpack.c.l.b16 %v6912
        %v7013 = vunpack.c.l.b16 %v6913
        %v7014 = vunpack.c.l.b16 %v6914
        %v7015 = vunpack.c.l.b16 %v6915
        %v7016 = vunpack.c.l.b16 %v6916
        %v7017 = vunpack.c.l.b16 %v6917
        %v7018 = vunpack.c.l.b16 %v6918
        %v7019 = vunpack.c.l.b16 %v6919
        %v7020 = vunpack.c.l.b16 %v6920
        %v7021 = vunpack.c.l.b16 %v6921
        %v7022 = vunpack.c.l.b16 %v6922
        %v7023 = vunpack.c.l.b16 %v6923
        %v7024 = vunpack.c.l.b16 %v6924
        %v7025 = vunpack.c.l.b16 %v6925
        %v7026 = vunpack.c.l.b16 %v6926
        %v7027 = vunpack.c.l.b16 %v6927
        %v7028 = vpack.c.b16 %v7013, %v7012
        %v7029 = vpack.c.b16 %v7015, %v7014
        %v7030 = vpack.c.b16 %v7017, %v7016
        %v7031 = vpack.c.b16 %v7019, %v7018
        %v7032 = vpack.c.b16 %v7021, %v7020
        %v7033 = vpack.c.b16 %v7023, %v7022
        %v7034 = vpack.c.b16 %v7025, %v7024
        %v7035 = vpack.c.b16 %v7027, %v7026
        %7044 = vmatprep.subr.bf16.mxu0 0
        %7045 = vmatpush1.bf16.msra.mxu0 %v7028
        %7046 = vmatprep.subr.bf16.mxu0 0
        %7047 = vmatpush1.bf16.msra.mxu0 %v7029
        %7048 = vmatprep.subr.bf16.mxu0 0
        %7049 = vmatpush1.bf16.msra.mxu0 %v7030
        %7050 = vmatprep.subr.bf16.mxu0 0
        %7051 = vmatpush1.bf16.msra.mxu0 %v7031
        %7052 = vmatprep.subr.bf16.mxu0 0
        %7053 = vmatpush1.bf16.msra.mxu0 %v7032
        %7054 = vmatprep.subr.bf16.mxu0 0
        %7055 = vmatpush1.bf16.msra.mxu0 %v7033
        %7056 = vmatprep.subr.bf16.mxu0 0
        %7057 = vmatpush1.bf16.msra.mxu0 %v7034
        %7058 = vmatprep.subr.bf16.mxu0 0
        %7059 = vmatpush1.bf16.msra.mxu0 %v7035
        %7060 = vmatprep.subr.bf16.mxu0 0
        %7061 = vmatpush1.bf16.msra.mxu0 0
        %7062 = vmatprep.subr.bf16.mxu0 0
        %7063 = vmatpush1.bf16.msra.mxu0 0
        %7064 = vmatprep.subr.bf16.mxu0 0
        %7065 = vmatpush1.bf16.msra.mxu0 0
        %7066 = vmatprep.subr.bf16.mxu0 0
        %7067 = vmatpush1.bf16.msra.mxu0 0
        %7068 = vmatprep.subr.bf16.mxu0 0
        %7069 = vmatpush1.bf16.msra.mxu0 0
        %7070 = vmatprep.subr.bf16.mxu0 0
        %7071 = vmatpush1.bf16.msra.mxu0 0
        %7072 = vmatprep.subr.bf16.mxu0 0
        %7073 = vmatpush1.bf16.msra.mxu0 0
        %7074 = vmatprep.subr.bf16.mxu0 0
        %7075 = vmatpush1.bf16.msra.mxu0 0
        %7076 = vmatprep.mubr.bf16.mxu0 0
        %7077 = vmatmul.mubr.bf16.gmra.mrb[0].mxu0 %v6944
        %v7078 = vpop.f32.mrb[0].mxu0
        %v7079 = vadd.f32 0.0, %v7078
        %v7080 = vpop.f32.mrb[0].mxu0
        %v7081 = vpop.f32.mrb[0].mxu0
        %v7082 = vadd.f32 0.0, %v7081
        %v7083 = vpop.f32.mrb[0].mxu0
        %7084 = vmatprep.mubr.bf16.mxu0 0
        %7085 = vmatmul.mubr.bf16.gmra.mrb[0].mxu0 %v6953
        %v7086 = vpop.f32.mrb[0].mxu0
        %v7087 = vadd.f32 0.0, %v7086
        %v7088 = vpop.f32.mrb[0].mxu0
        %v7089 = vpop.f32.mrb[0].mxu0
        %v7090 = vadd.f32 0.0, %v7089
        %v7091 = vpop.f32.mrb[0].mxu0
        %7092 = vmatprep.mubr.bf16.mxu0 0
        %7093 = vmatmul.mubr.bf16.gmra.mrb[0].mxu0 %v6962
        %v7094 = vpop.f32.mrb[0].mxu0
        %v7095 = vadd.f32 0.0, %v7094
        %v7096 = vpop.f32.mrb[0].mxu0
        %v7097 = vpop.f32.mrb[0].mxu0
        %v7098 = vadd.f32 0.0, %v7097
        %v7099 = vpop.f32.mrb[0].mxu0
        %7100 = vmatprep.mubr.bf16.mxu0 0
        %7101 = vmatmul.mubr.bf16.gmra.mrb[0].mxu0 %v6971
        %v7102 = vpop.f32.mrb[0].mxu0
        %v7103 = vadd.f32 0.0, %v7102
        %v7104 = vpop.f32.mrb[0].mxu0
        %v7105 = vpop.f32.mrb[0].mxu0
        %v7106 = vadd.f32 0.0, %v7105
        %v7107 = vpop.f32.mrb[0].mxu0
        %7108 = vmatprep.mubr.bf16.mxu0 0
        %7109 = vmatmul.mubr.bf16.gmra.mrb[0].mxu0 %v6980
        %v7110 = vpop.f32.mrb[0].mxu0
        %v7111 = vadd.f32 0.0, %v7110
        %v7112 = vpop.f32.mrb[0].mxu0
        %v7113 = vpop.f32.mrb[0].mxu0
        %v7114 = vadd.f32 0.0, %v7113
        %v7115 = vpop.f32.mrb[0].mxu0
        %7116 = vmatprep.mubr.bf16.mxu0 0
        %7117 = vmatmul.mubr.bf16.gmra.mrb[0].mxu0 %v6989
        %v7118 = vpop.f32.mrb[0].mxu0
        %v7119 = vadd.f32 0.0, %v7118
        %v7120 = vpop.f32.mrb[0].mxu0
        %v7121 = vpop.f32.mrb[0].mxu0
        %v7122 = vadd.f32 0.0, %v7121
        %v7123 = vpop.f32.mrb[0].mxu0
        %7124 = vdwg.mxu0
        %v7125 = vadd.f32 %v6893, %v7079
        %v7126 = vadd.f32 %v6894, %v7082
        %v7127 = vadd.f32 %v6895, %v7087
        %v7128 = vadd.f32 %v6896, %v7090
        %v7129 = vadd.f32 %v6897, %v7095
        %v7130 = vadd.f32 %v6898, %v7098
        %v7131 = vadd.f32 %v6899, %v7103
        %v7132 = vadd.f32 %v6900, %v7106
        %v7133 = vadd.f32 %v6901, %v7111
        %v7134 = vadd.f32 %v6902, %v7114
        %v7135 = vadd.f32 %v6903, %v7119
        %v7136 = vadd.f32 %v6904, %v7122
        %v7137 = vld [vmem:[#allocation2 + $0x78] sm:$0xf0]
        %v7138 = vld [vmem:[%s2368] sm:$0xf]
        %v7139 = vld [vmem:[%s2368 + $0x4] sm:$0xf]
        %v7140 = vld [vmem:[%s2368 + $0x8] sm:$0xf]
        %v7141 = vld [vmem:[%s2368 + $0xc] sm:$0xf]
        %v7142 = vld [vmem:[%s2368 + $0x10] sm:$0xf]
        %v7143 = vld [vmem:[%s2368 + $0x14] sm:$0xf]
        %v7144 = vld [vmem:[%s2368 + $0x18] sm:$0xf]
        %v7145 = vld [vmem:[%s2368 + $0x1c] sm:$0xf]
        %v7146 = vld [vmem:[%s2368 + $0x20] sm:$0xf]
        %v7147 = vld [vmem:[%s2368 + $0x24] sm:$0xf]
        %v7148 = vld [vmem:[%s2368 + $0x28] sm:$0xf]
        %v7149 = vld [vmem:[%s2368 + $0x2c] sm:$0xf]
        %v7150 = vld [vmem:[%s2368 + $0x30] sm:$0xf]
        %v7151 = vld [vmem:[%s2368 + $0x34] sm:$0xf]
        %v7152 = vld [vmem:[%s2368 + $0x38] sm:$0xf]
        %v7153 = vld [vmem:[%s2368 + $0x3c] sm:$0xf]
        %v7161 = vrot.slane %v7137, 4
        %v7162 = vrot.slane %v6906, 4
        %v7163 = vsel %vm978, %v7161, %v7162
        %v7164 = vrot.slane %v6907, 4
        %v7165 = vsel %vm978, %v7162, %v7164
        %v7166 = vrot.slane %v6908, 4
        %v7167 = vsel %vm978, %v7164, %v7166
        %v7168 = vrot.slane %v6909, 4
        %v7169 = vsel %vm978, %v7166, %v7168
        %v7170 = vrot.slane %v6910, 4
        %v7171 = vsel %vm978, %v7168, %v7170
        %v7172 = vrot.slane %v6911, 4
        %v7173 = vsel %vm978, %v7170, %v7172
        %v7196 = vunpack.c.l.b16 %v7138
        %v7197 = vunpack.c.l.b16 %v7139
        %v7198 = vunpack.c.l.b16 %v7140
        %v7199 = vunpack.c.l.b16 %v7141
        %v7200 = vunpack.c.l.b16 %v7142
        %v7201 = vunpack.c.l.b16 %v7143
        %v7202 = vunpack.c.l.b16 %v7144
        %v7203 = vunpack.c.l.b16 %v7145
        %v7204 = vunpack.c.l.b16 %v7146
        %v7205 = vunpack.c.l.b16 %v7147
        %v7206 = vunpack.c.l.b16 %v7148
        %v7207 = vunpack.c.l.b16 %v7149
        %v7208 = vunpack.c.l.b16 %v7150
        %v7209 = vunpack.c.l.b16 %v7151
        %v7210 = vunpack.c.l.b16 %v7152
        %v7211 = vunpack.c.l.b16 %v7153
        %v7212 = vpack.c.b16 %v7197, %v7196
        %v7213 = vpack.c.b16 %v7199, %v7198
        %v7214 = vpack.c.b16 %v7201, %v7200
        %v7215 = vpack.c.b16 %v7203, %v7202
        %v7216 = vpack.c.b16 %v7205, %v7204
        %v7217 = vpack.c.b16 %v7207, %v7206
        %v7218 = vpack.c.b16 %v7209, %v7208
        %v7219 = vpack.c.b16 %v7211, %v7210
        %7228 = vmatprep.subr.bf16.mxu0 0
        %7229 = vmatpush1.bf16.msra.mxu0 %v7212
        %7230 = vmatprep.subr.bf16.mxu0 0
        %7231 = vmatpush1.bf16.msra.mxu0 %v7213
        %7232 = vmatprep.subr.bf16.mxu0 0
        %7233 = vmatpush1.bf16.msra.mxu0 %v7214
        %7234 = vmatprep.subr.bf16.mxu0 0
        %7235 = vmatpush1.bf16.msra.mxu0 %v7215
        %7236 = vmatprep.subr.bf16.mxu0 0
        %7237 = vmatpush1.bf16.msra.mxu0 %v7216
        %7238 = vmatprep.subr.bf16.mxu0 0
        %7239 = vmatpush1.bf16.msra.mxu0 %v7217
        %7240 = vmatprep.subr.bf16.mxu0 0
        %7241 = vmatpush1.bf16.msra.mxu0 %v7218
        %7242 = vmatprep.subr.bf16.mxu0 0
        %7243 = vmatpush1.bf16.msra.mxu0 %v7219
        %7244 = vmatprep.subr.bf16.mxu0 0
        %7245 = vmatpush1.bf16.msra.mxu0 0
        %7246 = vmatprep.subr.bf16.mxu0 0
        %7247 = vmatpush1.bf16.msra.mxu0 0
        %7248 = vmatprep.subr.bf16.mxu0 0
        %7249 = vmatpush1.bf16.msra.mxu0 0
        %7250 = vmatprep.subr.bf16.mxu0 0
        %7251 = vmatpush1.bf16.msra.mxu0 0
        %7252 = vmatprep.subr.bf16.mxu0 0
        %7253 = vmatpush1.bf16.msra.mxu0 0
        %7254 = vmatprep.subr.bf16.mxu0 0
        %7255 = vmatpush1.bf16.msra.mxu0 0
        %7256 = vmatprep.subr.bf16.mxu0 0
        %7257 = vmatpush1.bf16.msra.mxu0 0
        %7258 = vmatprep.subr.bf16.mxu0 0
        %7259 = vmatpush1.bf16.msra.mxu0 0
        %7260 = vmatprep.mubr.bf16.mxu0 0
        %7261 = vmatmul.mubr.bf16.gmra.mrb[0].mxu0 %v7163
        %v7262 = vpop.f32.mrb[0].mxu0
        %v7263 = vadd.f32 0.0, %v7262
        %v7264 = vpop.f32.mrb[0].mxu0
        %v7265 = vpop.f32.mrb[0].mxu0
        %v7266 = vadd.f32 0.0, %v7265
        %v7267 = vpop.f32.mrb[0].mxu0
        %7268 = vmatprep.mubr.bf16.mxu0 0
        %7269 = vmatmul.mubr.bf16.gmra.mrb[0].mxu0 %v7165
        %v7270 = vpop.f32.mrb[0].mxu0
        %v7271 = vadd.f32 0.0, %v7270
        %v7272 = vpop.f32.mrb[0].mxu0
        %v7273 = vpop.f32.mrb[0].mxu0
        %v7274 = vadd.f32 0.0, %v7273
        %v7275 = vpop.f32.mrb[0].mxu0
        %7276 = vmatprep.mubr.bf16.mxu0 0
        %7277 = vmatmul.mubr.bf16.gmra.mrb[0].mxu0 %v7167
        %v7278 = vpop.f32.mrb[0].mxu0
        %v7279 = vadd.f32 0.0, %v7278
        %v7280 = vpop.f32.mrb[0].mxu0
        %v7281 = vpop.f32.mrb[0].mxu0
        %v7282 = vadd.f32 0.0, %v7281
        %v7283 = vpop.f32.mrb[0].mxu0
        %7284 = vmatprep.mubr.bf16.mxu0 0
        %7285 = vmatmul.mubr.bf16.gmra.mrb[0].mxu0 %v7169
        %v7286 = vpop.f32.mrb[0].mxu0
        %v7287 = vadd.f32 0.0, %v7286
        %v7288 = vpop.f32.mrb[0].mxu0
        %v7289 = vpop.f32.mrb[0].mxu0
        %v7290 = vadd.f32 0.0, %v7289
        %v7291 = vpop.f32.mrb[0].mxu0
        %7292 = vmatprep.mubr.bf16.mxu0 0
        %7293 = vmatmul.mubr.bf16.gmra.mrb[0].mxu0 %v7171
        %v7294 = vpop.f32.mrb[0].mxu0
        %v7295 = vadd.f32 0.0, %v7294
        %v7296 = vpop.f32.mrb[0].mxu0
        %v7297 = vpop.f32.mrb[0].mxu0
        %v7298 = vadd.f32 0.0, %v7297
        %v7299 = vpop.f32.mrb[0].mxu0
        %7300 = vmatprep.mubr.bf16.mxu0 0
        %7301 = vmatmul.mubr.bf16.gmra.mrb[0].mxu0 %v7173
        %v7302 = vpop.f32.mrb[0].mxu0
        %v7303 = vadd.f32 0.0, %v7302
        %v7304 = vpop.f32.mrb[0].mxu0
        %v7305 = vpop.f32.mrb[0].mxu0
        %v7306 = vadd.f32 0.0, %v7305
        %v7307 = vpop.f32.mrb[0].mxu0
        %7308 = vdwg.mxu0
        %v7309 = vadd.f32 %v7125, %v7263
        %v7310 = vadd.f32 %v7126, %v7266
        %v7311 = vadd.f32 %v7127, %v7271
        %v7312 = vadd.f32 %v7128, %v7274
        %v7313 = vadd.f32 %v7129, %v7279
        %v7314 = vadd.f32 %v7130, %v7282
        %v7315 = vadd.f32 %v7131, %v7287
        %v7316 = vadd.f32 %v7132, %v7290
        %v7317 = vadd.f32 %v7133, %v7295
        %v7318 = vadd.f32 %v7134, %v7298
        %v7319 = vadd.f32 %v7135, %v7303
        %v7320 = vadd.f32 %v7136, %v7306
        %v7321 = vld [vmem:[#allocation2 + $0xa8] sm:$0x1f]
        %v7322 = vld [vmem:[%s2553] sm:$0xf]
        %v7323 = vld [vmem:[%s2553 + $0x4] sm:$0xf]
        %v7324 = vld [vmem:[%s2553 + $0x8] sm:$0xf]
        %v7325 = vld [vmem:[%s2553 + $0xc] sm:$0xf]
        %v7326 = vld [vmem:[%s2553 + $0x10] sm:$0xf]
        %v7327 = vld [vmem:[%s2553 + $0x14] sm:$0xf]
        %v7328 = vld [vmem:[%s2553 + $0x18] sm:$0xf]
        %v7329 = vld [vmem:[%s2553 + $0x1c] sm:$0xf]
        %v7330 = vld [vmem:[%s2553 + $0x20] sm:$0xf]
        %v7331 = vld [vmem:[%s2553 + $0x24] sm:$0xf]
        %v7332 = vld [vmem:[%s2553 + $0x28] sm:$0xf]
        %v7333 = vld [vmem:[%s2553 + $0x2c] sm:$0xf]
        %v7334 = vld [vmem:[%s2553 + $0x30] sm:$0xf]
        %v7335 = vld [vmem:[%s2553 + $0x34] sm:$0xf]
        %v7336 = vld [vmem:[%s2553 + $0x38] sm:$0xf]
        %v7337 = vld [vmem:[%s2553 + $0x3c] sm:$0xf]
        %v7339 = vshrl.u32 %v7137, 16
        %v7341 = vrot.slane %v7339, 4
        %v7342 = vshll.u32 %v7137, 16
        %v7344 = vrot.slane %v7342, 5
        %v7345 = vor.u32 %v7341, %v7344
        %v7346 = vrot.slane %v6937, 4
        %v7347 = vrot.slane %v6940, 5
        %v7348 = vor.u32 %v7346, %v7347
        %v7349 = vsel %vm1343, %v7345, %v7348
        %v7350 = vrot.slane %v6946, 4
        %v7351 = vrot.slane %v6949, 5
        %v7352 = vor.u32 %v7350, %v7351
        %v7353 = vsel %vm1343, %v7348, %v7352
        %v7354 = vrot.slane %v6955, 4
        %v7355 = vrot.slane %v6958, 5
        %v7356 = vor.u32 %v7354, %v7355
        %v7357 = vsel %vm1343, %v7352, %v7356
        %v7358 = vrot.slane %v6964, 4
        %v7359 = vrot.slane %v6967, 5
        %v7360 = vor.u32 %v7358, %v7359
        %v7361 = vsel %vm1343, %v7356, %v7360
        %v7362 = vrot.slane %v6973, 4
        %v7363 = vrot.slane %v6976, 5
        %v7364 = vor.u32 %v7362, %v7363
        %v7365 = vsel %vm1343, %v7360, %v7364
        %v7367 = vshrl.u32 %v7321, 16
        %v7369 = vrot.slane %v7367, 4
        %v7370 = vshll.u32 %v7321, 16
        %v7372 = vrot.slane %v7370, 5
        %v7373 = vor.u32 %v7369, %v7372
        %v7374 = vsel %vm1343, %v7364, %v7373
        %v7397 = vunpack.c.l.b16 %v7322
        %v7398 = vunpack.c.l.b16 %v7323
        %v7399 = vunpack.c.l.b16 %v7324
        %v7400 = vunpack.c.l.b16 %v7325
        %v7401 = vunpack.c.l.b16 %v7326
        %v7402 = vunpack.c.l.b16 %v7327
        %v7403 = vunpack.c.l.b16 %v7328
        %v7404 = vunpack.c.l.b16 %v7329
        %v7405 = vunpack.c.l.b16 %v7330
        %v7406 = vunpack.c.l.b16 %v7331
        %v7407 = vunpack.c.l.b16 %v7332
        %v7408 = vunpack.c.l.b16 %v7333
        %v7409 = vunpack.c.l.b16 %v7334
        %v7410 = vunpack.c.l.b16 %v7335
        %v7411 = vunpack.c.l.b16 %v7336
        %v7412 = vunpack.c.l.b16 %v7337
        %v7413 = vpack.c.b16 %v7398, %v7397
        %v7414 = vpack.c.b16 %v7400, %v7399
        %v7415 = vpack.c.b16 %v7402, %v7401
        %v7416 = vpack.c.b16 %v7404, %v7403
        %v7417 = vpack.c.b16 %v7406, %v7405
        %v7418 = vpack.c.b16 %v7408, %v7407
        %v7419 = vpack.c.b16 %v7410, %v7409
        %v7420 = vpack.c.b16 %v7412, %v7411
        %7429 = vmatprep.subr.bf16.mxu0 0
        %7430 = vmatpush1.bf16.msra.mxu0 %v7413
        %7431 = vmatprep.subr.bf16.mxu0 0
        %7432 = vmatpush1.bf16.msra.mxu0 %v7414
        %7433 = vmatprep.subr.bf16.mxu0 0
        %7434 = vmatpush1.bf16.msra.mxu0 %v7415
        %7435 = vmatprep.subr.bf16.mxu0 0
        %7436 = vmatpush1.bf16.msra.mxu0 %v7416
        %7437 = vmatprep.subr.bf16.mxu0 0
        %7438 = vmatpush1.bf16.msra.mxu0 %v7417
        %7439 = vmatprep.subr.bf16.mxu0 0
        %7440 = vmatpush1.bf16.msra.mxu0 %v7418
        %7441 = vmatprep.subr.bf16.mxu0 0
        %7442 = vmatpush1.bf16.msra.mxu0 %v7419
        %7443 = vmatprep.subr.bf16.mxu0 0
        %7444 = vmatpush1.bf16.msra.mxu0 %v7420
        %7445 = vmatprep.subr.bf16.mxu0 0
        %7446 = vmatpush1.bf16.msra.mxu0 0
        %7447 = vmatprep.subr.bf16.mxu0 0
        %7448 = vmatpush1.bf16.msra.mxu0 0
        %7449 = vmatprep.subr.bf16.mxu0 0
        %7450 = vmatpush1.bf16.msra.mxu0 0
        %7451 = vmatprep.subr.bf16.mxu0 0
        %7452 = vmatpush1.bf16.msra.mxu0 0
        %7453 = vmatprep.subr.bf16.mxu0 0
        %7454 = vmatpush1.bf16.msra.mxu0 0
        %7455 = vmatprep.subr.bf16.mxu0 0
        %7456 = vmatpush1.bf16.msra.mxu0 0
        %7457 = vmatprep.subr.bf16.mxu0 0
        %7458 = vmatpush1.bf16.msra.mxu0 0
        %7459 = vmatprep.subr.bf16.mxu0 0
        %7460 = vmatpush1.bf16.msra.mxu0 0
        %7461 = vmatprep.mubr.bf16.mxu0 0
        %7462 = vmatmul.mubr.bf16.gmra.mrb[0].mxu0 %v7349
        %v7463 = vpop.f32.mrb[0].mxu0
        %v7464 = vadd.f32 0.0, %v7463
        %v7465 = vpop.f32.mrb[0].mxu0
        %v7466 = vpop.f32.mrb[0].mxu0
        %v7467 = vadd.f32 0.0, %v7466
        %v7468 = vpop.f32.mrb[0].mxu0
        %7469 = vmatprep.mubr.bf16.mxu0 0
        %7470 = vmatmul.mubr.bf16.gmra.mrb[0].mxu0 %v7353
        %v7471 = vpop.f32.mrb[0].mxu0
        %v7472 = vadd.f32 0.0, %v7471
        %v7473 = vpop.f32.mrb[0].mxu0
        %v7474 = vpop.f32.mrb[0].mxu0
        %v7475 = vadd.f32 0.0, %v7474
        %v7476 = vpop.f32.mrb[0].mxu0
        %7477 = vmatprep.mubr.bf16.mxu0 0
        %7478 = vmatmul.mubr.bf16.gmra.mrb[0].mxu0 %v7357
        %v7479 = vpop.f32.mrb[0].mxu0
        %v7480 = vadd.f32 0.0, %v7479
        %v7481 = vpop.f32.mrb[0].mxu0
        %v7482 = vpop.f32.mrb[0].mxu0
        %v7483 = vadd.f32 0.0, %v7482
        %v7484 = vpop.f32.mrb[0].mxu0
        %7485 = vmatprep.mubr.bf16.mxu0 0
        %7486 = vmatmul.mubr.bf16.gmra.mrb[0].mxu0 %v7361
        %v7487 = vpop.f32.mrb[0].mxu0
        %v7488 = vadd.f32 0.0, %v7487
        %v7489 = vpop.f32.mrb[0].mxu0
        %v7490 = vpop.f32.mrb[0].mxu0
        %v7491 = vadd.f32 0.0, %v7490
        %v7492 = vpop.f32.mrb[0].mxu0
        %7493 = vmatprep.mubr.bf16.mxu0 0
        %7494 = vmatmul.mubr.bf16.gmra.mrb[0].mxu0 %v7365
        %v7495 = vpop.f32.mrb[0].mxu0
        %v7496 = vadd.f32 0.0, %v7495
        %v7497 = vpop.f32.mrb[0].mxu0
        %v7498 = vpop.f32.mrb[0].mxu0
        %v7499 = vadd.f32 0.0, %v7498
        %v7500 = vpop.f32.mrb[0].mxu0
        %7501 = vmatprep.mubr.bf16.mxu0 0
        %7502 = vmatmul.mubr.bf16.gmra.mrb[0].mxu0 %v7374
        %v7503 = vpop.f32.mrb[0].mxu0
        %v7504 = vadd.f32 0.0, %v7503
        %v7505 = vpop.f32.mrb[0].mxu0
        %v7506 = vpop.f32.mrb[0].mxu0
        %v7507 = vadd.f32 0.0, %v7506
        %v7508 = vpop.f32.mrb[0].mxu0
        %7509 = vdwg.mxu0
        %v7510 = vadd.f32 %v7309, %v7464
        %v7511 = vadd.f32 %v7310, %v7467
        %v7512 = vadd.f32 %v7311, %v7472
        %v7513 = vadd.f32 %v7312, %v7475
        %v7514 = vadd.f32 %v7313, %v7480
        %v7515 = vadd.f32 %v7314, %v7483
        %v7516 = vadd.f32 %v7315, %v7488
        %v7517 = vadd.f32 %v7316, %v7491
        %v7518 = vadd.f32 %v7317, %v7496
        %v7519 = vadd.f32 %v7318, %v7499
        %v7520 = vadd.f32 %v7319, %v7504
        %v7521 = vadd.f32 %v7320, %v7507
        %v7522 = vmul.f32 %v7510, %v2757
        %v7523 = vmul.f32 %v7511, %v2757
        %v7524 = vmul.f32 %v7512, %v2757
        %v7525 = vmul.f32 %v7513, %v2757
        %v7526 = vmul.f32 %v7514, %v2757
        %v7527 = vmul.f32 %v7515, %v2757
        %v7528 = vmul.f32 %v7516, %v2757
        %v7529 = vmul.f32 %v7517, %v2757
        %v7530 = vmul.f32 %v7518, %v2757
        %v7531 = vmul.f32 %v7519, %v2757
        %v7532 = vmul.f32 %v7520, %v2757
        %v7533 = vmul.f32 %v7521, %v2757
        %v7534 = vadd.f32 %v7522, %v2773
        %v7535 = vadd.f32 %v7523, %v2773
        %v7536 = vadd.f32 %v7524, %v2773
        %v7537 = vadd.f32 %v7525, %v2773
        %v7538 = vadd.f32 %v7526, %v2773
        %v7539 = vadd.f32 %v7527, %v2773
        %v7540 = vadd.f32 %v7528, %v2773
        %v7541 = vadd.f32 %v7529, %v2773
        %v7542 = vadd.f32 %v7530, %v2773
        %v7543 = vadd.f32 %v7531, %v2773
        %v7544 = vadd.f32 %v7532, %v2773
        %v7545 = vadd.f32 %v7533, %v2773
        %v7546 = vmax.f32 %v7534, 0.0
        %v7547 = vmax.f32 %v7535, 0.0
        %v7548 = vmax.f32 %v7536, 0.0
        %v7549 = vmax.f32 %v7537, 0.0
        %v7550 = vmax.f32 %v7538, 0.0
        %v7551 = vmax.f32 %v7539, 0.0
        %v7552 = vmax.f32 %v7540, 0.0
        %v7553 = vmax.f32 %v7541, 0.0
        %v7554 = vmax.f32 %v7542, 0.0
        %v7555 = vmax.f32 %v7543, 0.0
        %v7556 = vmax.f32 %v7544, 0.0
        %v7557 = vmax.f32 %v7545, 0.0
        %v7558 = vld [vmem:[%s333 + $0x60] sm:$0xf]
        %v7559 = vld [vmem:[%s333 + $0x64] sm:$0xf]
        %v7560 = vld [vmem:[%s333 + $0x68] sm:$0xf]
        %v7561 = vld [vmem:[%s333 + $0x6c] sm:$0xf]
        %v7562 = vld [vmem:[%s333 + $0x70] sm:$0xf]
        %v7563 = vld [vmem:[%s333 + $0x74] sm:$0xf]
        %v7564 = vld [vmem:[%s333 + $0x78] sm:$0xf]
        %v7565 = vld [vmem:[%s333 + $0x7c] sm:$0xf]
        %v7566 = vld [vmem:[%s333 + $0x80] sm:$0xf]
        %v7567 = vld [vmem:[%s333 + $0x84] sm:$0xf]
        %v7568 = vld [vmem:[%s333 + $0x88] sm:$0xf]
        %v7569 = vld [vmem:[%s333 + $0x8c] sm:$0xf]
        %v7570 = vld [vmem:[#allocation11] sm:$0xf]
        %v7571 = vld [vmem:[#allocation11 + $0x4] sm:$0xf]
        %v7572 = vld [vmem:[#allocation11 + $0x8] sm:$0xf]
        %v7573 = vld [vmem:[#allocation11 + $0xc] sm:$0xf]
        %v7574 = vld [vmem:[#allocation11 + $0x10] sm:$0xf]
        %v7575 = vld [vmem:[#allocation11 + $0x14] sm:$0xf]
        %v7576 = vld [vmem:[#allocation11 + $0x18] sm:$0xf]
        %v7577 = vld [vmem:[#allocation11 + $0x1c] sm:$0xf]
        %v7578 = vld [vmem:[#allocation11 + $0x20] sm:$0xf]
        %v7579 = vld [vmem:[#allocation11 + $0x24] sm:$0xf]
        %v7580 = vld [vmem:[#allocation11 + $0x28] sm:$0xf]
        %v7581 = vld [vmem:[#allocation11 + $0x2c] sm:$0xf]
        %v7582 = vld [vmem:[#allocation11 + $0x30] sm:$0xf]
        %v7583 = vld [vmem:[#allocation11 + $0x34] sm:$0xf]
        %v7584 = vld [vmem:[#allocation11 + $0x38] sm:$0xf]
        %v7585 = vld [vmem:[#allocation11 + $0x3c] sm:$0xf]
        %v7598 = vunpack.c.l.b16 %v7558
        %v7599 = vunpack.c.l.b16 %v7559
        %v7600 = vunpack.c.l.b16 %v7560
        %v7601 = vunpack.c.l.b16 %v7561
        %v7602 = vunpack.c.l.b16 %v7562
        %v7603 = vunpack.c.l.b16 %v7563
        %v7604 = vunpack.c.l.b16 %v7564
        %v7605 = vunpack.c.l.b16 %v7565
        %v7606 = vunpack.c.l.b16 %v7566
        %v7607 = vunpack.c.l.b16 %v7567
        %v7608 = vunpack.c.l.b16 %v7568
        %v7609 = vunpack.c.l.b16 %v7569
        %v7610 = vpack.c.b16 %v7599, %v7598
        %v7611 = vpack.c.b16 %v7601, %v7600
        %v7612 = vpack.c.b16 %v7603, %v7602
        %v7613 = vpack.c.b16 %v7605, %v7604
        %v7614 = vpack.c.b16 %v7607, %v7606
        %v7615 = vpack.c.b16 %v7609, %v7608
        %v7638 = vunpack.c.l.b16 %v7570
        %v7639 = vunpack.c.l.b16 %v7571
        %v7640 = vunpack.c.l.b16 %v7572
        %v7641 = vunpack.c.l.b16 %v7573
        %v7642 = vunpack.c.l.b16 %v7574
        %v7643 = vunpack.c.l.b16 %v7575
        %v7644 = vunpack.c.l.b16 %v7576
        %v7645 = vunpack.c.l.b16 %v7577
        %v7646 = vunpack.c.l.b16 %v7578
        %v7647 = vunpack.c.l.b16 %v7579
        %v7648 = vunpack.c.l.b16 %v7580
        %v7649 = vunpack.c.l.b16 %v7581
        %v7650 = vunpack.c.l.b16 %v7582
        %v7651 = vunpack.c.l.b16 %v7583
        %v7652 = vunpack.c.l.b16 %v7584
        %v7653 = vunpack.c.l.b16 %v7585
        %v7654 = vpack.c.b16 %v7639, %v7638
        %v7655 = vpack.c.b16 %v7641, %v7640
        %v7656 = vpack.c.b16 %v7643, %v7642
        %v7657 = vpack.c.b16 %v7645, %v7644
        %v7658 = vpack.c.b16 %v7647, %v7646
        %v7659 = vpack.c.b16 %v7649, %v7648
        %v7660 = vpack.c.b16 %v7651, %v7650
        %v7661 = vpack.c.b16 %v7653, %v7652
        %7670 = vmatprep.subr.bf16.mxu0 0
        %7671 = vmatpush1.bf16.msra.mxu0 %v7654
        %7672 = vmatprep.subr.bf16.mxu0 0
        %7673 = vmatpush1.bf16.msra.mxu0 %v7655
        %7674 = vmatprep.subr.bf16.mxu0 0
        %7675 = vmatpush1.bf16.msra.mxu0 %v7656
        %7676 = vmatprep.subr.bf16.mxu0 0
        %7677 = vmatpush1.bf16.msra.mxu0 %v7657
        %7678 = vmatprep.subr.bf16.mxu0 0
        %7679 = vmatpush1.bf16.msra.mxu0 %v7658
        %7680 = vmatprep.subr.bf16.mxu0 0
        %7681 = vmatpush1.bf16.msra.mxu0 %v7659
        %7682 = vmatprep.subr.bf16.mxu0 0
        %7683 = vmatpush1.bf16.msra.mxu0 %v7660
        %7684 = vmatprep.subr.bf16.mxu0 0
        %7685 = vmatpush1.bf16.msra.mxu0 %v7661
        %7686 = vmatprep.subr.bf16.mxu0 0
        %7687 = vmatpush1.bf16.msra.mxu0 0
        %7688 = vmatprep.subr.bf16.mxu0 0
        %7689 = vmatpush1.bf16.msra.mxu0 0
        %7690 = vmatprep.subr.bf16.mxu0 0
        %7691 = vmatpush1.bf16.msra.mxu0 0
        %7692 = vmatprep.subr.bf16.mxu0 0
        %7693 = vmatpush1.bf16.msra.mxu0 0
        %7694 = vmatprep.subr.bf16.mxu0 0
        %7695 = vmatpush1.bf16.msra.mxu0 0
        %7696 = vmatprep.subr.bf16.mxu0 0
        %7697 = vmatpush1.bf16.msra.mxu0 0
        %7698 = vmatprep.subr.bf16.mxu0 0
        %7699 = vmatpush1.bf16.msra.mxu0 0
        %7700 = vmatprep.subr.bf16.mxu0 0
        %7701 = vmatpush1.bf16.msra.mxu0 0
        %7702 = vmatprep.mubr.bf16.mxu0 0
        %7703 = vmatmul.mubr.bf16.gmra.mrb[0].mxu0 %v7610
        %v7704 = vpop.f32.mrb[0].mxu0
        %v7705 = vadd.f32 %v2830, %v7704
        %v7706 = vpop.f32.mrb[0].mxu0
        %v7707 = vpop.f32.mrb[0].mxu0
        %v7708 = vadd.f32 %v2830, %v7707
        %v7709 = vpop.f32.mrb[0].mxu0
        %7710 = vmatprep.mubr.bf16.mxu0 0
        %7711 = vmatmul.mubr.bf16.gmra.mrb[0].mxu0 %v7611
        %v7712 = vpop.f32.mrb[0].mxu0
        %v7713 = vadd.f32 %v2830, %v7712
        %v7714 = vpop.f32.mrb[0].mxu0
        %v7715 = vpop.f32.mrb[0].mxu0
        %v7716 = vadd.f32 %v2830, %v7715
        %v7717 = vpop.f32.mrb[0].mxu0
        %7718 = vmatprep.mubr.bf16.mxu0 0
        %7719 = vmatmul.mubr.bf16.gmra.mrb[0].mxu0 %v7612
        %v7720 = vpop.f32.mrb[0].mxu0
        %v7721 = vadd.f32 %v2830, %v7720
        %v7722 = vpop.f32.mrb[0].mxu0
        %v7723 = vpop.f32.mrb[0].mxu0
        %v7724 = vadd.f32 %v2830, %v7723
        %v7725 = vpop.f32.mrb[0].mxu0
        %7726 = vmatprep.mubr.bf16.mxu0 0
        %7727 = vmatmul.mubr.bf16.gmra.mrb[0].mxu0 %v7613
        %v7728 = vpop.f32.mrb[0].mxu0
        %v7729 = vadd.f32 %v2830, %v7728
        %v7730 = vpop.f32.mrb[0].mxu0
        %v7731 = vpop.f32.mrb[0].mxu0
        %v7732 = vadd.f32 %v2830, %v7731
        %v7733 = vpop.f32.mrb[0].mxu0
        %7734 = vmatprep.mubr.bf16.mxu0 0
        %7735 = vmatmul.mubr.bf16.gmra.mrb[0].mxu0 %v7614
        %v7736 = vpop.f32.mrb[0].mxu0
        %v7737 = vadd.f32 %v2830, %v7736
        %v7738 = vpop.f32.mrb[0].mxu0
        %v7739 = vpop.f32.mrb[0].mxu0
        %v7740 = vadd.f32 %v2830, %v7739
        %v7741 = vpop.f32.mrb[0].mxu0
        %7742 = vmatprep.mubr.bf16.mxu0 0
        %7743 = vmatmul.mubr.bf16.gmra.mrb[0].mxu0 %v7615
        %v7744 = vpop.f32.mrb[0].mxu0
        %v7745 = vadd.f32 %v2830, %v7744
        %v7746 = vpop.f32.mrb[0].mxu0
        %v7747 = vpop.f32.mrb[0].mxu0
        %v7748 = vadd.f32 %v2830, %v7747
        %v7749 = vpop.f32.mrb[0].mxu0
        %7750 = vdwg.mxu0
        %v7751 = vadd.f32 %v7546, %v7705
        %v7752 = vadd.f32 %v7547, %v7708
        %v7753 = vadd.f32 %v7548, %v7713
        %v7754 = vadd.f32 %v7549, %v7716
        %v7755 = vadd.f32 %v7550, %v7721
        %v7756 = vadd.f32 %v7551, %v7724
        %v7757 = vadd.f32 %v7552, %v7729
        %v7758 = vadd.f32 %v7553, %v7732
        %v7759 = vadd.f32 %v7554, %v7737
        %v7760 = vadd.f32 %v7555, %v7740
        %v7761 = vadd.f32 %v7556, %v7745
        %v7762 = vadd.f32 %v7557, %v7748
        %v7763 = vpack.c.bf16 %v7752, %v7751
        %v7764 = vpack.c.bf16 %v7754, %v7753
        %v7765 = vpack.c.bf16 %v7756, %v7755
        %v7766 = vpack.c.bf16 %v7758, %v7757
        %v7767 = vpack.c.bf16 %v7760, %v7759
        %v7768 = vpack.c.bf16 %v7762, %v7761
        %v7775 = vunpack.c.l.b16 %v7763
        %v7776 = vunpack.c.h.b16 %v7763
        %v7777 = vunpack.c.l.b16 %v7764
        %v7778 = vunpack.c.h.b16 %v7764
        %v7779 = vunpack.c.l.b16 %v7765
        %v7780 = vunpack.c.h.b16 %v7765
        %v7781 = vunpack.c.l.b16 %v7766
        %v7782 = vunpack.c.h.b16 %v7766
        %v7783 = vunpack.c.l.b16 %v7767
        %v7784 = vunpack.c.h.b16 %v7767
        %v7785 = vunpack.c.l.b16 %v7768
        %v7786 = vunpack.c.h.b16 %v7768
        %v7787 = vpack.c.b16 %v7775, %v7775
        %v7788 = vpack.c.b16 %v7776, %v7776
        %v7789 = vpack.c.b16 %v7777, %v7777
        %v7790 = vpack.c.b16 %v7778, %v7778
        %v7791 = vpack.c.b16 %v7779, %v7779
        %v7792 = vpack.c.b16 %v7780, %v7780
        %v7793 = vpack.c.b16 %v7781, %v7781
        %v7794 = vpack.c.b16 %v7782, %v7782
        %v7795 = vpack.c.b16 %v7783, %v7783
        %v7796 = vpack.c.b16 %v7784, %v7784
        %v7797 = vpack.c.b16 %v7785, %v7785
        %v7798 = vpack.c.b16 %v7786, %v7786
        %7811 = vst [vmem:[%s381 + $0x60] sm:$0xf] %v7787
        %7812 = vst [vmem:[%s381 + $0x64] sm:$0xf] %v7788
        %7813 = vst [vmem:[%s381 + $0x68] sm:$0xf] %v7789
        %7814 = vst [vmem:[%s381 + $0x6c] sm:$0xf] %v7790
        %7815 = vst [vmem:[%s381 + $0x70] sm:$0xf] %v7791
        %7816 = vst [vmem:[%s381 + $0x74] sm:$0xf] %v7792
        %7817 = vst [vmem:[%s381 + $0x78] sm:$0xf] %v7793
        %7818 = vst [vmem:[%s381 + $0x7c] sm:$0xf] %v7794
        %7819 = vst [vmem:[%s381 + $0x80] sm:$0xf] %v7795
        %7820 = vst [vmem:[%s381 + $0x84] sm:$0xf] %v7796
        %7821 = vst [vmem:[%s381 + $0x88] sm:$0xf] %v7797
        %7822 = vst [vmem:[%s381 + $0x8c] sm:$0xf] %v7798
        %v7823 = vld [vmem:[#allocation2 + $0x90] sm:$0xf8]
        %v7824 = vld [vmem:[#allocation2 + $0x98] sm:$0xff]
        %v7825 = vld [vmem:[#allocation2 + $0xa0] sm:$0xff]
        %v7826 = vld [vmem:[#allocation2 + $0xa8] sm:$0xff]
        %v7827 = vld [vmem:[#allocation2 + $0xb0] sm:$0xff]
        %v7828 = vld [vmem:[#allocation2 + $0xb8] sm:$0xff]
        %v7829 = vld [vmem:[#allocation2 + $0xc0] sm:$0xf]
        %v7830 = vld [vmem:[#allocation9] sm:$0xf]
        %v7831 = vld [vmem:[#allocation9 + $0x4] sm:$0xf]
        %v7832 = vld [vmem:[#allocation9 + $0x8] sm:$0xf]
        %v7833 = vld [vmem:[#allocation9 + $0xc] sm:$0xf]
        %v7834 = vld [vmem:[#allocation9 + $0x10] sm:$0xf]
        %v7835 = vld [vmem:[#allocation9 + $0x14] sm:$0xf]
        %v7836 = vld [vmem:[#allocation9 + $0x18] sm:$0xf]
        %v7837 = vld [vmem:[#allocation9 + $0x1c] sm:$0xf]
        %v7838 = vld [vmem:[#allocation9 + $0x20] sm:$0xf]
        %v7839 = vld [vmem:[#allocation9 + $0x24] sm:$0xf]
        %v7840 = vld [vmem:[#allocation9 + $0x28] sm:$0xf]
        %v7841 = vld [vmem:[#allocation9 + $0x2c] sm:$0xf]
        %v7842 = vld [vmem:[#allocation9 + $0x30] sm:$0xf]
        %v7843 = vld [vmem:[#allocation9 + $0x34] sm:$0xf]
        %v7844 = vld [vmem:[#allocation9 + $0x38] sm:$0xf]
        %v7845 = vld [vmem:[#allocation9 + $0x3c] sm:$0xf]
        %v7846 = vld [vmem:[#allocation2 + $0x90] sm:$0xf0]
        %v7847 = vld [vmem:[%s954] sm:$0xf]
        %v7848 = vld [vmem:[%s954 + $0x4] sm:$0xf]
        %v7849 = vld [vmem:[%s954 + $0x8] sm:$0xf]
        %v7850 = vld [vmem:[%s954 + $0xc] sm:$0xf]
        %v7851 = vld [vmem:[%s954 + $0x10] sm:$0xf]
        %v7852 = vld [vmem:[%s954 + $0x14] sm:$0xf]
        %v7853 = vld [vmem:[%s954 + $0x18] sm:$0xf]
        %v7854 = vld [vmem:[%s954 + $0x1c] sm:$0xf]
        %v7855 = vld [vmem:[%s954 + $0x20] sm:$0xf]
        %v7856 = vld [vmem:[%s954 + $0x24] sm:$0xf]
        %v7857 = vld [vmem:[%s954 + $0x28] sm:$0xf]
        %v7858 = vld [vmem:[%s954 + $0x2c] sm:$0xf]
        %v7859 = vld [vmem:[%s954 + $0x30] sm:$0xf]
        %v7860 = vld [vmem:[%s954 + $0x34] sm:$0xf]
        %v7861 = vld [vmem:[%s954 + $0x38] sm:$0xf]
        %v7862 = vld [vmem:[%s954 + $0x3c] sm:$0xf]
        %v7870 = vrot.slane %v7846, 4
        %v7871 = vrot.slane %v7824, 4
        %v7872 = vsel %vm978, %v7870, %v7871
        %v7873 = vrot.slane %v7825, 4
        %v7874 = vsel %vm978, %v7871, %v7873
        %v7875 = vrot.slane %v7826, 4
        %v7876 = vsel %vm978, %v7873, %v7875
        %v7877 = vrot.slane %v7827, 4
        %v7878 = vsel %vm978, %v7875, %v7877
        %v7879 = vrot.slane %v7828, 4
        %v7880 = vsel %vm978, %v7877, %v7879
        %v7881 = vrot.slane %v7829, 4
        %v7882 = vsel %vm978, %v7879, %v7881
        %v7905 = vunpack.c.l.b16 %v7847
        %v7906 = vunpack.c.l.b16 %v7848
        %v7907 = vunpack.c.l.b16 %v7849
        %v7908 = vunpack.c.l.b16 %v7850
        %v7909 = vunpack.c.l.b16 %v7851
        %v7910 = vunpack.c.l.b16 %v7852
        %v7911 = vunpack.c.l.b16 %v7853
        %v7912 = vunpack.c.l.b16 %v7854
        %v7913 = vunpack.c.l.b16 %v7855
        %v7914 = vunpack.c.l.b16 %v7856
        %v7915 = vunpack.c.l.b16 %v7857
        %v7916 = vunpack.c.l.b16 %v7858
        %v7917 = vunpack.c.l.b16 %v7859
        %v7918 = vunpack.c.l.b16 %v7860
        %v7919 = vunpack.c.l.b16 %v7861
        %v7920 = vunpack.c.l.b16 %v7862
        %v7921 = vpack.c.b16 %v7906, %v7905
        %v7922 = vpack.c.b16 %v7908, %v7907
        %v7923 = vpack.c.b16 %v7910, %v7909
        %v7924 = vpack.c.b16 %v7912, %v7911
        %v7925 = vpack.c.b16 %v7914, %v7913
        %v7926 = vpack.c.b16 %v7916, %v7915
        %v7927 = vpack.c.b16 %v7918, %v7917
        %v7928 = vpack.c.b16 %v7920, %v7919
        %7937 = vmatprep.subr.bf16.mxu0 0
        %7938 = vmatpush1.bf16.msra.mxu0 %v7921
        %7939 = vmatprep.subr.bf16.mxu0 0
        %7940 = vmatpush1.bf16.msra.mxu0 %v7922
        %7941 = vmatprep.subr.bf16.mxu0 0
        %7942 = vmatpush1.bf16.msra.mxu0 %v7923
        %7943 = vmatprep.subr.bf16.mxu0 0
        %7944 = vmatpush1.bf16.msra.mxu0 %v7924
        %7945 = vmatprep.subr.bf16.mxu0 0
        %7946 = vmatpush1.bf16.msra.mxu0 %v7925
        %7947 = vmatprep.subr.bf16.mxu0 0
        %7948 = vmatpush1.bf16.msra.mxu0 %v7926
        %7949 = vmatprep.subr.bf16.mxu0 0
        %7950 = vmatpush1.bf16.msra.mxu0 %v7927
        %7951 = vmatprep.subr.bf16.mxu0 0
        %7952 = vmatpush1.bf16.msra.mxu0 %v7928
        %7953 = vmatprep.subr.bf16.mxu0 0
        %7954 = vmatpush1.bf16.msra.mxu0 0
        %7955 = vmatprep.subr.bf16.mxu0 0
        %7956 = vmatpush1.bf16.msra.mxu0 0
        %7957 = vmatprep.subr.bf16.mxu0 0
        %7958 = vmatpush1.bf16.msra.mxu0 0
        %7959 = vmatprep.subr.bf16.mxu0 0
        %7960 = vmatpush1.bf16.msra.mxu0 0
        %7961 = vmatprep.subr.bf16.mxu0 0
        %7962 = vmatpush1.bf16.msra.mxu0 0
        %7963 = vmatprep.subr.bf16.mxu0 0
        %7964 = vmatpush1.bf16.msra.mxu0 0
        %7965 = vmatprep.subr.bf16.mxu0 0
        %7966 = vmatpush1.bf16.msra.mxu0 0
        %7967 = vmatprep.subr.bf16.mxu0 0
        %7968 = vmatpush1.bf16.msra.mxu0 0
        %7969 = vmatprep.mubr.bf16.mxu0 0
        %7970 = vmatmul.mubr.bf16.gmra.mrb[0].mxu0 %v7872
        %v7971 = vpop.f32.mrb[0].mxu0
        %v7972 = vadd.f32 0.0, %v7971
        %v7973 = vpop.f32.mrb[0].mxu0
        %v7974 = vpop.f32.mrb[0].mxu0
        %v7975 = vadd.f32 0.0, %v7974
        %v7976 = vpop.f32.mrb[0].mxu0
        %7977 = vmatprep.mubr.bf16.mxu0 0
        %7978 = vmatmul.mubr.bf16.gmra.mrb[0].mxu0 %v7874
        %v7979 = vpop.f32.mrb[0].mxu0
        %v7980 = vadd.f32 0.0, %v7979
        %v7981 = vpop.f32.mrb[0].mxu0
        %v7982 = vpop.f32.mrb[0].mxu0
        %v7983 = vadd.f32 0.0, %v7982
        %v7984 = vpop.f32.mrb[0].mxu0
        %7985 = vmatprep.mubr.bf16.mxu0 0
        %7986 = vmatmul.mubr.bf16.gmra.mrb[0].mxu0 %v7876
        %v7987 = vpop.f32.mrb[0].mxu0
        %v7988 = vadd.f32 0.0, %v7987
        %v7989 = vpop.f32.mrb[0].mxu0
        %v7990 = vpop.f32.mrb[0].mxu0
        %v7991 = vadd.f32 0.0, %v7990
        %v7992 = vpop.f32.mrb[0].mxu0
        %7993 = vmatprep.mubr.bf16.mxu0 0
        %7994 = vmatmul.mubr.bf16.gmra.mrb[0].mxu0 %v7878
        %v7995 = vpop.f32.mrb[0].mxu0
        %v7996 = vadd.f32 0.0, %v7995
        %v7997 = vpop.f32.mrb[0].mxu0
        %v7998 = vpop.f32.mrb[0].mxu0
        %v7999 = vadd.f32 0.0, %v7998
        %v8000 = vpop.f32.mrb[0].mxu0
        %8001 = vmatprep.mubr.bf16.mxu0 0
        %8002 = vmatmul.mubr.bf16.gmra.mrb[0].mxu0 %v7880
        %v8003 = vpop.f32.mrb[0].mxu0
        %v8004 = vadd.f32 0.0, %v8003
        %v8005 = vpop.f32.mrb[0].mxu0
        %v8006 = vpop.f32.mrb[0].mxu0
        %v8007 = vadd.f32 0.0, %v8006
        %v8008 = vpop.f32.mrb[0].mxu0
        %8009 = vmatprep.mubr.bf16.mxu0 0
        %8010 = vmatmul.mubr.bf16.gmra.mrb[0].mxu0 %v7882
        %v8011 = vpop.f32.mrb[0].mxu0
        %v8012 = vadd.f32 0.0, %v8011
        %v8013 = vpop.f32.mrb[0].mxu0
        %v8014 = vpop.f32.mrb[0].mxu0
        %v8015 = vadd.f32 0.0, %v8014
        %v8016 = vpop.f32.mrb[0].mxu0
        %8017 = vdwg.mxu0
        %v8019 = vshrl.u32 %v7823, 16
        %v8021 = vrot.slane %v8019, 3
        %v8022 = vshll.u32 %v7823, 16
        %v8024 = vrot.slane %v8022, 4
        %v8025 = vor.u32 %v8021, %v8024
        %v8027 = vshrl.u32 %v7824, 16
        %v8029 = vrot.slane %v8027, 3
        %v8030 = vshll.u32 %v7824, 16
        %v8032 = vrot.slane %v8030, 4
        %v8033 = vor.u32 %v8029, %v8032
        %v8034 = vsel %vm1127, %v8025, %v8033
        %v8036 = vshrl.u32 %v7825, 16
        %v8038 = vrot.slane %v8036, 3
        %v8039 = vshll.u32 %v7825, 16
        %v8041 = vrot.slane %v8039, 4
        %v8042 = vor.u32 %v8038, %v8041
        %v8043 = vsel %vm1127, %v8033, %v8042
        %v8045 = vshrl.u32 %v7826, 16
        %v8047 = vrot.slane %v8045, 3
        %v8048 = vshll.u32 %v7826, 16
        %v8050 = vrot.slane %v8048, 4
        %v8051 = vor.u32 %v8047, %v8050
        %v8052 = vsel %vm1127, %v8042, %v8051
        %v8054 = vshrl.u32 %v7827, 16
        %v8056 = vrot.slane %v8054, 3
        %v8057 = vshll.u32 %v7827, 16
        %v8059 = vrot.slane %v8057, 4
        %v8060 = vor.u32 %v8056, %v8059
        %v8061 = vsel %vm1127, %v8051, %v8060
        %v8063 = vshrl.u32 %v7828, 16
        %v8065 = vrot.slane %v8063, 3
        %v8066 = vshll.u32 %v7828, 16
        %v8068 = vrot.slane %v8066, 4
        %v8069 = vor.u32 %v8065, %v8068
        %v8070 = vsel %vm1127, %v8060, %v8069
        %v8072 = vshrl.u32 %v7829, 16
        %v8074 = vrot.slane %v8072, 3
        %v8075 = vshll.u32 %v7829, 16
        %v8077 = vrot.slane %v8075, 4
        %v8078 = vor.u32 %v8074, %v8077
        %v8079 = vsel %vm1127, %v8069, %v8078
        %v8102 = vunpack.c.l.b16 %v7830
        %v8103 = vunpack.c.l.b16 %v7831
        %v8104 = vunpack.c.l.b16 %v7832
        %v8105 = vunpack.c.l.b16 %v7833
        %v8106 = vunpack.c.l.b16 %v7834
        %v8107 = vunpack.c.l.b16 %v7835
        %v8108 = vunpack.c.l.b16 %v7836
        %v8109 = vunpack.c.l.b16 %v7837
        %v8110 = vunpack.c.l.b16 %v7838
        %v8111 = vunpack.c.l.b16 %v7839
        %v8112 = vunpack.c.l.b16 %v7840
        %v8113 = vunpack.c.l.b16 %v7841
        %v8114 = vunpack.c.l.b16 %v7842
        %v8115 = vunpack.c.l.b16 %v7843
        %v8116 = vunpack.c.l.b16 %v7844
        %v8117 = vunpack.c.l.b16 %v7845
        %v8118 = vpack.c.b16 %v8103, %v8102
        %v8119 = vpack.c.b16 %v8105, %v8104
        %v8120 = vpack.c.b16 %v8107, %v8106
        %v8121 = vpack.c.b16 %v8109, %v8108
        %v8122 = vpack.c.b16 %v8111, %v8110
        %v8123 = vpack.c.b16 %v8113, %v8112
        %v8124 = vpack.c.b16 %v8115, %v8114
        %v8125 = vpack.c.b16 %v8117, %v8116
        %8134 = vmatprep.subr.bf16.mxu0 0
        %8135 = vmatpush1.bf16.msra.mxu0 %v8118
        %8136 = vmatprep.subr.bf16.mxu0 0
        %8137 = vmatpush1.bf16.msra.mxu0 %v8119
        %8138 = vmatprep.subr.bf16.mxu0 0
        %8139 = vmatpush1.bf16.msra.mxu0 %v8120
        %8140 = vmatprep.subr.bf16.mxu0 0
        %8141 = vmatpush1.bf16.msra.mxu0 %v8121
        %8142 = vmatprep.subr.bf16.mxu0 0
        %8143 = vmatpush1.bf16.msra.mxu0 %v8122
        %8144 = vmatprep.subr.bf16.mxu0 0
        %8145 = vmatpush1.bf16.msra.mxu0 %v8123
        %8146 = vmatprep.subr.bf16.mxu0 0
        %8147 = vmatpush1.bf16.msra.mxu0 %v8124
        %8148 = vmatprep.subr.bf16.mxu0 0
        %8149 = vmatpush1.bf16.msra.mxu0 %v8125
        %8150 = vmatprep.subr.bf16.mxu0 0
        %8151 = vmatpush1.bf16.msra.mxu0 0
        %8152 = vmatprep.subr.bf16.mxu0 0
        %8153 = vmatpush1.bf16.msra.mxu0 0
        %8154 = vmatprep.subr.bf16.mxu0 0
        %8155 = vmatpush1.bf16.msra.mxu0 0
        %8156 = vmatprep.subr.bf16.mxu0 0
        %8157 = vmatpush1.bf16.msra.mxu0 0
        %8158 = vmatprep.subr.bf16.mxu0 0
        %8159 = vmatpush1.bf16.msra.mxu0 0
        %8160 = vmatprep.subr.bf16.mxu0 0
        %8161 = vmatpush1.bf16.msra.mxu0 0
        %8162 = vmatprep.subr.bf16.mxu0 0
        %8163 = vmatpush1.bf16.msra.mxu0 0
        %8164 = vmatprep.subr.bf16.mxu0 0
        %8165 = vmatpush1.bf16.msra.mxu0 0
        %8166 = vmatprep.mubr.bf16.mxu0 0
        %8167 = vmatmul.mubr.bf16.gmra.mrb[0].mxu0 %v8034
        %v8168 = vpop.f32.mrb[0].mxu0
        %v8169 = vadd.f32 %v7972, %v8168
        %v8170 = vpop.f32.mrb[0].mxu0
        %v8171 = vpop.f32.mrb[0].mxu0
        %v8172 = vadd.f32 %v7975, %v8171
        %v8173 = vpop.f32.mrb[0].mxu0
        %8174 = vmatprep.mubr.bf16.mxu0 0
        %8175 = vmatmul.mubr.bf16.gmra.mrb[0].mxu0 %v8043
        %v8176 = vpop.f32.mrb[0].mxu0
        %v8177 = vadd.f32 %v7980, %v8176
        %v8178 = vpop.f32.mrb[0].mxu0
        %v8179 = vpop.f32.mrb[0].mxu0
        %v8180 = vadd.f32 %v7983, %v8179
        %v8181 = vpop.f32.mrb[0].mxu0
        %8182 = vmatprep.mubr.bf16.mxu0 0
        %8183 = vmatmul.mubr.bf16.gmra.mrb[0].mxu0 %v8052
        %v8184 = vpop.f32.mrb[0].mxu0
        %v8185 = vadd.f32 %v7988, %v8184
        %v8186 = vpop.f32.mrb[0].mxu0
        %v8187 = vpop.f32.mrb[0].mxu0
        %v8188 = vadd.f32 %v7991, %v8187
        %v8189 = vpop.f32.mrb[0].mxu0
        %8190 = vmatprep.mubr.bf16.mxu0 0
        %8191 = vmatmul.mubr.bf16.gmra.mrb[0].mxu0 %v8061
        %v8192 = vpop.f32.mrb[0].mxu0
        %v8193 = vadd.f32 %v7996, %v8192
        %v8194 = vpop.f32.mrb[0].mxu0
        %v8195 = vpop.f32.mrb[0].mxu0
        %v8196 = vadd.f32 %v7999, %v8195
        %v8197 = vpop.f32.mrb[0].mxu0
        %8198 = vmatprep.mubr.bf16.mxu0 0
        %8199 = vmatmul.mubr.bf16.gmra.mrb[0].mxu0 %v8070
        %v8200 = vpop.f32.mrb[0].mxu0
        %v8201 = vadd.f32 %v8004, %v8200
        %v8202 = vpop.f32.mrb[0].mxu0
        %v8203 = vpop.f32.mrb[0].mxu0
        %v8204 = vadd.f32 %v8007, %v8203
        %v8205 = vpop.f32.mrb[0].mxu0
        %8206 = vmatprep.mubr.bf16.mxu0 0
        %8207 = vmatmul.mubr.bf16.gmra.mrb[0].mxu0 %v8079
        %v8208 = vpop.f32.mrb[0].mxu0
        %v8209 = vadd.f32 %v8012, %v8208
        %v8210 = vpop.f32.mrb[0].mxu0
        %v8211 = vpop.f32.mrb[0].mxu0
        %v8212 = vadd.f32 %v8015, %v8211
        %v8213 = vpop.f32.mrb[0].mxu0
        %8214 = vdwg.mxu0
        %v8215 = vld [vmem:[#allocation2 + $0xc0] sm:$0x1f]
        %v8216 = vld [vmem:[%s1326] sm:$0xf]
        %v8217 = vld [vmem:[%s1326 + $0x4] sm:$0xf]
        %v8218 = vld [vmem:[%s1326 + $0x8] sm:$0xf]
        %v8219 = vld [vmem:[%s1326 + $0xc] sm:$0xf]
        %v8220 = vld [vmem:[%s1326 + $0x10] sm:$0xf]
        %v8221 = vld [vmem:[%s1326 + $0x14] sm:$0xf]
        %v8222 = vld [vmem:[%s1326 + $0x18] sm:$0xf]
        %v8223 = vld [vmem:[%s1326 + $0x1c] sm:$0xf]
        %v8224 = vld [vmem:[%s1326 + $0x20] sm:$0xf]
        %v8225 = vld [vmem:[%s1326 + $0x24] sm:$0xf]
        %v8226 = vld [vmem:[%s1326 + $0x28] sm:$0xf]
        %v8227 = vld [vmem:[%s1326 + $0x2c] sm:$0xf]
        %v8228 = vld [vmem:[%s1326 + $0x30] sm:$0xf]
        %v8229 = vld [vmem:[%s1326 + $0x34] sm:$0xf]
        %v8230 = vld [vmem:[%s1326 + $0x38] sm:$0xf]
        %v8231 = vld [vmem:[%s1326 + $0x3c] sm:$0xf]
        %v8233 = vshrl.u32 %v7846, 16
        %v8235 = vrot.slane %v8233, 4
        %v8236 = vshll.u32 %v7846, 16
        %v8238 = vrot.slane %v8236, 5
        %v8239 = vor.u32 %v8235, %v8238
        %v8240 = vrot.slane %v8027, 4
        %v8241 = vrot.slane %v8030, 5
        %v8242 = vor.u32 %v8240, %v8241
        %v8243 = vsel %vm1343, %v8239, %v8242
        %v8244 = vrot.slane %v8036, 4
        %v8245 = vrot.slane %v8039, 5
        %v8246 = vor.u32 %v8244, %v8245
        %v8247 = vsel %vm1343, %v8242, %v8246
        %v8248 = vrot.slane %v8045, 4
        %v8249 = vrot.slane %v8048, 5
        %v8250 = vor.u32 %v8248, %v8249
        %v8251 = vsel %vm1343, %v8246, %v8250
        %v8252 = vrot.slane %v8054, 4
        %v8253 = vrot.slane %v8057, 5
        %v8254 = vor.u32 %v8252, %v8253
        %v8255 = vsel %vm1343, %v8250, %v8254
        %v8256 = vrot.slane %v8063, 4
        %v8257 = vrot.slane %v8066, 5
        %v8258 = vor.u32 %v8256, %v8257
        %v8259 = vsel %vm1343, %v8254, %v8258
        %v8261 = vshrl.u32 %v8215, 16
        %v8263 = vrot.slane %v8261, 4
        %v8264 = vshll.u32 %v8215, 16
        %v8266 = vrot.slane %v8264, 5
        %v8267 = vor.u32 %v8263, %v8266
        %v8268 = vsel %vm1343, %v8258, %v8267
        %v8291 = vunpack.c.l.b16 %v8216
        %v8292 = vunpack.c.l.b16 %v8217
        %v8293 = vunpack.c.l.b16 %v8218
        %v8294 = vunpack.c.l.b16 %v8219
        %v8295 = vunpack.c.l.b16 %v8220
        %v8296 = vunpack.c.l.b16 %v8221
        %v8297 = vunpack.c.l.b16 %v8222
        %v8298 = vunpack.c.l.b16 %v8223
        %v8299 = vunpack.c.l.b16 %v8224
        %v8300 = vunpack.c.l.b16 %v8225
        %v8301 = vunpack.c.l.b16 %v8226
        %v8302 = vunpack.c.l.b16 %v8227
        %v8303 = vunpack.c.l.b16 %v8228
        %v8304 = vunpack.c.l.b16 %v8229
        %v8305 = vunpack.c.l.b16 %v8230
        %v8306 = vunpack.c.l.b16 %v8231
        %v8307 = vpack.c.b16 %v8292, %v8291
        %v8308 = vpack.c.b16 %v8294, %v8293
        %v8309 = vpack.c.b16 %v8296, %v8295
        %v8310 = vpack.c.b16 %v8298, %v8297
        %v8311 = vpack.c.b16 %v8300, %v8299
        %v8312 = vpack.c.b16 %v8302, %v8301
        %v8313 = vpack.c.b16 %v8304, %v8303
        %v8314 = vpack.c.b16 %v8306, %v8305
        %8323 = vmatprep.subr.bf16.mxu0 0
        %8324 = vmatpush1.bf16.msra.mxu0 %v8307
        %8325 = vmatprep.subr.bf16.mxu0 0
        %8326 = vmatpush1.bf16.msra.mxu0 %v8308
        %8327 = vmatprep.subr.bf16.mxu0 0
        %8328 = vmatpush1.bf16.msra.mxu0 %v8309
        %8329 = vmatprep.subr.bf16.mxu0 0
        %8330 = vmatpush1.bf16.msra.mxu0 %v8310
        %8331 = vmatprep.subr.bf16.mxu0 0
        %8332 = vmatpush1.bf16.msra.mxu0 %v8311
        %8333 = vmatprep.subr.bf16.mxu0 0
        %8334 = vmatpush1.bf16.msra.mxu0 %v8312
        %8335 = vmatprep.subr.bf16.mxu0 0
        %8336 = vmatpush1.bf16.msra.mxu0 %v8313
        %8337 = vmatprep.subr.bf16.mxu0 0
        %8338 = vmatpush1.bf16.msra.mxu0 %v8314
        %8339 = vmatprep.subr.bf16.mxu0 0
        %8340 = vmatpush1.bf16.msra.mxu0 0
        %8341 = vmatprep.subr.bf16.mxu0 0
        %8342 = vmatpush1.bf16.msra.mxu0 0
        %8343 = vmatprep.subr.bf16.mxu0 0
        %8344 = vmatpush1.bf16.msra.mxu0 0
        %8345 = vmatprep.subr.bf16.mxu0 0
        %8346 = vmatpush1.bf16.msra.mxu0 0
        %8347 = vmatprep.subr.bf16.mxu0 0
        %8348 = vmatpush1.bf16.msra.mxu0 0
        %8349 = vmatprep.subr.bf16.mxu0 0
        %8350 = vmatpush1.bf16.msra.mxu0 0
        %8351 = vmatprep.subr.bf16.mxu0 0
        %8352 = vmatpush1.bf16.msra.mxu0 0
        %8353 = vmatprep.subr.bf16.mxu0 0
        %8354 = vmatpush1.bf16.msra.mxu0 0
        %8355 = vmatprep.mubr.bf16.mxu0 0
        %8356 = vmatmul.mubr.bf16.gmra.mrb[0].mxu0 %v8243
        %v8357 = vpop.f32.mrb[0].mxu0
        %v8358 = vadd.f32 0.0, %v8357
        %v8359 = vpop.f32.mrb[0].mxu0
        %v8360 = vpop.f32.mrb[0].mxu0
        %v8361 = vadd.f32 0.0, %v8360
        %v8362 = vpop.f32.mrb[0].mxu0
        %8363 = vmatprep.mubr.bf16.mxu0 0
        %8364 = vmatmul.mubr.bf16.gmra.mrb[0].mxu0 %v8247
        %v8365 = vpop.f32.mrb[0].mxu0
        %v8366 = vadd.f32 0.0, %v8365
        %v8367 = vpop.f32.mrb[0].mxu0
        %v8368 = vpop.f32.mrb[0].mxu0
        %v8369 = vadd.f32 0.0, %v8368
        %v8370 = vpop.f32.mrb[0].mxu0
        %8371 = vmatprep.mubr.bf16.mxu0 0
        %8372 = vmatmul.mubr.bf16.gmra.mrb[0].mxu0 %v8251
        %v8373 = vpop.f32.mrb[0].mxu0
        %v8374 = vadd.f32 0.0, %v8373
        %v8375 = vpop.f32.mrb[0].mxu0
        %v8376 = vpop.f32.mrb[0].mxu0
        %v8377 = vadd.f32 0.0, %v8376
        %v8378 = vpop.f32.mrb[0].mxu0
        %8379 = vmatprep.mubr.bf16.mxu0 0
        %8380 = vmatmul.mubr.bf16.gmra.mrb[0].mxu0 %v8255
        %v8381 = vpop.f32.mrb[0].mxu0
        %v8382 = vadd.f32 0.0, %v8381
        %v8383 = vpop.f32.mrb[0].mxu0
        %v8384 = vpop.f32.mrb[0].mxu0
        %v8385 = vadd.f32 0.0, %v8384
        %v8386 = vpop.f32.mrb[0].mxu0
        %8387 = vmatprep.mubr.bf16.mxu0 0
        %8388 = vmatmul.mubr.bf16.gmra.mrb[0].mxu0 %v8259
        %v8389 = vpop.f32.mrb[0].mxu0
        %v8390 = vadd.f32 0.0, %v8389
        %v8391 = vpop.f32.mrb[0].mxu0
        %v8392 = vpop.f32.mrb[0].mxu0
        %v8393 = vadd.f32 0.0, %v8392
        %v8394 = vpop.f32.mrb[0].mxu0
        %8395 = vmatprep.mubr.bf16.mxu0 0
        %8396 = vmatmul.mubr.bf16.gmra.mrb[0].mxu0 %v8268
        %v8397 = vpop.f32.mrb[0].mxu0
        %v8398 = vadd.f32 0.0, %v8397
        %v8399 = vpop.f32.mrb[0].mxu0
        %v8400 = vpop.f32.mrb[0].mxu0
        %v8401 = vadd.f32 0.0, %v8400
        %v8402 = vpop.f32.mrb[0].mxu0
        %8403 = vdwg.mxu0
        %v8404 = vadd.f32 %v8169, %v8358
        %v8405 = vadd.f32 %v8172, %v8361
        %v8406 = vadd.f32 %v8177, %v8366
        %v8407 = vadd.f32 %v8180, %v8369
        %v8408 = vadd.f32 %v8185, %v8374
        %v8409 = vadd.f32 %v8188, %v8377
        %v8410 = vadd.f32 %v8193, %v8382
        %v8411 = vadd.f32 %v8196, %v8385
        %v8412 = vadd.f32 %v8201, %v8390
        %v8413 = vadd.f32 %v8204, %v8393
        %v8414 = vadd.f32 %v8209, %v8398
        %v8415 = vadd.f32 %v8212, %v8401
        %v8416 = vld [vmem:[#allocation2 + $0x98] sm:$0x80]
        %v8417 = vld [vmem:[#allocation2 + $0xa0] sm:$0xff]
        %v8418 = vld [vmem:[#allocation2 + $0xa8] sm:$0xff]
        %v8419 = vld [vmem:[#allocation2 + $0xb0] sm:$0xff]
        %v8420 = vld [vmem:[#allocation2 + $0xb8] sm:$0xff]
        %v8421 = vld [vmem:[#allocation2 + $0xc0] sm:$0xff]
        %v8422 = vld [vmem:[#allocation2 + $0xc8] sm:$0xff]
        %v8423 = vld [vmem:[%s1535] sm:$0xf]
        %v8424 = vld [vmem:[%s1535 + $0x4] sm:$0xf]
        %v8425 = vld [vmem:[%s1535 + $0x8] sm:$0xf]
        %v8426 = vld [vmem:[%s1535 + $0xc] sm:$0xf]
        %v8427 = vld [vmem:[%s1535 + $0x10] sm:$0xf]
        %v8428 = vld [vmem:[%s1535 + $0x14] sm:$0xf]
        %v8429 = vld [vmem:[%s1535 + $0x18] sm:$0xf]
        %v8430 = vld [vmem:[%s1535 + $0x1c] sm:$0xf]
        %v8431 = vld [vmem:[%s1535 + $0x20] sm:$0xf]
        %v8432 = vld [vmem:[%s1535 + $0x24] sm:$0xf]
        %v8433 = vld [vmem:[%s1535 + $0x28] sm:$0xf]
        %v8434 = vld [vmem:[%s1535 + $0x2c] sm:$0xf]
        %v8435 = vld [vmem:[%s1535 + $0x30] sm:$0xf]
        %v8436 = vld [vmem:[%s1535 + $0x34] sm:$0xf]
        %v8437 = vld [vmem:[%s1535 + $0x38] sm:$0xf]
        %v8438 = vld [vmem:[%s1535 + $0x3c] sm:$0xf]
        %v8440 = vshrl.u32 %v8416, 16
        %v8442 = vrot.slane %v8440, 7
        %v8444 = vshrl.u32 %v8417, 16
        %v8446 = vrot.slane %v8444, 7
        %v8447 = vshll.u32 %v8417, 16
        %v8449 = vor.u32 %v8446, %v8447
        %v8450 = vsel %vm1552, %v8442, %v8449
        %v8452 = vshrl.u32 %v8418, 16
        %v8454 = vrot.slane %v8452, 7
        %v8455 = vshll.u32 %v8418, 16
        %v8457 = vor.u32 %v8454, %v8455
        %v8458 = vsel %vm1552, %v8446, %v8457
        %v8460 = vshrl.u32 %v8419, 16
        %v8462 = vrot.slane %v8460, 7
        %v8463 = vshll.u32 %v8419, 16
        %v8465 = vor.u32 %v8462, %v8463
        %v8466 = vsel %vm1552, %v8454, %v8465
        %v8468 = vshrl.u32 %v8420, 16
        %v8470 = vrot.slane %v8468, 7
        %v8471 = vshll.u32 %v8420, 16
        %v8473 = vor.u32 %v8470, %v8471
        %v8474 = vsel %vm1552, %v8462, %v8473
        %v8476 = vshrl.u32 %v8421, 16
        %v8478 = vrot.slane %v8476, 7
        %v8479 = vshll.u32 %v8421, 16
        %v8481 = vor.u32 %v8478, %v8479
        %v8482 = vsel %vm1552, %v8470, %v8481
        %v8484 = vshrl.u32 %v8422, 16
        %v8486 = vrot.slane %v8484, 7
        %v8487 = vshll.u32 %v8422, 16
        %v8489 = vor.u32 %v8486, %v8487
        %v8490 = vsel %vm1552, %v8478, %v8489
        %v8513 = vunpack.c.l.b16 %v8423
        %v8514 = vunpack.c.l.b16 %v8424
        %v8515 = vunpack.c.l.b16 %v8425
        %v8516 = vunpack.c.l.b16 %v8426
        %v8517 = vunpack.c.l.b16 %v8427
        %v8518 = vunpack.c.l.b16 %v8428
        %v8519 = vunpack.c.l.b16 %v8429
        %v8520 = vunpack.c.l.b16 %v8430
        %v8521 = vunpack.c.l.b16 %v8431
        %v8522 = vunpack.c.l.b16 %v8432
        %v8523 = vunpack.c.l.b16 %v8433
        %v8524 = vunpack.c.l.b16 %v8434
        %v8525 = vunpack.c.l.b16 %v8435
        %v8526 = vunpack.c.l.b16 %v8436
        %v8527 = vunpack.c.l.b16 %v8437
        %v8528 = vunpack.c.l.b16 %v8438
        %v8529 = vpack.c.b16 %v8514, %v8513
        %v8530 = vpack.c.b16 %v8516, %v8515
        %v8531 = vpack.c.b16 %v8518, %v8517
        %v8532 = vpack.c.b16 %v8520, %v8519
        %v8533 = vpack.c.b16 %v8522, %v8521
        %v8534 = vpack.c.b16 %v8524, %v8523
        %v8535 = vpack.c.b16 %v8526, %v8525
        %v8536 = vpack.c.b16 %v8528, %v8527
        %8545 = vmatprep.subr.bf16.mxu0 0
        %8546 = vmatpush1.bf16.msra.mxu0 %v8529
        %8547 = vmatprep.subr.bf16.mxu0 0
        %8548 = vmatpush1.bf16.msra.mxu0 %v8530
        %8549 = vmatprep.subr.bf16.mxu0 0
        %8550 = vmatpush1.bf16.msra.mxu0 %v8531
        %8551 = vmatprep.subr.bf16.mxu0 0
        %8552 = vmatpush1.bf16.msra.mxu0 %v8532
        %8553 = vmatprep.subr.bf16.mxu0 0
        %8554 = vmatpush1.bf16.msra.mxu0 %v8533
        %8555 = vmatprep.subr.bf16.mxu0 0
        %8556 = vmatpush1.bf16.msra.mxu0 %v8534
        %8557 = vmatprep.subr.bf16.mxu0 0
        %8558 = vmatpush1.bf16.msra.mxu0 %v8535
        %8559 = vmatprep.subr.bf16.mxu0 0
        %8560 = vmatpush1.bf16.msra.mxu0 %v8536
        %8561 = vmatprep.subr.bf16.mxu0 0
        %8562 = vmatpush1.bf16.msra.mxu0 0
        %8563 = vmatprep.subr.bf16.mxu0 0
        %8564 = vmatpush1.bf16.msra.mxu0 0
        %8565 = vmatprep.subr.bf16.mxu0 0
        %8566 = vmatpush1.bf16.msra.mxu0 0
        %8567 = vmatprep.subr.bf16.mxu0 0
        %8568 = vmatpush1.bf16.msra.mxu0 0
        %8569 = vmatprep.subr.bf16.mxu0 0
        %8570 = vmatpush1.bf16.msra.mxu0 0
        %8571 = vmatprep.subr.bf16.mxu0 0
        %8572 = vmatpush1.bf16.msra.mxu0 0
        %8573 = vmatprep.subr.bf16.mxu0 0
        %8574 = vmatpush1.bf16.msra.mxu0 0
        %8575 = vmatprep.subr.bf16.mxu0 0
        %8576 = vmatpush1.bf16.msra.mxu0 0
        %8577 = vmatprep.mubr.bf16.mxu0 0
        %8578 = vmatmul.mubr.bf16.gmra.mrb[0].mxu0 %v8450
        %v8579 = vpop.f32.mrb[0].mxu0
        %v8580 = vadd.f32 0.0, %v8579
        %v8581 = vpop.f32.mrb[0].mxu0
        %v8582 = vpop.f32.mrb[0].mxu0
        %v8583 = vadd.f32 0.0, %v8582
        %v8584 = vpop.f32.mrb[0].mxu0
        %8585 = vmatprep.mubr.bf16.mxu0 0
        %8586 = vmatmul.mubr.bf16.gmra.mrb[0].mxu0 %v8458
        %v8587 = vpop.f32.mrb[0].mxu0
        %v8588 = vadd.f32 0.0, %v8587
        %v8589 = vpop.f32.mrb[0].mxu0
        %v8590 = vpop.f32.mrb[0].mxu0
        %v8591 = vadd.f32 0.0, %v8590
        %v8592 = vpop.f32.mrb[0].mxu0
        %8593 = vmatprep.mubr.bf16.mxu0 0
        %8594 = vmatmul.mubr.bf16.gmra.mrb[0].mxu0 %v8466
        %v8595 = vpop.f32.mrb[0].mxu0
        %v8596 = vadd.f32 0.0, %v8595
        %v8597 = vpop.f32.mrb[0].mxu0
        %v8598 = vpop.f32.mrb[0].mxu0
        %v8599 = vadd.f32 0.0, %v8598
        %v8600 = vpop.f32.mrb[0].mxu0
        %8601 = vmatprep.mubr.bf16.mxu0 0
        %8602 = vmatmul.mubr.bf16.gmra.mrb[0].mxu0 %v8474
        %v8603 = vpop.f32.mrb[0].mxu0
        %v8604 = vadd.f32 0.0, %v8603
        %v8605 = vpop.f32.mrb[0].mxu0
        %v8606 = vpop.f32.mrb[0].mxu0
        %v8607 = vadd.f32 0.0, %v8606
        %v8608 = vpop.f32.mrb[0].mxu0
        %8609 = vmatprep.mubr.bf16.mxu0 0
        %8610 = vmatmul.mubr.bf16.gmra.mrb[0].mxu0 %v8482
        %v8611 = vpop.f32.mrb[0].mxu0
        %v8612 = vadd.f32 0.0, %v8611
        %v8613 = vpop.f32.mrb[0].mxu0
        %v8614 = vpop.f32.mrb[0].mxu0
        %v8615 = vadd.f32 0.0, %v8614
        %v8616 = vpop.f32.mrb[0].mxu0
        %8617 = vmatprep.mubr.bf16.mxu0 0
        %8618 = vmatmul.mubr.bf16.gmra.mrb[0].mxu0 %v8490
        %v8619 = vpop.f32.mrb[0].mxu0
        %v8620 = vadd.f32 0.0, %v8619
        %v8621 = vpop.f32.mrb[0].mxu0
        %v8622 = vpop.f32.mrb[0].mxu0
        %v8623 = vadd.f32 0.0, %v8622
        %v8624 = vpop.f32.mrb[0].mxu0
        %8625 = vdwg.mxu0
        %v8626 = vadd.f32 %v8404, %v8580
        %v8627 = vadd.f32 %v8405, %v8583
        %v8628 = vadd.f32 %v8406, %v8588
        %v8629 = vadd.f32 %v8407, %v8591
        %v8630 = vadd.f32 %v8408, %v8596
        %v8631 = vadd.f32 %v8409, %v8599
        %v8632 = vadd.f32 %v8410, %v8604
        %v8633 = vadd.f32 %v8411, %v8607
        %v8634 = vadd.f32 %v8412, %v8612
        %v8635 = vadd.f32 %v8413, %v8615
        %v8636 = vadd.f32 %v8414, %v8620
        %v8637 = vadd.f32 %v8415, %v8623
        %v8638 = vld [vmem:[%s1752] sm:$0xf]
        %v8639 = vld [vmem:[%s1752 + $0x4] sm:$0xf]
        %v8640 = vld [vmem:[%s1752 + $0x8] sm:$0xf]
        %v8641 = vld [vmem:[%s1752 + $0xc] sm:$0xf]
        %v8642 = vld [vmem:[%s1752 + $0x10] sm:$0xf]
        %v8643 = vld [vmem:[%s1752 + $0x14] sm:$0xf]
        %v8644 = vld [vmem:[%s1752 + $0x18] sm:$0xf]
        %v8645 = vld [vmem:[%s1752 + $0x1c] sm:$0xf]
        %v8646 = vld [vmem:[%s1752 + $0x20] sm:$0xf]
        %v8647 = vld [vmem:[%s1752 + $0x24] sm:$0xf]
        %v8648 = vld [vmem:[%s1752 + $0x28] sm:$0xf]
        %v8649 = vld [vmem:[%s1752 + $0x2c] sm:$0xf]
        %v8650 = vld [vmem:[%s1752 + $0x30] sm:$0xf]
        %v8651 = vld [vmem:[%s1752 + $0x34] sm:$0xf]
        %v8652 = vld [vmem:[%s1752 + $0x38] sm:$0xf]
        %v8653 = vld [vmem:[%s1752 + $0x3c] sm:$0xf]
        %v8670 = vunpack.c.l.b16 %v8638
        %v8671 = vunpack.c.l.b16 %v8639
        %v8672 = vunpack.c.l.b16 %v8640
        %v8673 = vunpack.c.l.b16 %v8641
        %v8674 = vunpack.c.l.b16 %v8642
        %v8675 = vunpack.c.l.b16 %v8643
        %v8676 = vunpack.c.l.b16 %v8644
        %v8677 = vunpack.c.l.b16 %v8645
        %v8678 = vunpack.c.l.b16 %v8646
        %v8679 = vunpack.c.l.b16 %v8647
        %v8680 = vunpack.c.l.b16 %v8648
        %v8681 = vunpack.c.l.b16 %v8649
        %v8682 = vunpack.c.l.b16 %v8650
        %v8683 = vunpack.c.l.b16 %v8651
        %v8684 = vunpack.c.l.b16 %v8652
        %v8685 = vunpack.c.l.b16 %v8653
        %v8686 = vpack.c.b16 %v8671, %v8670
        %v8687 = vpack.c.b16 %v8673, %v8672
        %v8688 = vpack.c.b16 %v8675, %v8674
        %v8689 = vpack.c.b16 %v8677, %v8676
        %v8690 = vpack.c.b16 %v8679, %v8678
        %v8691 = vpack.c.b16 %v8681, %v8680
        %v8692 = vpack.c.b16 %v8683, %v8682
        %v8693 = vpack.c.b16 %v8685, %v8684
        %8702 = vmatprep.subr.bf16.mxu0 0
        %8703 = vmatpush1.bf16.msra.mxu0 %v8686
        %8704 = vmatprep.subr.bf16.mxu0 0
        %8705 = vmatpush1.bf16.msra.mxu0 %v8687
        %8706 = vmatprep.subr.bf16.mxu0 0
        %8707 = vmatpush1.bf16.msra.mxu0 %v8688
        %8708 = vmatprep.subr.bf16.mxu0 0
        %8709 = vmatpush1.bf16.msra.mxu0 %v8689
        %8710 = vmatprep.subr.bf16.mxu0 0
        %8711 = vmatpush1.bf16.msra.mxu0 %v8690
        %8712 = vmatprep.subr.bf16.mxu0 0
        %8713 = vmatpush1.bf16.msra.mxu0 %v8691
        %8714 = vmatprep.subr.bf16.mxu0 0
        %8715 = vmatpush1.bf16.msra.mxu0 %v8692
        %8716 = vmatprep.subr.bf16.mxu0 0
        %8717 = vmatpush1.bf16.msra.mxu0 %v8693
        %8718 = vmatprep.subr.bf16.mxu0 0
        %8719 = vmatpush1.bf16.msra.mxu0 0
        %8720 = vmatprep.subr.bf16.mxu0 0
        %8721 = vmatpush1.bf16.msra.mxu0 0
        %8722 = vmatprep.subr.bf16.mxu0 0
        %8723 = vmatpush1.bf16.msra.mxu0 0
        %8724 = vmatprep.subr.bf16.mxu0 0
        %8725 = vmatpush1.bf16.msra.mxu0 0
        %8726 = vmatprep.subr.bf16.mxu0 0
        %8727 = vmatpush1.bf16.msra.mxu0 0
        %8728 = vmatprep.subr.bf16.mxu0 0
        %8729 = vmatpush1.bf16.msra.mxu0 0
        %8730 = vmatprep.subr.bf16.mxu0 0
        %8731 = vmatpush1.bf16.msra.mxu0 0
        %8732 = vmatprep.subr.bf16.mxu0 0
        %8733 = vmatpush1.bf16.msra.mxu0 0
        %8734 = vmatprep.mubr.bf16.mxu0 0
        %8735 = vmatmul.mubr.bf16.gmra.mrb[0].mxu0 %v8417
        %v8736 = vpop.f32.mrb[0].mxu0
        %v8737 = vadd.f32 0.0, %v8736
        %v8738 = vpop.f32.mrb[0].mxu0
        %v8739 = vpop.f32.mrb[0].mxu0
        %v8740 = vadd.f32 0.0, %v8739
        %v8741 = vpop.f32.mrb[0].mxu0
        %8742 = vmatprep.mubr.bf16.mxu0 0
        %8743 = vmatmul.mubr.bf16.gmra.mrb[0].mxu0 %v8418
        %v8744 = vpop.f32.mrb[0].mxu0
        %v8745 = vadd.f32 0.0, %v8744
        %v8746 = vpop.f32.mrb[0].mxu0
        %v8747 = vpop.f32.mrb[0].mxu0
        %v8748 = vadd.f32 0.0, %v8747
        %v8749 = vpop.f32.mrb[0].mxu0
        %8750 = vmatprep.mubr.bf16.mxu0 0
        %8751 = vmatmul.mubr.bf16.gmra.mrb[0].mxu0 %v8419
        %v8752 = vpop.f32.mrb[0].mxu0
        %v8753 = vadd.f32 0.0, %v8752
        %v8754 = vpop.f32.mrb[0].mxu0
        %v8755 = vpop.f32.mrb[0].mxu0
        %v8756 = vadd.f32 0.0, %v8755
        %v8757 = vpop.f32.mrb[0].mxu0
        %8758 = vmatprep.mubr.bf16.mxu0 0
        %8759 = vmatmul.mubr.bf16.gmra.mrb[0].mxu0 %v8420
        %v8760 = vpop.f32.mrb[0].mxu0
        %v8761 = vadd.f32 0.0, %v8760
        %v8762 = vpop.f32.mrb[0].mxu0
        %v8763 = vpop.f32.mrb[0].mxu0
        %v8764 = vadd.f32 0.0, %v8763
        %v8765 = vpop.f32.mrb[0].mxu0
        %8766 = vmatprep.mubr.bf16.mxu0 0
        %8767 = vmatmul.mubr.bf16.gmra.mrb[0].mxu0 %v8421
        %v8768 = vpop.f32.mrb[0].mxu0
        %v8769 = vadd.f32 0.0, %v8768
        %v8770 = vpop.f32.mrb[0].mxu0
        %v8771 = vpop.f32.mrb[0].mxu0
        %v8772 = vadd.f32 0.0, %v8771
        %v8773 = vpop.f32.mrb[0].mxu0
        %8774 = vmatprep.mubr.bf16.mxu0 0
        %8775 = vmatmul.mubr.bf16.gmra.mrb[0].mxu0 %v8422
        %v8776 = vpop.f32.mrb[0].mxu0
        %v8777 = vadd.f32 0.0, %v8776
        %v8778 = vpop.f32.mrb[0].mxu0
        %v8779 = vpop.f32.mrb[0].mxu0
        %v8780 = vadd.f32 0.0, %v8779
        %v8781 = vpop.f32.mrb[0].mxu0
        %8782 = vdwg.mxu0
        %v8783 = vadd.f32 %v8626, %v8737
        %v8784 = vadd.f32 %v8627, %v8740
        %v8785 = vadd.f32 %v8628, %v8745
        %v8786 = vadd.f32 %v8629, %v8748
        %v8787 = vadd.f32 %v8630, %v8753
        %v8788 = vadd.f32 %v8631, %v8756
        %v8789 = vadd.f32 %v8632, %v8761
        %v8790 = vadd.f32 %v8633, %v8764
        %v8791 = vadd.f32 %v8634, %v8769
        %v8792 = vadd.f32 %v8635, %v8772
        %v8793 = vadd.f32 %v8636, %v8777
        %v8794 = vadd.f32 %v8637, %v8780
        %v8795 = vld [vmem:[#allocation2 + $0xa0] sm:$0xff]
        %v8796 = vld [vmem:[#allocation2 + $0xa8] sm:$0xff]
        %v8797 = vld [vmem:[#allocation2 + $0xb0] sm:$0xff]
        %v8798 = vld [vmem:[#allocation2 + $0xb8] sm:$0xff]
        %v8799 = vld [vmem:[#allocation2 + $0xc0] sm:$0xff]
        %v8800 = vld [vmem:[#allocation2 + $0xc8] sm:$0xff]
        %v8801 = vld [vmem:[#allocation2 + $0xd0] sm:$0x1]
        %v8802 = vld [vmem:[%s1917] sm:$0xf]
        %v8803 = vld [vmem:[%s1917 + $0x4] sm:$0xf]
        %v8804 = vld [vmem:[%s1917 + $0x8] sm:$0xf]
        %v8805 = vld [vmem:[%s1917 + $0xc] sm:$0xf]
        %v8806 = vld [vmem:[%s1917 + $0x10] sm:$0xf]
        %v8807 = vld [vmem:[%s1917 + $0x14] sm:$0xf]
        %v8808 = vld [vmem:[%s1917 + $0x18] sm:$0xf]
        %v8809 = vld [vmem:[%s1917 + $0x1c] sm:$0xf]
        %v8810 = vld [vmem:[%s1917 + $0x20] sm:$0xf]
        %v8811 = vld [vmem:[%s1917 + $0x24] sm:$0xf]
        %v8812 = vld [vmem:[%s1917 + $0x28] sm:$0xf]
        %v8813 = vld [vmem:[%s1917 + $0x2c] sm:$0xf]
        %v8814 = vld [vmem:[%s1917 + $0x30] sm:$0xf]
        %v8815 = vld [vmem:[%s1917 + $0x34] sm:$0xf]
        %v8816 = vld [vmem:[%s1917 + $0x38] sm:$0xf]
        %v8817 = vld [vmem:[%s1917 + $0x3c] sm:$0xf]
        %v8819 = vshrl.u32 %v8795, 16
        %v8821 = vshll.u32 %v8795, 16
        %v8823 = vrot.slane %v8821, 1
        %v8824 = vor.u32 %v8819, %v8823
        %v8826 = vshll.u32 %v8796, 16
        %v8828 = vrot.slane %v8826, 1
        %v8829 = vsel %vm1934, %v8824, %v8828
        %v8830 = vshrl.u32 %v8796, 16
        %v8832 = vor.u32 %v8830, %v8828
        %v8834 = vshll.u32 %v8797, 16
        %v8836 = vrot.slane %v8834, 1
        %v8837 = vsel %vm1934, %v8832, %v8836
        %v8838 = vshrl.u32 %v8797, 16
        %v8840 = vor.u32 %v8838, %v8836
        %v8842 = vshll.u32 %v8798, 16
        %v8844 = vrot.slane %v8842, 1
        %v8845 = vsel %vm1934, %v8840, %v8844
        %v8846 = vshrl.u32 %v8798, 16
        %v8848 = vor.u32 %v8846, %v8844
        %v8850 = vshll.u32 %v8799, 16
        %v8852 = vrot.slane %v8850, 1
        %v8853 = vsel %vm1934, %v8848, %v8852
        %v8854 = vshrl.u32 %v8799, 16
        %v8856 = vor.u32 %v8854, %v8852
        %v8858 = vshll.u32 %v8800, 16
        %v8860 = vrot.slane %v8858, 1
        %v8861 = vsel %vm1934, %v8856, %v8860
        %v8862 = vshrl.u32 %v8800, 16
        %v8864 = vor.u32 %v8862, %v8860
        %v8866 = vshll.u32 %v8801, 16
        %v8868 = vrot.slane %v8866, 1
        %v8869 = vsel %vm1934, %v8864, %v8868
        %v8892 = vunpack.c.l.b16 %v8802
        %v8893 = vunpack.c.l.b16 %v8803
        %v8894 = vunpack.c.l.b16 %v8804
        %v8895 = vunpack.c.l.b16 %v8805
        %v8896 = vunpack.c.l.b16 %v8806
        %v8897 = vunpack.c.l.b16 %v8807
        %v8898 = vunpack.c.l.b16 %v8808
        %v8899 = vunpack.c.l.b16 %v8809
        %v8900 = vunpack.c.l.b16 %v8810
        %v8901 = vunpack.c.l.b16 %v8811
        %v8902 = vunpack.c.l.b16 %v8812
        %v8903 = vunpack.c.l.b16 %v8813
        %v8904 = vunpack.c.l.b16 %v8814
        %v8905 = vunpack.c.l.b16 %v8815
        %v8906 = vunpack.c.l.b16 %v8816
        %v8907 = vunpack.c.l.b16 %v8817
        %v8908 = vpack.c.b16 %v8893, %v8892
        %v8909 = vpack.c.b16 %v8895, %v8894
        %v8910 = vpack.c.b16 %v8897, %v8896
        %v8911 = vpack.c.b16 %v8899, %v8898
        %v8912 = vpack.c.b16 %v8901, %v8900
        %v8913 = vpack.c.b16 %v8903, %v8902
        %v8914 = vpack.c.b16 %v8905, %v8904
        %v8915 = vpack.c.b16 %v8907, %v8906
        %8924 = vmatprep.subr.bf16.mxu0 0
        %8925 = vmatpush1.bf16.msra.mxu0 %v8908
        %8926 = vmatprep.subr.bf16.mxu0 0
        %8927 = vmatpush1.bf16.msra.mxu0 %v8909
        %8928 = vmatprep.subr.bf16.mxu0 0
        %8929 = vmatpush1.bf16.msra.mxu0 %v8910
        %8930 = vmatprep.subr.bf16.mxu0 0
        %8931 = vmatpush1.bf16.msra.mxu0 %v8911
        %8932 = vmatprep.subr.bf16.mxu0 0
        %8933 = vmatpush1.bf16.msra.mxu0 %v8912
        %8934 = vmatprep.subr.bf16.mxu0 0
        %8935 = vmatpush1.bf16.msra.mxu0 %v8913
        %8936 = vmatprep.subr.bf16.mxu0 0
        %8937 = vmatpush1.bf16.msra.mxu0 %v8914
        %8938 = vmatprep.subr.bf16.mxu0 0
        %8939 = vmatpush1.bf16.msra.mxu0 %v8915
        %8940 = vmatprep.subr.bf16.mxu0 0
        %8941 = vmatpush1.bf16.msra.mxu0 0
        %8942 = vmatprep.subr.bf16.mxu0 0
        %8943 = vmatpush1.bf16.msra.mxu0 0
        %8944 = vmatprep.subr.bf16.mxu0 0
        %8945 = vmatpush1.bf16.msra.mxu0 0
        %8946 = vmatprep.subr.bf16.mxu0 0
        %8947 = vmatpush1.bf16.msra.mxu0 0
        %8948 = vmatprep.subr.bf16.mxu0 0
        %8949 = vmatpush1.bf16.msra.mxu0 0
        %8950 = vmatprep.subr.bf16.mxu0 0
        %8951 = vmatpush1.bf16.msra.mxu0 0
        %8952 = vmatprep.subr.bf16.mxu0 0
        %8953 = vmatpush1.bf16.msra.mxu0 0
        %8954 = vmatprep.subr.bf16.mxu0 0
        %8955 = vmatpush1.bf16.msra.mxu0 0
        %8956 = vmatprep.mubr.bf16.mxu0 0
        %8957 = vmatmul.mubr.bf16.gmra.mrb[0].mxu0 %v8829
        %v8958 = vpop.f32.mrb[0].mxu0
        %v8959 = vadd.f32 0.0, %v8958
        %v8960 = vpop.f32.mrb[0].mxu0
        %v8961 = vpop.f32.mrb[0].mxu0
        %v8962 = vadd.f32 0.0, %v8961
        %v8963 = vpop.f32.mrb[0].mxu0
        %8964 = vmatprep.mubr.bf16.mxu0 0
        %8965 = vmatmul.mubr.bf16.gmra.mrb[0].mxu0 %v8837
        %v8966 = vpop.f32.mrb[0].mxu0
        %v8967 = vadd.f32 0.0, %v8966
        %v8968 = vpop.f32.mrb[0].mxu0
        %v8969 = vpop.f32.mrb[0].mxu0
        %v8970 = vadd.f32 0.0, %v8969
        %v8971 = vpop.f32.mrb[0].mxu0
        %8972 = vmatprep.mubr.bf16.mxu0 0
        %8973 = vmatmul.mubr.bf16.gmra.mrb[0].mxu0 %v8845
        %v8974 = vpop.f32.mrb[0].mxu0
        %v8975 = vadd.f32 0.0, %v8974
        %v8976 = vpop.f32.mrb[0].mxu0
        %v8977 = vpop.f32.mrb[0].mxu0
        %v8978 = vadd.f32 0.0, %v8977
        %v8979 = vpop.f32.mrb[0].mxu0
        %8980 = vmatprep.mubr.bf16.mxu0 0
        %8981 = vmatmul.mubr.bf16.gmra.mrb[0].mxu0 %v8853
        %v8982 = vpop.f32.mrb[0].mxu0
        %v8983 = vadd.f32 0.0, %v8982
        %v8984 = vpop.f32.mrb[0].mxu0
        %v8985 = vpop.f32.mrb[0].mxu0
        %v8986 = vadd.f32 0.0, %v8985
        %v8987 = vpop.f32.mrb[0].mxu0
        %8988 = vmatprep.mubr.bf16.mxu0 0
        %8989 = vmatmul.mubr.bf16.gmra.mrb[0].mxu0 %v8861
        %v8990 = vpop.f32.mrb[0].mxu0
        %v8991 = vadd.f32 0.0, %v8990
        %v8992 = vpop.f32.mrb[0].mxu0
        %v8993 = vpop.f32.mrb[0].mxu0
        %v8994 = vadd.f32 0.0, %v8993
        %v8995 = vpop.f32.mrb[0].mxu0
        %8996 = vmatprep.mubr.bf16.mxu0 0
        %8997 = vmatmul.mubr.bf16.gmra.mrb[0].mxu0 %v8869
        %v8998 = vpop.f32.mrb[0].mxu0
        %v8999 = vadd.f32 0.0, %v8998
        %v9000 = vpop.f32.mrb[0].mxu0
        %v9001 = vpop.f32.mrb[0].mxu0
        %v9002 = vadd.f32 0.0, %v9001
        %v9003 = vpop.f32.mrb[0].mxu0
        %9004 = vdwg.mxu0
        %v9005 = vadd.f32 %v8783, %v8959
        %v9006 = vadd.f32 %v8784, %v8962
        %v9007 = vadd.f32 %v8785, %v8967
        %v9008 = vadd.f32 %v8786, %v8970
        %v9009 = vadd.f32 %v8787, %v8975
        %v9010 = vadd.f32 %v8788, %v8978
        %v9011 = vadd.f32 %v8789, %v8983
        %v9012 = vadd.f32 %v8790, %v8986
        %v9013 = vadd.f32 %v8791, %v8991
        %v9014 = vadd.f32 %v8792, %v8994
        %v9015 = vadd.f32 %v8793, %v8999
        %v9016 = vadd.f32 %v8794, %v9002
        %v9017 = vld [vmem:[#allocation2 + $0xa8] sm:$0xf8]
        %v9018 = vld [vmem:[#allocation2 + $0xb0] sm:$0xff]
        %v9019 = vld [vmem:[#allocation2 + $0xb8] sm:$0xff]
        %v9020 = vld [vmem:[#allocation2 + $0xc0] sm:$0xff]
        %v9021 = vld [vmem:[#allocation2 + $0xc8] sm:$0xff]
        %v9022 = vld [vmem:[#allocation2 + $0xd0] sm:$0xff]
        %v9023 = vld [vmem:[#allocation2 + $0xd8] sm:$0xf]
        %v9024 = vld [vmem:[%s2141] sm:$0xf]
        %v9025 = vld [vmem:[%s2141 + $0x4] sm:$0xf]
        %v9026 = vld [vmem:[%s2141 + $0x8] sm:$0xf]
        %v9027 = vld [vmem:[%s2141 + $0xc] sm:$0xf]
        %v9028 = vld [vmem:[%s2141 + $0x10] sm:$0xf]
        %v9029 = vld [vmem:[%s2141 + $0x14] sm:$0xf]
        %v9030 = vld [vmem:[%s2141 + $0x18] sm:$0xf]
        %v9031 = vld [vmem:[%s2141 + $0x1c] sm:$0xf]
        %v9032 = vld [vmem:[%s2141 + $0x20] sm:$0xf]
        %v9033 = vld [vmem:[%s2141 + $0x24] sm:$0xf]
        %v9034 = vld [vmem:[%s2141 + $0x28] sm:$0xf]
        %v9035 = vld [vmem:[%s2141 + $0x2c] sm:$0xf]
        %v9036 = vld [vmem:[%s2141 + $0x30] sm:$0xf]
        %v9037 = vld [vmem:[%s2141 + $0x34] sm:$0xf]
        %v9038 = vld [vmem:[%s2141 + $0x38] sm:$0xf]
        %v9039 = vld [vmem:[%s2141 + $0x3c] sm:$0xf]
        %v9041 = vshrl.u32 %v9017, 16
        %v9043 = vrot.slane %v9041, 3
        %v9044 = vshll.u32 %v9017, 16
        %v9046 = vrot.slane %v9044, 4
        %v9047 = vor.u32 %v9043, %v9046
        %v9049 = vshrl.u32 %v9018, 16
        %v9051 = vrot.slane %v9049, 3
        %v9052 = vshll.u32 %v9018, 16
        %v9054 = vrot.slane %v9052, 4
        %v9055 = vor.u32 %v9051, %v9054
        %v9056 = vsel %vm1127, %v9047, %v9055
        %v9058 = vshrl.u32 %v9019, 16
        %v9060 = vrot.slane %v9058, 3
        %v9061 = vshll.u32 %v9019, 16
        %v9063 = vrot.slane %v9061, 4
        %v9064 = vor.u32 %v9060, %v9063
        %v9065 = vsel %vm1127, %v9055, %v9064
        %v9067 = vshrl.u32 %v9020, 16
        %v9069 = vrot.slane %v9067, 3
        %v9070 = vshll.u32 %v9020, 16
        %v9072 = vrot.slane %v9070, 4
        %v9073 = vor.u32 %v9069, %v9072
        %v9074 = vsel %vm1127, %v9064, %v9073
        %v9076 = vshrl.u32 %v9021, 16
        %v9078 = vrot.slane %v9076, 3
        %v9079 = vshll.u32 %v9021, 16
        %v9081 = vrot.slane %v9079, 4
        %v9082 = vor.u32 %v9078, %v9081
        %v9083 = vsel %vm1127, %v9073, %v9082
        %v9085 = vshrl.u32 %v9022, 16
        %v9087 = vrot.slane %v9085, 3
        %v9088 = vshll.u32 %v9022, 16
        %v9090 = vrot.slane %v9088, 4
        %v9091 = vor.u32 %v9087, %v9090
        %v9092 = vsel %vm1127, %v9082, %v9091
        %v9094 = vshrl.u32 %v9023, 16
        %v9096 = vrot.slane %v9094, 3
        %v9097 = vshll.u32 %v9023, 16
        %v9099 = vrot.slane %v9097, 4
        %v9100 = vor.u32 %v9096, %v9099
        %v9101 = vsel %vm1127, %v9091, %v9100
        %v9124 = vunpack.c.l.b16 %v9024
        %v9125 = vunpack.c.l.b16 %v9025
        %v9126 = vunpack.c.l.b16 %v9026
        %v9127 = vunpack.c.l.b16 %v9027
        %v9128 = vunpack.c.l.b16 %v9028
        %v9129 = vunpack.c.l.b16 %v9029
        %v9130 = vunpack.c.l.b16 %v9030
        %v9131 = vunpack.c.l.b16 %v9031
        %v9132 = vunpack.c.l.b16 %v9032
        %v9133 = vunpack.c.l.b16 %v9033
        %v9134 = vunpack.c.l.b16 %v9034
        %v9135 = vunpack.c.l.b16 %v9035
        %v9136 = vunpack.c.l.b16 %v9036
        %v9137 = vunpack.c.l.b16 %v9037
        %v9138 = vunpack.c.l.b16 %v9038
        %v9139 = vunpack.c.l.b16 %v9039
        %v9140 = vpack.c.b16 %v9125, %v9124
        %v9141 = vpack.c.b16 %v9127, %v9126
        %v9142 = vpack.c.b16 %v9129, %v9128
        %v9143 = vpack.c.b16 %v9131, %v9130
        %v9144 = vpack.c.b16 %v9133, %v9132
        %v9145 = vpack.c.b16 %v9135, %v9134
        %v9146 = vpack.c.b16 %v9137, %v9136
        %v9147 = vpack.c.b16 %v9139, %v9138
        %9156 = vmatprep.subr.bf16.mxu0 0
        %9157 = vmatpush1.bf16.msra.mxu0 %v9140
        %9158 = vmatprep.subr.bf16.mxu0 0
        %9159 = vmatpush1.bf16.msra.mxu0 %v9141
        %9160 = vmatprep.subr.bf16.mxu0 0
        %9161 = vmatpush1.bf16.msra.mxu0 %v9142
        %9162 = vmatprep.subr.bf16.mxu0 0
        %9163 = vmatpush1.bf16.msra.mxu0 %v9143
        %9164 = vmatprep.subr.bf16.mxu0 0
        %9165 = vmatpush1.bf16.msra.mxu0 %v9144
        %9166 = vmatprep.subr.bf16.mxu0 0
        %9167 = vmatpush1.bf16.msra.mxu0 %v9145
        %9168 = vmatprep.subr.bf16.mxu0 0
        %9169 = vmatpush1.bf16.msra.mxu0 %v9146
        %9170 = vmatprep.subr.bf16.mxu0 0
        %9171 = vmatpush1.bf16.msra.mxu0 %v9147
        %9172 = vmatprep.subr.bf16.mxu0 0
        %9173 = vmatpush1.bf16.msra.mxu0 0
        %9174 = vmatprep.subr.bf16.mxu0 0
        %9175 = vmatpush1.bf16.msra.mxu0 0
        %9176 = vmatprep.subr.bf16.mxu0 0
        %9177 = vmatpush1.bf16.msra.mxu0 0
        %9178 = vmatprep.subr.bf16.mxu0 0
        %9179 = vmatpush1.bf16.msra.mxu0 0
        %9180 = vmatprep.subr.bf16.mxu0 0
        %9181 = vmatpush1.bf16.msra.mxu0 0
        %9182 = vmatprep.subr.bf16.mxu0 0
        %9183 = vmatpush1.bf16.msra.mxu0 0
        %9184 = vmatprep.subr.bf16.mxu0 0
        %9185 = vmatpush1.bf16.msra.mxu0 0
        %9186 = vmatprep.subr.bf16.mxu0 0
        %9187 = vmatpush1.bf16.msra.mxu0 0
        %9188 = vmatprep.mubr.bf16.mxu0 0
        %9189 = vmatmul.mubr.bf16.gmra.mrb[0].mxu0 %v9056
        %v9190 = vpop.f32.mrb[0].mxu0
        %v9191 = vadd.f32 0.0, %v9190
        %v9192 = vpop.f32.mrb[0].mxu0
        %v9193 = vpop.f32.mrb[0].mxu0
        %v9194 = vadd.f32 0.0, %v9193
        %v9195 = vpop.f32.mrb[0].mxu0
        %9196 = vmatprep.mubr.bf16.mxu0 0
        %9197 = vmatmul.mubr.bf16.gmra.mrb[0].mxu0 %v9065
        %v9198 = vpop.f32.mrb[0].mxu0
        %v9199 = vadd.f32 0.0, %v9198
        %v9200 = vpop.f32.mrb[0].mxu0
        %v9201 = vpop.f32.mrb[0].mxu0
        %v9202 = vadd.f32 0.0, %v9201
        %v9203 = vpop.f32.mrb[0].mxu0
        %9204 = vmatprep.mubr.bf16.mxu0 0
        %9205 = vmatmul.mubr.bf16.gmra.mrb[0].mxu0 %v9074
        %v9206 = vpop.f32.mrb[0].mxu0
        %v9207 = vadd.f32 0.0, %v9206
        %v9208 = vpop.f32.mrb[0].mxu0
        %v9209 = vpop.f32.mrb[0].mxu0
        %v9210 = vadd.f32 0.0, %v9209
        %v9211 = vpop.f32.mrb[0].mxu0
        %9212 = vmatprep.mubr.bf16.mxu0 0
        %9213 = vmatmul.mubr.bf16.gmra.mrb[0].mxu0 %v9083
        %v9214 = vpop.f32.mrb[0].mxu0
        %v9215 = vadd.f32 0.0, %v9214
        %v9216 = vpop.f32.mrb[0].mxu0
        %v9217 = vpop.f32.mrb[0].mxu0
        %v9218 = vadd.f32 0.0, %v9217
        %v9219 = vpop.f32.mrb[0].mxu0
        %9220 = vmatprep.mubr.bf16.mxu0 0
        %9221 = vmatmul.mubr.bf16.gmra.mrb[0].mxu0 %v9092
        %v9222 = vpop.f32.mrb[0].mxu0
        %v9223 = vadd.f32 0.0, %v9222
        %v9224 = vpop.f32.mrb[0].mxu0
        %v9225 = vpop.f32.mrb[0].mxu0
        %v9226 = vadd.f32 0.0, %v9225
        %v9227 = vpop.f32.mrb[0].mxu0
        %9228 = vmatprep.mubr.bf16.mxu0 0
        %9229 = vmatmul.mubr.bf16.gmra.mrb[0].mxu0 %v9101
        %v9230 = vpop.f32.mrb[0].mxu0
        %v9231 = vadd.f32 0.0, %v9230
        %v9232 = vpop.f32.mrb[0].mxu0
        %v9233 = vpop.f32.mrb[0].mxu0
        %v9234 = vadd.f32 0.0, %v9233
        %v9235 = vpop.f32.mrb[0].mxu0
        %9236 = vdwg.mxu0
        %v9237 = vadd.f32 %v9005, %v9191
        %v9238 = vadd.f32 %v9006, %v9194
        %v9239 = vadd.f32 %v9007, %v9199
        %v9240 = vadd.f32 %v9008, %v9202
        %v9241 = vadd.f32 %v9009, %v9207
        %v9242 = vadd.f32 %v9010, %v9210
        %v9243 = vadd.f32 %v9011, %v9215
        %v9244 = vadd.f32 %v9012, %v9218
        %v9245 = vadd.f32 %v9013, %v9223
        %v9246 = vadd.f32 %v9014, %v9226
        %v9247 = vadd.f32 %v9015, %v9231
        %v9248 = vadd.f32 %v9016, %v9234
        %v9249 = vld [vmem:[#allocation2 + $0xa8] sm:$0xf0]
        %v9250 = vld [vmem:[%s2368] sm:$0xf]
        %v9251 = vld [vmem:[%s2368 + $0x4] sm:$0xf]
        %v9252 = vld [vmem:[%s2368 + $0x8] sm:$0xf]
        %v9253 = vld [vmem:[%s2368 + $0xc] sm:$0xf]
        %v9254 = vld [vmem:[%s2368 + $0x10] sm:$0xf]
        %v9255 = vld [vmem:[%s2368 + $0x14] sm:$0xf]
        %v9256 = vld [vmem:[%s2368 + $0x18] sm:$0xf]
        %v9257 = vld [vmem:[%s2368 + $0x1c] sm:$0xf]
        %v9258 = vld [vmem:[%s2368 + $0x20] sm:$0xf]
        %v9259 = vld [vmem:[%s2368 + $0x24] sm:$0xf]
        %v9260 = vld [vmem:[%s2368 + $0x28] sm:$0xf]
        %v9261 = vld [vmem:[%s2368 + $0x2c] sm:$0xf]
        %v9262 = vld [vmem:[%s2368 + $0x30] sm:$0xf]
        %v9263 = vld [vmem:[%s2368 + $0x34] sm:$0xf]
        %v9264 = vld [vmem:[%s2368 + $0x38] sm:$0xf]
        %v9265 = vld [vmem:[%s2368 + $0x3c] sm:$0xf]
        %v9273 = vrot.slane %v9249, 4
        %v9274 = vrot.slane %v9018, 4
        %v9275 = vsel %vm978, %v9273, %v9274
        %v9276 = vrot.slane %v9019, 4
        %v9277 = vsel %vm978, %v9274, %v9276
        %v9278 = vrot.slane %v9020, 4
        %v9279 = vsel %vm978, %v9276, %v9278
        %v9280 = vrot.slane %v9021, 4
        %v9281 = vsel %vm978, %v9278, %v9280
        %v9282 = vrot.slane %v9022, 4
        %v9283 = vsel %vm978, %v9280, %v9282
        %v9284 = vrot.slane %v9023, 4
        %v9285 = vsel %vm978, %v9282, %v9284
        %v9308 = vunpack.c.l.b16 %v9250
        %v9309 = vunpack.c.l.b16 %v9251
        %v9310 = vunpack.c.l.b16 %v9252
        %v9311 = vunpack.c.l.b16 %v9253
        %v9312 = vunpack.c.l.b16 %v9254
        %v9313 = vunpack.c.l.b16 %v9255
        %v9314 = vunpack.c.l.b16 %v9256
        %v9315 = vunpack.c.l.b16 %v9257
        %v9316 = vunpack.c.l.b16 %v9258
        %v9317 = vunpack.c.l.b16 %v9259
        %v9318 = vunpack.c.l.b16 %v9260
        %v9319 = vunpack.c.l.b16 %v9261
        %v9320 = vunpack.c.l.b16 %v9262
        %v9321 = vunpack.c.l.b16 %v9263
        %v9322 = vunpack.c.l.b16 %v9264
        %v9323 = vunpack.c.l.b16 %v9265
        %v9324 = vpack.c.b16 %v9309, %v9308
        %v9325 = vpack.c.b16 %v9311, %v9310
        %v9326 = vpack.c.b16 %v9313, %v9312
        %v9327 = vpack.c.b16 %v9315, %v9314
        %v9328 = vpack.c.b16 %v9317, %v9316
        %v9329 = vpack.c.b16 %v9319, %v9318
        %v9330 = vpack.c.b16 %v9321, %v9320
        %v9331 = vpack.c.b16 %v9323, %v9322
        %9340 = vmatprep.subr.bf16.mxu0 0
        %9341 = vmatpush1.bf16.msra.mxu0 %v9324
        %9342 = vmatprep.subr.bf16.mxu0 0
        %9343 = vmatpush1.bf16.msra.mxu0 %v9325
        %9344 = vmatprep.subr.bf16.mxu0 0
        %9345 = vmatpush1.bf16.msra.mxu0 %v9326
        %9346 = vmatprep.subr.bf16.mxu0 0
        %9347 = vmatpush1.bf16.msra.mxu0 %v9327
        %9348 = vmatprep.subr.bf16.mxu0 0
        %9349 = vmatpush1.bf16.msra.mxu0 %v9328
        %9350 = vmatprep.subr.bf16.mxu0 0
        %9351 = vmatpush1.bf16.msra.mxu0 %v9329
        %9352 = vmatprep.subr.bf16.mxu0 0
        %9353 = vmatpush1.bf16.msra.mxu0 %v9330
        %9354 = vmatprep.subr.bf16.mxu0 0
        %9355 = vmatpush1.bf16.msra.mxu0 %v9331
        %9356 = vmatprep.subr.bf16.mxu0 0
        %9357 = vmatpush1.bf16.msra.mxu0 0
        %9358 = vmatprep.subr.bf16.mxu0 0
        %9359 = vmatpush1.bf16.msra.mxu0 0
        %9360 = vmatprep.subr.bf16.mxu0 0
        %9361 = vmatpush1.bf16.msra.mxu0 0
        %9362 = vmatprep.subr.bf16.mxu0 0
        %9363 = vmatpush1.bf16.msra.mxu0 0
        %9364 = vmatprep.subr.bf16.mxu0 0
        %9365 = vmatpush1.bf16.msra.mxu0 0
        %9366 = vmatprep.subr.bf16.mxu0 0
        %9367 = vmatpush1.bf16.msra.mxu0 0
        %9368 = vmatprep.subr.bf16.mxu0 0
        %9369 = vmatpush1.bf16.msra.mxu0 0
        %9370 = vmatprep.subr.bf16.mxu0 0
        %9371 = vmatpush1.bf16.msra.mxu0 0
        %9372 = vmatprep.mubr.bf16.mxu0 0
        %9373 = vmatmul.mubr.bf16.gmra.mrb[0].mxu0 %v9275
        %v9374 = vpop.f32.mrb[0].mxu0
        %v9375 = vadd.f32 0.0, %v9374
        %v9376 = vpop.f32.mrb[0].mxu0
        %v9377 = vpop.f32.mrb[0].mxu0
        %v9378 = vadd.f32 0.0, %v9377
        %v9379 = vpop.f32.mrb[0].mxu0
        %9380 = vmatprep.mubr.bf16.mxu0 0
        %9381 = vmatmul.mubr.bf16.gmra.mrb[0].mxu0 %v9277
        %v9382 = vpop.f32.mrb[0].mxu0
        %v9383 = vadd.f32 0.0, %v9382
        %v9384 = vpop.f32.mrb[0].mxu0
        %v9385 = vpop.f32.mrb[0].mxu0
        %v9386 = vadd.f32 0.0, %v9385
        %v9387 = vpop.f32.mrb[0].mxu0
        %9388 = vmatprep.mubr.bf16.mxu0 0
        %9389 = vmatmul.mubr.bf16.gmra.mrb[0].mxu0 %v9279
        %v9390 = vpop.f32.mrb[0].mxu0
        %v9391 = vadd.f32 0.0, %v9390
        %v9392 = vpop.f32.mrb[0].mxu0
        %v9393 = vpop.f32.mrb[0].mxu0
        %v9394 = vadd.f32 0.0, %v9393
        %v9395 = vpop.f32.mrb[0].mxu0
        %9396 = vmatprep.mubr.bf16.mxu0 0
        %9397 = vmatmul.mubr.bf16.gmra.mrb[0].mxu0 %v9281
        %v9398 = vpop.f32.mrb[0].mxu0
        %v9399 = vadd.f32 0.0, %v9398
        %v9400 = vpop.f32.mrb[0].mxu0
        %v9401 = vpop.f32.mrb[0].mxu0
        %v9402 = vadd.f32 0.0, %v9401
        %v9403 = vpop.f32.mrb[0].mxu0
        %9404 = vmatprep.mubr.bf16.mxu0 0
        %9405 = vmatmul.mubr.bf16.gmra.mrb[0].mxu0 %v9283
        %v9406 = vpop.f32.mrb[0].mxu0
        %v9407 = vadd.f32 0.0, %v9406
        %v9408 = vpop.f32.mrb[0].mxu0
        %v9409 = vpop.f32.mrb[0].mxu0
        %v9410 = vadd.f32 0.0, %v9409
        %v9411 = vpop.f32.mrb[0].mxu0
        %9412 = vmatprep.mubr.bf16.mxu0 0
        %9413 = vmatmul.mubr.bf16.gmra.mrb[0].mxu0 %v9285
        %v9414 = vpop.f32.mrb[0].mxu0
        %v9415 = vadd.f32 0.0, %v9414
        %v9416 = vpop.f32.mrb[0].mxu0
        %v9417 = vpop.f32.mrb[0].mxu0
        %v9418 = vadd.f32 0.0, %v9417
        %v9419 = vpop.f32.mrb[0].mxu0
        %9420 = vdwg.mxu0
        %v9421 = vadd.f32 %v9237, %v9375
        %v9422 = vadd.f32 %v9238, %v9378
        %v9423 = vadd.f32 %v9239, %v9383
        %v9424 = vadd.f32 %v9240, %v9386
        %v9425 = vadd.f32 %v9241, %v9391
        %v9426 = vadd.f32 %v9242, %v9394
        %v9427 = vadd.f32 %v9243, %v9399
        %v9428 = vadd.f32 %v9244, %v9402
        %v9429 = vadd.f32 %v9245, %v9407
        %v9430 = vadd.f32 %v9246, %v9410
        %v9431 = vadd.f32 %v9247, %v9415
        %v9432 = vadd.f32 %v9248, %v9418
        %v9433 = vld [vmem:[#allocation2 + $0xd8] sm:$0x1f]
        %v9434 = vld [vmem:[%s2553] sm:$0xf]
        %v9435 = vld [vmem:[%s2553 + $0x4] sm:$0xf]
        %v9436 = vld [vmem:[%s2553 + $0x8] sm:$0xf]
        %v9437 = vld [vmem:[%s2553 + $0xc] sm:$0xf]
        %v9438 = vld [vmem:[%s2553 + $0x10] sm:$0xf]
        %v9439 = vld [vmem:[%s2553 + $0x14] sm:$0xf]
        %v9440 = vld [vmem:[%s2553 + $0x18] sm:$0xf]
        %v9441 = vld [vmem:[%s2553 + $0x1c] sm:$0xf]
        %v9442 = vld [vmem:[%s2553 + $0x20] sm:$0xf]
        %v9443 = vld [vmem:[%s2553 + $0x24] sm:$0xf]
        %v9444 = vld [vmem:[%s2553 + $0x28] sm:$0xf]
        %v9445 = vld [vmem:[%s2553 + $0x2c] sm:$0xf]
        %v9446 = vld [vmem:[%s2553 + $0x30] sm:$0xf]
        %v9447 = vld [vmem:[%s2553 + $0x34] sm:$0xf]
        %v9448 = vld [vmem:[%s2553 + $0x38] sm:$0xf]
        %v9449 = vld [vmem:[%s2553 + $0x3c] sm:$0xf]
        %v9451 = vshrl.u32 %v9249, 16
        %v9453 = vrot.slane %v9451, 4
        %v9454 = vshll.u32 %v9249, 16
        %v9456 = vrot.slane %v9454, 5
        %v9457 = vor.u32 %v9453, %v9456
        %v9458 = vrot.slane %v9049, 4
        %v9459 = vrot.slane %v9052, 5
        %v9460 = vor.u32 %v9458, %v9459
        %v9461 = vsel %vm1343, %v9457, %v9460
        %v9462 = vrot.slane %v9058, 4
        %v9463 = vrot.slane %v9061, 5
        %v9464 = vor.u32 %v9462, %v9463
        %v9465 = vsel %vm1343, %v9460, %v9464
        %v9466 = vrot.slane %v9067, 4
        %v9467 = vrot.slane %v9070, 5
        %v9468 = vor.u32 %v9466, %v9467
        %v9469 = vsel %vm1343, %v9464, %v9468
        %v9470 = vrot.slane %v9076, 4
        %v9471 = vrot.slane %v9079, 5
        %v9472 = vor.u32 %v9470, %v9471
        %v9473 = vsel %vm1343, %v9468, %v9472
        %v9474 = vrot.slane %v9085, 4
        %v9475 = vrot.slane %v9088, 5
        %v9476 = vor.u32 %v9474, %v9475
        %v9477 = vsel %vm1343, %v9472, %v9476
        %v9479 = vshrl.u32 %v9433, 16
        %v9481 = vrot.slane %v9479, 4
        %v9482 = vshll.u32 %v9433, 16
        %v9484 = vrot.slane %v9482, 5
        %v9485 = vor.u32 %v9481, %v9484
        %v9486 = vsel %vm1343, %v9476, %v9485
        %v9509 = vunpack.c.l.b16 %v9434
        %v9510 = vunpack.c.l.b16 %v9435
        %v9511 = vunpack.c.l.b16 %v9436
        %v9512 = vunpack.c.l.b16 %v9437
        %v9513 = vunpack.c.l.b16 %v9438
        %v9514 = vunpack.c.l.b16 %v9439
        %v9515 = vunpack.c.l.b16 %v9440
        %v9516 = vunpack.c.l.b16 %v9441
        %v9517 = vunpack.c.l.b16 %v9442
        %v9518 = vunpack.c.l.b16 %v9443
        %v9519 = vunpack.c.l.b16 %v9444
        %v9520 = vunpack.c.l.b16 %v9445
        %v9521 = vunpack.c.l.b16 %v9446
        %v9522 = vunpack.c.l.b16 %v9447
        %v9523 = vunpack.c.l.b16 %v9448
        %v9524 = vunpack.c.l.b16 %v9449
        %v9525 = vpack.c.b16 %v9510, %v9509
        %v9526 = vpack.c.b16 %v9512, %v9511
        %v9527 = vpack.c.b16 %v9514, %v9513
        %v9528 = vpack.c.b16 %v9516, %v9515
        %v9529 = vpack.c.b16 %v9518, %v9517
        %v9530 = vpack.c.b16 %v9520, %v9519
        %v9531 = vpack.c.b16 %v9522, %v9521
        %v9532 = vpack.c.b16 %v9524, %v9523
        %9541 = vmatprep.subr.bf16.mxu0 0
        %9542 = vmatpush1.bf16.msra.mxu0 %v9525
        %9543 = vmatprep.subr.bf16.mxu0 0
        %9544 = vmatpush1.bf16.msra.mxu0 %v9526
        %9545 = vmatprep.subr.bf16.mxu0 0
        %9546 = vmatpush1.bf16.msra.mxu0 %v9527
        %9547 = vmatprep.subr.bf16.mxu0 0
        %9548 = vmatpush1.bf16.msra.mxu0 %v9528
        %9549 = vmatprep.subr.bf16.mxu0 0
        %9550 = vmatpush1.bf16.msra.mxu0 %v9529
        %9551 = vmatprep.subr.bf16.mxu0 0
        %9552 = vmatpush1.bf16.msra.mxu0 %v9530
        %9553 = vmatprep.subr.bf16.mxu0 0
        %9554 = vmatpush1.bf16.msra.mxu0 %v9531
        %9555 = vmatprep.subr.bf16.mxu0 0
        %9556 = vmatpush1.bf16.msra.mxu0 %v9532
        %9557 = vmatprep.subr.bf16.mxu0 0
        %9558 = vmatpush1.bf16.msra.mxu0 0
        %9559 = vmatprep.subr.bf16.mxu0 0
        %9560 = vmatpush1.bf16.msra.mxu0 0
        %9561 = vmatprep.subr.bf16.mxu0 0
        %9562 = vmatpush1.bf16.msra.mxu0 0
        %9563 = vmatprep.subr.bf16.mxu0 0
        %9564 = vmatpush1.bf16.msra.mxu0 0
        %9565 = vmatprep.subr.bf16.mxu0 0
        %9566 = vmatpush1.bf16.msra.mxu0 0
        %9567 = vmatprep.subr.bf16.mxu0 0
        %9568 = vmatpush1.bf16.msra.mxu0 0
        %9569 = vmatprep.subr.bf16.mxu0 0
        %9570 = vmatpush1.bf16.msra.mxu0 0
        %9571 = vmatprep.subr.bf16.mxu0 0
        %9572 = vmatpush1.bf16.msra.mxu0 0
        %9573 = vmatprep.mubr.bf16.mxu0 0
        %9574 = vmatmul.mubr.bf16.gmra.mrb[0].mxu0 %v9461
        %v9575 = vpop.f32.mrb[0].mxu0
        %v9576 = vadd.f32 0.0, %v9575
        %v9577 = vpop.f32.mrb[0].mxu0
        %v9578 = vpop.f32.mrb[0].mxu0
        %v9579 = vadd.f32 0.0, %v9578
        %v9580 = vpop.f32.mrb[0].mxu0
        %9581 = vmatprep.mubr.bf16.mxu0 0
        %9582 = vmatmul.mubr.bf16.gmra.mrb[0].mxu0 %v9465
        %v9583 = vpop.f32.mrb[0].mxu0
        %v9584 = vadd.f32 0.0, %v9583
        %v9585 = vpop.f32.mrb[0].mxu0
        %v9586 = vpop.f32.mrb[0].mxu0
        %v9587 = vadd.f32 0.0, %v9586
        %v9588 = vpop.f32.mrb[0].mxu0
        %9589 = vmatprep.mubr.bf16.mxu0 0
        %9590 = vmatmul.mubr.bf16.gmra.mrb[0].mxu0 %v9469
        %v9591 = vpop.f32.mrb[0].mxu0
        %v9592 = vadd.f32 0.0, %v9591
        %v9593 = vpop.f32.mrb[0].mxu0
        %v9594 = vpop.f32.mrb[0].mxu0
        %v9595 = vadd.f32 0.0, %v9594
        %v9596 = vpop.f32.mrb[0].mxu0
        %9597 = vmatprep.mubr.bf16.mxu0 0
        %9598 = vmatmul.mubr.bf16.gmra.mrb[0].mxu0 %v9473
        %v9599 = vpop.f32.mrb[0].mxu0
        %v9600 = vadd.f32 0.0, %v9599
        %v9601 = vpop.f32.mrb[0].mxu0
        %v9602 = vpop.f32.mrb[0].mxu0
        %v9603 = vadd.f32 0.0, %v9602
        %v9604 = vpop.f32.mrb[0].mxu0
        %9605 = vmatprep.mubr.bf16.mxu0 0
        %9606 = vmatmul.mubr.bf16.gmra.mrb[0].mxu0 %v9477
        %v9607 = vpop.f32.mrb[0].mxu0
        %v9608 = vadd.f32 0.0, %v9607
        %v9609 = vpop.f32.mrb[0].mxu0
        %v9610 = vpop.f32.mrb[0].mxu0
        %v9611 = vadd.f32 0.0, %v9610
        %v9612 = vpop.f32.mrb[0].mxu0
        %9613 = vmatprep.mubr.bf16.mxu0 0
        %9614 = vmatmul.mubr.bf16.gmra.mrb[0].mxu0 %v9486
        %v9615 = vpop.f32.mrb[0].mxu0
        %v9616 = vadd.f32 0.0, %v9615
        %v9617 = vpop.f32.mrb[0].mxu0
        %v9618 = vpop.f32.mrb[0].mxu0
        %v9619 = vadd.f32 0.0, %v9618
        %v9620 = vpop.f32.mrb[0].mxu0
        %9621 = vdwg.mxu0
        %v9622 = vadd.f32 %v9421, %v9576
        %v9623 = vadd.f32 %v9422, %v9579
        %v9624 = vadd.f32 %v9423, %v9584
        %v9625 = vadd.f32 %v9424, %v9587
        %v9626 = vadd.f32 %v9425, %v9592
        %v9627 = vadd.f32 %v9426, %v9595
        %v9628 = vadd.f32 %v9427, %v9600
        %v9629 = vadd.f32 %v9428, %v9603
        %v9630 = vadd.f32 %v9429, %v9608
        %v9631 = vadd.f32 %v9430, %v9611
        %v9632 = vadd.f32 %v9431, %v9616
        %v9633 = vadd.f32 %v9432, %v9619
        %v9634 = vmul.f32 %v9622, %v2757
        %v9635 = vmul.f32 %v9623, %v2757
        %v9636 = vmul.f32 %v9624, %v2757
        %v9637 = vmul.f32 %v9625, %v2757
        %v9638 = vmul.f32 %v9626, %v2757
        %v9639 = vmul.f32 %v9627, %v2757
        %v9640 = vmul.f32 %v9628, %v2757
        %v9641 = vmul.f32 %v9629, %v2757
        %v9642 = vmul.f32 %v9630, %v2757
        %v9643 = vmul.f32 %v9631, %v2757
        %v9644 = vmul.f32 %v9632, %v2757
        %v9645 = vmul.f32 %v9633, %v2757
        %v9646 = vadd.f32 %v9634, %v2773
        %v9647 = vadd.f32 %v9635, %v2773
        %v9648 = vadd.f32 %v9636, %v2773
        %v9649 = vadd.f32 %v9637, %v2773
        %v9650 = vadd.f32 %v9638, %v2773
        %v9651 = vadd.f32 %v9639, %v2773
        %v9652 = vadd.f32 %v9640, %v2773
        %v9653 = vadd.f32 %v9641, %v2773
        %v9654 = vadd.f32 %v9642, %v2773
        %v9655 = vadd.f32 %v9643, %v2773
        %v9656 = vadd.f32 %v9644, %v2773
        %v9657 = vadd.f32 %v9645, %v2773
        %v9658 = vmax.f32 %v9646, 0.0
        %v9659 = vmax.f32 %v9647, 0.0
        %v9660 = vmax.f32 %v9648, 0.0
        %v9661 = vmax.f32 %v9649, 0.0
        %v9662 = vmax.f32 %v9650, 0.0
        %v9663 = vmax.f32 %v9651, 0.0
        %v9664 = vmax.f32 %v9652, 0.0
        %v9665 = vmax.f32 %v9653, 0.0
        %v9666 = vmax.f32 %v9654, 0.0
        %v9667 = vmax.f32 %v9655, 0.0
        %v9668 = vmax.f32 %v9656, 0.0
        %v9669 = vmax.f32 %v9657, 0.0
        %v9670 = vld [vmem:[%s333 + $0x90] sm:$0xf]
        %v9671 = vld [vmem:[%s333 + $0x94] sm:$0xf]
        %v9672 = vld [vmem:[%s333 + $0x98] sm:$0xf]
        %v9673 = vld [vmem:[%s333 + $0x9c] sm:$0xf]
        %v9674 = vld [vmem:[%s333 + $0xa0] sm:$0xf]
        %v9675 = vld [vmem:[%s333 + $0xa4] sm:$0xf]
        %v9676 = vld [vmem:[%s333 + $0xa8] sm:$0xf]
        %v9677 = vld [vmem:[%s333 + $0xac] sm:$0xf]
        %v9678 = vld [vmem:[%s333 + $0xb0] sm:$0xf]
        %v9679 = vld [vmem:[%s333 + $0xb4] sm:$0xf]
        %v9680 = vld [vmem:[%s333 + $0xb8] sm:$0xf]
        %v9681 = vld [vmem:[%s333 + $0xbc] sm:$0xf]
        %v9682 = vld [vmem:[#allocation11] sm:$0xf]
        %v9683 = vld [vmem:[#allocation11 + $0x4] sm:$0xf]
        %v9684 = vld [vmem:[#allocation11 + $0x8] sm:$0xf]
        %v9685 = vld [vmem:[#allocation11 + $0xc] sm:$0xf]
        %v9686 = vld [vmem:[#allocation11 + $0x10] sm:$0xf]
        %v9687 = vld [vmem:[#allocation11 + $0x14] sm:$0xf]
        %v9688 = vld [vmem:[#allocation11 + $0x18] sm:$0xf]
        %v9689 = vld [vmem:[#allocation11 + $0x1c] sm:$0xf]
        %v9690 = vld [vmem:[#allocation11 + $0x20] sm:$0xf]
        %v9691 = vld [vmem:[#allocation11 + $0x24] sm:$0xf]
        %v9692 = vld [vmem:[#allocation11 + $0x28] sm:$0xf]
        %v9693 = vld [vmem:[#allocation11 + $0x2c] sm:$0xf]
        %v9694 = vld [vmem:[#allocation11 + $0x30] sm:$0xf]
        %v9695 = vld [vmem:[#allocation11 + $0x34] sm:$0xf]
        %v9696 = vld [vmem:[#allocation11 + $0x38] sm:$0xf]
        %v9697 = vld [vmem:[#allocation11 + $0x3c] sm:$0xf]
        %v9710 = vunpack.c.l.b16 %v9670
        %v9711 = vunpack.c.l.b16 %v9671
        %v9712 = vunpack.c.l.b16 %v9672
        %v9713 = vunpack.c.l.b16 %v9673
        %v9714 = vunpack.c.l.b16 %v9674
        %v9715 = vunpack.c.l.b16 %v9675
        %v9716 = vunpack.c.l.b16 %v9676
        %v9717 = vunpack.c.l.b16 %v9677
        %v9718 = vunpack.c.l.b16 %v9678
        %v9719 = vunpack.c.l.b16 %v9679
        %v9720 = vunpack.c.l.b16 %v9680
        %v9721 = vunpack.c.l.b16 %v9681
        %v9722 = vpack.c.b16 %v9711, %v9710
        %v9723 = vpack.c.b16 %v9713, %v9712
        %v9724 = vpack.c.b16 %v9715, %v9714
        %v9725 = vpack.c.b16 %v9717, %v9716
        %v9726 = vpack.c.b16 %v9719, %v9718
        %v9727 = vpack.c.b16 %v9721, %v9720
        %v9750 = vunpack.c.l.b16 %v9682
        %v9751 = vunpack.c.l.b16 %v9683
        %v9752 = vunpack.c.l.b16 %v9684
        %v9753 = vunpack.c.l.b16 %v9685
        %v9754 = vunpack.c.l.b16 %v9686
        %v9755 = vunpack.c.l.b16 %v9687
        %v9756 = vunpack.c.l.b16 %v9688
        %v9757 = vunpack.c.l.b16 %v9689
        %v9758 = vunpack.c.l.b16 %v9690
        %v9759 = vunpack.c.l.b16 %v9691
        %v9760 = vunpack.c.l.b16 %v9692
        %v9761 = vunpack.c.l.b16 %v9693
        %v9762 = vunpack.c.l.b16 %v9694
        %v9763 = vunpack.c.l.b16 %v9695
        %v9764 = vunpack.c.l.b16 %v9696
        %v9765 = vunpack.c.l.b16 %v9697
        %v9766 = vpack.c.b16 %v9751, %v9750
        %v9767 = vpack.c.b16 %v9753, %v9752
        %v9768 = vpack.c.b16 %v9755, %v9754
        %v9769 = vpack.c.b16 %v9757, %v9756
        %v9770 = vpack.c.b16 %v9759, %v9758
        %v9771 = vpack.c.b16 %v9761, %v9760
        %v9772 = vpack.c.b16 %v9763, %v9762
        %v9773 = vpack.c.b16 %v9765, %v9764
        %9782 = vmatprep.subr.bf16.mxu0 0
        %9783 = vmatpush1.bf16.msra.mxu0 %v9766
        %9784 = vmatprep.subr.bf16.mxu0 0
        %9785 = vmatpush1.bf16.msra.mxu0 %v9767
        %9786 = vmatprep.subr.bf16.mxu0 0
        %9787 = vmatpush1.bf16.msra.mxu0 %v9768
        %9788 = vmatprep.subr.bf16.mxu0 0
        %9789 = vmatpush1.bf16.msra.mxu0 %v9769
        %9790 = vmatprep.subr.bf16.mxu0 0
        %9791 = vmatpush1.bf16.msra.mxu0 %v9770
        %9792 = vmatprep.subr.bf16.mxu0 0
        %9793 = vmatpush1.bf16.msra.mxu0 %v9771
        %9794 = vmatprep.subr.bf16.mxu0 0
        %9795 = vmatpush1.bf16.msra.mxu0 %v9772
        %9796 = vmatprep.subr.bf16.mxu0 0
        %9797 = vmatpush1.bf16.msra.mxu0 %v9773
        %9798 = vmatprep.subr.bf16.mxu0 0
        %9799 = vmatpush1.bf16.msra.mxu0 0
        %9800 = vmatprep.subr.bf16.mxu0 0
        %9801 = vmatpush1.bf16.msra.mxu0 0
        %9802 = vmatprep.subr.bf16.mxu0 0
        %9803 = vmatpush1.bf16.msra.mxu0 0
        %9804 = vmatprep.subr.bf16.mxu0 0
        %9805 = vmatpush1.bf16.msra.mxu0 0
        %9806 = vmatprep.subr.bf16.mxu0 0
        %9807 = vmatpush1.bf16.msra.mxu0 0
        %9808 = vmatprep.subr.bf16.mxu0 0
        %9809 = vmatpush1.bf16.msra.mxu0 0
        %9810 = vmatprep.subr.bf16.mxu0 0
        %9811 = vmatpush1.bf16.msra.mxu0 0
        %9812 = vmatprep.subr.bf16.mxu0 0
        %9813 = vmatpush1.bf16.msra.mxu0 0
        %9814 = vmatprep.mubr.bf16.mxu0 0
        %9815 = vmatmul.mubr.bf16.gmra.mrb[0].mxu0 %v9722
        %v9816 = vpop.f32.mrb[0].mxu0
        %v9817 = vadd.f32 %v2830, %v9816
        %v9818 = vpop.f32.mrb[0].mxu0
        %v9819 = vpop.f32.mrb[0].mxu0
        %v9820 = vadd.f32 %v2830, %v9819
        %v9821 = vpop.f32.mrb[0].mxu0
        %9822 = vmatprep.mubr.bf16.mxu0 0
        %9823 = vmatmul.mubr.bf16.gmra.mrb[0].mxu0 %v9723
        %v9824 = vpop.f32.mrb[0].mxu0
        %v9825 = vadd.f32 %v2830, %v9824
        %v9826 = vpop.f32.mrb[0].mxu0
        %v9827 = vpop.f32.mrb[0].mxu0
        %v9828 = vadd.f32 %v2830, %v9827
        %v9829 = vpop.f32.mrb[0].mxu0
        %9830 = vmatprep.mubr.bf16.mxu0 0
        %9831 = vmatmul.mubr.bf16.gmra.mrb[0].mxu0 %v9724
        %v9832 = vpop.f32.mrb[0].mxu0
        %v9833 = vadd.f32 %v2830, %v9832
        %v9834 = vpop.f32.mrb[0].mxu0
        %v9835 = vpop.f32.mrb[0].mxu0
        %v9836 = vadd.f32 %v2830, %v9835
        %v9837 = vpop.f32.mrb[0].mxu0
        %9838 = vmatprep.mubr.bf16.mxu0 0
        %9839 = vmatmul.mubr.bf16.gmra.mrb[0].mxu0 %v9725
        %v9840 = vpop.f32.mrb[0].mxu0
        %v9841 = vadd.f32 %v2830, %v9840
        %v9842 = vpop.f32.mrb[0].mxu0
        %v9843 = vpop.f32.mrb[0].mxu0
        %v9844 = vadd.f32 %v2830, %v9843
        %v9845 = vpop.f32.mrb[0].mxu0
        %9846 = vmatprep.mubr.bf16.mxu0 0
        %9847 = vmatmul.mubr.bf16.gmra.mrb[0].mxu0 %v9726
        %v9848 = vpop.f32.mrb[0].mxu0
        %v9849 = vadd.f32 %v2830, %v9848
        %v9850 = vpop.f32.mrb[0].mxu0
        %v9851 = vpop.f32.mrb[0].mxu0
        %v9852 = vadd.f32 %v2830, %v9851
        %v9853 = vpop.f32.mrb[0].mxu0
        %9854 = vmatprep.mubr.bf16.mxu0 0
        %9855 = vmatmul.mubr.bf16.gmra.mrb[0].mxu0 %v9727
        %v9856 = vpop.f32.mrb[0].mxu0
        %v9857 = vadd.f32 %v2830, %v9856
        %v9858 = vpop.f32.mrb[0].mxu0
        %v9859 = vpop.f32.mrb[0].mxu0
        %v9860 = vadd.f32 %v2830, %v9859
        %v9861 = vpop.f32.mrb[0].mxu0
        %9862 = vdwg.mxu0
        %v9863 = vadd.f32 %v9658, %v9817
        %v9864 = vadd.f32 %v9659, %v9820
        %v9865 = vadd.f32 %v9660, %v9825
        %v9866 = vadd.f32 %v9661, %v9828
        %v9867 = vadd.f32 %v9662, %v9833
        %v9868 = vadd.f32 %v9663, %v9836
        %v9869 = vadd.f32 %v9664, %v9841
        %v9870 = vadd.f32 %v9665, %v9844
        %v9871 = vadd.f32 %v9666, %v9849
        %v9872 = vadd.f32 %v9667, %v9852
        %v9873 = vadd.f32 %v9668, %v9857
        %v9874 = vadd.f32 %v9669, %v9860
        %v9875 = vpack.c.bf16 %v9864, %v9863
        %v9876 = vpack.c.bf16 %v9866, %v9865
        %v9877 = vpack.c.bf16 %v9868, %v9867
        %v9878 = vpack.c.bf16 %v9870, %v9869
        %v9879 = vpack.c.bf16 %v9872, %v9871
        %v9880 = vpack.c.bf16 %v9874, %v9873
        %v9887 = vunpack.c.l.b16 %v9875
        %v9888 = vunpack.c.h.b16 %v9875
        %v9889 = vunpack.c.l.b16 %v9876
        %v9890 = vunpack.c.h.b16 %v9876
        %v9891 = vunpack.c.l.b16 %v9877
        %v9892 = vunpack.c.h.b16 %v9877
        %v9893 = vunpack.c.l.b16 %v9878
        %v9894 = vunpack.c.h.b16 %v9878
        %v9895 = vunpack.c.l.b16 %v9879
        %v9896 = vunpack.c.h.b16 %v9879
        %v9897 = vunpack.c.l.b16 %v9880
        %v9898 = vunpack.c.h.b16 %v9880
        %v9899 = vpack.c.b16 %v9887, %v9887
        %v9900 = vpack.c.b16 %v9888, %v9888
        %v9901 = vpack.c.b16 %v9889, %v9889
        %v9902 = vpack.c.b16 %v9890, %v9890
        %v9903 = vpack.c.b16 %v9891, %v9891
        %v9904 = vpack.c.b16 %v9892, %v9892
        %v9905 = vpack.c.b16 %v9893, %v9893
        %v9906 = vpack.c.b16 %v9894, %v9894
        %v9907 = vpack.c.b16 %v9895, %v9895
        %v9908 = vpack.c.b16 %v9896, %v9896
        %v9909 = vpack.c.b16 %v9897, %v9897
        %v9910 = vpack.c.b16 %v9898, %v9898
        %9923 = vst [vmem:[%s381 + $0x90] sm:$0xf] %v9899
        %9924 = vst [vmem:[%s381 + $0x94] sm:$0xf] %v9900
        %9925 = vst [vmem:[%s381 + $0x98] sm:$0xf] %v9901
        %9926 = vst [vmem:[%s381 + $0x9c] sm:$0xf] %v9902
        %9927 = vst [vmem:[%s381 + $0xa0] sm:$0xf] %v9903
        %9928 = vst [vmem:[%s381 + $0xa4] sm:$0xf] %v9904
        %9929 = vst [vmem:[%s381 + $0xa8] sm:$0xf] %v9905
        %9930 = vst [vmem:[%s381 + $0xac] sm:$0xf] %v9906
        %9931 = vst [vmem:[%s381 + $0xb0] sm:$0xf] %v9907
        %9932 = vst [vmem:[%s381 + $0xb4] sm:$0xf] %v9908
        %9933 = vst [vmem:[%s381 + $0xb8] sm:$0xf] %v9909
        %9934 = vst [vmem:[%s381 + $0xbc] sm:$0xf] %v9910
        %s9935 = sand.u32 %s208, 1
        %s9936 = scalar_lea.sflag [#allocation5], %s9935
        %s9937 = sand.u32 %s208, 1
        %s9938 = smul.addr %s9937, 192
        %s9939 = scalar_lea.vmem [#allocation12], %s9938
        // Predicated region
        $region73: #{tpu_custom_call.1} parent=51 // pred_check
          %p9940 = pneg %p218
        $region74: #{tpu_custom_call.1} parent=51 // pred_check_branch
          %9942 = sbr.rel (%p9940) target = $region76
        $region75: #{tpu_custom_call.1} parent=51 // pred_region
          %s9944 = ssub.s32 3072, 3072
          %9945 = vsyncadd %s9936, %s9944
          %s9946 = smul.addr %s27, 48
          %s9947 = smul.addr %s9946, 64
          %s9948 = scalar_lea.hbm %s8, %s9947
          %s9949 = sshll.u32 %s9939, 4
          %s9950 = int_to_ptr.vmem [resolvable:$true] %s9949
          %9955 = dma.vmem_to_hbm [thread:$0]  %s9950, 3072, %s9948, %s9936, 64, 64, 4
        $region76: #{tpu_custom_call.1} parent=51 // pred_fallthru
          _
      $region52: #{tpu_custom_call.1} parent=5 // pred_fallthru
        _
      %p9956 = scmp.le.s32.totalorder 2, %s22
      // Predicated region
      $region77: #{tpu_custom_call.1} parent=5 // pred_check
        %p9957 = pneg %p9956
      $region78: #{tpu_custom_call.1} parent=5 // pred_check_branch
        %9959 = sbr.rel (%p9957) target = $region80
      $region79: #{tpu_custom_call.1} parent=5 // pred_region
        %s9960 = ssub.s32 %s22, 2
        // Predicated region
        $region81: #{tpu_custom_call.1} parent=79 // pred_check
          %p9961 = pneg %p224
        $region82: #{tpu_custom_call.1} parent=79 // pred_check_branch
          %9963 = sbr.rel (%p9961) target = $region84
        $region83: #{tpu_custom_call.1} parent=79 // pred_region
          %s9964 = sand.u32 %s209, 1
          %s9965 = scalar_lea.sflag [#allocation5], %s9964
          %s9966 = sand.u32 %s209, 1
          %s9967 = smul.addr %s9966, 192
          %s9968 = scalar_lea.vmem [#allocation12], %s9967
          %9969 = dma.done %s9965, 3072
        $region84: #{tpu_custom_call.1} parent=79 // pred_fallthru
          _
      $region80: #{tpu_custom_call.1} parent=5 // pred_fallthru
        _
    $region6: #{tpu_custom_call.1} parent=1 // loop_footer
      %s26 = sadd.s32 1, %s22
    $region7: #{tpu_custom_call.1} parent=1 // loop_footer_branch
      %21 = sbr.rel target = $region3
    $region8: #{tpu_custom_call.1} parent=1 // loop_exit
      _
    %9970 = vsyncpa [#allocation4], 1
    %s9971 = scalar_lea.sflag [#allocation4], 1
    %9972 = vsyncpa %s9971, 1
    %9973 = vsyncpa [#allocation7], 1
    %9974 = vsyncpa [#allocation10], 1
    %9975 = vsyncpa [#allocation5], 1
    %s9976 = scalar_lea.sflag [#allocation5], 1
    %9977 = vsyncpa %s9976, 1

</llo_original>
